<compile_context>
chip_gen: v5e
topology: v5e:2x2
jax: 0.10.0
libtpu: 0.0.40
codegen_flags: <defaults>
</compile_context>

<pallas_src>
import functools
import math

import jax
import jax.numpy as jnp
from jax.experimental import pallas as pl
from jax.experimental.pallas import tpu as pltpu

_CP = 128  # lane-dense channel padding (all channel dims padded to 128)


def _const_index_map(ndim):
    return lambda n: (0,) * ndim


# ------------------------------ fused whole-network kernel ------------------------------

def _fused_resnet_kernel(*refs, block_cfg, cp):
    """Whole resnet18_1D + FC head for one batch sample, fully VMEM-resident."""
    x_ref = refs[0]
    stem_w, stem_shift = refs[1], refs[2]
    idx = 3
    blocks = []
    for (_, has_down) in block_cfg:
        n = 6 if has_down else 4
        blocks.append(refs[idx:idx + n])
        idx += n
    fc_w_ref, fc_b_ref = refs[idx], refs[idx + 1]
    out_ref = refs[idx + 2]
    buf = refs[idx + 3]          # (rows, cp) f32 scratch: padded-input staging buffer

    def conv(x, w_ref, shift_ref, *, K, stride, pad, relu, residual=None):
        """Conv1d (K taps) + folded-BN shift [+ residual] [+ ReLU]. Halo zeroed in buf."""
        L_i, x_lanes = x.shape
        L_o = (L_i + 2 * pad - K) // stride + 1
        # Stage the (zero-haloed) input rows in the f32 scratch buffer.
        if x_lanes == cp:
            if pad > 0:
                z = jnp.zeros((pad, cp), jnp.float32)
                buf[0:pad, :] = z
                buf[pad + L_i: pad + L_i + pad, :] = z
            buf[pad: pad + L_i, :] = x
        else:
            # Narrow (stem) input: zero the whole used region, then write the real lanes.
            buf[0: L_i + 2 * pad, :] = jnp.zeros((L_i + 2 * pad, cp), jnp.float32)
            buf[pad: pad + L_i, 0:x_lanes] = x

        acc = jnp.zeros((L_o, cp), jnp.float32)
        for k in range(K):                                   # K <= 7, fully unrolled
            if stride == 1:
                xs = buf[k: k + L_o, :]                       # contiguous rows
            else:
                xs = buf[pl.ds(k, L_o, stride=stride), :]     # strided sublane read
            wk = w_ref[k * cp:(k + 1) * cp, :]                # (cp, cp) bf16
            acc = acc + jnp.dot(xs.astype(jnp.bfloat16), wk,
                                preferred_element_type=jnp.float32)
        y = acc + shift_ref[...]                              # BN shift (scale pre-folded)
        if residual is not None:
            y = y + residual
        if relu:
            y = jnp.maximum(y, 0.0)
        return y

    def maxpool3s2(x):
        # MaxPool1d(3, 2, 1).  Input is post-ReLU (>= 0), so zero padding == -inf padding.
        L_i = x.shape[0]
        L_o = (L_i + 2 - 3) // 2 + 1
        z = jnp.zeros((1, cp), jnp.float32)
        buf[0:1, :] = z
        buf[1 + L_i: 2 + L_i, :] = z
        buf[1: 1 + L_i, :] = x
        m = buf[pl.ds(0, L_o, stride=2), :]
        m = jnp.maximum(m, buf[pl.ds(1, L_o, stride=2), :])
        m = jnp.maximum(m, buf[pl.ds(2, L_o, stride=2), :])
        return m

    # stem: conv7/s2/p3 + BN + ReLU, then MaxPool(3,2,1)
    x = x_ref[0]                                              # (L, C_in) f32
    x = conv(x, stem_w, stem_shift, K=7, stride=2, pad=3, relu=True)
    x = maxpool3s2(x)

    # 4 stages x 2 BasicBlocks
    for bp, (stride, has_down) in zip(blocks, block_cfg):
        if has_down:
            w1, s1, w2, s2, wd, sd = bp
            identity = conv(x, wd, sd, K=1, stride=stride, pad=0, relu=False)
        else:
            w1, s1, w2, s2 = bp
            identity = x
        h = conv(x, w1, s1, K=3, stride=stride, pad=1, relu=True)
        x = conv(h, w2, s2, K=3, stride=1, pad=1, relu=True, residual=identity)

    # AdaptiveAvgPool1d(1) + flatten + Linear (lane-dense padded classes)
    feat = jnp.mean(x, axis=0, keepdims=True)                 # (1, cp)
    logits = jnp.dot(feat, fc_w_ref[...],
                     preferred_element_type=jnp.float32) + fc_b_ref[...]
    out_ref[0] = logits


# ----------------------------------- forward wrapper ------------------------------------

def complete_model_forward(params, x_ncl):
    N, c_in, L0 = x_ncl.shape
    cp = params['cp']
    num_classes = params['num_classes']
    block_cfg = params['block_cfg']

    # Only wrapper-side data movement: tiny NCL -> NLC transpose of the network input.
    x_nlc = jnp.transpose(x_ncl, (0, 2, 1)).astype(jnp.float32)

    inputs = [x_nlc, params['stem_w'], params['stem_shift']]
    for bp, (_, has_down) in zip(params['blocks'], block_cfg):
        inputs += [bp['w1'], bp['s1'], bp['w2'], bp['s2']]
        if has_down:
            inputs += [bp['wd'], bp['sd']]
    inputs += [params['fc_w'], params['fc_b']]

    in_specs = [pl.BlockSpec((1, L0, c_in), lambda n: (n, 0, 0))]
    for a in inputs[1:]:
        # Weights: full-array blocks, same block for every grid step (loaded once).
        in_specs.append(pl.BlockSpec(a.shape, _const_index_map(a.ndim)))

    buf_rows = ((L0 + 2 * 3) + 7) // 8 * 8      # enough rows for the stem's padded input

    kernel = functools.partial(_fused_resnet_kernel, block_cfg=block_cfg, cp=cp)
    out = pl.pallas_call(
        kernel,
        out_shape=jax.ShapeDtypeStruct((N, 1, cp), jnp.float32),
        grid=(N,),                              # batch-parallel: both v7x TCs get work
        in_specs=in_specs,
        out_specs=pl.BlockSpec((1, 1, cp), lambda n: (n, 0, 0)),
        scratch_shapes=[pltpu.VMEM((buf_rows, cp), jnp.float32)],
        compiler_params=pltpu.CompilerParams(dimension_semantics=("parallel",)),
    )(*inputs)
    return out[:, 0, :num_classes]


# ----------------------------------- parameter builders ---------------------------------

def _conv_bn(key, c_out, c_in, k, cp, eps=1e-5):
    """PyTorch-style Conv1d init + inference BatchNorm, BN scale folded into the weight.
    Returns w: (k*cp, cp) bf16 (rows ordered (tap, c_in), zero-padded), shift: (1, cp) f32."""
    k1, k2, k3 = jax.random.split(key, 3)
    bound = 1.0 / math.sqrt(c_in * k)
    w = jax.random.uniform(k1, (c_out, c_in, k), jnp.float32, -bound, bound)
    gamma = 1.0 + 0.1 * jax.random.normal(k2, (c_out,), jnp.float32)
    beta = 0.1 * jax.random.normal(k3, (c_out,), jnp.float32)
    running_mean = jnp.zeros((c_out,), jnp.float32)
    running_var = jnp.ones((c_out,), jnp.float32)
    scale = gamma / jnp.sqrt(running_var + eps)
    shift = beta - running_mean * scale
    w_scaled = w * scale[:, None, None]                    # fold BN scale into the conv
    w_kc = jnp.transpose(w_scaled, (2, 1, 0))              # (k, c_in, c_out)
    w_pad = jnp.zeros((k, cp, cp), jnp.float32).at[:, :c_in, :c_out].set(w_kc)
    w_pad = w_pad.reshape(k * cp, cp).astype(jnp.bfloat16)
    shift_pad = jnp.zeros((1, cp), jnp.float32).at[0, :c_out].set(shift)
    return w_pad, shift_pad


def build_params(key, in_channels, base, num_classes, cp=_CP):
    keys = iter(jax.random.split(key, 64))
    params = {'cp': cp, 'num_classes': num_classes}
    params['stem_w'], params['stem_shift'] = _conv_bn(next(keys), base, in_channels, 7, cp)

    blocks, block_cfg = [], []
    c_prev = base
    for stage_i, c_out in enumerate([base, base * 2, base * 4, base * 8]):
        for b in range(2):
            stride = 2 if (stage_i > 0 and b == 0) else 1
            has_down = (stride != 1) or (c_prev != c_out)
            bp = {}
            bp['w1'], bp['s1'] = _conv_bn(next(keys), c_out, c_prev, 3, cp)
            bp['w2'], bp['s2'] = _conv_bn(next(keys), c_out, c_out, 3, cp)
            if has_down:
                bp['wd'], bp['sd'] = _conv_bn(next(keys), c_out, c_prev, 1, cp)
            blocks.append(bp)
            block_cfg.append((stride, has_down))
            c_prev = c_out
    params['blocks'] = blocks
    params['block_cfg'] = tuple(block_cfg)

    feat_dim = base * 8
    bound = 1.0 / math.sqrt(feat_dim)
    k1, k2 = next(keys), next(keys)
    fc_w = jax.random.uniform(k1, (feat_dim, num_classes), jnp.float32, -bound, bound)
    fc_b = jax.random.uniform(k2, (num_classes,), jnp.float32, -bound, bound)
    params['fc_w'] = jnp.zeros((cp, cp), jnp.float32).at[:feat_dim, :num_classes].set(fc_w)
    params['fc_b'] = jnp.zeros((1, cp), jnp.float32).at[0, :num_classes].set(fc_b)
    return params


# ----------------------------------------- main ------------------------------------------

if __name__ == "__main__":
    key = jax.random.PRNGKey(0)
    k_param, k_x = jax.random.split(key)
    N, C_in, L = 2, 4, 64          # small shapes: batch=2, in_channels=4, seq=64
    base, num_classes = 8, 10      # feat_dim = base * 8 = 64
    params = build_params(k_param, C_in, base, num_classes)
    x = jax.random.normal(k_x, (N, C_in, L), jnp.float32)

    fwd = jax.jit(functools.partial(complete_model_forward, params))
    logits = fwd(x)
    jax.block_until_ready(logits)

    assert logits.shape == (N, num_classes)
    assert bool(jnp.all(jnp.isfinite(logits)))
    print("KERNEL_OK")
</pallas_src>

<mosaic_0001>
module attributes {stable_mosaic.version = 11 : i64} {
  func.func @_fused_resnet_kernel(%arg0: i32, %arg1: memref<1x64x4xf32, #tpu.memory_space<vmem>>, %arg2: memref<896x128xbf16, #tpu.memory_space<vmem>>, %arg3: memref<1x128xf32, #tpu.memory_space<vmem>>, %arg4: memref<384x128xbf16, #tpu.memory_space<vmem>>, %arg5: memref<1x128xf32, #tpu.memory_space<vmem>>, %arg6: memref<384x128xbf16, #tpu.memory_space<vmem>>, %arg7: memref<1x128xf32, #tpu.memory_space<vmem>>, %arg8: memref<384x128xbf16, #tpu.memory_space<vmem>>, %arg9: memref<1x128xf32, #tpu.memory_space<vmem>>, %arg10: memref<384x128xbf16, #tpu.memory_space<vmem>>, %arg11: memref<1x128xf32, #tpu.memory_space<vmem>>, %arg12: memref<384x128xbf16, #tpu.memory_space<vmem>>, %arg13: memref<1x128xf32, #tpu.memory_space<vmem>>, %arg14: memref<384x128xbf16, #tpu.memory_space<vmem>>, %arg15: memref<1x128xf32, #tpu.memory_space<vmem>>, %arg16: memref<128x128xbf16, #tpu.memory_space<vmem>>, %arg17: memref<1x128xf32, #tpu.memory_space<vmem>>, %arg18: memref<384x128xbf16, #tpu.memory_space<vmem>>, %arg19: memref<1x128xf32, #tpu.memory_space<vmem>>, %arg20: memref<384x128xbf16, #tpu.memory_space<vmem>>, %arg21: memref<1x128xf32, #tpu.memory_space<vmem>>, %arg22: memref<384x128xbf16, #tpu.memory_space<vmem>>, %arg23: memref<1x128xf32, #tpu.memory_space<vmem>>, %arg24: memref<384x128xbf16, #tpu.memory_space<vmem>>, %arg25: memref<1x128xf32, #tpu.memory_space<vmem>>, %arg26: memref<128x128xbf16, #tpu.memory_space<vmem>>, %arg27: memref<1x128xf32, #tpu.memory_space<vmem>>, %arg28: memref<384x128xbf16, #tpu.memory_space<vmem>>, %arg29: memref<1x128xf32, #tpu.memory_space<vmem>>, %arg30: memref<384x128xbf16, #tpu.memory_space<vmem>>, %arg31: memref<1x128xf32, #tpu.memory_space<vmem>>, %arg32: memref<384x128xbf16, #tpu.memory_space<vmem>>, %arg33: memref<1x128xf32, #tpu.memory_space<vmem>>, %arg34: memref<384x128xbf16, #tpu.memory_space<vmem>>, %arg35: memref<1x128xf32, #tpu.memory_space<vmem>>, %arg36: memref<128x128xbf16, #tpu.memory_space<vmem>>, %arg37: memref<1x128xf32, #tpu.memory_space<vmem>>, %arg38: memref<384x128xbf16, #tpu.memory_space<vmem>>, %arg39: memref<1x128xf32, #tpu.memory_space<vmem>>, %arg40: memref<384x128xbf16, #tpu.memory_space<vmem>>, %arg41: memref<1x128xf32, #tpu.memory_space<vmem>>, %arg42: memref<128x128xf32, #tpu.memory_space<vmem>>, %arg43: memref<1x128xf32, #tpu.memory_space<vmem>>, %arg44: memref<1x1x128xf32, #tpu.memory_space<vmem>>, %arg45: memref<72x128xf32, #tpu.memory_space<vmem>>) attributes {dimension_semantics = [#tpu.dimension_semantics<parallel>], iteration_bounds = array<i64: 2>, scalar_prefetch = 0 : i64, scratch_operands = 1 : i64, tpu.core_type = #tpu.core_type<tc>, window_params = [{transform_indices = @transform_0, window_bounds = array<i64: 1, 64, 4>}, {pipeline_mode = #tpu.pipeline_mode<synchronous>, transform_indices = @transform_1, window_bounds = array<i64: 896, 128>}, {pipeline_mode = #tpu.pipeline_mode<synchronous>, transform_indices = @transform_2, window_bounds = array<i64: 1, 128>}, {pipeline_mode = #tpu.pipeline_mode<synchronous>, transform_indices = @transform_3, window_bounds = array<i64: 384, 128>}, {pipeline_mode = #tpu.pipeline_mode<synchronous>, transform_indices = @transform_4, window_bounds = array<i64: 1, 128>}, {pipeline_mode = #tpu.pipeline_mode<synchronous>, transform_indices = @transform_5, window_bounds = array<i64: 384, 128>}, {pipeline_mode = #tpu.pipeline_mode<synchronous>, transform_indices = @transform_6, window_bounds = array<i64: 1, 128>}, {pipeline_mode = #tpu.pipeline_mode<synchronous>, transform_indices = @transform_7, window_bounds = array<i64: 384, 128>}, {pipeline_mode = #tpu.pipeline_mode<synchronous>, transform_indices = @transform_8, window_bounds = array<i64: 1, 128>}, {pipeline_mode = #tpu.pipeline_mode<synchronous>, transform_indices = @transform_9, window_bounds = array<i64: 384, 128>}, {pipeline_mode = #tpu.pipeline_mode<synchronous>, transform_indices = @transform_10, window_bounds = array<i64: 1, 128>}, {pipeline_mode = #tpu.pipeline_mode<synchronous>, transform_indices = @transform_11, window_bounds = array<i64: 384, 128>}, {pipeline_mode = #tpu.pipeline_mode<synchronous>, transform_indices = @transform_12, window_bounds = array<i64: 1, 128>}, {pipeline_mode = #tpu.pipeline_mode<synchronous>, transform_indices = @transform_13, window_bounds = array<i64: 384, 128>}, {pipeline_mode = #tpu.pipeline_mode<synchronous>, transform_indices = @transform_14, window_bounds = array<i64: 1, 128>}, {pipeline_mode = #tpu.pipeline_mode<synchronous>, transform_indices = @transform_15, window_bounds = array<i64: 128, 128>}, {pipeline_mode = #tpu.pipeline_mode<synchronous>, transform_indices = @transform_16, window_bounds = array<i64: 1, 128>}, {pipeline_mode = #tpu.pipeline_mode<synchronous>, transform_indices = @transform_17, window_bounds = array<i64: 384, 128>}, {pipeline_mode = #tpu.pipeline_mode<synchronous>, transform_indices = @transform_18, window_bounds = array<i64: 1, 128>}, {pipeline_mode = #tpu.pipeline_mode<synchronous>, transform_indices = @transform_19, window_bounds = array<i64: 384, 128>}, {pipeline_mode = #tpu.pipeline_mode<synchronous>, transform_indices = @transform_20, window_bounds = array<i64: 1, 128>}, {pipeline_mode = #tpu.pipeline_mode<synchronous>, transform_indices = @transform_21, window_bounds = array<i64: 384, 128>}, {pipeline_mode = #tpu.pipeline_mode<synchronous>, transform_indices = @transform_22, window_bounds = array<i64: 1, 128>}, {pipeline_mode = #tpu.pipeline_mode<synchronous>, transform_indices = @transform_23, window_bounds = array<i64: 384, 128>}, {pipeline_mode = #tpu.pipeline_mode<synchronous>, transform_indices = @transform_24, window_bounds = array<i64: 1, 128>}, {pipeline_mode = #tpu.pipeline_mode<synchronous>, transform_indices = @transform_25, window_bounds = array<i64: 128, 128>}, {pipeline_mode = #tpu.pipeline_mode<synchronous>, transform_indices = @transform_26, window_bounds = array<i64: 1, 128>}, {pipeline_mode = #tpu.pipeline_mode<synchronous>, transform_indices = @transform_27, window_bounds = array<i64: 384, 128>}, {pipeline_mode = #tpu.pipeline_mode<synchronous>, transform_indices = @transform_28, window_bounds = array<i64: 1, 128>}, {pipeline_mode = #tpu.pipeline_mode<synchronous>, transform_indices = @transform_29, window_bounds = array<i64: 384, 128>}, {pipeline_mode = #tpu.pipeline_mode<synchronous>, transform_indices = @transform_30, window_bounds = array<i64: 1, 128>}, {pipeline_mode = #tpu.pipeline_mode<synchronous>, transform_indices = @transform_31, window_bounds = array<i64: 384, 128>}, {pipeline_mode = #tpu.pipeline_mode<synchronous>, transform_indices = @transform_32, window_bounds = array<i64: 1, 128>}, {pipeline_mode = #tpu.pipeline_mode<synchronous>, transform_indices = @transform_33, window_bounds = array<i64: 384, 128>}, {pipeline_mode = #tpu.pipeline_mode<synchronous>, transform_indices = @transform_34, window_bounds = array<i64: 1, 128>}, {pipeline_mode = #tpu.pipeline_mode<synchronous>, transform_indices = @transform_35, window_bounds = array<i64: 128, 128>}, {pipeline_mode = #tpu.pipeline_mode<synchronous>, transform_indices = @transform_36, window_bounds = array<i64: 1, 128>}, {pipeline_mode = #tpu.pipeline_mode<synchronous>, transform_indices = @transform_37, window_bounds = array<i64: 384, 128>}, {pipeline_mode = #tpu.pipeline_mode<synchronous>, transform_indices = @transform_38, window_bounds = array<i64: 1, 128>}, {pipeline_mode = #tpu.pipeline_mode<synchronous>, transform_indices = @transform_39, window_bounds = array<i64: 384, 128>}, {pipeline_mode = #tpu.pipeline_mode<synchronous>, transform_indices = @transform_40, window_bounds = array<i64: 1, 128>}, {pipeline_mode = #tpu.pipeline_mode<synchronous>, transform_indices = @transform_41, window_bounds = array<i64: 128, 128>}, {pipeline_mode = #tpu.pipeline_mode<synchronous>, transform_indices = @transform_42, window_bounds = array<i64: 1, 128>}, {transform_indices = @transform_43, window_bounds = array<i64: 1, 1, 128>}]} {
    %c0 = arith.constant 0 : index
    %c0_0 = arith.constant 0 : index
    %c0_1 = arith.constant 0 : index
    %0 = vector.load %arg1[%c0, %c0_0, %c0_1] : memref<1x64x4xf32, #tpu.memory_space<vmem>>, vector<1x64x4xf32>
    %1 = vector.shape_cast %0 : vector<1x64x4xf32> to vector<64x4xf32>
    %cst = arith.constant 0.000000e+00 : f32
    %2 = vector.broadcast %cst : f32 to vector<70x128xf32>
    %c0_2 = arith.constant 0 : index
    %c0_3 = arith.constant 0 : index
    %3 = vector.load %arg45[%c0_2, %c0_3] : memref<72x128xf32, #tpu.memory_space<vmem>>, vector<70x128xf32>
    tpu.vector_store %arg45[%c0_2, %c0_3], %2 {strides = array<i32>} : memref<72x128xf32, #tpu.memory_space<vmem>>, vector<70x128xf32>,
    %c3 = arith.constant 3 : index
    %c0_4 = arith.constant 0 : index
    %4 = vector.load %arg45[%c3, %c0_4] : memref<72x128xf32, #tpu.memory_space<vmem>>, vector<64x4xf32>
    tpu.vector_store %arg45[%c3, %c0_4], %1 {strides = array<i32>} : memref<72x128xf32, #tpu.memory_space<vmem>>, vector<64x4xf32>,
    %cst_5 = arith.constant 0.000000e+00 : f32
    %5 = vector.broadcast %cst_5 : f32 to vector<32x128xf32>
    %c0_6 = arith.constant 0 : index
    %c0_7 = arith.constant 0 : index
    %6 = tpu.strided_load %arg45[%c0_6, %c0_7] {strides = array<i32: 2, 1>} : memref<72x128xf32, #tpu.memory_space<vmem>>, vector<32x128xf32>
    %c0_8 = arith.constant 0 : index
    %c0_9 = arith.constant 0 : index
    %7 = vector.load %arg2[%c0_8, %c0_9] : memref<896x128xbf16, #tpu.memory_space<vmem>>, vector<128x128xbf16>
    %8 = arith.truncf %6 : vector<32x128xf32> to vector<32x128xbf16>
    %cst_10 = arith.constant dense<0.000000e+00> : vector<32x128xf32>
    %9 = tpu.matmul %8, %7, %cst_10 {dimension_numbers = #tpu.dot_dimension_numbers<[1], [0], [0], [1], [0, 0, 1, 1], [], []>} : vector<32x128xbf16>, vector<128x128xbf16>, vector<32x128xf32> -> vector<32x128xf32>
    %10 = arith.addf %5, %9 : vector<32x128xf32>
    %c1 = arith.constant 1 : index
    %c0_11 = arith.constant 0 : index
    %11 = tpu.strided_load %arg45[%c1, %c0_11] {strides = array<i32: 2, 1>} : memref<72x128xf32, #tpu.memory_space<vmem>>, vector<32x128xf32>
    %c128 = arith.constant 128 : index
    %c0_12 = arith.constant 0 : index
    %12 = vector.load %arg2[%c128, %c0_12] : memref<896x128xbf16, #tpu.memory_space<vmem>>, vector<128x128xbf16>
    %13 = arith.truncf %11 : vector<32x128xf32> to vector<32x128xbf16>
    %cst_13 = arith.constant dense<0.000000e+00> : vector<32x128xf32>
    %14 = tpu.matmul %13, %12, %cst_13 {dimension_numbers = #tpu.dot_dimension_numbers<[1], [0], [0], [1], [0, 0, 1, 1], [], []>} : vector<32x128xbf16>, vector<128x128xbf16>, vector<32x128xf32> -> vector<32x128xf32>
    %15 = arith.addf %10, %14 : vector<32x128xf32>
    %c2 = arith.constant 2 : index
    %c0_14 = arith.constant 0 : index
    %16 = tpu.strided_load %arg45[%c2, %c0_14] {strides = array<i32: 2, 1>} : memref<72x128xf32, #tpu.memory_space<vmem>>, vector<32x128xf32>
    %c256 = arith.constant 256 : index
    %c0_15 = arith.constant 0 : index
    %17 = vector.load %arg2[%c256, %c0_15] : memref<896x128xbf16, #tpu.memory_space<vmem>>, vector<128x128xbf16>
    %18 = arith.truncf %16 : vector<32x128xf32> to vector<32x128xbf16>
    %cst_16 = arith.constant dense<0.000000e+00> : vector<32x128xf32>
    %19 = tpu.matmul %18, %17, %cst_16 {dimension_numbers = #tpu.dot_dimension_numbers<[1], [0], [0], [1], [0, 0, 1, 1], [], []>} : vector<32x128xbf16>, vector<128x128xbf16>, vector<32x128xf32> -> vector<32x128xf32>
    %20 = arith.addf %15, %19 : vector<32x128xf32>
    %c3_17 = arith.constant 3 : index
    %c0_18 = arith.constant 0 : index
    %21 = tpu.strided_load %arg45[%c3_17, %c0_18] {strides = array<i32: 2, 1>} : memref<72x128xf32, #tpu.memory_space<vmem>>, vector<32x128xf32>
    %c384 = arith.constant 384 : index
    %c0_19 = arith.constant 0 : index
    %22 = vector.load %arg2[%c384, %c0_19] : memref<896x128xbf16, #tpu.memory_space<vmem>>, vector<128x128xbf16>
    %23 = arith.truncf %21 : vector<32x128xf32> to vector<32x128xbf16>
    %cst_20 = arith.constant dense<0.000000e+00> : vector<32x128xf32>
    %24 = tpu.matmul %23, %22, %cst_20 {dimension_numbers = #tpu.dot_dimension_numbers<[1], [0], [0], [1], [0, 0, 1, 1], [], []>} : vector<32x128xbf16>, vector<128x128xbf16>, vector<32x128xf32> -> vector<32x128xf32>
    %25 = arith.addf %20, %24 : vector<32x128xf32>
    %c4 = arith.constant 4 : index
    %c0_21 = arith.constant 0 : index
    %26 = tpu.strided_load %arg45[%c4, %c0_21] {strides = array<i32: 2, 1>} : memref<72x128xf32, #tpu.memory_space<vmem>>, vector<32x128xf32>
    %c512 = arith.constant 512 : index
    %c0_22 = arith.constant 0 : index
    %27 = vector.load %arg2[%c512, %c0_22] : memref<896x128xbf16, #tpu.memory_space<vmem>>, vector<128x128xbf16>
    %28 = arith.truncf %26 : vector<32x128xf32> to vector<32x128xbf16>
    %cst_23 = arith.constant dense<0.000000e+00> : vector<32x128xf32>
    %29 = tpu.matmul %28, %27, %cst_23 {dimension_numbers = #tpu.dot_dimension_numbers<[1], [0], [0], [1], [0, 0, 1, 1], [], []>} : vector<32x128xbf16>, vector<128x128xbf16>, vector<32x128xf32> -> vector<32x128xf32>
    %30 = arith.addf %25, %29 : vector<32x128xf32>
    %c5 = arith.constant 5 : index
    %c0_24 = arith.constant 0 : index
    %31 = tpu.strided_load %arg45[%c5, %c0_24] {strides = array<i32: 2, 1>} : memref<72x128xf32, #tpu.memory_space<vmem>>, vector<32x128xf32>
    %c640 = arith.constant 640 : index
    %c0_25 = arith.constant 0 : index
    %32 = vector.load %arg2[%c640, %c0_25] : memref<896x128xbf16, #tpu.memory_space<vmem>>, vector<128x128xbf16>
    %33 = arith.truncf %31 : vector<32x128xf32> to vector<32x128xbf16>
    %cst_26 = arith.constant dense<0.000000e+00> : vector<32x128xf32>
    %34 = tpu.matmul %33, %32, %cst_26 {dimension_numbers = #tpu.dot_dimension_numbers<[1], [0], [0], [1], [0, 0, 1, 1], [], []>} : vector<32x128xbf16>, vector<128x128xbf16>, vector<32x128xf32> -> vector<32x128xf32>
    %35 = arith.addf %30, %34 : vector<32x128xf32>
    %c6 = arith.constant 6 : index
    %c0_27 = arith.constant 0 : index
    %36 = tpu.strided_load %arg45[%c6, %c0_27] {strides = array<i32: 2, 1>} : memref<72x128xf32, #tpu.memory_space<vmem>>, vector<32x128xf32>
    %c768 = arith.constant 768 : index
    %c0_28 = arith.constant 0 : index
    %37 = vector.load %arg2[%c768, %c0_28] : memref<896x128xbf16, #tpu.memory_space<vmem>>, vector<128x128xbf16>
    %38 = arith.truncf %36 : vector<32x128xf32> to vector<32x128xbf16>
    %cst_29 = arith.constant dense<0.000000e+00> : vector<32x128xf32>
    %39 = tpu.matmul %38, %37, %cst_29 {dimension_numbers = #tpu.dot_dimension_numbers<[1], [0], [0], [1], [0, 0, 1, 1], [], []>} : vector<32x128xbf16>, vector<128x128xbf16>, vector<32x128xf32> -> vector<32x128xf32>
    %40 = arith.addf %35, %39 : vector<32x128xf32>
    %c0_30 = arith.constant 0 : index
    %c0_31 = arith.constant 0 : index
    %41 = vector.load %arg3[%c0_30, %c0_31] : memref<1x128xf32, #tpu.memory_space<vmem>>, vector<1x128xf32>
    %42 = vector.broadcast %41 : vector<1x128xf32> to vector<32x128xf32>
    %43 = arith.addf %40, %42 : vector<32x128xf32>
    %cst_32 = arith.constant 0.000000e+00 : f32
    %44 = vector.broadcast %cst_32 : f32 to vector<32x128xf32>
    %45 = arith.maximumf %43, %44 : vector<32x128xf32>
    %cst_33 = arith.constant 0.000000e+00 : f32
    %46 = vector.broadcast %cst_33 : f32 to vector<1x128xf32>
    %c0_34 = arith.constant 0 : index
    %c0_35 = arith.constant 0 : index
    %47 = vector.load %arg45[%c0_34, %c0_35] : memref<72x128xf32, #tpu.memory_space<vmem>>, vector<1x128xf32>
    tpu.vector_store %arg45[%c0_34, %c0_35], %46 {strides = array<i32>} : memref<72x128xf32, #tpu.memory_space<vmem>>, vector<1x128xf32>,
    %c33 = arith.constant 33 : index
    %c0_36 = arith.constant 0 : index
    %48 = vector.load %arg45[%c33, %c0_36] : memref<72x128xf32, #tpu.memory_space<vmem>>, vector<1x128xf32>
    tpu.vector_store %arg45[%c33, %c0_36], %46 {strides = array<i32>} : memref<72x128xf32, #tpu.memory_space<vmem>>, vector<1x128xf32>,
    %c1_37 = arith.constant 1 : index
    %c0_38 = arith.constant 0 : index
    %49 = vector.load %arg45[%c1_37, %c0_38] : memref<72x128xf32, #tpu.memory_space<vmem>>, vector<32x128xf32>
    tpu.vector_store %arg45[%c1_37, %c0_38], %45 {strides = array<i32>} : memref<72x128xf32, #tpu.memory_space<vmem>>, vector<32x128xf32>,
    %c0_39 = arith.constant 0 : index
    %c0_40 = arith.constant 0 : index
    %50 = tpu.strided_load %arg45[%c0_39, %c0_40] {strides = array<i32: 2, 1>} : memref<72x128xf32, #tpu.memory_space<vmem>>, vector<16x128xf32>
    %c1_41 = arith.constant 1 : index
    %c0_42 = arith.constant 0 : index
    %51 = tpu.strided_load %arg45[%c1_41, %c0_42] {strides = array<i32: 2, 1>} : memref<72x128xf32, #tpu.memory_space<vmem>>, vector<16x128xf32>
    %52 = arith.maximumf %50, %51 : vector<16x128xf32>
    %c2_43 = arith.constant 2 : index
    %c0_44 = arith.constant 0 : index
    %53 = tpu.strided_load %arg45[%c2_43, %c0_44] {strides = array<i32: 2, 1>} : memref<72x128xf32, #tpu.memory_space<vmem>>, vector<16x128xf32>
    %54 = arith.maximumf %52, %53 : vector<16x128xf32>
    %cst_45 = arith.constant 0.000000e+00 : f32
    %55 = vector.broadcast %cst_45 : f32 to vector<1x128xf32>
    %c0_46 = arith.constant 0 : index
    %c0_47 = arith.constant 0 : index
    %56 = vector.load %arg45[%c0_46, %c0_47] : memref<72x128xf32, #tpu.memory_space<vmem>>, vector<1x128xf32>
    tpu.vector_store %arg45[%c0_46, %c0_47], %55 {strides = array<i32>} : memref<72x128xf32, #tpu.memory_space<vmem>>, vector<1x128xf32>,
    %c17 = arith.constant 17 : index
    %c0_48 = arith.constant 0 : index
    %57 = vector.load %arg45[%c17, %c0_48] : memref<72x128xf32, #tpu.memory_space<vmem>>, vector<1x128xf32>
    tpu.vector_store %arg45[%c17, %c0_48], %55 {strides = array<i32>} : memref<72x128xf32, #tpu.memory_space<vmem>>, vector<1x128xf32>,
    %c1_49 = arith.constant 1 : index
    %c0_50 = arith.constant 0 : index
    %58 = vector.load %arg45[%c1_49, %c0_50] : memref<72x128xf32, #tpu.memory_space<vmem>>, vector<16x128xf32>
    tpu.vector_store %arg45[%c1_49, %c0_50], %54 {strides = array<i32>} : memref<72x128xf32, #tpu.memory_space<vmem>>, vector<16x128xf32>,
    %cst_51 = arith.constant 0.000000e+00 : f32
    %59 = vector.broadcast %cst_51 : f32 to vector<16x128xf32>
    %c0_52 = arith.constant 0 : index
    %c0_53 = arith.constant 0 : index
    %60 = vector.load %arg45[%c0_52, %c0_53] : memref<72x128xf32, #tpu.memory_space<vmem>>, vector<16x128xf32>
    %c0_54 = arith.constant 0 : index
    %c0_55 = arith.constant 0 : index
    %61 = vector.load %arg4[%c0_54, %c0_55] : memref<384x128xbf16, #tpu.memory_space<vmem>>, vector<128x128xbf16>
    %62 = arith.truncf %60 : vector<16x128xf32> to vector<16x128xbf16>
    %cst_56 = arith.constant dense<0.000000e+00> : vector<16x128xf32>
    %63 = tpu.matmul %62, %61, %cst_56 {dimension_numbers = #tpu.dot_dimension_numbers<[1], [0], [0], [1], [0, 0, 1, 1], [], []>} : vector<16x128xbf16>, vector<128x128xbf16>, vector<16x128xf32> -> vector<16x128xf32>
    %64 = arith.addf %59, %63 : vector<16x128xf32>
    %c1_57 = arith.constant 1 : index
    %c0_58 = arith.constant 0 : index
    %65 = vector.load %arg45[%c1_57, %c0_58] : memref<72x128xf32, #tpu.memory_space<vmem>>, vector<16x128xf32>
    %c128_59 = arith.constant 128 : index
    %c0_60 = arith.constant 0 : index
    %66 = vector.load %arg4[%c128_59, %c0_60] : memref<384x128xbf16, #tpu.memory_space<vmem>>, vector<128x128xbf16>
    %67 = arith.truncf %65 : vector<16x128xf32> to vector<16x128xbf16>
    %cst_61 = arith.constant dense<0.000000e+00> : vector<16x128xf32>
    %68 = tpu.matmul %67, %66, %cst_61 {dimension_numbers = #tpu.dot_dimension_numbers<[1], [0], [0], [1], [0, 0, 1, 1], [], []>} : vector<16x128xbf16>, vector<128x128xbf16>, vector<16x128xf32> -> vector<16x128xf32>
    %69 = arith.addf %64, %68 : vector<16x128xf32>
    %c2_62 = arith.constant 2 : index
    %c0_63 = arith.constant 0 : index
    %70 = vector.load %arg45[%c2_62, %c0_63] : memref<72x128xf32, #tpu.memory_space<vmem>>, vector<16x128xf32>
    %c256_64 = arith.constant 256 : index
    %c0_65 = arith.constant 0 : index
    %71 = vector.load %arg4[%c256_64, %c0_65] : memref<384x128xbf16, #tpu.memory_space<vmem>>, vector<128x128xbf16>
    %72 = arith.truncf %70 : vector<16x128xf32> to vector<16x128xbf16>
    %cst_66 = arith.constant dense<0.000000e+00> : vector<16x128xf32>
    %73 = tpu.matmul %72, %71, %cst_66 {dimension_numbers = #tpu.dot_dimension_numbers<[1], [0], [0], [1], [0, 0, 1, 1], [], []>} : vector<16x128xbf16>, vector<128x128xbf16>, vector<16x128xf32> -> vector<16x128xf32>
    %74 = arith.addf %69, %73 : vector<16x128xf32>
    %c0_67 = arith.constant 0 : index
    %c0_68 = arith.constant 0 : index
    %75 = vector.load %arg5[%c0_67, %c0_68] : memref<1x128xf32, #tpu.memory_space<vmem>>, vector<1x128xf32>
    %76 = vector.broadcast %75 : vector<1x128xf32> to vector<16x128xf32>
    %77 = arith.addf %74, %76 : vector<16x128xf32>
    %cst_69 = arith.constant 0.000000e+00 : f32
    %78 = vector.broadcast %cst_69 : f32 to vector<16x128xf32>
    %79 = arith.maximumf %77, %78 : vector<16x128xf32>
    %cst_70 = arith.constant 0.000000e+00 : f32
    %80 = vector.broadcast %cst_70 : f32 to vector<1x128xf32>
    %c0_71 = arith.constant 0 : index
    %c0_72 = arith.constant 0 : index
    %81 = vector.load %arg45[%c0_71, %c0_72] : memref<72x128xf32, #tpu.memory_space<vmem>>, vector<1x128xf32>
    tpu.vector_store %arg45[%c0_71, %c0_72], %80 {strides = array<i32>} : memref<72x128xf32, #tpu.memory_space<vmem>>, vector<1x128xf32>,
    %c17_73 = arith.constant 17 : index
    %c0_74 = arith.constant 0 : index
    %82 = vector.load %arg45[%c17_73, %c0_74] : memref<72x128xf32, #tpu.memory_space<vmem>>, vector<1x128xf32>
    tpu.vector_store %arg45[%c17_73, %c0_74], %80 {strides = array<i32>} : memref<72x128xf32, #tpu.memory_space<vmem>>, vector<1x128xf32>,
    %c1_75 = arith.constant 1 : index
    %c0_76 = arith.constant 0 : index
    %83 = vector.load %arg45[%c1_75, %c0_76] : memref<72x128xf32, #tpu.memory_space<vmem>>, vector<16x128xf32>
    tpu.vector_store %arg45[%c1_75, %c0_76], %79 {strides = array<i32>} : memref<72x128xf32, #tpu.memory_space<vmem>>, vector<16x128xf32>,
    %cst_77 = arith.constant 0.000000e+00 : f32
    %84 = vector.broadcast %cst_77 : f32 to vector<16x128xf32>
    %c0_78 = arith.constant 0 : index
    %c0_79 = arith.constant 0 : index
    %85 = vector.load %arg45[%c0_78, %c0_79] : memref<72x128xf32, #tpu.memory_space<vmem>>, vector<16x128xf32>
    %c0_80 = arith.constant 0 : index
    %c0_81 = arith.constant 0 : index
    %86 = vector.load %arg6[%c0_80, %c0_81] : memref<384x128xbf16, #tpu.memory_space<vmem>>, vector<128x128xbf16>
    %87 = arith.truncf %85 : vector<16x128xf32> to vector<16x128xbf16>
    %cst_82 = arith.constant dense<0.000000e+00> : vector<16x128xf32>
    %88 = tpu.matmul %87, %86, %cst_82 {dimension_numbers = #tpu.dot_dimension_numbers<[1], [0], [0], [1], [0, 0, 1, 1], [], []>} : vector<16x128xbf16>, vector<128x128xbf16>, vector<16x128xf32> -> vector<16x128xf32>
    %89 = arith.addf %84, %88 : vector<16x128xf32>
    %c1_83 = arith.constant 1 : index
    %c0_84 = arith.constant 0 : index
    %90 = vector.load %arg45[%c1_83, %c0_84] : memref<72x128xf32, #tpu.memory_space<vmem>>, vector<16x128xf32>
    %c128_85 = arith.constant 128 : index
    %c0_86 = arith.constant 0 : index
    %91 = vector.load %arg6[%c128_85, %c0_86] : memref<384x128xbf16, #tpu.memory_space<vmem>>, vector<128x128xbf16>
    %92 = arith.truncf %90 : vector<16x128xf32> to vector<16x128xbf16>
    %cst_87 = arith.constant dense<0.000000e+00> : vector<16x128xf32>
    %93 = tpu.matmul %92, %91, %cst_87 {dimension_numbers = #tpu.dot_dimension_numbers<[1], [0], [0], [1], [0, 0, 1, 1], [], []>} : vector<16x128xbf16>, vector<128x128xbf16>, vector<16x128xf32> -> vector<16x128xf32>
    %94 = arith.addf %89, %93 : vector<16x128xf32>
    %c2_88 = arith.constant 2 : index
    %c0_89 = arith.constant 0 : index
    %95 = vector.load %arg45[%c2_88, %c0_89] : memref<72x128xf32, #tpu.memory_space<vmem>>, vector<16x128xf32>
    %c256_90 = arith.constant 256 : index
    %c0_91 = arith.constant 0 : index
    %96 = vector.load %arg6[%c256_90, %c0_91] : memref<384x128xbf16, #tpu.memory_space<vmem>>, vector<128x128xbf16>
    %97 = arith.truncf %95 : vector<16x128xf32> to vector<16x128xbf16>
    %cst_92 = arith.constant dense<0.000000e+00> : vector<16x128xf32>
    %98 = tpu.matmul %97, %96, %cst_92 {dimension_numbers = #tpu.dot_dimension_numbers<[1], [0], [0], [1], [0, 0, 1, 1], [], []>} : vector<16x128xbf16>, vector<128x128xbf16>, vector<16x128xf32> -> vector<16x128xf32>
    %99 = arith.addf %94, %98 : vector<16x128xf32>
    %c0_93 = arith.constant 0 : index
    %c0_94 = arith.constant 0 : index
    %100 = vector.load %arg7[%c0_93, %c0_94] : memref<1x128xf32, #tpu.memory_space<vmem>>, vector<1x128xf32>
    %101 = vector.broadcast %100 : vector<1x128xf32> to vector<16x128xf32>
    %102 = arith.addf %99, %101 : vector<16x128xf32>
    %103 = arith.addf %102, %54 : vector<16x128xf32>
    %cst_95 = arith.constant 0.000000e+00 : f32
    %104 = vector.broadcast %cst_95 : f32 to vector<16x128xf32>
    %105 = arith.maximumf %103, %104 : vector<16x128xf32>
    %cst_96 = arith.constant 0.000000e+00 : f32
    %106 = vector.broadcast %cst_96 : f32 to vector<1x128xf32>
    %c0_97 = arith.constant 0 : index
    %c0_98 = arith.constant 0 : index
    %107 = vector.load %arg45[%c0_97, %c0_98] : memref<72x128xf32, #tpu.memory_space<vmem>>, vector<1x128xf32>
    tpu.vector_store %arg45[%c0_97, %c0_98], %106 {strides = array<i32>} : memref<72x128xf32, #tpu.memory_space<vmem>>, vector<1x128xf32>,
    %c17_99 = arith.constant 17 : index
    %c0_100 = arith.constant 0 : index
    %108 = vector.load %arg45[%c17_99, %c0_100] : memref<72x128xf32, #tpu.memory_space<vmem>>, vector<1x128xf32>
    tpu.vector_store %arg45[%c17_99, %c0_100], %106 {strides = array<i32>} : memref<72x128xf32, #tpu.memory_space<vmem>>, vector<1x128xf32>,
    %c1_101 = arith.constant 1 : index
    %c0_102 = arith.constant 0 : index
    %109 = vector.load %arg45[%c1_101, %c0_102] : memref<72x128xf32, #tpu.memory_space<vmem>>, vector<16x128xf32>
    tpu.vector_store %arg45[%c1_101, %c0_102], %105 {strides = array<i32>} : memref<72x128xf32, #tpu.memory_space<vmem>>, vector<16x128xf32>,
    %cst_103 = arith.constant 0.000000e+00 : f32
    %110 = vector.broadcast %cst_103 : f32 to vector<16x128xf32>
    %c0_104 = arith.constant 0 : index
    %c0_105 = arith.constant 0 : index
    %111 = vector.load %arg45[%c0_104, %c0_105] : memref<72x128xf32, #tpu.memory_space<vmem>>, vector<16x128xf32>
    %c0_106 = arith.constant 0 : index
    %c0_107 = arith.constant 0 : index
    %112 = vector.load %arg8[%c0_106, %c0_107] : memref<384x128xbf16, #tpu.memory_space<vmem>>, vector<128x128xbf16>
    %113 = arith.truncf %111 : vector<16x128xf32> to vector<16x128xbf16>
    %cst_108 = arith.constant dense<0.000000e+00> : vector<16x128xf32>
    %114 = tpu.matmul %113, %112, %cst_108 {dimension_numbers = #tpu.dot_dimension_numbers<[1], [0], [0], [1], [0, 0, 1, 1], [], []>} : vector<16x128xbf16>, vector<128x128xbf16>, vector<16x128xf32> -> vector<16x128xf32>
    %115 = arith.addf %110, %114 : vector<16x128xf32>
    %c1_109 = arith.constant 1 : index
    %c0_110 = arith.constant 0 : index
    %116 = vector.load %arg45[%c1_109, %c0_110] : memref<72x128xf32, #tpu.memory_space<vmem>>, vector<16x128xf32>
    %c128_111 = arith.constant 128 : index
    %c0_112 = arith.constant 0 : index
    %117 = vector.load %arg8[%c128_111, %c0_112] : memref<384x128xbf16, #tpu.memory_space<vmem>>, vector<128x128xbf16>
    %118 = arith.truncf %116 : vector<16x128xf32> to vector<16x128xbf16>
    %cst_113 = arith.constant dense<0.000000e+00> : vector<16x128xf32>
    %119 = tpu.matmul %118, %117, %cst_113 {dimension_numbers = #tpu.dot_dimension_numbers<[1], [0], [0], [1], [0, 0, 1, 1], [], []>} : vector<16x128xbf16>, vector<128x128xbf16>, vector<16x128xf32> -> vector<16x128xf32>
    %120 = arith.addf %115, %119 : vector<16x128xf32>
    %c2_114 = arith.constant 2 : index
    %c0_115 = arith.constant 0 : index
    %121 = vector.load %arg45[%c2_114, %c0_115] : memref<72x128xf32, #tpu.memory_space<vmem>>, vector<16x128xf32>
    %c256_116 = arith.constant 256 : index
    %c0_117 = arith.constant 0 : index
    %122 = vector.load %arg8[%c256_116, %c0_117] : memref<384x128xbf16, #tpu.memory_space<vmem>>, vector<128x128xbf16>
    %123 = arith.truncf %121 : vector<16x128xf32> to vector<16x128xbf16>
    %cst_118 = arith.constant dense<0.000000e+00> : vector<16x128xf32>
    %124 = tpu.matmul %123, %122, %cst_118 {dimension_numbers = #tpu.dot_dimension_numbers<[1], [0], [0], [1], [0, 0, 1, 1], [], []>} : vector<16x128xbf16>, vector<128x128xbf16>, vector<16x128xf32> -> vector<16x128xf32>
    %125 = arith.addf %120, %124 : vector<16x128xf32>
    %c0_119 = arith.constant 0 : index
    %c0_120 = arith.constant 0 : index
    %126 = vector.load %arg9[%c0_119, %c0_120] : memref<1x128xf32, #tpu.memory_space<vmem>>, vector<1x128xf32>
    %127 = vector.broadcast %126 : vector<1x128xf32> to vector<16x128xf32>
    %128 = arith.addf %125, %127 : vector<16x128xf32>
    %cst_121 = arith.constant 0.000000e+00 : f32
    %129 = vector.broadcast %cst_121 : f32 to vector<16x128xf32>
    %130 = arith.maximumf %128, %129 : vector<16x128xf32>
    %cst_122 = arith.constant 0.000000e+00 : f32
    %131 = vector.broadcast %cst_122 : f32 to vector<1x128xf32>
    %c0_123 = arith.constant 0 : index
    %c0_124 = arith.constant 0 : index
    %132 = vector.load %arg45[%c0_123, %c0_124] : memref<72x128xf32, #tpu.memory_space<vmem>>, vector<1x128xf32>
    tpu.vector_store %arg45[%c0_123, %c0_124], %131 {strides = array<i32>} : memref<72x128xf32, #tpu.memory_space<vmem>>, vector<1x128xf32>,
    %c17_125 = arith.constant 17 : index
    %c0_126 = arith.constant 0 : index
    %133 = vector.load %arg45[%c17_125, %c0_126] : memref<72x128xf32, #tpu.memory_space<vmem>>, vector<1x128xf32>
    tpu.vector_store %arg45[%c17_125, %c0_126], %131 {strides = array<i32>} : memref<72x128xf32, #tpu.memory_space<vmem>>, vector<1x128xf32>,
    %c1_127 = arith.constant 1 : index
    %c0_128 = arith.constant 0 : index
    %134 = vector.load %arg45[%c1_127, %c0_128] : memref<72x128xf32, #tpu.memory_space<vmem>>, vector<16x128xf32>
    tpu.vector_store %arg45[%c1_127, %c0_128], %130 {strides = array<i32>} : memref<72x128xf32, #tpu.memory_space<vmem>>, vector<16x128xf32>,
    %cst_129 = arith.constant 0.000000e+00 : f32
    %135 = vector.broadcast %cst_129 : f32 to vector<16x128xf32>
    %c0_130 = arith.constant 0 : index
    %c0_131 = arith.constant 0 : index
    %136 = vector.load %arg45[%c0_130, %c0_131] : memref<72x128xf32, #tpu.memory_space<vmem>>, vector<16x128xf32>
    %c0_132 = arith.constant 0 : index
    %c0_133 = arith.constant 0 : index
    %137 = vector.load %arg10[%c0_132, %c0_133] : memref<384x128xbf16, #tpu.memory_space<vmem>>, vector<128x128xbf16>
    %138 = arith.truncf %136 : vector<16x128xf32> to vector<16x128xbf16>
    %cst_134 = arith.constant dense<0.000000e+00> : vector<16x128xf32>
    %139 = tpu.matmul %138, %137, %cst_134 {dimension_numbers = #tpu.dot_dimension_numbers<[1], [0], [0], [1], [0, 0, 1, 1], [], []>} : vector<16x128xbf16>, vector<128x128xbf16>, vector<16x128xf32> -> vector<16x128xf32>
    %140 = arith.addf %135, %139 : vector<16x128xf32>
    %c1_135 = arith.constant 1 : index
    %c0_136 = arith.constant 0 : index
    %141 = vector.load %arg45[%c1_135, %c0_136] : memref<72x128xf32, #tpu.memory_space<vmem>>, vector<16x128xf32>
    %c128_137 = arith.constant 128 : index
    %c0_138 = arith.constant 0 : index
    %142 = vector.load %arg10[%c128_137, %c0_138] : memref<384x128xbf16, #tpu.memory_space<vmem>>, vector<128x128xbf16>
    %143 = arith.truncf %141 : vector<16x128xf32> to vector<16x128xbf16>
    %cst_139 = arith.constant dense<0.000000e+00> : vector<16x128xf32>
    %144 = tpu.matmul %143, %142, %cst_139 {dimension_numbers = #tpu.dot_dimension_numbers<[1], [0], [0], [1], [0, 0, 1, 1], [], []>} : vector<16x128xbf16>, vector<128x128xbf16>, vector<16x128xf32> -> vector<16x128xf32>
    %145 = arith.addf %140, %144 : vector<16x128xf32>
    %c2_140 = arith.constant 2 : index
    %c0_141 = arith.constant 0 : index
    %146 = vector.load %arg45[%c2_140, %c0_141] : memref<72x128xf32, #tpu.memory_space<vmem>>, vector<16x128xf32>
    %c256_142 = arith.constant 256 : index
    %c0_143 = arith.constant 0 : index
    %147 = vector.load %arg10[%c256_142, %c0_143] : memref<384x128xbf16, #tpu.memory_space<vmem>>, vector<128x128xbf16>
    %148 = arith.truncf %146 : vector<16x128xf32> to vector<16x128xbf16>
    %cst_144 = arith.constant dense<0.000000e+00> : vector<16x128xf32>
    %149 = tpu.matmul %148, %147, %cst_144 {dimension_numbers = #tpu.dot_dimension_numbers<[1], [0], [0], [1], [0, 0, 1, 1], [], []>} : vector<16x128xbf16>, vector<128x128xbf16>, vector<16x128xf32> -> vector<16x128xf32>
    %150 = arith.addf %145, %149 : vector<16x128xf32>
    %c0_145 = arith.constant 0 : index
    %c0_146 = arith.constant 0 : index
    %151 = vector.load %arg11[%c0_145, %c0_146] : memref<1x128xf32, #tpu.memory_space<vmem>>, vector<1x128xf32>
    %152 = vector.broadcast %151 : vector<1x128xf32> to vector<16x128xf32>
    %153 = arith.addf %150, %152 : vector<16x128xf32>
    %154 = arith.addf %153, %105 : vector<16x128xf32>
    %cst_147 = arith.constant 0.000000e+00 : f32
    %155 = vector.broadcast %cst_147 : f32 to vector<16x128xf32>
    %156 = arith.maximumf %154, %155 : vector<16x128xf32>
    %c0_148 = arith.constant 0 : index
    %c0_149 = arith.constant 0 : index
    %157 = vector.load %arg45[%c0_148, %c0_149] : memref<72x128xf32, #tpu.memory_space<vmem>>, vector<16x128xf32>
    tpu.vector_store %arg45[%c0_148, %c0_149], %156 {strides = array<i32>} : memref<72x128xf32, #tpu.memory_space<vmem>>, vector<16x128xf32>,
    %cst_150 = arith.constant 0.000000e+00 : f32
    %158 = vector.broadcast %cst_150 : f32 to vector<8x128xf32>
    %c0_151 = arith.constant 0 : index
    %c0_152 = arith.constant 0 : index
    %159 = tpu.strided_load %arg45[%c0_151, %c0_152] {strides = array<i32: 2, 1>} : memref<72x128xf32, #tpu.memory_space<vmem>>, vector<8x128xf32>
    %c0_153 = arith.constant 0 : index
    %c0_154 = arith.constant 0 : index
    %160 = vector.load %arg16[%c0_153, %c0_154] : memref<128x128xbf16, #tpu.memory_space<vmem>>, vector<128x128xbf16>
    %161 = arith.truncf %159 : vector<8x128xf32> to vector<8x128xbf16>
    %cst_155 = arith.constant dense<0.000000e+00> : vector<8x128xf32>
    %162 = tpu.matmul %161, %160, %cst_155 {dimension_numbers = #tpu.dot_dimension_numbers<[1], [0], [0], [1], [0, 0, 1, 1], [], []>} : vector<8x128xbf16>, vector<128x128xbf16>, vector<8x128xf32> -> vector<8x128xf32>
    %163 = arith.addf %158, %162 : vector<8x128xf32>
    %c0_156 = arith.constant 0 : index
    %c0_157 = arith.constant 0 : index
    %164 = vector.load %arg17[%c0_156, %c0_157] : memref<1x128xf32, #tpu.memory_space<vmem>>, vector<1x128xf32>
    %165 = vector.broadcast %164 : vector<1x128xf32> to vector<8x128xf32>
    %166 = arith.addf %163, %165 : vector<8x128xf32>
    %cst_158 = arith.constant 0.000000e+00 : f32
    %167 = vector.broadcast %cst_158 : f32 to vector<1x128xf32>
    %c0_159 = arith.constant 0 : index
    %c0_160 = arith.constant 0 : index
    %168 = vector.load %arg45[%c0_159, %c0_160] : memref<72x128xf32, #tpu.memory_space<vmem>>, vector<1x128xf32>
    tpu.vector_store %arg45[%c0_159, %c0_160], %167 {strides = array<i32>} : memref<72x128xf32, #tpu.memory_space<vmem>>, vector<1x128xf32>,
    %c17_161 = arith.constant 17 : index
    %c0_162 = arith.constant 0 : index
    %169 = vector.load %arg45[%c17_161, %c0_162] : memref<72x128xf32, #tpu.memory_space<vmem>>, vector<1x128xf32>
    tpu.vector_store %arg45[%c17_161, %c0_162], %167 {strides = array<i32>} : memref<72x128xf32, #tpu.memory_space<vmem>>, vector<1x128xf32>,
    %c1_163 = arith.constant 1 : index
    %c0_164 = arith.constant 0 : index
    %170 = vector.load %arg45[%c1_163, %c0_164] : memref<72x128xf32, #tpu.memory_space<vmem>>, vector<16x128xf32>
    tpu.vector_store %arg45[%c1_163, %c0_164], %156 {strides = array<i32>} : memref<72x128xf32, #tpu.memory_space<vmem>>, vector<16x128xf32>,
    %cst_165 = arith.constant 0.000000e+00 : f32
    %171 = vector.broadcast %cst_165 : f32 to vector<8x128xf32>
    %c0_166 = arith.constant 0 : index
    %c0_167 = arith.constant 0 : index
    %172 = tpu.strided_load %arg45[%c0_166, %c0_167] {strides = array<i32: 2, 1>} : memref<72x128xf32, #tpu.memory_space<vmem>>, vector<8x128xf32>
    %c0_168 = arith.constant 0 : index
    %c0_169 = arith.constant 0 : index
    %173 = vector.load %arg12[%c0_168, %c0_169] : memref<384x128xbf16, #tpu.memory_space<vmem>>, vector<128x128xbf16>
    %174 = arith.truncf %172 : vector<8x128xf32> to vector<8x128xbf16>
    %cst_170 = arith.constant dense<0.000000e+00> : vector<8x128xf32>
    %175 = tpu.matmul %174, %173, %cst_170 {dimension_numbers = #tpu.dot_dimension_numbers<[1], [0], [0], [1], [0, 0, 1, 1], [], []>} : vector<8x128xbf16>, vector<128x128xbf16>, vector<8x128xf32> -> vector<8x128xf32>
    %176 = arith.addf %171, %175 : vector<8x128xf32>
    %c1_171 = arith.constant 1 : index
    %c0_172 = arith.constant 0 : index
    %177 = tpu.strided_load %arg45[%c1_171, %c0_172] {strides = array<i32: 2, 1>} : memref<72x128xf32, #tpu.memory_space<vmem>>, vector<8x128xf32>
    %c128_173 = arith.constant 128 : index
    %c0_174 = arith.constant 0 : index
    %178 = vector.load %arg12[%c128_173, %c0_174] : memref<384x128xbf16, #tpu.memory_space<vmem>>, vector<128x128xbf16>
    %179 = arith.truncf %177 : vector<8x128xf32> to vector<8x128xbf16>
    %cst_175 = arith.constant dense<0.000000e+00> : vector<8x128xf32>
    %180 = tpu.matmul %179, %178, %cst_175 {dimension_numbers = #tpu.dot_dimension_numbers<[1], [0], [0], [1], [0, 0, 1, 1], [], []>} : vector<8x128xbf16>, vector<128x128xbf16>, vector<8x128xf32> -> vector<8x128xf32>
    %181 = arith.addf %176, %180 : vector<8x128xf32>
    %c2_176 = arith.constant 2 : index
    %c0_177 = arith.constant 0 : index
    %182 = tpu.strided_load %arg45[%c2_176, %c0_177] {strides = array<i32: 2, 1>} : memref<72x128xf32, #tpu.memory_space<vmem>>, vector<8x128xf32>
    %c256_178 = arith.constant 256 : index
    %c0_179 = arith.constant 0 : index
    %183 = vector.load %arg12[%c256_178, %c0_179] : memref<384x128xbf16, #tpu.memory_space<vmem>>, vector<128x128xbf16>
    %184 = arith.truncf %182 : vector<8x128xf32> to vector<8x128xbf16>
    %cst_180 = arith.constant dense<0.000000e+00> : vector<8x128xf32>
    %185 = tpu.matmul %184, %183, %cst_180 {dimension_numbers = #tpu.dot_dimension_numbers<[1], [0], [0], [1], [0, 0, 1, 1], [], []>} : vector<8x128xbf16>, vector<128x128xbf16>, vector<8x128xf32> -> vector<8x128xf32>
    %186 = arith.addf %181, %185 : vector<8x128xf32>
    %c0_181 = arith.constant 0 : index
    %c0_182 = arith.constant 0 : index
    %187 = vector.load %arg13[%c0_181, %c0_182] : memref<1x128xf32, #tpu.memory_space<vmem>>, vector<1x128xf32>
    %188 = vector.broadcast %187 : vector<1x128xf32> to vector<8x128xf32>
    %189 = arith.addf %186, %188 : vector<8x128xf32>
    %cst_183 = arith.constant 0.000000e+00 : f32
    %190 = vector.broadcast %cst_183 : f32 to vector<8x128xf32>
    %191 = arith.maximumf %189, %190 : vector<8x128xf32>
    %cst_184 = arith.constant 0.000000e+00 : f32
    %192 = vector.broadcast %cst_184 : f32 to vector<1x128xf32>
    %c0_185 = arith.constant 0 : index
    %c0_186 = arith.constant 0 : index
    %193 = vector.load %arg45[%c0_185, %c0_186] : memref<72x128xf32, #tpu.memory_space<vmem>>, vector<1x128xf32>
    tpu.vector_store %arg45[%c0_185, %c0_186], %192 {strides = array<i32>} : memref<72x128xf32, #tpu.memory_space<vmem>>, vector<1x128xf32>,
    %c9 = arith.constant 9 : index
    %c0_187 = arith.constant 0 : index
    %194 = vector.load %arg45[%c9, %c0_187] : memref<72x128xf32, #tpu.memory_space<vmem>>, vector<1x128xf32>
    tpu.vector_store %arg45[%c9, %c0_187], %192 {strides = array<i32>} : memref<72x128xf32, #tpu.memory_space<vmem>>, vector<1x128xf32>,
    %c1_188 = arith.constant 1 : index
    %c0_189 = arith.constant 0 : index
    %195 = vector.load %arg45[%c1_188, %c0_189] : memref<72x128xf32, #tpu.memory_space<vmem>>, vector<8x128xf32>
    tpu.vector_store %arg45[%c1_188, %c0_189], %191 {strides = array<i32>} : memref<72x128xf32, #tpu.memory_space<vmem>>, vector<8x128xf32>,
    %cst_190 = arith.constant 0.000000e+00 : f32
    %196 = vector.broadcast %cst_190 : f32 to vector<8x128xf32>
    %c0_191 = arith.constant 0 : index
    %c0_192 = arith.constant 0 : index
    %197 = vector.load %arg45[%c0_191, %c0_192] : memref<72x128xf32, #tpu.memory_space<vmem>>, vector<8x128xf32>
    %c0_193 = arith.constant 0 : index
    %c0_194 = arith.constant 0 : index
    %198 = vector.load %arg14[%c0_193, %c0_194] : memref<384x128xbf16, #tpu.memory_space<vmem>>, vector<128x128xbf16>
    %199 = arith.truncf %197 : vector<8x128xf32> to vector<8x128xbf16>
    %cst_195 = arith.constant dense<0.000000e+00> : vector<8x128xf32>
    %200 = tpu.matmul %199, %198, %cst_195 {dimension_numbers = #tpu.dot_dimension_numbers<[1], [0], [0], [1], [0, 0, 1, 1], [], []>} : vector<8x128xbf16>, vector<128x128xbf16>, vector<8x128xf32> -> vector<8x128xf32>
    %201 = arith.addf %196, %200 : vector<8x128xf32>
    %c1_196 = arith.constant 1 : index
    %c0_197 = arith.constant 0 : index
    %202 = vector.load %arg45[%c1_196, %c0_197] : memref<72x128xf32, #tpu.memory_space<vmem>>, vector<8x128xf32>
    %c128_198 = arith.constant 128 : index
    %c0_199 = arith.constant 0 : index
    %203 = vector.load %arg14[%c128_198, %c0_199] : memref<384x128xbf16, #tpu.memory_space<vmem>>, vector<128x128xbf16>
    %204 = arith.truncf %202 : vector<8x128xf32> to vector<8x128xbf16>
    %cst_200 = arith.constant dense<0.000000e+00> : vector<8x128xf32>
    %205 = tpu.matmul %204, %203, %cst_200 {dimension_numbers = #tpu.dot_dimension_numbers<[1], [0], [0], [1], [0, 0, 1, 1], [], []>} : vector<8x128xbf16>, vector<128x128xbf16>, vector<8x128xf32> -> vector<8x128xf32>
    %206 = arith.addf %201, %205 : vector<8x128xf32>
    %c2_201 = arith.constant 2 : index
    %c0_202 = arith.constant 0 : index
    %207 = vector.load %arg45[%c2_201, %c0_202] : memref<72x128xf32, #tpu.memory_space<vmem>>, vector<8x128xf32>
    %c256_203 = arith.constant 256 : index
    %c0_204 = arith.constant 0 : index
    %208 = vector.load %arg14[%c256_203, %c0_204] : memref<384x128xbf16, #tpu.memory_space<vmem>>, vector<128x128xbf16>
    %209 = arith.truncf %207 : vector<8x128xf32> to vector<8x128xbf16>
    %cst_205 = arith.constant dense<0.000000e+00> : vector<8x128xf32>
    %210 = tpu.matmul %209, %208, %cst_205 {dimension_numbers = #tpu.dot_dimension_numbers<[1], [0], [0], [1], [0, 0, 1, 1], [], []>} : vector<8x128xbf16>, vector<128x128xbf16>, vector<8x128xf32> -> vector<8x128xf32>
    %211 = arith.addf %206, %210 : vector<8x128xf32>
    %c0_206 = arith.constant 0 : index
    %c0_207 = arith.constant 0 : index
    %212 = vector.load %arg15[%c0_206, %c0_207] : memref<1x128xf32, #tpu.memory_space<vmem>>, vector<1x128xf32>
    %213 = vector.broadcast %212 : vector<1x128xf32> to vector<8x128xf32>
    %214 = arith.addf %211, %213 : vector<8x128xf32>
    %215 = arith.addf %214, %166 : vector<8x128xf32>
    %cst_208 = arith.constant 0.000000e+00 : f32
    %216 = vector.broadcast %cst_208 : f32 to vector<8x128xf32>
    %217 = arith.maximumf %215, %216 : vector<8x128xf32>
    %cst_209 = arith.constant 0.000000e+00 : f32
    %218 = vector.broadcast %cst_209 : f32 to vector<1x128xf32>
    %c0_210 = arith.constant 0 : index
    %c0_211 = arith.constant 0 : index
    %219 = vector.load %arg45[%c0_210, %c0_211] : memref<72x128xf32, #tpu.memory_space<vmem>>, vector<1x128xf32>
    tpu.vector_store %arg45[%c0_210, %c0_211], %218 {strides = array<i32>} : memref<72x128xf32, #tpu.memory_space<vmem>>, vector<1x128xf32>,
    %c9_212 = arith.constant 9 : index
    %c0_213 = arith.constant 0 : index
    %220 = vector.load %arg45[%c9_212, %c0_213] : memref<72x128xf32, #tpu.memory_space<vmem>>, vector<1x128xf32>
    tpu.vector_store %arg45[%c9_212, %c0_213], %218 {strides = array<i32>} : memref<72x128xf32, #tpu.memory_space<vmem>>, vector<1x128xf32>,
    %c1_214 = arith.constant 1 : index
    %c0_215 = arith.constant 0 : index
    %221 = vector.load %arg45[%c1_214, %c0_215] : memref<72x128xf32, #tpu.memory_space<vmem>>, vector<8x128xf32>
    tpu.vector_store %arg45[%c1_214, %c0_215], %217 {strides = array<i32>} : memref<72x128xf32, #tpu.memory_space<vmem>>, vector<8x128xf32>,
    %cst_216 = arith.constant 0.000000e+00 : f32
    %222 = vector.broadcast %cst_216 : f32 to vector<8x128xf32>
    %c0_217 = arith.constant 0 : index
    %c0_218 = arith.constant 0 : index
    %223 = vector.load %arg45[%c0_217, %c0_218] : memref<72x128xf32, #tpu.memory_space<vmem>>, vector<8x128xf32>
    %c0_219 = arith.constant 0 : index
    %c0_220 = arith.constant 0 : index
    %224 = vector.load %arg18[%c0_219, %c0_220] : memref<384x128xbf16, #tpu.memory_space<vmem>>, vector<128x128xbf16>
    %225 = arith.truncf %223 : vector<8x128xf32> to vector<8x128xbf16>
    %cst_221 = arith.constant dense<0.000000e+00> : vector<8x128xf32>
    %226 = tpu.matmul %225, %224, %cst_221 {dimension_numbers = #tpu.dot_dimension_numbers<[1], [0], [0], [1], [0, 0, 1, 1], [], []>} : vector<8x128xbf16>, vector<128x128xbf16>, vector<8x128xf32> -> vector<8x128xf32>
    %227 = arith.addf %222, %226 : vector<8x128xf32>
    %c1_222 = arith.constant 1 : index
    %c0_223 = arith.constant 0 : index
    %228 = vector.load %arg45[%c1_222, %c0_223] : memref<72x128xf32, #tpu.memory_space<vmem>>, vector<8x128xf32>
    %c128_224 = arith.constant 128 : index
    %c0_225 = arith.constant 0 : index
    %229 = vector.load %arg18[%c128_224, %c0_225] : memref<384x128xbf16, #tpu.memory_space<vmem>>, vector<128x128xbf16>
    %230 = arith.truncf %228 : vector<8x128xf32> to vector<8x128xbf16>
    %cst_226 = arith.constant dense<0.000000e+00> : vector<8x128xf32>
    %231 = tpu.matmul %230, %229, %cst_226 {dimension_numbers = #tpu.dot_dimension_numbers<[1], [0], [0], [1], [0, 0, 1, 1], [], []>} : vector<8x128xbf16>, vector<128x128xbf16>, vector<8x128xf32> -> vector<8x128xf32>
    %232 = arith.addf %227, %231 : vector<8x128xf32>
    %c2_227 = arith.constant 2 : index
    %c0_228 = arith.constant 0 : index
    %233 = vector.load %arg45[%c2_227, %c0_228] : memref<72x128xf32, #tpu.memory_space<vmem>>, vector<8x128xf32>
    %c256_229 = arith.constant 256 : index
    %c0_230 = arith.constant 0 : index
    %234 = vector.load %arg18[%c256_229, %c0_230] : memref<384x128xbf16, #tpu.memory_space<vmem>>, vector<128x128xbf16>
    %235 = arith.truncf %233 : vector<8x128xf32> to vector<8x128xbf16>
    %cst_231 = arith.constant dense<0.000000e+00> : vector<8x128xf32>
    %236 = tpu.matmul %235, %234, %cst_231 {dimension_numbers = #tpu.dot_dimension_numbers<[1], [0], [0], [1], [0, 0, 1, 1], [], []>} : vector<8x128xbf16>, vector<128x128xbf16>, vector<8x128xf32> -> vector<8x128xf32>
    %237 = arith.addf %232, %236 : vector<8x128xf32>
    %c0_232 = arith.constant 0 : index
    %c0_233 = arith.constant 0 : index
    %238 = vector.load %arg19[%c0_232, %c0_233] : memref<1x128xf32, #tpu.memory_space<vmem>>, vector<1x128xf32>
    %239 = vector.broadcast %238 : vector<1x128xf32> to vector<8x128xf32>
    %240 = arith.addf %237, %239 : vector<8x128xf32>
    %cst_234 = arith.constant 0.000000e+00 : f32
    %241 = vector.broadcast %cst_234 : f32 to vector<8x128xf32>
    %242 = arith.maximumf %240, %241 : vector<8x128xf32>
    %cst_235 = arith.constant 0.000000e+00 : f32
    %243 = vector.broadcast %cst_235 : f32 to vector<1x128xf32>
    %c0_236 = arith.constant 0 : index
    %c0_237 = arith.constant 0 : index
    %244 = vector.load %arg45[%c0_236, %c0_237] : memref<72x128xf32, #tpu.memory_space<vmem>>, vector<1x128xf32>
    tpu.vector_store %arg45[%c0_236, %c0_237], %243 {strides = array<i32>} : memref<72x128xf32, #tpu.memory_space<vmem>>, vector<1x128xf32>,
    %c9_238 = arith.constant 9 : index
    %c0_239 = arith.constant 0 : index
    %245 = vector.load %arg45[%c9_238, %c0_239] : memref<72x128xf32, #tpu.memory_space<vmem>>, vector<1x128xf32>
    tpu.vector_store %arg45[%c9_238, %c0_239], %243 {strides = array<i32>} : memref<72x128xf32, #tpu.memory_space<vmem>>, vector<1x128xf32>,
    %c1_240 = arith.constant 1 : index
    %c0_241 = arith.constant 0 : index
    %246 = vector.load %arg45[%c1_240, %c0_241] : memref<72x128xf32, #tpu.memory_space<vmem>>, vector<8x128xf32>
    tpu.vector_store %arg45[%c1_240, %c0_241], %242 {strides = array<i32>} : memref<72x128xf32, #tpu.memory_space<vmem>>, vector<8x128xf32>,
    %cst_242 = arith.constant 0.000000e+00 : f32
    %247 = vector.broadcast %cst_242 : f32 to vector<8x128xf32>
    %c0_243 = arith.constant 0 : index
    %c0_244 = arith.constant 0 : index
    %248 = vector.load %arg45[%c0_243, %c0_244] : memref<72x128xf32, #tpu.memory_space<vmem>>, vector<8x128xf32>
    %c0_245 = arith.constant 0 : index
    %c0_246 = arith.constant 0 : index
    %249 = vector.load %arg20[%c0_245, %c0_246] : memref<384x128xbf16, #tpu.memory_space<vmem>>, vector<128x128xbf16>
    %250 = arith.truncf %248 : vector<8x128xf32> to vector<8x128xbf16>
    %cst_247 = arith.constant dense<0.000000e+00> : vector<8x128xf32>
    %251 = tpu.matmul %250, %249, %cst_247 {dimension_numbers = #tpu.dot_dimension_numbers<[1], [0], [0], [1], [0, 0, 1, 1], [], []>} : vector<8x128xbf16>, vector<128x128xbf16>, vector<8x128xf32> -> vector<8x128xf32>
    %252 = arith.addf %247, %251 : vector<8x128xf32>
    %c1_248 = arith.constant 1 : index
    %c0_249 = arith.constant 0 : index
    %253 = vector.load %arg45[%c1_248, %c0_249] : memref<72x128xf32, #tpu.memory_space<vmem>>, vector<8x128xf32>
    %c128_250 = arith.constant 128 : index
    %c0_251 = arith.constant 0 : index
    %254 = vector.load %arg20[%c128_250, %c0_251] : memref<384x128xbf16, #tpu.memory_space<vmem>>, vector<128x128xbf16>
    %255 = arith.truncf %253 : vector<8x128xf32> to vector<8x128xbf16>
    %cst_252 = arith.constant dense<0.000000e+00> : vector<8x128xf32>
    %256 = tpu.matmul %255, %254, %cst_252 {dimension_numbers = #tpu.dot_dimension_numbers<[1], [0], [0], [1], [0, 0, 1, 1], [], []>} : vector<8x128xbf16>, vector<128x128xbf16>, vector<8x128xf32> -> vector<8x128xf32>
    %257 = arith.addf %252, %256 : vector<8x128xf32>
    %c2_253 = arith.constant 2 : index
    %c0_254 = arith.constant 0 : index
    %258 = vector.load %arg45[%c2_253, %c0_254] : memref<72x128xf32, #tpu.memory_space<vmem>>, vector<8x128xf32>
    %c256_255 = arith.constant 256 : index
    %c0_256 = arith.constant 0 : index
    %259 = vector.load %arg20[%c256_255, %c0_256] : memref<384x128xbf16, #tpu.memory_space<vmem>>, vector<128x128xbf16>
    %260 = arith.truncf %258 : vector<8x128xf32> to vector<8x128xbf16>
    %cst_257 = arith.constant dense<0.000000e+00> : vector<8x128xf32>
    %261 = tpu.matmul %260, %259, %cst_257 {dimension_numbers = #tpu.dot_dimension_numbers<[1], [0], [0], [1], [0, 0, 1, 1], [], []>} : vector<8x128xbf16>, vector<128x128xbf16>, vector<8x128xf32> -> vector<8x128xf32>
    %262 = arith.addf %257, %261 : vector<8x128xf32>
    %c0_258 = arith.constant 0 : index
    %c0_259 = arith.constant 0 : index
    %263 = vector.load %arg21[%c0_258, %c0_259] : memref<1x128xf32, #tpu.memory_space<vmem>>, vector<1x128xf32>
    %264 = vector.broadcast %263 : vector<1x128xf32> to vector<8x128xf32>
    %265 = arith.addf %262, %264 : vector<8x128xf32>
    %266 = arith.addf %265, %217 : vector<8x128xf32>
    %cst_260 = arith.constant 0.000000e+00 : f32
    %267 = vector.broadcast %cst_260 : f32 to vector<8x128xf32>
    %268 = arith.maximumf %266, %267 : vector<8x128xf32>
    %c0_261 = arith.constant 0 : index
    %c0_262 = arith.constant 0 : index
    %269 = vector.load %arg45[%c0_261, %c0_262] : memref<72x128xf32, #tpu.memory_space<vmem>>, vector<8x128xf32>
    tpu.vector_store %arg45[%c0_261, %c0_262], %268 {strides = array<i32>} : memref<72x128xf32, #tpu.memory_space<vmem>>, vector<8x128xf32>,
    %cst_263 = arith.constant 0.000000e+00 : f32
    %270 = vector.broadcast %cst_263 : f32 to vector<4x128xf32>
    %c0_264 = arith.constant 0 : index
    %c0_265 = arith.constant 0 : index
    %271 = tpu.strided_load %arg45[%c0_264, %c0_265] {strides = array<i32: 2, 1>} : memref<72x128xf32, #tpu.memory_space<vmem>>, vector<4x128xf32>
    %c0_266 = arith.constant 0 : index
    %c0_267 = arith.constant 0 : index
    %272 = vector.load %arg26[%c0_266, %c0_267] : memref<128x128xbf16, #tpu.memory_space<vmem>>, vector<128x128xbf16>
    %273 = arith.truncf %271 : vector<4x128xf32> to vector<4x128xbf16>
    %cst_268 = arith.constant dense<0.000000e+00> : vector<4x128xf32>
    %274 = tpu.matmul %273, %272, %cst_268 {dimension_numbers = #tpu.dot_dimension_numbers<[1], [0], [0], [1], [0, 0, 1, 1], [], []>} : vector<4x128xbf16>, vector<128x128xbf16>, vector<4x128xf32> -> vector<4x128xf32>
    %275 = arith.addf %270, %274 : vector<4x128xf32>
    %c0_269 = arith.constant 0 : index
    %c0_270 = arith.constant 0 : index
    %276 = vector.load %arg27[%c0_269, %c0_270] : memref<1x128xf32, #tpu.memory_space<vmem>>, vector<1x128xf32>
    %277 = vector.broadcast %276 : vector<1x128xf32> to vector<4x128xf32>
    %278 = arith.addf %275, %277 : vector<4x128xf32>
    %cst_271 = arith.constant 0.000000e+00 : f32
    %279 = vector.broadcast %cst_271 : f32 to vector<1x128xf32>
    %c0_272 = arith.constant 0 : index
    %c0_273 = arith.constant 0 : index
    %280 = vector.load %arg45[%c0_272, %c0_273] : memref<72x128xf32, #tpu.memory_space<vmem>>, vector<1x128xf32>
    tpu.vector_store %arg45[%c0_272, %c0_273], %279 {strides = array<i32>} : memref<72x128xf32, #tpu.memory_space<vmem>>, vector<1x128xf32>,
    %c9_274 = arith.constant 9 : index
    %c0_275 = arith.constant 0 : index
    %281 = vector.load %arg45[%c9_274, %c0_275] : memref<72x128xf32, #tpu.memory_space<vmem>>, vector<1x128xf32>
    tpu.vector_store %arg45[%c9_274, %c0_275], %279 {strides = array<i32>} : memref<72x128xf32, #tpu.memory_space<vmem>>, vector<1x128xf32>,
    %c1_276 = arith.constant 1 : index
    %c0_277 = arith.constant 0 : index
    %282 = vector.load %arg45[%c1_276, %c0_277] : memref<72x128xf32, #tpu.memory_space<vmem>>, vector<8x128xf32>
    tpu.vector_store %arg45[%c1_276, %c0_277], %268 {strides = array<i32>} : memref<72x128xf32, #tpu.memory_space<vmem>>, vector<8x128xf32>,
    %cst_278 = arith.constant 0.000000e+00 : f32
    %283 = vector.broadcast %cst_278 : f32 to vector<4x128xf32>
    %c0_279 = arith.constant 0 : index
    %c0_280 = arith.constant 0 : index
    %284 = tpu.strided_load %arg45[%c0_279, %c0_280] {strides = array<i32: 2, 1>} : memref<72x128xf32, #tpu.memory_space<vmem>>, vector<4x128xf32>
    %c0_281 = arith.constant 0 : index
    %c0_282 = arith.constant 0 : index
    %285 = vector.load %arg22[%c0_281, %c0_282] : memref<384x128xbf16, #tpu.memory_space<vmem>>, vector<128x128xbf16>
    %286 = arith.truncf %284 : vector<4x128xf32> to vector<4x128xbf16>
    %cst_283 = arith.constant dense<0.000000e+00> : vector<4x128xf32>
    %287 = tpu.matmul %286, %285, %cst_283 {dimension_numbers = #tpu.dot_dimension_numbers<[1], [0], [0], [1], [0, 0, 1, 1], [], []>} : vector<4x128xbf16>, vector<128x128xbf16>, vector<4x128xf32> -> vector<4x128xf32>
    %288 = arith.addf %283, %287 : vector<4x128xf32>
    %c1_284 = arith.constant 1 : index
    %c0_285 = arith.constant 0 : index
    %289 = tpu.strided_load %arg45[%c1_284, %c0_285] {strides = array<i32: 2, 1>} : memref<72x128xf32, #tpu.memory_space<vmem>>, vector<4x128xf32>
    %c128_286 = arith.constant 128 : index
    %c0_287 = arith.constant 0 : index
    %290 = vector.load %arg22[%c128_286, %c0_287] : memref<384x128xbf16, #tpu.memory_space<vmem>>, vector<128x128xbf16>
    %291 = arith.truncf %289 : vector<4x128xf32> to vector<4x128xbf16>
    %cst_288 = arith.constant dense<0.000000e+00> : vector<4x128xf32>
    %292 = tpu.matmul %291, %290, %cst_288 {dimension_numbers = #tpu.dot_dimension_numbers<[1], [0], [0], [1], [0, 0, 1, 1], [], []>} : vector<4x128xbf16>, vector<128x128xbf16>, vector<4x128xf32> -> vector<4x128xf32>
    %293 = arith.addf %288, %292 : vector<4x128xf32>
    %c2_289 = arith.constant 2 : index
    %c0_290 = arith.constant 0 : index
    %294 = tpu.strided_load %arg45[%c2_289, %c0_290] {strides = array<i32: 2, 1>} : memref<72x128xf32, #tpu.memory_space<vmem>>, vector<4x128xf32>
    %c256_291 = arith.constant 256 : index
    %c0_292 = arith.constant 0 : index
    %295 = vector.load %arg22[%c256_291, %c0_292] : memref<384x128xbf16, #tpu.memory_space<vmem>>, vector<128x128xbf16>
    %296 = arith.truncf %294 : vector<4x128xf32> to vector<4x128xbf16>
    %cst_293 = arith.constant dense<0.000000e+00> : vector<4x128xf32>
    %297 = tpu.matmul %296, %295, %cst_293 {dimension_numbers = #tpu.dot_dimension_numbers<[1], [0], [0], [1], [0, 0, 1, 1], [], []>} : vector<4x128xbf16>, vector<128x128xbf16>, vector<4x128xf32> -> vector<4x128xf32>
    %298 = arith.addf %293, %297 : vector<4x128xf32>
    %c0_294 = arith.constant 0 : index
    %c0_295 = arith.constant 0 : index
    %299 = vector.load %arg23[%c0_294, %c0_295] : memref<1x128xf32, #tpu.memory_space<vmem>>, vector<1x128xf32>
    %300 = vector.broadcast %299 : vector<1x128xf32> to vector<4x128xf32>
    %301 = arith.addf %298, %300 : vector<4x128xf32>
    %cst_296 = arith.constant 0.000000e+00 : f32
    %302 = vector.broadcast %cst_296 : f32 to vector<4x128xf32>
    %303 = arith.maximumf %301, %302 : vector<4x128xf32>
    %cst_297 = arith.constant 0.000000e+00 : f32
    %304 = vector.broadcast %cst_297 : f32 to vector<1x128xf32>
    %c0_298 = arith.constant 0 : index
    %c0_299 = arith.constant 0 : index
    %305 = vector.load %arg45[%c0_298, %c0_299] : memref<72x128xf32, #tpu.memory_space<vmem>>, vector<1x128xf32>
    tpu.vector_store %arg45[%c0_298, %c0_299], %304 {strides = array<i32>} : memref<72x128xf32, #tpu.memory_space<vmem>>, vector<1x128xf32>,
    %c5_300 = arith.constant 5 : index
    %c0_301 = arith.constant 0 : index
    %306 = vector.load %arg45[%c5_300, %c0_301] : memref<72x128xf32, #tpu.memory_space<vmem>>, vector<1x128xf32>
    tpu.vector_store %arg45[%c5_300, %c0_301], %304 {strides = array<i32>} : memref<72x128xf32, #tpu.memory_space<vmem>>, vector<1x128xf32>,
    %c1_302 = arith.constant 1 : index
    %c0_303 = arith.constant 0 : index
    %307 = vector.load %arg45[%c1_302, %c0_303] : memref<72x128xf32, #tpu.memory_space<vmem>>, vector<4x128xf32>
    tpu.vector_store %arg45[%c1_302, %c0_303], %303 {strides = array<i32>} : memref<72x128xf32, #tpu.memory_space<vmem>>, vector<4x128xf32>,
    %cst_304 = arith.constant 0.000000e+00 : f32
    %308 = vector.broadcast %cst_304 : f32 to vector<4x128xf32>
    %c0_305 = arith.constant 0 : index
    %c0_306 = arith.constant 0 : index
    %309 = vector.load %arg45[%c0_305, %c0_306] : memref<72x128xf32, #tpu.memory_space<vmem>>, vector<4x128xf32>
    %c0_307 = arith.constant 0 : index
    %c0_308 = arith.constant 0 : index
    %310 = vector.load %arg24[%c0_307, %c0_308] : memref<384x128xbf16, #tpu.memory_space<vmem>>, vector<128x128xbf16>
    %311 = arith.truncf %309 : vector<4x128xf32> to vector<4x128xbf16>
    %cst_309 = arith.constant dense<0.000000e+00> : vector<4x128xf32>
    %312 = tpu.matmul %311, %310, %cst_309 {dimension_numbers = #tpu.dot_dimension_numbers<[1], [0], [0], [1], [0, 0, 1, 1], [], []>} : vector<4x128xbf16>, vector<128x128xbf16>, vector<4x128xf32> -> vector<4x128xf32>
    %313 = arith.addf %308, %312 : vector<4x128xf32>
    %c1_310 = arith.constant 1 : index
    %c0_311 = arith.constant 0 : index
    %314 = vector.load %arg45[%c1_310, %c0_311] : memref<72x128xf32, #tpu.memory_space<vmem>>, vector<4x128xf32>
    %c128_312 = arith.constant 128 : index
    %c0_313 = arith.constant 0 : index
    %315 = vector.load %arg24[%c128_312, %c0_313] : memref<384x128xbf16, #tpu.memory_space<vmem>>, vector<128x128xbf16>
    %316 = arith.truncf %314 : vector<4x128xf32> to vector<4x128xbf16>
    %cst_314 = arith.constant dense<0.000000e+00> : vector<4x128xf32>
    %317 = tpu.matmul %316, %315, %cst_314 {dimension_numbers = #tpu.dot_dimension_numbers<[1], [0], [0], [1], [0, 0, 1, 1], [], []>} : vector<4x128xbf16>, vector<128x128xbf16>, vector<4x128xf32> -> vector<4x128xf32>
    %318 = arith.addf %313, %317 : vector<4x128xf32>
    %c2_315 = arith.constant 2 : index
    %c0_316 = arith.constant 0 : index
    %319 = vector.load %arg45[%c2_315, %c0_316] : memref<72x128xf32, #tpu.memory_space<vmem>>, vector<4x128xf32>
    %c256_317 = arith.constant 256 : index
    %c0_318 = arith.constant 0 : index
    %320 = vector.load %arg24[%c256_317, %c0_318] : memref<384x128xbf16, #tpu.memory_space<vmem>>, vector<128x128xbf16>
    %321 = arith.truncf %319 : vector<4x128xf32> to vector<4x128xbf16>
    %cst_319 = arith.constant dense<0.000000e+00> : vector<4x128xf32>
    %322 = tpu.matmul %321, %320, %cst_319 {dimension_numbers = #tpu.dot_dimension_numbers<[1], [0], [0], [1], [0, 0, 1, 1], [], []>} : vector<4x128xbf16>, vector<128x128xbf16>, vector<4x128xf32> -> vector<4x128xf32>
    %323 = arith.addf %318, %322 : vector<4x128xf32>
    %c0_320 = arith.constant 0 : index
    %c0_321 = arith.constant 0 : index
    %324 = vector.load %arg25[%c0_320, %c0_321] : memref<1x128xf32, #tpu.memory_space<vmem>>, vector<1x128xf32>
    %325 = vector.broadcast %324 : vector<1x128xf32> to vector<4x128xf32>
    %326 = arith.addf %323, %325 : vector<4x128xf32>
    %327 = arith.addf %326, %278 : vector<4x128xf32>
    %cst_322 = arith.constant 0.000000e+00 : f32
    %328 = vector.broadcast %cst_322 : f32 to vector<4x128xf32>
    %329 = arith.maximumf %327, %328 : vector<4x128xf32>
    %cst_323 = arith.constant 0.000000e+00 : f32
    %330 = vector.broadcast %cst_323 : f32 to vector<1x128xf32>
    %c0_324 = arith.constant 0 : index
    %c0_325 = arith.constant 0 : index
    %331 = vector.load %arg45[%c0_324, %c0_325] : memref<72x128xf32, #tpu.memory_space<vmem>>, vector<1x128xf32>
    tpu.vector_store %arg45[%c0_324, %c0_325], %330 {strides = array<i32>} : memref<72x128xf32, #tpu.memory_space<vmem>>, vector<1x128xf32>,
    %c5_326 = arith.constant 5 : index
    %c0_327 = arith.constant 0 : index
    %332 = vector.load %arg45[%c5_326, %c0_327] : memref<72x128xf32, #tpu.memory_space<vmem>>, vector<1x128xf32>
    tpu.vector_store %arg45[%c5_326, %c0_327], %330 {strides = array<i32>} : memref<72x128xf32, #tpu.memory_space<vmem>>, vector<1x128xf32>,
    %c1_328 = arith.constant 1 : index
    %c0_329 = arith.constant 0 : index
    %333 = vector.load %arg45[%c1_328, %c0_329] : memref<72x128xf32, #tpu.memory_space<vmem>>, vector<4x128xf32>
    tpu.vector_store %arg45[%c1_328, %c0_329], %329 {strides = array<i32>} : memref<72x128xf32, #tpu.memory_space<vmem>>, vector<4x128xf32>,
    %cst_330 = arith.constant 0.000000e+00 : f32
    %334 = vector.broadcast %cst_330 : f32 to vector<4x128xf32>
    %c0_331 = arith.constant 0 : index
    %c0_332 = arith.constant 0 : index
    %335 = vector.load %arg45[%c0_331, %c0_332] : memref<72x128xf32, #tpu.memory_space<vmem>>, vector<4x128xf32>
    %c0_333 = arith.constant 0 : index
    %c0_334 = arith.constant 0 : index
    %336 = vector.load %arg28[%c0_333, %c0_334] : memref<384x128xbf16, #tpu.memory_space<vmem>>, vector<128x128xbf16>
    %337 = arith.truncf %335 : vector<4x128xf32> to vector<4x128xbf16>
    %cst_335 = arith.constant dense<0.000000e+00> : vector<4x128xf32>
    %338 = tpu.matmul %337, %336, %cst_335 {dimension_numbers = #tpu.dot_dimension_numbers<[1], [0], [0], [1], [0, 0, 1, 1], [], []>} : vector<4x128xbf16>, vector<128x128xbf16>, vector<4x128xf32> -> vector<4x128xf32>
    %339 = arith.addf %334, %338 : vector<4x128xf32>
    %c1_336 = arith.constant 1 : index
    %c0_337 = arith.constant 0 : index
    %340 = vector.load %arg45[%c1_336, %c0_337] : memref<72x128xf32, #tpu.memory_space<vmem>>, vector<4x128xf32>
    %c128_338 = arith.constant 128 : index
    %c0_339 = arith.constant 0 : index
    %341 = vector.load %arg28[%c128_338, %c0_339] : memref<384x128xbf16, #tpu.memory_space<vmem>>, vector<128x128xbf16>
    %342 = arith.truncf %340 : vector<4x128xf32> to vector<4x128xbf16>
    %cst_340 = arith.constant dense<0.000000e+00> : vector<4x128xf32>
    %343 = tpu.matmul %342, %341, %cst_340 {dimension_numbers = #tpu.dot_dimension_numbers<[1], [0], [0], [1], [0, 0, 1, 1], [], []>} : vector<4x128xbf16>, vector<128x128xbf16>, vector<4x128xf32> -> vector<4x128xf32>
    %344 = arith.addf %339, %343 : vector<4x128xf32>
    %c2_341 = arith.constant 2 : index
    %c0_342 = arith.constant 0 : index
    %345 = vector.load %arg45[%c2_341, %c0_342] : memref<72x128xf32, #tpu.memory_space<vmem>>, vector<4x128xf32>
    %c256_343 = arith.constant 256 : index
    %c0_344 = arith.constant 0 : index
    %346 = vector.load %arg28[%c256_343, %c0_344] : memref<384x128xbf16, #tpu.memory_space<vmem>>, vector<128x128xbf16>
    %347 = arith.truncf %345 : vector<4x128xf32> to vector<4x128xbf16>
    %cst_345 = arith.constant dense<0.000000e+00> : vector<4x128xf32>
    %348 = tpu.matmul %347, %346, %cst_345 {dimension_numbers = #tpu.dot_dimension_numbers<[1], [0], [0], [1], [0, 0, 1, 1], [], []>} : vector<4x128xbf16>, vector<128x128xbf16>, vector<4x128xf32> -> vector<4x128xf32>
    %349 = arith.addf %344, %348 : vector<4x128xf32>
    %c0_346 = arith.constant 0 : index
    %c0_347 = arith.constant 0 : index
    %350 = vector.load %arg29[%c0_346, %c0_347] : memref<1x128xf32, #tpu.memory_space<vmem>>, vector<1x128xf32>
    %351 = vector.broadcast %350 : vector<1x128xf32> to vector<4x128xf32>
    %352 = arith.addf %349, %351 : vector<4x128xf32>
    %cst_348 = arith.constant 0.000000e+00 : f32
    %353 = vector.broadcast %cst_348 : f32 to vector<4x128xf32>
    %354 = arith.maximumf %352, %353 : vector<4x128xf32>
    %cst_349 = arith.constant 0.000000e+00 : f32
    %355 = vector.broadcast %cst_349 : f32 to vector<1x128xf32>
    %c0_350 = arith.constant 0 : index
    %c0_351 = arith.constant 0 : index
    %356 = vector.load %arg45[%c0_350, %c0_351] : memref<72x128xf32, #tpu.memory_space<vmem>>, vector<1x128xf32>
    tpu.vector_store %arg45[%c0_350, %c0_351], %355 {strides = array<i32>} : memref<72x128xf32, #tpu.memory_space<vmem>>, vector<1x128xf32>,
    %c5_352 = arith.constant 5 : index
    %c0_353 = arith.constant 0 : index
    %357 = vector.load %arg45[%c5_352, %c0_353] : memref<72x128xf32, #tpu.memory_space<vmem>>, vector<1x128xf32>
    tpu.vector_store %arg45[%c5_352, %c0_353], %355 {strides = array<i32>} : memref<72x128xf32, #tpu.memory_space<vmem>>, vector<1x128xf32>,
    %c1_354 = arith.constant 1 : index
    %c0_355 = arith.constant 0 : index
    %358 = vector.load %arg45[%c1_354, %c0_355] : memref<72x128xf32, #tpu.memory_space<vmem>>, vector<4x128xf32>
    tpu.vector_store %arg45[%c1_354, %c0_355], %354 {strides = array<i32>} : memref<72x128xf32, #tpu.memory_space<vmem>>, vector<4x128xf32>,
    %cst_356 = arith.constant 0.000000e+00 : f32
    %359 = vector.broadcast %cst_356 : f32 to vector<4x128xf32>
    %c0_357 = arith.constant 0 : index
    %c0_358 = arith.constant 0 : index
    %360 = vector.load %arg45[%c0_357, %c0_358] : memref<72x128xf32, #tpu.memory_space<vmem>>, vector<4x128xf32>
    %c0_359 = arith.constant 0 : index
    %c0_360 = arith.constant 0 : index
    %361 = vector.load %arg30[%c0_359, %c0_360] : memref<384x128xbf16, #tpu.memory_space<vmem>>, vector<128x128xbf16>
    %362 = arith.truncf %360 : vector<4x128xf32> to vector<4x128xbf16>
    %cst_361 = arith.constant dense<0.000000e+00> : vector<4x128xf32>
    %363 = tpu.matmul %362, %361, %cst_361 {dimension_numbers = #tpu.dot_dimension_numbers<[1], [0], [0], [1], [0, 0, 1, 1], [], []>} : vector<4x128xbf16>, vector<128x128xbf16>, vector<4x128xf32> -> vector<4x128xf32>
    %364 = arith.addf %359, %363 : vector<4x128xf32>
    %c1_362 = arith.constant 1 : index
    %c0_363 = arith.constant 0 : index
    %365 = vector.load %arg45[%c1_362, %c0_363] : memref<72x128xf32, #tpu.memory_space<vmem>>, vector<4x128xf32>
    %c128_364 = arith.constant 128 : index
    %c0_365 = arith.constant 0 : index
    %366 = vector.load %arg30[%c128_364, %c0_365] : memref<384x128xbf16, #tpu.memory_space<vmem>>, vector<128x128xbf16>
    %367 = arith.truncf %365 : vector<4x128xf32> to vector<4x128xbf16>
    %cst_366 = arith.constant dense<0.000000e+00> : vector<4x128xf32>
    %368 = tpu.matmul %367, %366, %cst_366 {dimension_numbers = #tpu.dot_dimension_numbers<[1], [0], [0], [1], [0, 0, 1, 1], [], []>} : vector<4x128xbf16>, vector<128x128xbf16>, vector<4x128xf32> -> vector<4x128xf32>
    %369 = arith.addf %364, %368 : vector<4x128xf32>
    %c2_367 = arith.constant 2 : index
    %c0_368 = arith.constant 0 : index
    %370 = vector.load %arg45[%c2_367, %c0_368] : memref<72x128xf32, #tpu.memory_space<vmem>>, vector<4x128xf32>
    %c256_369 = arith.constant 256 : index
    %c0_370 = arith.constant 0 : index
    %371 = vector.load %arg30[%c256_369, %c0_370] : memref<384x128xbf16, #tpu.memory_space<vmem>>, vector<128x128xbf16>
    %372 = arith.truncf %370 : vector<4x128xf32> to vector<4x128xbf16>
    %cst_371 = arith.constant dense<0.000000e+00> : vector<4x128xf32>
    %373 = tpu.matmul %372, %371, %cst_371 {dimension_numbers = #tpu.dot_dimension_numbers<[1], [0], [0], [1], [0, 0, 1, 1], [], []>} : vector<4x128xbf16>, vector<128x128xbf16>, vector<4x128xf32> -> vector<4x128xf32>
    %374 = arith.addf %369, %373 : vector<4x128xf32>
    %c0_372 = arith.constant 0 : index
    %c0_373 = arith.constant 0 : index
    %375 = vector.load %arg31[%c0_372, %c0_373] : memref<1x128xf32, #tpu.memory_space<vmem>>, vector<1x128xf32>
    %376 = vector.broadcast %375 : vector<1x128xf32> to vector<4x128xf32>
    %377 = arith.addf %374, %376 : vector<4x128xf32>
    %378 = arith.addf %377, %329 : vector<4x128xf32>
    %cst_374 = arith.constant 0.000000e+00 : f32
    %379 = vector.broadcast %cst_374 : f32 to vector<4x128xf32>
    %380 = arith.maximumf %378, %379 : vector<4x128xf32>
    %c0_375 = arith.constant 0 : index
    %c0_376 = arith.constant 0 : index
    %381 = vector.load %arg45[%c0_375, %c0_376] : memref<72x128xf32, #tpu.memory_space<vmem>>, vector<4x128xf32>
    tpu.vector_store %arg45[%c0_375, %c0_376], %380 {strides = array<i32>} : memref<72x128xf32, #tpu.memory_space<vmem>>, vector<4x128xf32>,
    %cst_377 = arith.constant 0.000000e+00 : f32
    %382 = vector.broadcast %cst_377 : f32 to vector<2x128xf32>
    %c0_378 = arith.constant 0 : index
    %c0_379 = arith.constant 0 : index
    %383 = tpu.strided_load %arg45[%c0_378, %c0_379] {strides = array<i32: 2, 1>} : memref<72x128xf32, #tpu.memory_space<vmem>>, vector<2x128xf32>
    %c0_380 = arith.constant 0 : index
    %c0_381 = arith.constant 0 : index
    %384 = vector.load %arg36[%c0_380, %c0_381] : memref<128x128xbf16, #tpu.memory_space<vmem>>, vector<128x128xbf16>
    %385 = arith.truncf %383 : vector<2x128xf32> to vector<2x128xbf16>
    %cst_382 = arith.constant dense<0.000000e+00> : vector<2x128xf32>
    %386 = tpu.matmul %385, %384, %cst_382 {dimension_numbers = #tpu.dot_dimension_numbers<[1], [0], [0], [1], [0, 0, 1, 1], [], []>} : vector<2x128xbf16>, vector<128x128xbf16>, vector<2x128xf32> -> vector<2x128xf32>
    %387 = arith.addf %382, %386 : vector<2x128xf32>
    %c0_383 = arith.constant 0 : index
    %c0_384 = arith.constant 0 : index
    %388 = vector.load %arg37[%c0_383, %c0_384] : memref<1x128xf32, #tpu.memory_space<vmem>>, vector<1x128xf32>
    %389 = vector.broadcast %388 : vector<1x128xf32> to vector<2x128xf32>
    %390 = arith.addf %387, %389 : vector<2x128xf32>
    %cst_385 = arith.constant 0.000000e+00 : f32
    %391 = vector.broadcast %cst_385 : f32 to vector<1x128xf32>
    %c0_386 = arith.constant 0 : index
    %c0_387 = arith.constant 0 : index
    %392 = vector.load %arg45[%c0_386, %c0_387] : memref<72x128xf32, #tpu.memory_space<vmem>>, vector<1x128xf32>
    tpu.vector_store %arg45[%c0_386, %c0_387], %391 {strides = array<i32>} : memref<72x128xf32, #tpu.memory_space<vmem>>, vector<1x128xf32>,
    %c5_388 = arith.constant 5 : index
    %c0_389 = arith.constant 0 : index
    %393 = vector.load %arg45[%c5_388, %c0_389] : memref<72x128xf32, #tpu.memory_space<vmem>>, vector<1x128xf32>
    tpu.vector_store %arg45[%c5_388, %c0_389], %391 {strides = array<i32>} : memref<72x128xf32, #tpu.memory_space<vmem>>, vector<1x128xf32>,
    %c1_390 = arith.constant 1 : index
    %c0_391 = arith.constant 0 : index
    %394 = vector.load %arg45[%c1_390, %c0_391] : memref<72x128xf32, #tpu.memory_space<vmem>>, vector<4x128xf32>
    tpu.vector_store %arg45[%c1_390, %c0_391], %380 {strides = array<i32>} : memref<72x128xf32, #tpu.memory_space<vmem>>, vector<4x128xf32>,
    %cst_392 = arith.constant 0.000000e+00 : f32
    %395 = vector.broadcast %cst_392 : f32 to vector<2x128xf32>
    %c0_393 = arith.constant 0 : index
    %c0_394 = arith.constant 0 : index
    %396 = tpu.strided_load %arg45[%c0_393, %c0_394] {strides = array<i32: 2, 1>} : memref<72x128xf32, #tpu.memory_space<vmem>>, vector<2x128xf32>
    %c0_395 = arith.constant 0 : index
    %c0_396 = arith.constant 0 : index
    %397 = vector.load %arg32[%c0_395, %c0_396] : memref<384x128xbf16, #tpu.memory_space<vmem>>, vector<128x128xbf16>
    %398 = arith.truncf %396 : vector<2x128xf32> to vector<2x128xbf16>
    %cst_397 = arith.constant dense<0.000000e+00> : vector<2x128xf32>
    %399 = tpu.matmul %398, %397, %cst_397 {dimension_numbers = #tpu.dot_dimension_numbers<[1], [0], [0], [1], [0, 0, 1, 1], [], []>} : vector<2x128xbf16>, vector<128x128xbf16>, vector<2x128xf32> -> vector<2x128xf32>
    %400 = arith.addf %395, %399 : vector<2x128xf32>
    %c1_398 = arith.constant 1 : index
    %c0_399 = arith.constant 0 : index
    %401 = tpu.strided_load %arg45[%c1_398, %c0_399] {strides = array<i32: 2, 1>} : memref<72x128xf32, #tpu.memory_space<vmem>>, vector<2x128xf32>
    %c128_400 = arith.constant 128 : index
    %c0_401 = arith.constant 0 : index
    %402 = vector.load %arg32[%c128_400, %c0_401] : memref<384x128xbf16, #tpu.memory_space<vmem>>, vector<128x128xbf16>
    %403 = arith.truncf %401 : vector<2x128xf32> to vector<2x128xbf16>
    %cst_402 = arith.constant dense<0.000000e+00> : vector<2x128xf32>
    %404 = tpu.matmul %403, %402, %cst_402 {dimension_numbers = #tpu.dot_dimension_numbers<[1], [0], [0], [1], [0, 0, 1, 1], [], []>} : vector<2x128xbf16>, vector<128x128xbf16>, vector<2x128xf32> -> vector<2x128xf32>
    %405 = arith.addf %400, %404 : vector<2x128xf32>
    %c2_403 = arith.constant 2 : index
    %c0_404 = arith.constant 0 : index
    %406 = tpu.strided_load %arg45[%c2_403, %c0_404] {strides = array<i32: 2, 1>} : memref<72x128xf32, #tpu.memory_space<vmem>>, vector<2x128xf32>
    %c256_405 = arith.constant 256 : index
    %c0_406 = arith.constant 0 : index
    %407 = vector.load %arg32[%c256_405, %c0_406] : memref<384x128xbf16, #tpu.memory_space<vmem>>, vector<128x128xbf16>
    %408 = arith.truncf %406 : vector<2x128xf32> to vector<2x128xbf16>
    %cst_407 = arith.constant dense<0.000000e+00> : vector<2x128xf32>
    %409 = tpu.matmul %408, %407, %cst_407 {dimension_numbers = #tpu.dot_dimension_numbers<[1], [0], [0], [1], [0, 0, 1, 1], [], []>} : vector<2x128xbf16>, vector<128x128xbf16>, vector<2x128xf32> -> vector<2x128xf32>
    %410 = arith.addf %405, %409 : vector<2x128xf32>
    %c0_408 = arith.constant 0 : index
    %c0_409 = arith.constant 0 : index
    %411 = vector.load %arg33[%c0_408, %c0_409] : memref<1x128xf32, #tpu.memory_space<vmem>>, vector<1x128xf32>
    %412 = vector.broadcast %411 : vector<1x128xf32> to vector<2x128xf32>
    %413 = arith.addf %410, %412 : vector<2x128xf32>
    %cst_410 = arith.constant 0.000000e+00 : f32
    %414 = vector.broadcast %cst_410 : f32 to vector<2x128xf32>
    %415 = arith.maximumf %413, %414 : vector<2x128xf32>
    %cst_411 = arith.constant 0.000000e+00 : f32
    %416 = vector.broadcast %cst_411 : f32 to vector<1x128xf32>
    %c0_412 = arith.constant 0 : index
    %c0_413 = arith.constant 0 : index
    %417 = vector.load %arg45[%c0_412, %c0_413] : memref<72x128xf32, #tpu.memory_space<vmem>>, vector<1x128xf32>
    tpu.vector_store %arg45[%c0_412, %c0_413], %416 {strides = array<i32>} : memref<72x128xf32, #tpu.memory_space<vmem>>, vector<1x128xf32>,
    %c3_414 = arith.constant 3 : index
    %c0_415 = arith.constant 0 : index
    %418 = vector.load %arg45[%c3_414, %c0_415] : memref<72x128xf32, #tpu.memory_space<vmem>>, vector<1x128xf32>
    tpu.vector_store %arg45[%c3_414, %c0_415], %416 {strides = array<i32>} : memref<72x128xf32, #tpu.memory_space<vmem>>, vector<1x128xf32>,
    %c1_416 = arith.constant 1 : index
    %c0_417 = arith.constant 0 : index
    %419 = vector.load %arg45[%c1_416, %c0_417] : memref<72x128xf32, #tpu.memory_space<vmem>>, vector<2x128xf32>
    tpu.vector_store %arg45[%c1_416, %c0_417], %415 {strides = array<i32>} : memref<72x128xf32, #tpu.memory_space<vmem>>, vector<2x128xf32>,
    %cst_418 = arith.constant 0.000000e+00 : f32
    %420 = vector.broadcast %cst_418 : f32 to vector<2x128xf32>
    %c0_419 = arith.constant 0 : index
    %c0_420 = arith.constant 0 : index
    %421 = vector.load %arg45[%c0_419, %c0_420] : memref<72x128xf32, #tpu.memory_space<vmem>>, vector<2x128xf32>
    %c0_421 = arith.constant 0 : index
    %c0_422 = arith.constant 0 : index
    %422 = vector.load %arg34[%c0_421, %c0_422] : memref<384x128xbf16, #tpu.memory_space<vmem>>, vector<128x128xbf16>
    %423 = arith.truncf %421 : vector<2x128xf32> to vector<2x128xbf16>
    %cst_423 = arith.constant dense<0.000000e+00> : vector<2x128xf32>
    %424 = tpu.matmul %423, %422, %cst_423 {dimension_numbers = #tpu.dot_dimension_numbers<[1], [0], [0], [1], [0, 0, 1, 1], [], []>} : vector<2x128xbf16>, vector<128x128xbf16>, vector<2x128xf32> -> vector<2x128xf32>
    %425 = arith.addf %420, %424 : vector<2x128xf32>
    %c1_424 = arith.constant 1 : index
    %c0_425 = arith.constant 0 : index
    %426 = vector.load %arg45[%c1_424, %c0_425] : memref<72x128xf32, #tpu.memory_space<vmem>>, vector<2x128xf32>
    %c128_426 = arith.constant 128 : index
    %c0_427 = arith.constant 0 : index
    %427 = vector.load %arg34[%c128_426, %c0_427] : memref<384x128xbf16, #tpu.memory_space<vmem>>, vector<128x128xbf16>
    %428 = arith.truncf %426 : vector<2x128xf32> to vector<2x128xbf16>
    %cst_428 = arith.constant dense<0.000000e+00> : vector<2x128xf32>
    %429 = tpu.matmul %428, %427, %cst_428 {dimension_numbers = #tpu.dot_dimension_numbers<[1], [0], [0], [1], [0, 0, 1, 1], [], []>} : vector<2x128xbf16>, vector<128x128xbf16>, vector<2x128xf32> -> vector<2x128xf32>
    %430 = arith.addf %425, %429 : vector<2x128xf32>
    %c2_429 = arith.constant 2 : index
    %c0_430 = arith.constant 0 : index
    %431 = vector.load %arg45[%c2_429, %c0_430] : memref<72x128xf32, #tpu.memory_space<vmem>>, vector<2x128xf32>
    %c256_431 = arith.constant 256 : index
    %c0_432 = arith.constant 0 : index
    %432 = vector.load %arg34[%c256_431, %c0_432] : memref<384x128xbf16, #tpu.memory_space<vmem>>, vector<128x128xbf16>
    %433 = arith.truncf %431 : vector<2x128xf32> to vector<2x128xbf16>
    %cst_433 = arith.constant dense<0.000000e+00> : vector<2x128xf32>
    %434 = tpu.matmul %433, %432, %cst_433 {dimension_numbers = #tpu.dot_dimension_numbers<[1], [0], [0], [1], [0, 0, 1, 1], [], []>} : vector<2x128xbf16>, vector<128x128xbf16>, vector<2x128xf32> -> vector<2x128xf32>
    %435 = arith.addf %430, %434 : vector<2x128xf32>
    %c0_434 = arith.constant 0 : index
    %c0_435 = arith.constant 0 : index
    %436 = vector.load %arg35[%c0_434, %c0_435] : memref<1x128xf32, #tpu.memory_space<vmem>>, vector<1x128xf32>
    %437 = vector.broadcast %436 : vector<1x128xf32> to vector<2x128xf32>
    %438 = arith.addf %435, %437 : vector<2x128xf32>
    %439 = arith.addf %438, %390 : vector<2x128xf32>
    %cst_436 = arith.constant 0.000000e+00 : f32
    %440 = vector.broadcast %cst_436 : f32 to vector<2x128xf32>
    %441 = arith.maximumf %439, %440 : vector<2x128xf32>
    %cst_437 = arith.constant 0.000000e+00 : f32
    %442 = vector.broadcast %cst_437 : f32 to vector<1x128xf32>
    %c0_438 = arith.constant 0 : index
    %c0_439 = arith.constant 0 : index
    %443 = vector.load %arg45[%c0_438, %c0_439] : memref<72x128xf32, #tpu.memory_space<vmem>>, vector<1x128xf32>
    tpu.vector_store %arg45[%c0_438, %c0_439], %442 {strides = array<i32>} : memref<72x128xf32, #tpu.memory_space<vmem>>, vector<1x128xf32>,
    %c3_440 = arith.constant 3 : index
    %c0_441 = arith.constant 0 : index
    %444 = vector.load %arg45[%c3_440, %c0_441] : memref<72x128xf32, #tpu.memory_space<vmem>>, vector<1x128xf32>
    tpu.vector_store %arg45[%c3_440, %c0_441], %442 {strides = array<i32>} : memref<72x128xf32, #tpu.memory_space<vmem>>, vector<1x128xf32>,
    %c1_442 = arith.constant 1 : index
    %c0_443 = arith.constant 0 : index
    %445 = vector.load %arg45[%c1_442, %c0_443] : memref<72x128xf32, #tpu.memory_space<vmem>>, vector<2x128xf32>
    tpu.vector_store %arg45[%c1_442, %c0_443], %441 {strides = array<i32>} : memref<72x128xf32, #tpu.memory_space<vmem>>, vector<2x128xf32>,
    %cst_444 = arith.constant 0.000000e+00 : f32
    %446 = vector.broadcast %cst_444 : f32 to vector<2x128xf32>
    %c0_445 = arith.constant 0 : index
    %c0_446 = arith.constant 0 : index
    %447 = vector.load %arg45[%c0_445, %c0_446] : memref<72x128xf32, #tpu.memory_space<vmem>>, vector<2x128xf32>
    %c0_447 = arith.constant 0 : index
    %c0_448 = arith.constant 0 : index
    %448 = vector.load %arg38[%c0_447, %c0_448] : memref<384x128xbf16, #tpu.memory_space<vmem>>, vector<128x128xbf16>
    %449 = arith.truncf %447 : vector<2x128xf32> to vector<2x128xbf16>
    %cst_449 = arith.constant dense<0.000000e+00> : vector<2x128xf32>
    %450 = tpu.matmul %449, %448, %cst_449 {dimension_numbers = #tpu.dot_dimension_numbers<[1], [0], [0], [1], [0, 0, 1, 1], [], []>} : vector<2x128xbf16>, vector<128x128xbf16>, vector<2x128xf32> -> vector<2x128xf32>
    %451 = arith.addf %446, %450 : vector<2x128xf32>
    %c1_450 = arith.constant 1 : index
    %c0_451 = arith.constant 0 : index
    %452 = vector.load %arg45[%c1_450, %c0_451] : memref<72x128xf32, #tpu.memory_space<vmem>>, vector<2x128xf32>
    %c128_452 = arith.constant 128 : index
    %c0_453 = arith.constant 0 : index
    %453 = vector.load %arg38[%c128_452, %c0_453] : memref<384x128xbf16, #tpu.memory_space<vmem>>, vector<128x128xbf16>
    %454 = arith.truncf %452 : vector<2x128xf32> to vector<2x128xbf16>
    %cst_454 = arith.constant dense<0.000000e+00> : vector<2x128xf32>
    %455 = tpu.matmul %454, %453, %cst_454 {dimension_numbers = #tpu.dot_dimension_numbers<[1], [0], [0], [1], [0, 0, 1, 1], [], []>} : vector<2x128xbf16>, vector<128x128xbf16>, vector<2x128xf32> -> vector<2x128xf32>
    %456 = arith.addf %451, %455 : vector<2x128xf32>
    %c2_455 = arith.constant 2 : index
    %c0_456 = arith.constant 0 : index
    %457 = vector.load %arg45[%c2_455, %c0_456] : memref<72x128xf32, #tpu.memory_space<vmem>>, vector<2x128xf32>
    %c256_457 = arith.constant 256 : index
    %c0_458 = arith.constant 0 : index
    %458 = vector.load %arg38[%c256_457, %c0_458] : memref<384x128xbf16, #tpu.memory_space<vmem>>, vector<128x128xbf16>
    %459 = arith.truncf %457 : vector<2x128xf32> to vector<2x128xbf16>
    %cst_459 = arith.constant dense<0.000000e+00> : vector<2x128xf32>
    %460 = tpu.matmul %459, %458, %cst_459 {dimension_numbers = #tpu.dot_dimension_numbers<[1], [0], [0], [1], [0, 0, 1, 1], [], []>} : vector<2x128xbf16>, vector<128x128xbf16>, vector<2x128xf32> -> vector<2x128xf32>
    %461 = arith.addf %456, %460 : vector<2x128xf32>
    %c0_460 = arith.constant 0 : index
    %c0_461 = arith.constant 0 : index
    %462 = vector.load %arg39[%c0_460, %c0_461] : memref<1x128xf32, #tpu.memory_space<vmem>>, vector<1x128xf32>
    %463 = vector.broadcast %462 : vector<1x128xf32> to vector<2x128xf32>
    %464 = arith.addf %461, %463 : vector<2x128xf32>
    %cst_462 = arith.constant 0.000000e+00 : f32
    %465 = vector.broadcast %cst_462 : f32 to vector<2x128xf32>
    %466 = arith.maximumf %464, %465 : vector<2x128xf32>
    %cst_463 = arith.constant 0.000000e+00 : f32
    %467 = vector.broadcast %cst_463 : f32 to vector<1x128xf32>
    %c0_464 = arith.constant 0 : index
    %c0_465 = arith.constant 0 : index
    %468 = vector.load %arg45[%c0_464, %c0_465] : memref<72x128xf32, #tpu.memory_space<vmem>>, vector<1x128xf32>
    tpu.vector_store %arg45[%c0_464, %c0_465], %467 {strides = array<i32>} : memref<72x128xf32, #tpu.memory_space<vmem>>, vector<1x128xf32>,
    %c3_466 = arith.constant 3 : index
    %c0_467 = arith.constant 0 : index
    %469 = vector.load %arg45[%c3_466, %c0_467] : memref<72x128xf32, #tpu.memory_space<vmem>>, vector<1x128xf32>
    tpu.vector_store %arg45[%c3_466, %c0_467], %467 {strides = array<i32>} : memref<72x128xf32, #tpu.memory_space<vmem>>, vector<1x128xf32>,
    %c1_468 = arith.constant 1 : index
    %c0_469 = arith.constant 0 : index
    %470 = vector.load %arg45[%c1_468, %c0_469] : memref<72x128xf32, #tpu.memory_space<vmem>>, vector<2x128xf32>
    tpu.vector_store %arg45[%c1_468, %c0_469], %466 {strides = array<i32>} : memref<72x128xf32, #tpu.memory_space<vmem>>, vector<2x128xf32>,
    %cst_470 = arith.constant 0.000000e+00 : f32
    %471 = vector.broadcast %cst_470 : f32 to vector<2x128xf32>
    %c0_471 = arith.constant 0 : index
    %c0_472 = arith.constant 0 : index
    %472 = vector.load %arg45[%c0_471, %c0_472] : memref<72x128xf32, #tpu.memory_space<vmem>>, vector<2x128xf32>
    %c0_473 = arith.constant 0 : index
    %c0_474 = arith.constant 0 : index
    %473 = vector.load %arg40[%c0_473, %c0_474] : memref<384x128xbf16, #tpu.memory_space<vmem>>, vector<128x128xbf16>
    %474 = arith.truncf %472 : vector<2x128xf32> to vector<2x128xbf16>
    %cst_475 = arith.constant dense<0.000000e+00> : vector<2x128xf32>
    %475 = tpu.matmul %474, %473, %cst_475 {dimension_numbers = #tpu.dot_dimension_numbers<[1], [0], [0], [1], [0, 0, 1, 1], [], []>} : vector<2x128xbf16>, vector<128x128xbf16>, vector<2x128xf32> -> vector<2x128xf32>
    %476 = arith.addf %471, %475 : vector<2x128xf32>
    %c1_476 = arith.constant 1 : index
    %c0_477 = arith.constant 0 : index
    %477 = vector.load %arg45[%c1_476, %c0_477] : memref<72x128xf32, #tpu.memory_space<vmem>>, vector<2x128xf32>
    %c128_478 = arith.constant 128 : index
    %c0_479 = arith.constant 0 : index
    %478 = vector.load %arg40[%c128_478, %c0_479] : memref<384x128xbf16, #tpu.memory_space<vmem>>, vector<128x128xbf16>
    %479 = arith.truncf %477 : vector<2x128xf32> to vector<2x128xbf16>
    %cst_480 = arith.constant dense<0.000000e+00> : vector<2x128xf32>
    %480 = tpu.matmul %479, %478, %cst_480 {dimension_numbers = #tpu.dot_dimension_numbers<[1], [0], [0], [1], [0, 0, 1, 1], [], []>} : vector<2x128xbf16>, vector<128x128xbf16>, vector<2x128xf32> -> vector<2x128xf32>
    %481 = arith.addf %476, %480 : vector<2x128xf32>
    %c2_481 = arith.constant 2 : index
    %c0_482 = arith.constant 0 : index
    %482 = vector.load %arg45[%c2_481, %c0_482] : memref<72x128xf32, #tpu.memory_space<vmem>>, vector<2x128xf32>
    %c256_483 = arith.constant 256 : index
    %c0_484 = arith.constant 0 : index
    %483 = vector.load %arg40[%c256_483, %c0_484] : memref<384x128xbf16, #tpu.memory_space<vmem>>, vector<128x128xbf16>
    %484 = arith.truncf %482 : vector<2x128xf32> to vector<2x128xbf16>
    %cst_485 = arith.constant dense<0.000000e+00> : vector<2x128xf32>
    %485 = tpu.matmul %484, %483, %cst_485 {dimension_numbers = #tpu.dot_dimension_numbers<[1], [0], [0], [1], [0, 0, 1, 1], [], []>} : vector<2x128xbf16>, vector<128x128xbf16>, vector<2x128xf32> -> vector<2x128xf32>
    %486 = arith.addf %481, %485 : vector<2x128xf32>
    %c0_486 = arith.constant 0 : index
    %c0_487 = arith.constant 0 : index
    %487 = vector.load %arg41[%c0_486, %c0_487] : memref<1x128xf32, #tpu.memory_space<vmem>>, vector<1x128xf32>
    %488 = vector.broadcast %487 : vector<1x128xf32> to vector<2x128xf32>
    %489 = arith.addf %486, %488 : vector<2x128xf32>
    %490 = arith.addf %489, %441 : vector<2x128xf32>
    %cst_488 = arith.constant 0.000000e+00 : f32
    %491 = vector.broadcast %cst_488 : f32 to vector<2x128xf32>
    %492 = arith.maximumf %490, %491 : vector<2x128xf32>
    %cst_489 = arith.constant dense<0.000000e+00> : vector<128xf32>
    %493 = vector.multi_reduction <add>, %492, %cst_489 [0] : vector<2x128xf32> to vector<128xf32>
    %494 = vector.shape_cast %493 : vector<128xf32> to vector<1x128xf32>
    %cst_490 = arith.constant 2.000000e+00 : f32
    %495 = vector.broadcast %cst_490 : f32 to vector<1x128xf32>
    %496 = arith.divf %494, %495 : vector<1x128xf32>
    %c0_491 = arith.constant 0 : index
    %c0_492 = arith.constant 0 : index
    %497 = vector.load %arg42[%c0_491, %c0_492] : memref<128x128xf32, #tpu.memory_space<vmem>>, vector<128x128xf32>
    %cst_493 = arith.constant dense<0.000000e+00> : vector<1x128xf32>
    %498 = tpu.matmul %496, %497, %cst_493 {dimension_numbers = #tpu.dot_dimension_numbers<[1], [0], [0], [1], [0, 0, 1, 1], [], []>} : vector<1x128xf32>, vector<128x128xf32>, vector<1x128xf32> -> vector<1x128xf32>
    %c0_494 = arith.constant 0 : index
    %c0_495 = arith.constant 0 : index
    %499 = vector.load %arg43[%c0_494, %c0_495] : memref<1x128xf32, #tpu.memory_space<vmem>>, vector<1x128xf32>
    %500 = arith.addf %498, %499 : vector<1x128xf32>
    %c0_496 = arith.constant 0 : index
    %c0_497 = arith.constant 0 : index
    %c0_498 = arith.constant 0 : index
    %501 = vector.load %arg44[%c0_496, %c0_497, %c0_498] : memref<1x1x128xf32, #tpu.memory_space<vmem>>, vector<1x1x128xf32>
    %502 = vector.shape_cast %501 : vector<1x1x128xf32> to vector<1x128xf32>
    %503 = vector.shape_cast %500 : vector<1x128xf32> to vector<1x1x128xf32>
    tpu.vector_store %arg44[%c0_496, %c0_497, %c0_498], %503 {strides = array<i32>} : memref<1x1x128xf32, #tpu.memory_space<vmem>>, vector<1x1x128xf32>,
    return
  }
  func.func @transform_0(%arg0: i32) -> (i32, i32, i32) {
    %c0_i32 = arith.constant 0 : i32
    %c0_i32_0 = arith.constant 0 : i32
    %c0_i32_1 = arith.constant 0 : i32
    return %arg0, %c0_i32, %c0_i32_0 : i32, i32, i32
  }
  func.func @transform_1(%arg0: i32) -> (i32, i32) {
    %c0_i32 = arith.constant 0 : i32
    %c0_i32_0 = arith.constant 0 : i32
    %c0_i32_1 = arith.constant 0 : i32
    return %c0_i32, %c0_i32_0 : i32, i32
  }
  func.func @transform_2(%arg0: i32) -> (i32, i32) {
    %c0_i32 = arith.constant 0 : i32
    %c0_i32_0 = arith.constant 0 : i32
    %c0_i32_1 = arith.constant 0 : i32
    return %c0_i32, %c0_i32_0 : i32, i32
  }
  func.func @transform_3(%arg0: i32) -> (i32, i32) {
    %c0_i32 = arith.constant 0 : i32
    %c0_i32_0 = arith.constant 0 : i32
    %c0_i32_1 = arith.constant 0 : i32
    return %c0_i32, %c0_i32_0 : i32, i32
  }
  func.func @transform_4(%arg0: i32) -> (i32, i32) {
    %c0_i32 = arith.constant 0 : i32
    %c0_i32_0 = arith.constant 0 : i32
    %c0_i32_1 = arith.constant 0 : i32
    return %c0_i32, %c0_i32_0 : i32, i32
  }
  func.func @transform_5(%arg0: i32) -> (i32, i32) {
    %c0_i32 = arith.constant 0 : i32
    %c0_i32_0 = arith.constant 0 : i32
    %c0_i32_1 = arith.constant 0 : i32
    return %c0_i32, %c0_i32_0 : i32, i32
  }
  func.func @transform_6(%arg0: i32) -> (i32, i32) {
    %c0_i32 = arith.constant 0 : i32
    %c0_i32_0 = arith.constant 0 : i32
    %c0_i32_1 = arith.constant 0 : i32
    return %c0_i32, %c0_i32_0 : i32, i32
  }
  func.func @transform_7(%arg0: i32) -> (i32, i32) {
    %c0_i32 = arith.constant 0 : i32
    %c0_i32_0 = arith.constant 0 : i32
    %c0_i32_1 = arith.constant 0 : i32
    return %c0_i32, %c0_i32_0 : i32, i32
  }
  func.func @transform_8(%arg0: i32) -> (i32, i32) {
    %c0_i32 = arith.constant 0 : i32
    %c0_i32_0 = arith.constant 0 : i32
    %c0_i32_1 = arith.constant 0 : i32
    return %c0_i32, %c0_i32_0 : i32, i32
  }
  func.func @transform_9(%arg0: i32) -> (i32, i32) {
    %c0_i32 = arith.constant 0 : i32
    %c0_i32_0 = arith.constant 0 : i32
    %c0_i32_1 = arith.constant 0 : i32
    return %c0_i32, %c0_i32_0 : i32, i32
  }
  func.func @transform_10(%arg0: i32) -> (i32, i32) {
    %c0_i32 = arith.constant 0 : i32
    %c0_i32_0 = arith.constant 0 : i32
    %c0_i32_1 = arith.constant 0 : i32
    return %c0_i32, %c0_i32_0 : i32, i32
  }
  func.func @transform_11(%arg0: i32) -> (i32, i32) {
    %c0_i32 = arith.constant 0 : i32
    %c0_i32_0 = arith.constant 0 : i32
    %c0_i32_1 = arith.constant 0 : i32
    return %c0_i32, %c0_i32_0 : i32, i32
  }
  func.func @transform_12(%arg0: i32) -> (i32, i32) {
    %c0_i32 = arith.constant 0 : i32
    %c0_i32_0 = arith.constant 0 : i32
    %c0_i32_1 = arith.constant 0 : i32
    return %c0_i32, %c0_i32_0 : i32, i32
  }
  func.func @transform_13(%arg0: i32) -> (i32, i32) {
    %c0_i32 = arith.constant 0 : i32
    %c0_i32_0 = arith.constant 0 : i32
    %c0_i32_1 = arith.constant 0 : i32
    return %c0_i32, %c0_i32_0 : i32, i32
  }
  func.func @transform_14(%arg0: i32) -> (i32, i32) {
    %c0_i32 = arith.constant 0 : i32
    %c0_i32_0 = arith.constant 0 : i32
    %c0_i32_1 = arith.constant 0 : i32
    return %c0_i32, %c0_i32_0 : i32, i32
  }
  func.func @transform_15(%arg0: i32) -> (i32, i32) {
    %c0_i32 = arith.constant 0 : i32
    %c0_i32_0 = arith.constant 0 : i32
    %c0_i32_1 = arith.constant 0 : i32
    return %c0_i32, %c0_i32_0 : i32, i32
  }
  func.func @transform_16(%arg0: i32) -> (i32, i32) {
    %c0_i32 = arith.constant 0 : i32
    %c0_i32_0 = arith.constant 0 : i32
    %c0_i32_1 = arith.constant 0 : i32
    return %c0_i32, %c0_i32_0 : i32, i32
  }
  func.func @transform_17(%arg0: i32) -> (i32, i32) {
    %c0_i32 = arith.constant 0 : i32
    %c0_i32_0 = arith.constant 0 : i32
    %c0_i32_1 = arith.constant 0 : i32
    return %c0_i32, %c0_i32_0 : i32, i32
  }
  func.func @transform_18(%arg0: i32) -> (i32, i32) {
    %c0_i32 = arith.constant 0 : i32
    %c0_i32_0 = arith.constant 0 : i32
    %c0_i32_1 = arith.constant 0 : i32
    return %c0_i32, %c0_i32_0 : i32, i32
  }
  func.func @transform_19(%arg0: i32) -> (i32, i32) {
    %c0_i32 = arith.constant 0 : i32
    %c0_i32_0 = arith.constant 0 : i32
    %c0_i32_1 = arith.constant 0 : i32
    return %c0_i32, %c0_i32_0 : i32, i32
  }
  func.func @transform_20(%arg0: i32) -> (i32, i32) {
    %c0_i32 = arith.constant 0 : i32
    %c0_i32_0 = arith.constant 0 : i32
    %c0_i32_1 = arith.constant 0 : i32
    return %c0_i32, %c0_i32_0 : i32, i32
  }
  func.func @transform_21(%arg0: i32) -> (i32, i32) {
    %c0_i32 = arith.constant 0 : i32
    %c0_i32_0 = arith.constant 0 : i32
    %c0_i32_1 = arith.constant 0 : i32
    return %c0_i32, %c0_i32_0 : i32, i32
  }
  func.func @transform_22(%arg0: i32) -> (i32, i32) {
    %c0_i32 = arith.constant 0 : i32
    %c0_i32_0 = arith.constant 0 : i32
    %c0_i32_1 = arith.constant 0 : i32
    return %c0_i32, %c0_i32_0 : i32, i32
  }
  func.func @transform_23(%arg0: i32) -> (i32, i32) {
    %c0_i32 = arith.constant 0 : i32
    %c0_i32_0 = arith.constant 0 : i32
    %c0_i32_1 = arith.constant 0 : i32
    return %c0_i32, %c0_i32_0 : i32, i32
  }
  func.func @transform_24(%arg0: i32) -> (i32, i32) {
    %c0_i32 = arith.constant 0 : i32
    %c0_i32_0 = arith.constant 0 : i32
    %c0_i32_1 = arith.constant 0 : i32
    return %c0_i32, %c0_i32_0 : i32, i32
  }
  func.func @transform_25(%arg0: i32) -> (i32, i32) {
    %c0_i32 = arith.constant 0 : i32
    %c0_i32_0 = arith.constant 0 : i32
    %c0_i32_1 = arith.constant 0 : i32
    return %c0_i32, %c0_i32_0 : i32, i32
  }
  func.func @transform_26(%arg0: i32) -> (i32, i32) {
    %c0_i32 = arith.constant 0 : i32
    %c0_i32_0 = arith.constant 0 : i32
    %c0_i32_1 = arith.constant 0 : i32
    return %c0_i32, %c0_i32_0 : i32, i32
  }
  func.func @transform_27(%arg0: i32) -> (i32, i32) {
    %c0_i32 = arith.constant 0 : i32
    %c0_i32_0 = arith.constant 0 : i32
    %c0_i32_1 = arith.constant 0 : i32
    return %c0_i32, %c0_i32_0 : i32, i32
  }
  func.func @transform_28(%arg0: i32) -> (i32, i32) {
    %c0_i32 = arith.constant 0 : i32
    %c0_i32_0 = arith.constant 0 : i32
    %c0_i32_1 = arith.constant 0 : i32
    return %c0_i32, %c0_i32_0 : i32, i32
  }
  func.func @transform_29(%arg0: i32) -> (i32, i32) {
    %c0_i32 = arith.constant 0 : i32
    %c0_i32_0 = arith.constant 0 : i32
    %c0_i32_1 = arith.constant 0 : i32
    return %c0_i32, %c0_i32_0 : i32, i32
  }
  func.func @transform_30(%arg0: i32) -> (i32, i32) {
    %c0_i32 = arith.constant 0 : i32
    %c0_i32_0 = arith.constant 0 : i32
    %c0_i32_1 = arith.constant 0 : i32
    return %c0_i32, %c0_i32_0 : i32, i32
  }
  func.func @transform_31(%arg0: i32) -> (i32, i32) {
    %c0_i32 = arith.constant 0 : i32
    %c0_i32_0 = arith.constant 0 : i32
    %c0_i32_1 = arith.constant 0 : i32
    return %c0_i32, %c0_i32_0 : i32, i32
  }
  func.func @transform_32(%arg0: i32) -> (i32, i32) {
    %c0_i32 = arith.constant 0 : i32
    %c0_i32_0 = arith.constant 0 : i32
    %c0_i32_1 = arith.constant 0 : i32
    return %c0_i32, %c0_i32_0 : i32, i32
  }
  func.func @transform_33(%arg0: i32) -> (i32, i32) {
    %c0_i32 = arith.constant 0 : i32
    %c0_i32_0 = arith.constant 0 : i32
    %c0_i32_1 = arith.constant 0 : i32
    return %c0_i32, %c0_i32_0 : i32, i32
  }
  func.func @transform_34(%arg0: i32) -> (i32, i32) {
    %c0_i32 = arith.constant 0 : i32
    %c0_i32_0 = arith.constant 0 : i32
    %c0_i32_1 = arith.constant 0 : i32
    return %c0_i32, %c0_i32_0 : i32, i32
  }
  func.func @transform_35(%arg0: i32) -> (i32, i32) {
    %c0_i32 = arith.constant 0 : i32
    %c0_i32_0 = arith.constant 0 : i32
    %c0_i32_1 = arith.constant 0 : i32
    return %c0_i32, %c0_i32_0 : i32, i32
  }
  func.func @transform_36(%arg0: i32) -> (i32, i32) {
    %c0_i32 = arith.constant 0 : i32
    %c0_i32_0 = arith.constant 0 : i32
    %c0_i32_1 = arith.constant 0 : i32
    return %c0_i32, %c0_i32_0 : i32, i32
  }
  func.func @transform_37(%arg0: i32) -> (i32, i32) {
    %c0_i32 = arith.constant 0 : i32
    %c0_i32_0 = arith.constant 0 : i32
    %c0_i32_1 = arith.constant 0 : i32
    return %c0_i32, %c0_i32_0 : i32, i32
  }
  func.func @transform_38(%arg0: i32) -> (i32, i32) {
    %c0_i32 = arith.constant 0 : i32
    %c0_i32_0 = arith.constant 0 : i32
    %c0_i32_1 = arith.constant 0 : i32
    return %c0_i32, %c0_i32_0 : i32, i32
  }
  func.func @transform_39(%arg0: i32) -> (i32, i32) {
    %c0_i32 = arith.constant 0 : i32
    %c0_i32_0 = arith.constant 0 : i32
    %c0_i32_1 = arith.constant 0 : i32
    return %c0_i32, %c0_i32_0 : i32, i32
  }
  func.func @transform_40(%arg0: i32) -> (i32, i32) {
    %c0_i32 = arith.constant 0 : i32
    %c0_i32_0 = arith.constant 0 : i32
    %c0_i32_1 = arith.constant 0 : i32
    return %c0_i32, %c0_i32_0 : i32, i32
  }
  func.func @transform_41(%arg0: i32) -> (i32, i32) {
    %c0_i32 = arith.constant 0 : i32
    %c0_i32_0 = arith.constant 0 : i32
    %c0_i32_1 = arith.constant 0 : i32
    return %c0_i32, %c0_i32_0 : i32, i32
  }
  func.func @transform_42(%arg0: i32) -> (i32, i32) {
    %c0_i32 = arith.constant 0 : i32
    %c0_i32_0 = arith.constant 0 : i32
    %c0_i32_1 = arith.constant 0 : i32
    return %c0_i32, %c0_i32_0 : i32, i32
  }
  func.func @transform_43(%arg0: i32) -> (i32, i32, i32) {
    %c0_i32 = arith.constant 0 : i32
    %c0_i32_0 = arith.constant 0 : i32
    %c0_i32_1 = arith.constant 0 : i32
    return %arg0, %c0_i32, %c0_i32_0 : i32, i32, i32
  }
}

</mosaic_0001>

<llo_original>
// kernel: complete_model_forward.1
$region0: #{complete_model_forward.1}
  #allocation0 [shape = 'u32[]', space=smem, size = 0x4, offset = 0x4, fixed_abs, tag = 'smem constant byte address 0x4 - core index']
  #allocation1 [shape = 'u32[72,128]{1,0:T(1,128)}', space=vmem, size = 0x9000, scoped, tag = 'internal scratch']
  #allocation2 [shape = 'f32[72,128]{1,0:T(8,128)}', space=vmem, size = 0x9000, scoped, tag = 'scratch operand']
  %s0 = inlined_call_operand.smem [shape: u32[44], index: -1, kind: input, shape index: {}]
  %s1 = sld [smem:[%s0]]
  %s2 = scalar_lea.smem %s0, 1
  %s3 = sld [smem:[%s2]]
  %s4 = scalar_lea.smem %s0, 2
  %s5 = sld [smem:[%s4]]
  %s6 = scalar_lea.smem %s0, 3
  %s7 = sld [smem:[%s6]]
  %s8 = scalar_lea.smem %s0, 4
  %s9 = sld [smem:[%s8]]
  %s10 = scalar_lea.smem %s0, 5
  %s11 = sld [smem:[%s10]]
  %s12 = scalar_lea.smem %s0, 6
  %s13 = sld [smem:[%s12]]
  %s14 = scalar_lea.smem %s0, 7
  %s15 = sld [smem:[%s14]]
  %s16 = scalar_lea.smem %s0, 8
  %s17 = sld [smem:[%s16]]
  %s18 = scalar_lea.smem %s0, 9
  %s19 = sld [smem:[%s18]]
  %s20 = scalar_lea.smem %s0, 10
  %s21 = sld [smem:[%s20]]
  %s22 = scalar_lea.smem %s0, 11
  %s23 = sld [smem:[%s22]]
  %s24 = scalar_lea.smem %s0, 12
  %s25 = sld [smem:[%s24]]
  %s26 = scalar_lea.smem %s0, 13
  %s27 = sld [smem:[%s26]]
  %s28 = scalar_lea.smem %s0, 14
  %s29 = sld [smem:[%s28]]
  %s30 = scalar_lea.smem %s0, 15
  %s31 = sld [smem:[%s30]]
  %s32 = scalar_lea.smem %s0, 16
  %s33 = sld [smem:[%s32]]
  %s34 = scalar_lea.smem %s0, 17
  %s35 = sld [smem:[%s34]]
  %s36 = scalar_lea.smem %s0, 18
  %s37 = sld [smem:[%s36]]
  %s38 = scalar_lea.smem %s0, 19
  %s39 = sld [smem:[%s38]]
  %s40 = scalar_lea.smem %s0, 20
  %s41 = sld [smem:[%s40]]
  %s42 = scalar_lea.smem %s0, 21
  %s43 = sld [smem:[%s42]]
  %s44 = scalar_lea.smem %s0, 22
  %s45 = sld [smem:[%s44]]
  %s46 = scalar_lea.smem %s0, 23
  %s47 = sld [smem:[%s46]]
  %s48 = scalar_lea.smem %s0, 24
  %s49 = sld [smem:[%s48]]
  %s50 = scalar_lea.smem %s0, 25
  %s51 = sld [smem:[%s50]]
  %s52 = scalar_lea.smem %s0, 26
  %s53 = sld [smem:[%s52]]
  %s54 = scalar_lea.smem %s0, 27
  %s55 = sld [smem:[%s54]]
  %s56 = scalar_lea.smem %s0, 28
  %s57 = sld [smem:[%s56]]
  %s58 = scalar_lea.smem %s0, 29
  %s59 = sld [smem:[%s58]]
  %s60 = scalar_lea.smem %s0, 30
  %s61 = sld [smem:[%s60]]
  %s62 = scalar_lea.smem %s0, 31
  %s63 = sld [smem:[%s62]]
  %s64 = scalar_lea.smem %s0, 32
  %s65 = sld [smem:[%s64]]
  %s66 = scalar_lea.smem %s0, 33
  %s67 = sld [smem:[%s66]]
  %s68 = scalar_lea.smem %s0, 34
  %s69 = sld [smem:[%s68]]
  %s70 = scalar_lea.smem %s0, 35
  %s71 = sld [smem:[%s70]]
  %s72 = scalar_lea.smem %s0, 36
  %s73 = sld [smem:[%s72]]
  %s74 = scalar_lea.smem %s0, 37
  %s75 = sld [smem:[%s74]]
  %s76 = scalar_lea.smem %s0, 38
  %s77 = sld [smem:[%s76]]
  %s78 = scalar_lea.smem %s0, 39
  %s79 = sld [smem:[%s78]]
  %s80 = scalar_lea.smem %s0, 40
  %s81 = sld [smem:[%s80]]
  %s82 = scalar_lea.smem %s0, 41
  %s83 = sld [smem:[%s82]]
  %s84 = scalar_lea.smem %s0, 42
  %s85 = sld [smem:[%s84]]
  %s86 = scalar_lea.smem %s0, 43
  %s87 = sld [smem:[%s86]]
  %s88 = sld [smem:[#allocation0]]
  $region285: #{complete_model_forward.1} parent=0
    _
  %s90 = ssub.s32 1, %s88
  %s91 = scalar_select 0, %s90, %s88
  $region1: #{complete_model_forward.1} parent=0
    #allocation3 [shape = 'u8[229376]{0}', space=vmem, size = 0x38000, scoped, tag = 'input window, operand 1, single buffered']
    #allocation4 [shape = 's32[2]{0}', space=sflag, size = 0x8, scoped, tag = 'scoped memory for complete_model_forward.1']
    #allocation5 [shape = 's32[2]{0}', space=sflag, size = 0x8, scoped, tag = 'scoped memory for complete_model_forward.1']
    #allocation6 [shape = 'u8[98304]{0}', space=vmem, size = 0x18000, scoped, tag = 'input window, operand 3, single buffered']
    #allocation7 [shape = 's32[1]{0}', space=sflag, size = 0x4, scoped, tag = 'scoped memory for complete_model_forward.1']
    #allocation8 [shape = 'u8[98304]{0}', space=vmem, size = 0x18000, scoped, tag = 'input window, operand 5, single buffered']
    #allocation9 [shape = 'u8[98304]{0}', space=vmem, size = 0x18000, scoped, tag = 'input window, operand 7, single buffered']
    #allocation10 [shape = 's32[1]{0}', space=sflag, size = 0x4, scoped, tag = 'scoped memory for complete_model_forward.1']
    #allocation11 [shape = 'u8[98304]{0}', space=vmem, size = 0x18000, scoped, tag = 'input window, operand 9, single buffered']
    #allocation12 [shape = 'u8[98304]{0}', space=vmem, size = 0x18000, scoped, tag = 'input window, operand 11, single buffered']
    #allocation13 [shape = 's32[1]{0}', space=sflag, size = 0x4, scoped, tag = 'scoped memory for complete_model_forward.1']
    #allocation14 [shape = 'u8[98304]{0}', space=vmem, size = 0x18000, scoped, tag = 'input window, operand 13, single buffered']
    #allocation15 [shape = 'u8[32768]{0}', space=vmem, size = 0x8000, scoped, tag = 'input window, operand 15, single buffered']
    #allocation16 [shape = 's32[1]{0}', space=sflag, size = 0x4, scoped, tag = 'scoped memory for complete_model_forward.1']
    #allocation17 [shape = 'u8[98304]{0}', space=vmem, size = 0x18000, scoped, tag = 'input window, operand 17, single buffered']
    #allocation18 [shape = 'u8[98304]{0}', space=vmem, size = 0x18000, scoped, tag = 'input window, operand 19, single buffered']
    #allocation19 [shape = 's32[1]{0}', space=sflag, size = 0x4, scoped, tag = 'scoped memory for complete_model_forward.1']
    #allocation20 [shape = 'u8[98304]{0}', space=vmem, size = 0x18000, scoped, tag = 'input window, operand 21, single buffered']
    #allocation21 [shape = 'u8[98304]{0}', space=vmem, size = 0x18000, scoped, tag = 'input window, operand 23, single buffered']
    #allocation22 [shape = 's32[1]{0}', space=sflag, size = 0x4, scoped, tag = 'scoped memory for complete_model_forward.1']
    #allocation23 [shape = 'u8[32768]{0}', space=vmem, size = 0x8000, scoped, tag = 'input window, operand 25, single buffered']
    #allocation24 [shape = 'u8[98304]{0}', space=vmem, size = 0x18000, scoped, tag = 'input window, operand 27, single buffered']
    #allocation25 [shape = 's32[1]{0}', space=sflag, size = 0x4, scoped, tag = 'scoped memory for complete_model_forward.1']
    #allocation26 [shape = 'u8[98304]{0}', space=vmem, size = 0x18000, scoped, tag = 'input window, operand 29, single buffered']
    #allocation27 [shape = 'u8[98304]{0}', space=vmem, size = 0x18000, scoped, tag = 'input window, operand 31, single buffered']
    #allocation28 [shape = 's32[1]{0}', space=sflag, size = 0x4, scoped, tag = 'scoped memory for complete_model_forward.1']
    #allocation29 [shape = 'u8[98304]{0}', space=vmem, size = 0x18000, scoped, tag = 'input window, operand 33, single buffered']
    #allocation30 [shape = 'u8[32768]{0}', space=vmem, size = 0x8000, scoped, tag = 'input window, operand 35, single buffered']
    #allocation31 [shape = 's32[1]{0}', space=sflag, size = 0x4, scoped, tag = 'scoped memory for complete_model_forward.1']
    #allocation32 [shape = 'u8[98304]{0}', space=vmem, size = 0x18000, scoped, tag = 'input window, operand 37, single buffered']
    #allocation33 [shape = 'u8[98304]{0}', space=vmem, size = 0x18000, scoped, tag = 'input window, operand 39, single buffered']
    #allocation34 [shape = 's32[1]{0}', space=sflag, size = 0x4, scoped, tag = 'scoped memory for complete_model_forward.1']
    #allocation35 [shape = 'u8[1024]{0}', space=vmem, size = 0x400, scoped, tag = 'output window, operand 0']
    %92 = vsyncpa [#allocation4], 0
    %93 = vsyncpa [#allocation7], 0
    %94 = vsyncpa [#allocation10], 0
    %95 = vsyncpa [#allocation13], 0
    %96 = vsyncpa [#allocation16], 0
    %97 = vsyncpa [#allocation19], 0
    %98 = vsyncpa [#allocation22], 0
    %99 = vsyncpa [#allocation25], 0
    %100 = vsyncpa [#allocation28], 0
    %101 = vsyncpa [#allocation31], 0
    %102 = vsyncpa [#allocation34], 0
    %103 = vsyncpa [#allocation5], 0
    %s104 = scalar_lea.sflag [#allocation5], 1
    %105 = vsyncpa %s104, 0
    loop: start=0, step=1, limit=4
    $region2: #{complete_model_forward.1} parent=1 // loop_pre_header
      _
    $region3: #{complete_model_forward.1} parent=1 // loop_header
      %s107 = sphi 0, %s111
      %p108 = scmp.ge.s32.totalorder %s107, 4
      %s117 = sphi 0, %s119
      %s120 = sphi 0, %s117
      %s121 = sphi 0, %s120
      %s137 = sphi 0, %s121
      %s141 = sphi 0, %s141
      %s143 = sphi 0, %s141
      %s144 = sphi 0, %s143
      %s158 = sphi 0, %s144
      %s162 = sphi 0, %s162
      %s164 = sphi 0, %s162
      %s165 = sphi 0, %s164
      %s179 = sphi 0, %s165
      %s183 = sphi 0, %s183
      %s185 = sphi 0, %s183
      %s186 = sphi 0, %s185
      %s200 = sphi 0, %s186
      %s204 = sphi 0, %s204
      %s206 = sphi 0, %s204
      %s207 = sphi 0, %s206
      %s221 = sphi 0, %s207
      %s225 = sphi 0, %s225
      %s227 = sphi 0, %s225
      %s228 = sphi 0, %s227
      %s242 = sphi 0, %s228
      %s246 = sphi 0, %s246
      %s248 = sphi 0, %s246
      %s249 = sphi 0, %s248
      %s263 = sphi 0, %s249
      %s267 = sphi 0, %s267
      %s269 = sphi 0, %s267
      %s270 = sphi 0, %s269
      %s284 = sphi 0, %s270
      %s288 = sphi 0, %s288
      %s290 = sphi 0, %s288
      %s291 = sphi 0, %s290
      %s305 = sphi 0, %s291
      %s309 = sphi 0, %s309
      %s311 = sphi 0, %s309
      %s312 = sphi 0, %s311
      %s326 = sphi 0, %s312
      %s330 = sphi 0, %s330
      %s332 = sphi 0, %s330
      %s333 = sphi 0, %s332
      %s347 = sphi 0, %s333
      %s351 = sphi 0, %s351
      %s353 = sphi 0, %s351
      %s354 = sphi 0, %s353
      %s368 = sphi 0, %s354
      %s372 = sphi 0, %s372
      %s374 = sphi 0, %s372
      %s375 = sphi 0, %s374
      %s389 = sphi 0, %s375
      %s393 = sphi 0, %s393
      %s395 = sphi 0, %s393
      %s396 = sphi 0, %s395
      %s410 = sphi 0, %s396
      %s414 = sphi 0, %s414
      %s416 = sphi 0, %s414
      %s417 = sphi 0, %s416
      %s431 = sphi 0, %s417
      %s435 = sphi 0, %s435
      %s437 = sphi 0, %s435
      %s438 = sphi 0, %s437
      %s452 = sphi 0, %s438
      %s456 = sphi 0, %s456
      %s458 = sphi 0, %s456
      %s459 = sphi 0, %s458
      %s473 = sphi 0, %s459
      %s477 = sphi 0, %s477
      %s479 = sphi 0, %s477
      %s480 = sphi 0, %s479
      %s494 = sphi 0, %s480
      %s498 = sphi 0, %s498
      %s500 = sphi 0, %s498
      %s501 = sphi 0, %s500
      %s515 = sphi 0, %s501
      %s519 = sphi 0, %s519
      %s521 = sphi 0, %s519
      %s522 = sphi 0, %s521
      %s536 = sphi 0, %s522
      %s540 = sphi 0, %s540
      %s542 = sphi 0, %s540
      %s543 = sphi 0, %s542
      %s557 = sphi 0, %s543
      %s561 = sphi 0, %s561
      %s563 = sphi 0, %s561
      %s564 = sphi 0, %s563
      %s578 = sphi 0, %s564
      %s582 = sphi 0, %s582
      %s584 = sphi 0, %s582
      %s585 = sphi 0, %s584
      %s599 = sphi 0, %s585
      %s603 = sphi 0, %s603
      %s605 = sphi 0, %s603
      %s606 = sphi 0, %s605
      %s620 = sphi 0, %s606
      %s624 = sphi 0, %s624
      %s626 = sphi 0, %s624
      %s627 = sphi 0, %s626
      %s641 = sphi 0, %s627
      %s645 = sphi 0, %s645
      %s647 = sphi 0, %s645
      %s648 = sphi 0, %s647
      %s662 = sphi 0, %s648
      %s666 = sphi 0, %s666
      %s668 = sphi 0, %s666
      %s669 = sphi 0, %s668
      %s683 = sphi 0, %s669
      %s687 = sphi 0, %s687
      %s689 = sphi 0, %s687
      %s690 = sphi 0, %s689
      %s704 = sphi 0, %s690
      %s708 = sphi 0, %s708
      %s710 = sphi 0, %s708
      %s711 = sphi 0, %s710
      %s725 = sphi 0, %s711
      %s729 = sphi 0, %s729
      %s731 = sphi 0, %s729
      %s732 = sphi 0, %s731
      %s746 = sphi 0, %s732
      %s750 = sphi 0, %s750
      %s752 = sphi 0, %s750
      %s753 = sphi 0, %s752
      %s767 = sphi 0, %s753
      %s771 = sphi 0, %s771
      %s773 = sphi 0, %s771
      %s774 = sphi 0, %s773
      %s788 = sphi 0, %s774
      %s792 = sphi 0, %s792
      %s794 = sphi 0, %s792
      %s795 = sphi 0, %s794
      %s809 = sphi 0, %s795
      %s813 = sphi 0, %s813
      %s815 = sphi 0, %s813
      %s816 = sphi 0, %s815
      %s830 = sphi 0, %s816
      %s834 = sphi 0, %s834
      %s836 = sphi 0, %s834
      %s837 = sphi 0, %s836
      %s851 = sphi 0, %s837
      %s855 = sphi 0, %s855
      %s857 = sphi 0, %s855
      %s858 = sphi 0, %s857
      %s872 = sphi 0, %s858
      %s876 = sphi 0, %s876
      %s878 = sphi 0, %s876
      %s879 = sphi 0, %s878
      %s893 = sphi 0, %s879
      %s897 = sphi 0, %s897
      %s899 = sphi 0, %s897
      %s900 = sphi 0, %s899
      %s914 = sphi 0, %s900
      %s918 = sphi 0, %s918
      %s920 = sphi 0, %s918
      %s921 = sphi 0, %s920
      %s935 = sphi 0, %s921
      %s939 = sphi 0, %s939
      %s941 = sphi 0, %s939
      %s942 = sphi 0, %s941
      %s956 = sphi 0, %s942
      %s960 = sphi 0, %s960
      %s962 = sphi 0, %s960
      %s963 = sphi 0, %s962
      %s977 = sphi 0, %s963
      %s981 = sphi 0, %s981
      %s983 = sphi 0, %s981
      %s984 = sphi 0, %s983
      %s998 = sphi 0, %s984
      %s1002 = sphi 0, %s1002
      %s1004 = sphi 0, %s1002
      %s1005 = sphi 0, %s1004
      %s1019 = sphi 0, %s1005
      %s1025 = sphi 0, %s1027
      %s1028 = sphi 0, %s1025
      %s1029 = sphi 0, %s1028
      %s1045 = sphi 0, %s1029
    $region4: #{complete_model_forward.1} parent=1 // loop_header_branch
      %110 = sbr.rel (%p108) target = $region8
    $region5: #{complete_model_forward.1} parent=1 // loop_body
      %s112 = ssub.s32 %s107, 1
      %s113 = ssub.s32 %s107, 2
      %s114 = sadd.s32 %s107, 1
      %s115 = ssub.s32 %s107, %s114
      %p116 = scmp.eq.s32.totalorder %s115, 0
      %s118 = sadd.s32 %s117, 1
      %s119 = scalar_select %p116, %s117, %s118
      %p122 = pneg %p116
      %p123 = scmp.eq.s32.totalorder %s107, 1
      %p124 = por %p122, %p123
      %p125 = scmp.ne.s32.totalorder %s117, %s120
      %p126 = scmp.eq.s32.totalorder %s107, 0
      %p127 = por %p125, %p126
      %p128 = scmp.ne.s32.totalorder %s117, %s120
      %p129 = scmp.eq.s32.totalorder %s112, 1
      %p130 = por %p128, %p129
      %p131 = scmp.ne.s32.totalorder %s120, %s121
      %p132 = scmp.eq.s32.totalorder %s112, 0
      %p133 = por %p131, %p132
      %p134 = scmp.ne.s32.totalorder %s120, %s121
      %p135 = scmp.eq.s32.totalorder %s113, 1
      %p136 = por %p134, %p135
      %p138 = scmp.ne.s32.totalorder %s121, %s137
      %p139 = scmp.eq.s32.totalorder %s113, 0
      %p140 = por %p138, %p139
      %s142 = sadd.s32 %s141, 1
      %p145 = scmp.eq.s32.totalorder %s107, 1
      %p146 = scmp.ne.s32.totalorder %s141, %s143
      %p147 = scmp.eq.s32.totalorder %s107, 0
      %p148 = por %p146, %p147
      %p149 = scmp.ne.s32.totalorder %s141, %s143
      %p150 = scmp.eq.s32.totalorder %s112, 1
      %p151 = por %p149, %p150
      %p152 = scmp.ne.s32.totalorder %s143, %s144
      %p153 = scmp.eq.s32.totalorder %s112, 0
      %p154 = por %p152, %p153
      %p155 = scmp.ne.s32.totalorder %s143, %s144
      %p156 = scmp.eq.s32.totalorder %s113, 1
      %p157 = por %p155, %p156
      %p159 = scmp.ne.s32.totalorder %s144, %s158
      %p160 = scmp.eq.s32.totalorder %s113, 0
      %p161 = por %p159, %p160
      %s163 = sadd.s32 %s162, 1
      %p166 = scmp.eq.s32.totalorder %s107, 1
      %p167 = scmp.ne.s32.totalorder %s162, %s164
      %p168 = scmp.eq.s32.totalorder %s107, 0
      %p169 = por %p167, %p168
      %p170 = scmp.ne.s32.totalorder %s162, %s164
      %p171 = scmp.eq.s32.totalorder %s112, 1
      %p172 = por %p170, %p171
      %p173 = scmp.ne.s32.totalorder %s164, %s165
      %p174 = scmp.eq.s32.totalorder %s112, 0
      %p175 = por %p173, %p174
      %p176 = scmp.ne.s32.totalorder %s164, %s165
      %p177 = scmp.eq.s32.totalorder %s113, 1
      %p178 = por %p176, %p177
      %p180 = scmp.ne.s32.totalorder %s165, %s179
      %p181 = scmp.eq.s32.totalorder %s113, 0
      %p182 = por %p180, %p181
      %s184 = sadd.s32 %s183, 1
      %p187 = scmp.eq.s32.totalorder %s107, 1
      %p188 = scmp.ne.s32.totalorder %s183, %s185
      %p189 = scmp.eq.s32.totalorder %s107, 0
      %p190 = por %p188, %p189
      %p191 = scmp.ne.s32.totalorder %s183, %s185
      %p192 = scmp.eq.s32.totalorder %s112, 1
      %p193 = por %p191, %p192
      %p194 = scmp.ne.s32.totalorder %s185, %s186
      %p195 = scmp.eq.s32.totalorder %s112, 0
      %p196 = por %p194, %p195
      %p197 = scmp.ne.s32.totalorder %s185, %s186
      %p198 = scmp.eq.s32.totalorder %s113, 1
      %p199 = por %p197, %p198
      %p201 = scmp.ne.s32.totalorder %s186, %s200
      %p202 = scmp.eq.s32.totalorder %s113, 0
      %p203 = por %p201, %p202
      %s205 = sadd.s32 %s204, 1
      %p208 = scmp.eq.s32.totalorder %s107, 1
      %p209 = scmp.ne.s32.totalorder %s204, %s206
      %p210 = scmp.eq.s32.totalorder %s107, 0
      %p211 = por %p209, %p210
      %p212 = scmp.ne.s32.totalorder %s204, %s206
      %p213 = scmp.eq.s32.totalorder %s112, 1
      %p214 = por %p212, %p213
      %p215 = scmp.ne.s32.totalorder %s206, %s207
      %p216 = scmp.eq.s32.totalorder %s112, 0
      %p217 = por %p215, %p216
      %p218 = scmp.ne.s32.totalorder %s206, %s207
      %p219 = scmp.eq.s32.totalorder %s113, 1
      %p220 = por %p218, %p219
      %p222 = scmp.ne.s32.totalorder %s207, %s221
      %p223 = scmp.eq.s32.totalorder %s113, 0
      %p224 = por %p222, %p223
      %s226 = sadd.s32 %s225, 1
      %p229 = scmp.eq.s32.totalorder %s107, 1
      %p230 = scmp.ne.s32.totalorder %s225, %s227
      %p231 = scmp.eq.s32.totalorder %s107, 0
      %p232 = por %p230, %p231
      %p233 = scmp.ne.s32.totalorder %s225, %s227
      %p234 = scmp.eq.s32.totalorder %s112, 1
      %p235 = por %p233, %p234
      %p236 = scmp.ne.s32.totalorder %s227, %s228
      %p237 = scmp.eq.s32.totalorder %s112, 0
      %p238 = por %p236, %p237
      %p239 = scmp.ne.s32.totalorder %s227, %s228
      %p240 = scmp.eq.s32.totalorder %s113, 1
      %p241 = por %p239, %p240
      %p243 = scmp.ne.s32.totalorder %s228, %s242
      %p244 = scmp.eq.s32.totalorder %s113, 0
      %p245 = por %p243, %p244
      %s247 = sadd.s32 %s246, 1
      %p250 = scmp.eq.s32.totalorder %s107, 1
      %p251 = scmp.ne.s32.totalorder %s246, %s248
      %p252 = scmp.eq.s32.totalorder %s107, 0
      %p253 = por %p251, %p252
      %p254 = scmp.ne.s32.totalorder %s246, %s248
      %p255 = scmp.eq.s32.totalorder %s112, 1
      %p256 = por %p254, %p255
      %p257 = scmp.ne.s32.totalorder %s248, %s249
      %p258 = scmp.eq.s32.totalorder %s112, 0
      %p259 = por %p257, %p258
      %p260 = scmp.ne.s32.totalorder %s248, %s249
      %p261 = scmp.eq.s32.totalorder %s113, 1
      %p262 = por %p260, %p261
      %p264 = scmp.ne.s32.totalorder %s249, %s263
      %p265 = scmp.eq.s32.totalorder %s113, 0
      %p266 = por %p264, %p265
      %s268 = sadd.s32 %s267, 1
      %p271 = scmp.eq.s32.totalorder %s107, 1
      %p272 = scmp.ne.s32.totalorder %s267, %s269
      %p273 = scmp.eq.s32.totalorder %s107, 0
      %p274 = por %p272, %p273
      %p275 = scmp.ne.s32.totalorder %s267, %s269
      %p276 = scmp.eq.s32.totalorder %s112, 1
      %p277 = por %p275, %p276
      %p278 = scmp.ne.s32.totalorder %s269, %s270
      %p279 = scmp.eq.s32.totalorder %s112, 0
      %p280 = por %p278, %p279
      %p281 = scmp.ne.s32.totalorder %s269, %s270
      %p282 = scmp.eq.s32.totalorder %s113, 1
      %p283 = por %p281, %p282
      %p285 = scmp.ne.s32.totalorder %s270, %s284
      %p286 = scmp.eq.s32.totalorder %s113, 0
      %p287 = por %p285, %p286
      %s289 = sadd.s32 %s288, 1
      %p292 = scmp.eq.s32.totalorder %s107, 1
      %p293 = scmp.ne.s32.totalorder %s288, %s290
      %p294 = scmp.eq.s32.totalorder %s107, 0
      %p295 = por %p293, %p294
      %p296 = scmp.ne.s32.totalorder %s288, %s290
      %p297 = scmp.eq.s32.totalorder %s112, 1
      %p298 = por %p296, %p297
      %p299 = scmp.ne.s32.totalorder %s290, %s291
      %p300 = scmp.eq.s32.totalorder %s112, 0
      %p301 = por %p299, %p300
      %p302 = scmp.ne.s32.totalorder %s290, %s291
      %p303 = scmp.eq.s32.totalorder %s113, 1
      %p304 = por %p302, %p303
      %p306 = scmp.ne.s32.totalorder %s291, %s305
      %p307 = scmp.eq.s32.totalorder %s113, 0
      %p308 = por %p306, %p307
      %s310 = sadd.s32 %s309, 1
      %p313 = scmp.eq.s32.totalorder %s107, 1
      %p314 = scmp.ne.s32.totalorder %s309, %s311
      %p315 = scmp.eq.s32.totalorder %s107, 0
      %p316 = por %p314, %p315
      %p317 = scmp.ne.s32.totalorder %s309, %s311
      %p318 = scmp.eq.s32.totalorder %s112, 1
      %p319 = por %p317, %p318
      %p320 = scmp.ne.s32.totalorder %s311, %s312
      %p321 = scmp.eq.s32.totalorder %s112, 0
      %p322 = por %p320, %p321
      %p323 = scmp.ne.s32.totalorder %s311, %s312
      %p324 = scmp.eq.s32.totalorder %s113, 1
      %p325 = por %p323, %p324
      %p327 = scmp.ne.s32.totalorder %s312, %s326
      %p328 = scmp.eq.s32.totalorder %s113, 0
      %p329 = por %p327, %p328
      %s331 = sadd.s32 %s330, 1
      %p334 = scmp.eq.s32.totalorder %s107, 1
      %p335 = scmp.ne.s32.totalorder %s330, %s332
      %p336 = scmp.eq.s32.totalorder %s107, 0
      %p337 = por %p335, %p336
      %p338 = scmp.ne.s32.totalorder %s330, %s332
      %p339 = scmp.eq.s32.totalorder %s112, 1
      %p340 = por %p338, %p339
      %p341 = scmp.ne.s32.totalorder %s332, %s333
      %p342 = scmp.eq.s32.totalorder %s112, 0
      %p343 = por %p341, %p342
      %p344 = scmp.ne.s32.totalorder %s332, %s333
      %p345 = scmp.eq.s32.totalorder %s113, 1
      %p346 = por %p344, %p345
      %p348 = scmp.ne.s32.totalorder %s333, %s347
      %p349 = scmp.eq.s32.totalorder %s113, 0
      %p350 = por %p348, %p349
      %s352 = sadd.s32 %s351, 1
      %p355 = scmp.eq.s32.totalorder %s107, 1
      %p356 = scmp.ne.s32.totalorder %s351, %s353
      %p357 = scmp.eq.s32.totalorder %s107, 0
      %p358 = por %p356, %p357
      %p359 = scmp.ne.s32.totalorder %s351, %s353
      %p360 = scmp.eq.s32.totalorder %s112, 1
      %p361 = por %p359, %p360
      %p362 = scmp.ne.s32.totalorder %s353, %s354
      %p363 = scmp.eq.s32.totalorder %s112, 0
      %p364 = por %p362, %p363
      %p365 = scmp.ne.s32.totalorder %s353, %s354
      %p366 = scmp.eq.s32.totalorder %s113, 1
      %p367 = por %p365, %p366
      %p369 = scmp.ne.s32.totalorder %s354, %s368
      %p370 = scmp.eq.s32.totalorder %s113, 0
      %p371 = por %p369, %p370
      %s373 = sadd.s32 %s372, 1
      %p376 = scmp.eq.s32.totalorder %s107, 1
      %p377 = scmp.ne.s32.totalorder %s372, %s374
      %p378 = scmp.eq.s32.totalorder %s107, 0
      %p379 = por %p377, %p378
      %p380 = scmp.ne.s32.totalorder %s372, %s374
      %p381 = scmp.eq.s32.totalorder %s112, 1
      %p382 = por %p380, %p381
      %p383 = scmp.ne.s32.totalorder %s374, %s375
      %p384 = scmp.eq.s32.totalorder %s112, 0
      %p385 = por %p383, %p384
      %p386 = scmp.ne.s32.totalorder %s374, %s375
      %p387 = scmp.eq.s32.totalorder %s113, 1
      %p388 = por %p386, %p387
      %p390 = scmp.ne.s32.totalorder %s375, %s389
      %p391 = scmp.eq.s32.totalorder %s113, 0
      %p392 = por %p390, %p391
      %s394 = sadd.s32 %s393, 1
      %p397 = scmp.eq.s32.totalorder %s107, 1
      %p398 = scmp.ne.s32.totalorder %s393, %s395
      %p399 = scmp.eq.s32.totalorder %s107, 0
      %p400 = por %p398, %p399
      %p401 = scmp.ne.s32.totalorder %s393, %s395
      %p402 = scmp.eq.s32.totalorder %s112, 1
      %p403 = por %p401, %p402
      %p404 = scmp.ne.s32.totalorder %s395, %s396
      %p405 = scmp.eq.s32.totalorder %s112, 0
      %p406 = por %p404, %p405
      %p407 = scmp.ne.s32.totalorder %s395, %s396
      %p408 = scmp.eq.s32.totalorder %s113, 1
      %p409 = por %p407, %p408
      %p411 = scmp.ne.s32.totalorder %s396, %s410
      %p412 = scmp.eq.s32.totalorder %s113, 0
      %p413 = por %p411, %p412
      %s415 = sadd.s32 %s414, 1
      %p418 = scmp.eq.s32.totalorder %s107, 1
      %p419 = scmp.ne.s32.totalorder %s414, %s416
      %p420 = scmp.eq.s32.totalorder %s107, 0
      %p421 = por %p419, %p420
      %p422 = scmp.ne.s32.totalorder %s414, %s416
      %p423 = scmp.eq.s32.totalorder %s112, 1
      %p424 = por %p422, %p423
      %p425 = scmp.ne.s32.totalorder %s416, %s417
      %p426 = scmp.eq.s32.totalorder %s112, 0
      %p427 = por %p425, %p426
      %p428 = scmp.ne.s32.totalorder %s416, %s417
      %p429 = scmp.eq.s32.totalorder %s113, 1
      %p430 = por %p428, %p429
      %p432 = scmp.ne.s32.totalorder %s417, %s431
      %p433 = scmp.eq.s32.totalorder %s113, 0
      %p434 = por %p432, %p433
      %s436 = sadd.s32 %s435, 1
      %p439 = scmp.eq.s32.totalorder %s107, 1
      %p440 = scmp.ne.s32.totalorder %s435, %s437
      %p441 = scmp.eq.s32.totalorder %s107, 0
      %p442 = por %p440, %p441
      %p443 = scmp.ne.s32.totalorder %s435, %s437
      %p444 = scmp.eq.s32.totalorder %s112, 1
      %p445 = por %p443, %p444
      %p446 = scmp.ne.s32.totalorder %s437, %s438
      %p447 = scmp.eq.s32.totalorder %s112, 0
      %p448 = por %p446, %p447
      %p449 = scmp.ne.s32.totalorder %s437, %s438
      %p450 = scmp.eq.s32.totalorder %s113, 1
      %p451 = por %p449, %p450
      %p453 = scmp.ne.s32.totalorder %s438, %s452
      %p454 = scmp.eq.s32.totalorder %s113, 0
      %p455 = por %p453, %p454
      %s457 = sadd.s32 %s456, 1
      %p460 = scmp.eq.s32.totalorder %s107, 1
      %p461 = scmp.ne.s32.totalorder %s456, %s458
      %p462 = scmp.eq.s32.totalorder %s107, 0
      %p463 = por %p461, %p462
      %p464 = scmp.ne.s32.totalorder %s456, %s458
      %p465 = scmp.eq.s32.totalorder %s112, 1
      %p466 = por %p464, %p465
      %p467 = scmp.ne.s32.totalorder %s458, %s459
      %p468 = scmp.eq.s32.totalorder %s112, 0
      %p469 = por %p467, %p468
      %p470 = scmp.ne.s32.totalorder %s458, %s459
      %p471 = scmp.eq.s32.totalorder %s113, 1
      %p472 = por %p470, %p471
      %p474 = scmp.ne.s32.totalorder %s459, %s473
      %p475 = scmp.eq.s32.totalorder %s113, 0
      %p476 = por %p474, %p475
      %s478 = sadd.s32 %s477, 1
      %p481 = scmp.eq.s32.totalorder %s107, 1
      %p482 = scmp.ne.s32.totalorder %s477, %s479
      %p483 = scmp.eq.s32.totalorder %s107, 0
      %p484 = por %p482, %p483
      %p485 = scmp.ne.s32.totalorder %s477, %s479
      %p486 = scmp.eq.s32.totalorder %s112, 1
      %p487 = por %p485, %p486
      %p488 = scmp.ne.s32.totalorder %s479, %s480
      %p489 = scmp.eq.s32.totalorder %s112, 0
      %p490 = por %p488, %p489
      %p491 = scmp.ne.s32.totalorder %s479, %s480
      %p492 = scmp.eq.s32.totalorder %s113, 1
      %p493 = por %p491, %p492
      %p495 = scmp.ne.s32.totalorder %s480, %s494
      %p496 = scmp.eq.s32.totalorder %s113, 0
      %p497 = por %p495, %p496
      %s499 = sadd.s32 %s498, 1
      %p502 = scmp.eq.s32.totalorder %s107, 1
      %p503 = scmp.ne.s32.totalorder %s498, %s500
      %p504 = scmp.eq.s32.totalorder %s107, 0
      %p505 = por %p503, %p504
      %p506 = scmp.ne.s32.totalorder %s498, %s500
      %p507 = scmp.eq.s32.totalorder %s112, 1
      %p508 = por %p506, %p507
      %p509 = scmp.ne.s32.totalorder %s500, %s501
      %p510 = scmp.eq.s32.totalorder %s112, 0
      %p511 = por %p509, %p510
      %p512 = scmp.ne.s32.totalorder %s500, %s501
      %p513 = scmp.eq.s32.totalorder %s113, 1
      %p514 = por %p512, %p513
      %p516 = scmp.ne.s32.totalorder %s501, %s515
      %p517 = scmp.eq.s32.totalorder %s113, 0
      %p518 = por %p516, %p517
      %s520 = sadd.s32 %s519, 1
      %p523 = scmp.eq.s32.totalorder %s107, 1
      %p524 = scmp.ne.s32.totalorder %s519, %s521
      %p525 = scmp.eq.s32.totalorder %s107, 0
      %p526 = por %p524, %p525
      %p527 = scmp.ne.s32.totalorder %s519, %s521
      %p528 = scmp.eq.s32.totalorder %s112, 1
      %p529 = por %p527, %p528
      %p530 = scmp.ne.s32.totalorder %s521, %s522
      %p531 = scmp.eq.s32.totalorder %s112, 0
      %p532 = por %p530, %p531
      %p533 = scmp.ne.s32.totalorder %s521, %s522
      %p534 = scmp.eq.s32.totalorder %s113, 1
      %p535 = por %p533, %p534
      %p537 = scmp.ne.s32.totalorder %s522, %s536
      %p538 = scmp.eq.s32.totalorder %s113, 0
      %p539 = por %p537, %p538
      %s541 = sadd.s32 %s540, 1
      %p544 = scmp.eq.s32.totalorder %s107, 1
      %p545 = scmp.ne.s32.totalorder %s540, %s542
      %p546 = scmp.eq.s32.totalorder %s107, 0
      %p547 = por %p545, %p546
      %p548 = scmp.ne.s32.totalorder %s540, %s542
      %p549 = scmp.eq.s32.totalorder %s112, 1
      %p550 = por %p548, %p549
      %p551 = scmp.ne.s32.totalorder %s542, %s543
      %p552 = scmp.eq.s32.totalorder %s112, 0
      %p553 = por %p551, %p552
      %p554 = scmp.ne.s32.totalorder %s542, %s543
      %p555 = scmp.eq.s32.totalorder %s113, 1
      %p556 = por %p554, %p555
      %p558 = scmp.ne.s32.totalorder %s543, %s557
      %p559 = scmp.eq.s32.totalorder %s113, 0
      %p560 = por %p558, %p559
      %s562 = sadd.s32 %s561, 1
      %p565 = scmp.eq.s32.totalorder %s107, 1
      %p566 = scmp.ne.s32.totalorder %s561, %s563
      %p567 = scmp.eq.s32.totalorder %s107, 0
      %p568 = por %p566, %p567
      %p569 = scmp.ne.s32.totalorder %s561, %s563
      %p570 = scmp.eq.s32.totalorder %s112, 1
      %p571 = por %p569, %p570
      %p572 = scmp.ne.s32.totalorder %s563, %s564
      %p573 = scmp.eq.s32.totalorder %s112, 0
      %p574 = por %p572, %p573
      %p575 = scmp.ne.s32.totalorder %s563, %s564
      %p576 = scmp.eq.s32.totalorder %s113, 1
      %p577 = por %p575, %p576
      %p579 = scmp.ne.s32.totalorder %s564, %s578
      %p580 = scmp.eq.s32.totalorder %s113, 0
      %p581 = por %p579, %p580
      %s583 = sadd.s32 %s582, 1
      %p586 = scmp.eq.s32.totalorder %s107, 1
      %p587 = scmp.ne.s32.totalorder %s582, %s584
      %p588 = scmp.eq.s32.totalorder %s107, 0
      %p589 = por %p587, %p588
      %p590 = scmp.ne.s32.totalorder %s582, %s584
      %p591 = scmp.eq.s32.totalorder %s112, 1
      %p592 = por %p590, %p591
      %p593 = scmp.ne.s32.totalorder %s584, %s585
      %p594 = scmp.eq.s32.totalorder %s112, 0
      %p595 = por %p593, %p594
      %p596 = scmp.ne.s32.totalorder %s584, %s585
      %p597 = scmp.eq.s32.totalorder %s113, 1
      %p598 = por %p596, %p597
      %p600 = scmp.ne.s32.totalorder %s585, %s599
      %p601 = scmp.eq.s32.totalorder %s113, 0
      %p602 = por %p600, %p601
      %s604 = sadd.s32 %s603, 1
      %p607 = scmp.eq.s32.totalorder %s107, 1
      %p608 = scmp.ne.s32.totalorder %s603, %s605
      %p609 = scmp.eq.s32.totalorder %s107, 0
      %p610 = por %p608, %p609
      %p611 = scmp.ne.s32.totalorder %s603, %s605
      %p612 = scmp.eq.s32.totalorder %s112, 1
      %p613 = por %p611, %p612
      %p614 = scmp.ne.s32.totalorder %s605, %s606
      %p615 = scmp.eq.s32.totalorder %s112, 0
      %p616 = por %p614, %p615
      %p617 = scmp.ne.s32.totalorder %s605, %s606
      %p618 = scmp.eq.s32.totalorder %s113, 1
      %p619 = por %p617, %p618
      %p621 = scmp.ne.s32.totalorder %s606, %s620
      %p622 = scmp.eq.s32.totalorder %s113, 0
      %p623 = por %p621, %p622
      %s625 = sadd.s32 %s624, 1
      %p628 = scmp.eq.s32.totalorder %s107, 1
      %p629 = scmp.ne.s32.totalorder %s624, %s626
      %p630 = scmp.eq.s32.totalorder %s107, 0
      %p631 = por %p629, %p630
      %p632 = scmp.ne.s32.totalorder %s624, %s626
      %p633 = scmp.eq.s32.totalorder %s112, 1
      %p634 = por %p632, %p633
      %p635 = scmp.ne.s32.totalorder %s626, %s627
      %p636 = scmp.eq.s32.totalorder %s112, 0
      %p637 = por %p635, %p636
      %p638 = scmp.ne.s32.totalorder %s626, %s627
      %p639 = scmp.eq.s32.totalorder %s113, 1
      %p640 = por %p638, %p639
      %p642 = scmp.ne.s32.totalorder %s627, %s641
      %p643 = scmp.eq.s32.totalorder %s113, 0
      %p644 = por %p642, %p643
      %s646 = sadd.s32 %s645, 1
      %p649 = scmp.eq.s32.totalorder %s107, 1
      %p650 = scmp.ne.s32.totalorder %s645, %s647
      %p651 = scmp.eq.s32.totalorder %s107, 0
      %p652 = por %p650, %p651
      %p653 = scmp.ne.s32.totalorder %s645, %s647
      %p654 = scmp.eq.s32.totalorder %s112, 1
      %p655 = por %p653, %p654
      %p656 = scmp.ne.s32.totalorder %s647, %s648
      %p657 = scmp.eq.s32.totalorder %s112, 0
      %p658 = por %p656, %p657
      %p659 = scmp.ne.s32.totalorder %s647, %s648
      %p660 = scmp.eq.s32.totalorder %s113, 1
      %p661 = por %p659, %p660
      %p663 = scmp.ne.s32.totalorder %s648, %s662
      %p664 = scmp.eq.s32.totalorder %s113, 0
      %p665 = por %p663, %p664
      %s667 = sadd.s32 %s666, 1
      %p670 = scmp.eq.s32.totalorder %s107, 1
      %p671 = scmp.ne.s32.totalorder %s666, %s668
      %p672 = scmp.eq.s32.totalorder %s107, 0
      %p673 = por %p671, %p672
      %p674 = scmp.ne.s32.totalorder %s666, %s668
      %p675 = scmp.eq.s32.totalorder %s112, 1
      %p676 = por %p674, %p675
      %p677 = scmp.ne.s32.totalorder %s668, %s669
      %p678 = scmp.eq.s32.totalorder %s112, 0
      %p679 = por %p677, %p678
      %p680 = scmp.ne.s32.totalorder %s668, %s669
      %p681 = scmp.eq.s32.totalorder %s113, 1
      %p682 = por %p680, %p681
      %p684 = scmp.ne.s32.totalorder %s669, %s683
      %p685 = scmp.eq.s32.totalorder %s113, 0
      %p686 = por %p684, %p685
      %s688 = sadd.s32 %s687, 1
      %p691 = scmp.eq.s32.totalorder %s107, 1
      %p692 = scmp.ne.s32.totalorder %s687, %s689
      %p693 = scmp.eq.s32.totalorder %s107, 0
      %p694 = por %p692, %p693
      %p695 = scmp.ne.s32.totalorder %s687, %s689
      %p696 = scmp.eq.s32.totalorder %s112, 1
      %p697 = por %p695, %p696
      %p698 = scmp.ne.s32.totalorder %s689, %s690
      %p699 = scmp.eq.s32.totalorder %s112, 0
      %p700 = por %p698, %p699
      %p701 = scmp.ne.s32.totalorder %s689, %s690
      %p702 = scmp.eq.s32.totalorder %s113, 1
      %p703 = por %p701, %p702
      %p705 = scmp.ne.s32.totalorder %s690, %s704
      %p706 = scmp.eq.s32.totalorder %s113, 0
      %p707 = por %p705, %p706
      %s709 = sadd.s32 %s708, 1
      %p712 = scmp.eq.s32.totalorder %s107, 1
      %p713 = scmp.ne.s32.totalorder %s708, %s710
      %p714 = scmp.eq.s32.totalorder %s107, 0
      %p715 = por %p713, %p714
      %p716 = scmp.ne.s32.totalorder %s708, %s710
      %p717 = scmp.eq.s32.totalorder %s112, 1
      %p718 = por %p716, %p717
      %p719 = scmp.ne.s32.totalorder %s710, %s711
      %p720 = scmp.eq.s32.totalorder %s112, 0
      %p721 = por %p719, %p720
      %p722 = scmp.ne.s32.totalorder %s710, %s711
      %p723 = scmp.eq.s32.totalorder %s113, 1
      %p724 = por %p722, %p723
      %p726 = scmp.ne.s32.totalorder %s711, %s725
      %p727 = scmp.eq.s32.totalorder %s113, 0
      %p728 = por %p726, %p727
      %s730 = sadd.s32 %s729, 1
      %p733 = scmp.eq.s32.totalorder %s107, 1
      %p734 = scmp.ne.s32.totalorder %s729, %s731
      %p735 = scmp.eq.s32.totalorder %s107, 0
      %p736 = por %p734, %p735
      %p737 = scmp.ne.s32.totalorder %s729, %s731
      %p738 = scmp.eq.s32.totalorder %s112, 1
      %p739 = por %p737, %p738
      %p740 = scmp.ne.s32.totalorder %s731, %s732
      %p741 = scmp.eq.s32.totalorder %s112, 0
      %p742 = por %p740, %p741
      %p743 = scmp.ne.s32.totalorder %s731, %s732
      %p744 = scmp.eq.s32.totalorder %s113, 1
      %p745 = por %p743, %p744
      %p747 = scmp.ne.s32.totalorder %s732, %s746
      %p748 = scmp.eq.s32.totalorder %s113, 0
      %p749 = por %p747, %p748
      %s751 = sadd.s32 %s750, 1
      %p754 = scmp.eq.s32.totalorder %s107, 1
      %p755 = scmp.ne.s32.totalorder %s750, %s752
      %p756 = scmp.eq.s32.totalorder %s107, 0
      %p757 = por %p755, %p756
      %p758 = scmp.ne.s32.totalorder %s750, %s752
      %p759 = scmp.eq.s32.totalorder %s112, 1
      %p760 = por %p758, %p759
      %p761 = scmp.ne.s32.totalorder %s752, %s753
      %p762 = scmp.eq.s32.totalorder %s112, 0
      %p763 = por %p761, %p762
      %p764 = scmp.ne.s32.totalorder %s752, %s753
      %p765 = scmp.eq.s32.totalorder %s113, 1
      %p766 = por %p764, %p765
      %p768 = scmp.ne.s32.totalorder %s753, %s767
      %p769 = scmp.eq.s32.totalorder %s113, 0
      %p770 = por %p768, %p769
      %s772 = sadd.s32 %s771, 1
      %p775 = scmp.eq.s32.totalorder %s107, 1
      %p776 = scmp.ne.s32.totalorder %s771, %s773
      %p777 = scmp.eq.s32.totalorder %s107, 0
      %p778 = por %p776, %p777
      %p779 = scmp.ne.s32.totalorder %s771, %s773
      %p780 = scmp.eq.s32.totalorder %s112, 1
      %p781 = por %p779, %p780
      %p782 = scmp.ne.s32.totalorder %s773, %s774
      %p783 = scmp.eq.s32.totalorder %s112, 0
      %p784 = por %p782, %p783
      %p785 = scmp.ne.s32.totalorder %s773, %s774
      %p786 = scmp.eq.s32.totalorder %s113, 1
      %p787 = por %p785, %p786
      %p789 = scmp.ne.s32.totalorder %s774, %s788
      %p790 = scmp.eq.s32.totalorder %s113, 0
      %p791 = por %p789, %p790
      %s793 = sadd.s32 %s792, 1
      %p796 = scmp.eq.s32.totalorder %s107, 1
      %p797 = scmp.ne.s32.totalorder %s792, %s794
      %p798 = scmp.eq.s32.totalorder %s107, 0
      %p799 = por %p797, %p798
      %p800 = scmp.ne.s32.totalorder %s792, %s794
      %p801 = scmp.eq.s32.totalorder %s112, 1
      %p802 = por %p800, %p801
      %p803 = scmp.ne.s32.totalorder %s794, %s795
      %p804 = scmp.eq.s32.totalorder %s112, 0
      %p805 = por %p803, %p804
      %p806 = scmp.ne.s32.totalorder %s794, %s795
      %p807 = scmp.eq.s32.totalorder %s113, 1
      %p808 = por %p806, %p807
      %p810 = scmp.ne.s32.totalorder %s795, %s809
      %p811 = scmp.eq.s32.totalorder %s113, 0
      %p812 = por %p810, %p811
      %s814 = sadd.s32 %s813, 1
      %p817 = scmp.eq.s32.totalorder %s107, 1
      %p818 = scmp.ne.s32.totalorder %s813, %s815
      %p819 = scmp.eq.s32.totalorder %s107, 0
      %p820 = por %p818, %p819
      %p821 = scmp.ne.s32.totalorder %s813, %s815
      %p822 = scmp.eq.s32.totalorder %s112, 1
      %p823 = por %p821, %p822
      %p824 = scmp.ne.s32.totalorder %s815, %s816
      %p825 = scmp.eq.s32.totalorder %s112, 0
      %p826 = por %p824, %p825
      %p827 = scmp.ne.s32.totalorder %s815, %s816
      %p828 = scmp.eq.s32.totalorder %s113, 1
      %p829 = por %p827, %p828
      %p831 = scmp.ne.s32.totalorder %s816, %s830
      %p832 = scmp.eq.s32.totalorder %s113, 0
      %p833 = por %p831, %p832
      %s835 = sadd.s32 %s834, 1
      %p838 = scmp.eq.s32.totalorder %s107, 1
      %p839 = scmp.ne.s32.totalorder %s834, %s836
      %p840 = scmp.eq.s32.totalorder %s107, 0
      %p841 = por %p839, %p840
      %p842 = scmp.ne.s32.totalorder %s834, %s836
      %p843 = scmp.eq.s32.totalorder %s112, 1
      %p844 = por %p842, %p843
      %p845 = scmp.ne.s32.totalorder %s836, %s837
      %p846 = scmp.eq.s32.totalorder %s112, 0
      %p847 = por %p845, %p846
      %p848 = scmp.ne.s32.totalorder %s836, %s837
      %p849 = scmp.eq.s32.totalorder %s113, 1
      %p850 = por %p848, %p849
      %p852 = scmp.ne.s32.totalorder %s837, %s851
      %p853 = scmp.eq.s32.totalorder %s113, 0
      %p854 = por %p852, %p853
      %s856 = sadd.s32 %s855, 1
      %p859 = scmp.eq.s32.totalorder %s107, 1
      %p860 = scmp.ne.s32.totalorder %s855, %s857
      %p861 = scmp.eq.s32.totalorder %s107, 0
      %p862 = por %p860, %p861
      %p863 = scmp.ne.s32.totalorder %s855, %s857
      %p864 = scmp.eq.s32.totalorder %s112, 1
      %p865 = por %p863, %p864
      %p866 = scmp.ne.s32.totalorder %s857, %s858
      %p867 = scmp.eq.s32.totalorder %s112, 0
      %p868 = por %p866, %p867
      %p869 = scmp.ne.s32.totalorder %s857, %s858
      %p870 = scmp.eq.s32.totalorder %s113, 1
      %p871 = por %p869, %p870
      %p873 = scmp.ne.s32.totalorder %s858, %s872
      %p874 = scmp.eq.s32.totalorder %s113, 0
      %p875 = por %p873, %p874
      %s877 = sadd.s32 %s876, 1
      %p880 = scmp.eq.s32.totalorder %s107, 1
      %p881 = scmp.ne.s32.totalorder %s876, %s878
      %p882 = scmp.eq.s32.totalorder %s107, 0
      %p883 = por %p881, %p882
      %p884 = scmp.ne.s32.totalorder %s876, %s878
      %p885 = scmp.eq.s32.totalorder %s112, 1
      %p886 = por %p884, %p885
      %p887 = scmp.ne.s32.totalorder %s878, %s879
      %p888 = scmp.eq.s32.totalorder %s112, 0
      %p889 = por %p887, %p888
      %p890 = scmp.ne.s32.totalorder %s878, %s879
      %p891 = scmp.eq.s32.totalorder %s113, 1
      %p892 = por %p890, %p891
      %p894 = scmp.ne.s32.totalorder %s879, %s893
      %p895 = scmp.eq.s32.totalorder %s113, 0
      %p896 = por %p894, %p895
      %s898 = sadd.s32 %s897, 1
      %p901 = scmp.eq.s32.totalorder %s107, 1
      %p902 = scmp.ne.s32.totalorder %s897, %s899
      %p903 = scmp.eq.s32.totalorder %s107, 0
      %p904 = por %p902, %p903
      %p905 = scmp.ne.s32.totalorder %s897, %s899
      %p906 = scmp.eq.s32.totalorder %s112, 1
      %p907 = por %p905, %p906
      %p908 = scmp.ne.s32.totalorder %s899, %s900
      %p909 = scmp.eq.s32.totalorder %s112, 0
      %p910 = por %p908, %p909
      %p911 = scmp.ne.s32.totalorder %s899, %s900
      %p912 = scmp.eq.s32.totalorder %s113, 1
      %p913 = por %p911, %p912
      %p915 = scmp.ne.s32.totalorder %s900, %s914
      %p916 = scmp.eq.s32.totalorder %s113, 0
      %p917 = por %p915, %p916
      %s919 = sadd.s32 %s918, 1
      %p922 = scmp.eq.s32.totalorder %s107, 1
      %p923 = scmp.ne.s32.totalorder %s918, %s920
      %p924 = scmp.eq.s32.totalorder %s107, 0
      %p925 = por %p923, %p924
      %p926 = scmp.ne.s32.totalorder %s918, %s920
      %p927 = scmp.eq.s32.totalorder %s112, 1
      %p928 = por %p926, %p927
      %p929 = scmp.ne.s32.totalorder %s920, %s921
      %p930 = scmp.eq.s32.totalorder %s112, 0
      %p931 = por %p929, %p930
      %p932 = scmp.ne.s32.totalorder %s920, %s921
      %p933 = scmp.eq.s32.totalorder %s113, 1
      %p934 = por %p932, %p933
      %p936 = scmp.ne.s32.totalorder %s921, %s935
      %p937 = scmp.eq.s32.totalorder %s113, 0
      %p938 = por %p936, %p937
      %s940 = sadd.s32 %s939, 1
      %p943 = scmp.eq.s32.totalorder %s107, 1
      %p944 = scmp.ne.s32.totalorder %s939, %s941
      %p945 = scmp.eq.s32.totalorder %s107, 0
      %p946 = por %p944, %p945
      %p947 = scmp.ne.s32.totalorder %s939, %s941
      %p948 = scmp.eq.s32.totalorder %s112, 1
      %p949 = por %p947, %p948
      %p950 = scmp.ne.s32.totalorder %s941, %s942
      %p951 = scmp.eq.s32.totalorder %s112, 0
      %p952 = por %p950, %p951
      %p953 = scmp.ne.s32.totalorder %s941, %s942
      %p954 = scmp.eq.s32.totalorder %s113, 1
      %p955 = por %p953, %p954
      %p957 = scmp.ne.s32.totalorder %s942, %s956
      %p958 = scmp.eq.s32.totalorder %s113, 0
      %p959 = por %p957, %p958
      %s961 = sadd.s32 %s960, 1
      %p964 = scmp.eq.s32.totalorder %s107, 1
      %p965 = scmp.ne.s32.totalorder %s960, %s962
      %p966 = scmp.eq.s32.totalorder %s107, 0
      %p967 = por %p965, %p966
      %p968 = scmp.ne.s32.totalorder %s960, %s962
      %p969 = scmp.eq.s32.totalorder %s112, 1
      %p970 = por %p968, %p969
      %p971 = scmp.ne.s32.totalorder %s962, %s963
      %p972 = scmp.eq.s32.totalorder %s112, 0
      %p973 = por %p971, %p972
      %p974 = scmp.ne.s32.totalorder %s962, %s963
      %p975 = scmp.eq.s32.totalorder %s113, 1
      %p976 = por %p974, %p975
      %p978 = scmp.ne.s32.totalorder %s963, %s977
      %p979 = scmp.eq.s32.totalorder %s113, 0
      %p980 = por %p978, %p979
      %s982 = sadd.s32 %s981, 1
      %p985 = scmp.eq.s32.totalorder %s107, 1
      %p986 = scmp.ne.s32.totalorder %s981, %s983
      %p987 = scmp.eq.s32.totalorder %s107, 0
      %p988 = por %p986, %p987
      %p989 = scmp.ne.s32.totalorder %s981, %s983
      %p990 = scmp.eq.s32.totalorder %s112, 1
      %p991 = por %p989, %p990
      %p992 = scmp.ne.s32.totalorder %s983, %s984
      %p993 = scmp.eq.s32.totalorder %s112, 0
      %p994 = por %p992, %p993
      %p995 = scmp.ne.s32.totalorder %s983, %s984
      %p996 = scmp.eq.s32.totalorder %s113, 1
      %p997 = por %p995, %p996
      %p999 = scmp.ne.s32.totalorder %s984, %s998
      %p1000 = scmp.eq.s32.totalorder %s113, 0
      %p1001 = por %p999, %p1000
      %s1003 = sadd.s32 %s1002, 1
      %p1006 = scmp.eq.s32.totalorder %s107, 1
      %p1007 = scmp.ne.s32.totalorder %s1002, %s1004
      %p1008 = scmp.eq.s32.totalorder %s107, 0
      %p1009 = por %p1007, %p1008
      %p1010 = scmp.ne.s32.totalorder %s1002, %s1004
      %p1011 = scmp.eq.s32.totalorder %s112, 1
      %p1012 = por %p1010, %p1011
      %p1013 = scmp.ne.s32.totalorder %s1004, %s1005
      %p1014 = scmp.eq.s32.totalorder %s112, 0
      %p1015 = por %p1013, %p1014
      %p1016 = scmp.ne.s32.totalorder %s1004, %s1005
      %p1017 = scmp.eq.s32.totalorder %s113, 1
      %p1018 = por %p1016, %p1017
      %p1020 = scmp.ne.s32.totalorder %s1005, %s1019
      %p1021 = scmp.eq.s32.totalorder %s113, 0
      %p1022 = por %p1020, %p1021
      %s1023 = ssub.s32 %s107, %s114
      %p1024 = scmp.eq.s32.totalorder %s1023, 0
      %s1026 = sadd.s32 %s1025, 1
      %s1027 = scalar_select %p1024, %s1025, %s1026
      %p1030 = pneg %p1024
      %p1031 = scmp.eq.s32.totalorder %s107, 1
      %p1032 = por %p1030, %p1031
      %p1033 = scmp.ne.s32.totalorder %s1025, %s1028
      %p1034 = scmp.eq.s32.totalorder %s107, 0
      %p1035 = por %p1033, %p1034
      %p1036 = scmp.ne.s32.totalorder %s1025, %s1028
      %p1037 = scmp.eq.s32.totalorder %s112, 1
      %p1038 = por %p1036, %p1037
      %p1039 = scmp.ne.s32.totalorder %s1028, %s1029
      %p1040 = scmp.eq.s32.totalorder %s112, 0
      %p1041 = por %p1039, %p1040
      %p1042 = scmp.ne.s32.totalorder %s1028, %s1029
      %p1043 = scmp.eq.s32.totalorder %s113, 1
      %p1044 = por %p1042, %p1043
      %p1046 = scmp.ne.s32.totalorder %s1029, %s1045
      %p1047 = scmp.eq.s32.totalorder %s113, 0
      %p1048 = por %p1046, %p1047
      %p1049 = scmp.le.s32.totalorder 1, %s107
      %p1050 = scmp.lt.s32.totalorder %s107, 3
      %p1051 = pnand %p1049, %p1050
      %p1052 = pneg %p1051
      // Predicated region
      $region9: #{complete_model_forward.1} parent=5 // pred_check
        _
      $region10: #{complete_model_forward.1} parent=5 // pred_check_branch
        %1054 = sbr.rel (%p1051) target = $region12
      $region11: #{complete_model_forward.1} parent=5 // pred_region
        %s1055 = ssub.s32 %s107, 1
        // Predicated region
        $region13: #{complete_model_forward.1} parent=11 // pred_check
          %p1056 = pneg %p154
        $region14: #{complete_model_forward.1} parent=11 // pred_check_branch
          %1058 = sbr.rel (%p1056) target = $region16
        $region15: #{complete_model_forward.1} parent=11 // pred_region
          %1060 = vsyncadd [#allocation4], 0
          %s1061 = sshll.u32 %s3, 4
          %s1062 = int_to_ptr.hbm [resolvable:$true] %s1061
          %s1063 = sshll.u32 [#allocation3], 4
          %s1064 = int_to_ptr.vmem [resolvable:$true] %s1063
          %1069 = dma.hbm_to_vmem [thread:$0]  %s1062, 7168, %s1064, [#allocation4], 64, 64, 4
        $region16: #{complete_model_forward.1} parent=11 // pred_fallthru
          _
        // Predicated region
        $region17: #{complete_model_forward.1} parent=11 // pred_check
          %p1070 = pneg %p175
        $region18: #{complete_model_forward.1} parent=11 // pred_check_branch
          %1072 = sbr.rel (%p1070) target = $region20
        $region19: #{complete_model_forward.1} parent=11 // pred_region
          _
        $region20: #{complete_model_forward.1} parent=11 // pred_fallthru
          _
        // Predicated region
        $region21: #{complete_model_forward.1} parent=11 // pred_check
          %p1073 = pneg %p196
        $region22: #{complete_model_forward.1} parent=11 // pred_check_branch
          %1075 = sbr.rel (%p1073) target = $region24
        $region23: #{complete_model_forward.1} parent=11 // pred_region
          %1077 = vsyncadd [#allocation7], 0
          %s1078 = sshll.u32 %s7, 4
          %s1079 = int_to_ptr.hbm [resolvable:$true] %s1078
          %s1080 = sshll.u32 [#allocation6], 4
          %s1081 = int_to_ptr.vmem [resolvable:$true] %s1080
          %1086 = dma.hbm_to_vmem [thread:$0]  %s1079, 3072, %s1081, [#allocation7], 64, 64, 4
        $region24: #{complete_model_forward.1} parent=11 // pred_fallthru
          _
        // Predicated region
        $region25: #{complete_model_forward.1} parent=11 // pred_check
          %p1087 = pneg %p217
        $region26: #{complete_model_forward.1} parent=11 // pred_check_branch
          %1089 = sbr.rel (%p1087) target = $region28
        $region27: #{complete_model_forward.1} parent=11 // pred_region
          _
        $region28: #{complete_model_forward.1} parent=11 // pred_fallthru
          _
        // Predicated region
        $region29: #{complete_model_forward.1} parent=11 // pred_check
          %p1090 = pneg %p238
        $region30: #{complete_model_forward.1} parent=11 // pred_check_branch
          %1092 = sbr.rel (%p1090) target = $region32
        $region31: #{complete_model_forward.1} parent=11 // pred_region
          %1094 = vsyncadd [#allocation7], 0
          %s1095 = sshll.u32 %s11, 4
          %s1096 = int_to_ptr.hbm [resolvable:$true] %s1095
          %s1097 = sshll.u32 [#allocation8], 4
          %s1098 = int_to_ptr.vmem [resolvable:$true] %s1097
          %1103 = dma.hbm_to_vmem [thread:$0]  %s1096, 3072, %s1098, [#allocation7], 64, 64, 4
        $region32: #{complete_model_forward.1} parent=11 // pred_fallthru
          _
        // Predicated region
        $region33: #{complete_model_forward.1} parent=11 // pred_check
          %p1104 = pneg %p259
        $region34: #{complete_model_forward.1} parent=11 // pred_check_branch
          %1106 = sbr.rel (%p1104) target = $region36
        $region35: #{complete_model_forward.1} parent=11 // pred_region
          _
        $region36: #{complete_model_forward.1} parent=11 // pred_fallthru
          _
        // Predicated region
        $region37: #{complete_model_forward.1} parent=11 // pred_check
          %p1107 = pneg %p280
        $region38: #{complete_model_forward.1} parent=11 // pred_check_branch
          %1109 = sbr.rel (%p1107) target = $region40
        $region39: #{complete_model_forward.1} parent=11 // pred_region
          %1111 = vsyncadd [#allocation10], 0
          %s1112 = sshll.u32 %s15, 4
          %s1113 = int_to_ptr.hbm [resolvable:$true] %s1112
          %s1114 = sshll.u32 [#allocation9], 4
          %s1115 = int_to_ptr.vmem [resolvable:$true] %s1114
          %1120 = dma.hbm_to_vmem [thread:$0]  %s1113, 3072, %s1115, [#allocation10], 64, 64, 4
        $region40: #{complete_model_forward.1} parent=11 // pred_fallthru
          _
        // Predicated region
        $region41: #{complete_model_forward.1} parent=11 // pred_check
          %p1121 = pneg %p301
        $region42: #{complete_model_forward.1} parent=11 // pred_check_branch
          %1123 = sbr.rel (%p1121) target = $region44
        $region43: #{complete_model_forward.1} parent=11 // pred_region
          _
        $region44: #{complete_model_forward.1} parent=11 // pred_fallthru
          _
        // Predicated region
        $region45: #{complete_model_forward.1} parent=11 // pred_check
          %p1124 = pneg %p322
        $region46: #{complete_model_forward.1} parent=11 // pred_check_branch
          %1126 = sbr.rel (%p1124) target = $region48
        $region47: #{complete_model_forward.1} parent=11 // pred_region
          %1128 = vsyncadd [#allocation10], 0
          %s1129 = sshll.u32 %s19, 4
          %s1130 = int_to_ptr.hbm [resolvable:$true] %s1129
          %s1131 = sshll.u32 [#allocation11], 4
          %s1132 = int_to_ptr.vmem [resolvable:$true] %s1131
          %1137 = dma.hbm_to_vmem [thread:$0]  %s1130, 3072, %s1132, [#allocation10], 64, 64, 4
        $region48: #{complete_model_forward.1} parent=11 // pred_fallthru
          _
        // Predicated region
        $region49: #{complete_model_forward.1} parent=11 // pred_check
          %p1138 = pneg %p343
        $region50: #{complete_model_forward.1} parent=11 // pred_check_branch
          %1140 = sbr.rel (%p1138) target = $region52
        $region51: #{complete_model_forward.1} parent=11 // pred_region
          _
        $region52: #{complete_model_forward.1} parent=11 // pred_fallthru
          _
        // Predicated region
        $region53: #{complete_model_forward.1} parent=11 // pred_check
          %p1141 = pneg %p364
        $region54: #{complete_model_forward.1} parent=11 // pred_check_branch
          %1143 = sbr.rel (%p1141) target = $region56
        $region55: #{complete_model_forward.1} parent=11 // pred_region
          %1145 = vsyncadd [#allocation13], 0
          %s1146 = sshll.u32 %s23, 4
          %s1147 = int_to_ptr.hbm [resolvable:$true] %s1146
          %s1148 = sshll.u32 [#allocation12], 4
          %s1149 = int_to_ptr.vmem [resolvable:$true] %s1148
          %1154 = dma.hbm_to_vmem [thread:$0]  %s1147, 3072, %s1149, [#allocation13], 64, 64, 4
        $region56: #{complete_model_forward.1} parent=11 // pred_fallthru
          _
        // Predicated region
        $region57: #{complete_model_forward.1} parent=11 // pred_check
          %p1155 = pneg %p385
        $region58: #{complete_model_forward.1} parent=11 // pred_check_branch
          %1157 = sbr.rel (%p1155) target = $region60
        $region59: #{complete_model_forward.1} parent=11 // pred_region
          _
        $region60: #{complete_model_forward.1} parent=11 // pred_fallthru
          _
        // Predicated region
        $region61: #{complete_model_forward.1} parent=11 // pred_check
          %p1158 = pneg %p406
        $region62: #{complete_model_forward.1} parent=11 // pred_check_branch
          %1160 = sbr.rel (%p1158) target = $region64
        $region63: #{complete_model_forward.1} parent=11 // pred_region
          %1162 = vsyncadd [#allocation13], 0
          %s1163 = sshll.u32 %s27, 4
          %s1164 = int_to_ptr.hbm [resolvable:$true] %s1163
          %s1165 = sshll.u32 [#allocation14], 4
          %s1166 = int_to_ptr.vmem [resolvable:$true] %s1165
          %1171 = dma.hbm_to_vmem [thread:$0]  %s1164, 3072, %s1166, [#allocation13], 64, 64, 4
        $region64: #{complete_model_forward.1} parent=11 // pred_fallthru
          _
        // Predicated region
        $region65: #{complete_model_forward.1} parent=11 // pred_check
          %p1172 = pneg %p427
        $region66: #{complete_model_forward.1} parent=11 // pred_check_branch
          %1174 = sbr.rel (%p1172) target = $region68
        $region67: #{complete_model_forward.1} parent=11 // pred_region
          _
        $region68: #{complete_model_forward.1} parent=11 // pred_fallthru
          _
        // Predicated region
        $region69: #{complete_model_forward.1} parent=11 // pred_check
          %p1175 = pneg %p448
        $region70: #{complete_model_forward.1} parent=11 // pred_check_branch
          %1177 = sbr.rel (%p1175) target = $region72
        $region71: #{complete_model_forward.1} parent=11 // pred_region
          %1179 = vsyncadd [#allocation16], 0
          %s1180 = sshll.u32 %s31, 4
          %s1181 = int_to_ptr.hbm [resolvable:$true] %s1180
          %s1182 = sshll.u32 [#allocation15], 4
          %s1183 = int_to_ptr.vmem [resolvable:$true] %s1182
          %1188 = dma.hbm_to_vmem [thread:$0]  %s1181, 1024, %s1183, [#allocation16], 64, 64, 4
        $region72: #{complete_model_forward.1} parent=11 // pred_fallthru
          _
        // Predicated region
        $region73: #{complete_model_forward.1} parent=11 // pred_check
          %p1189 = pneg %p469
        $region74: #{complete_model_forward.1} parent=11 // pred_check_branch
          %1191 = sbr.rel (%p1189) target = $region76
        $region75: #{complete_model_forward.1} parent=11 // pred_region
          _
        $region76: #{complete_model_forward.1} parent=11 // pred_fallthru
          _
        // Predicated region
        $region77: #{complete_model_forward.1} parent=11 // pred_check
          %p1192 = pneg %p490
        $region78: #{complete_model_forward.1} parent=11 // pred_check_branch
          %1194 = sbr.rel (%p1192) target = $region80
        $region79: #{complete_model_forward.1} parent=11 // pred_region
          %1196 = vsyncadd [#allocation16], 0
          %s1197 = sshll.u32 %s35, 4
          %s1198 = int_to_ptr.hbm [resolvable:$true] %s1197
          %s1199 = sshll.u32 [#allocation17], 4
          %s1200 = int_to_ptr.vmem [resolvable:$true] %s1199
          %1205 = dma.hbm_to_vmem [thread:$0]  %s1198, 3072, %s1200, [#allocation16], 64, 64, 4
        $region80: #{complete_model_forward.1} parent=11 // pred_fallthru
          _
        // Predicated region
        $region81: #{complete_model_forward.1} parent=11 // pred_check
          %p1206 = pneg %p511
        $region82: #{complete_model_forward.1} parent=11 // pred_check_branch
          %1208 = sbr.rel (%p1206) target = $region84
        $region83: #{complete_model_forward.1} parent=11 // pred_region
          _
        $region84: #{complete_model_forward.1} parent=11 // pred_fallthru
          _
        // Predicated region
        $region85: #{complete_model_forward.1} parent=11 // pred_check
          %p1209 = pneg %p532
        $region86: #{complete_model_forward.1} parent=11 // pred_check_branch
          %1211 = sbr.rel (%p1209) target = $region88
        $region87: #{complete_model_forward.1} parent=11 // pred_region
          %1213 = vsyncadd [#allocation19], 0
          %s1214 = sshll.u32 %s39, 4
          %s1215 = int_to_ptr.hbm [resolvable:$true] %s1214
          %s1216 = sshll.u32 [#allocation18], 4
          %s1217 = int_to_ptr.vmem [resolvable:$true] %s1216
          %1222 = dma.hbm_to_vmem [thread:$0]  %s1215, 3072, %s1217, [#allocation19], 64, 64, 4
        $region88: #{complete_model_forward.1} parent=11 // pred_fallthru
          _
        // Predicated region
        $region89: #{complete_model_forward.1} parent=11 // pred_check
          %p1223 = pneg %p553
        $region90: #{complete_model_forward.1} parent=11 // pred_check_branch
          %1225 = sbr.rel (%p1223) target = $region92
        $region91: #{complete_model_forward.1} parent=11 // pred_region
          _
        $region92: #{complete_model_forward.1} parent=11 // pred_fallthru
          _
        // Predicated region
        $region93: #{complete_model_forward.1} parent=11 // pred_check
          %p1226 = pneg %p574
        $region94: #{complete_model_forward.1} parent=11 // pred_check_branch
          %1228 = sbr.rel (%p1226) target = $region96
        $region95: #{complete_model_forward.1} parent=11 // pred_region
          %1230 = vsyncadd [#allocation19], 0
          %s1231 = sshll.u32 %s43, 4
          %s1232 = int_to_ptr.hbm [resolvable:$true] %s1231
          %s1233 = sshll.u32 [#allocation20], 4
          %s1234 = int_to_ptr.vmem [resolvable:$true] %s1233
          %1239 = dma.hbm_to_vmem [thread:$0]  %s1232, 3072, %s1234, [#allocation19], 64, 64, 4
        $region96: #{complete_model_forward.1} parent=11 // pred_fallthru
          _
        // Predicated region
        $region97: #{complete_model_forward.1} parent=11 // pred_check
          %p1240 = pneg %p595
        $region98: #{complete_model_forward.1} parent=11 // pred_check_branch
          %1242 = sbr.rel (%p1240) target = $region100
        $region99: #{complete_model_forward.1} parent=11 // pred_region
          _
        $region100: #{complete_model_forward.1} parent=11 // pred_fallthru
          _
        // Predicated region
        $region101: #{complete_model_forward.1} parent=11 // pred_check
          %p1243 = pneg %p616
        $region102: #{complete_model_forward.1} parent=11 // pred_check_branch
          %1245 = sbr.rel (%p1243) target = $region104
        $region103: #{complete_model_forward.1} parent=11 // pred_region
          %1247 = vsyncadd [#allocation22], 0
          %s1248 = sshll.u32 %s47, 4
          %s1249 = int_to_ptr.hbm [resolvable:$true] %s1248
          %s1250 = sshll.u32 [#allocation21], 4
          %s1251 = int_to_ptr.vmem [resolvable:$true] %s1250
          %1256 = dma.hbm_to_vmem [thread:$0]  %s1249, 3072, %s1251, [#allocation22], 64, 64, 4
        $region104: #{complete_model_forward.1} parent=11 // pred_fallthru
          _
        // Predicated region
        $region105: #{complete_model_forward.1} parent=11 // pred_check
          %p1257 = pneg %p637
        $region106: #{complete_model_forward.1} parent=11 // pred_check_branch
          %1259 = sbr.rel (%p1257) target = $region108
        $region107: #{complete_model_forward.1} parent=11 // pred_region
          _
        $region108: #{complete_model_forward.1} parent=11 // pred_fallthru
          _
        // Predicated region
        $region109: #{complete_model_forward.1} parent=11 // pred_check
          %p1260 = pneg %p658
        $region110: #{complete_model_forward.1} parent=11 // pred_check_branch
          %1262 = sbr.rel (%p1260) target = $region112
        $region111: #{complete_model_forward.1} parent=11 // pred_region
          %1264 = vsyncadd [#allocation22], 0
          %s1265 = sshll.u32 %s51, 4
          %s1266 = int_to_ptr.hbm [resolvable:$true] %s1265
          %s1267 = sshll.u32 [#allocation23], 4
          %s1268 = int_to_ptr.vmem [resolvable:$true] %s1267
          %1273 = dma.hbm_to_vmem [thread:$0]  %s1266, 1024, %s1268, [#allocation22], 64, 64, 4
        $region112: #{complete_model_forward.1} parent=11 // pred_fallthru
          _
        // Predicated region
        $region113: #{complete_model_forward.1} parent=11 // pred_check
          %p1274 = pneg %p679
        $region114: #{complete_model_forward.1} parent=11 // pred_check_branch
          %1276 = sbr.rel (%p1274) target = $region116
        $region115: #{complete_model_forward.1} parent=11 // pred_region
          _
        $region116: #{complete_model_forward.1} parent=11 // pred_fallthru
          _
        // Predicated region
        $region117: #{complete_model_forward.1} parent=11 // pred_check
          %p1277 = pneg %p700
        $region118: #{complete_model_forward.1} parent=11 // pred_check_branch
          %1279 = sbr.rel (%p1277) target = $region120
        $region119: #{complete_model_forward.1} parent=11 // pred_region
          %1281 = vsyncadd [#allocation25], 0
          %s1282 = sshll.u32 %s55, 4
          %s1283 = int_to_ptr.hbm [resolvable:$true] %s1282
          %s1284 = sshll.u32 [#allocation24], 4
          %s1285 = int_to_ptr.vmem [resolvable:$true] %s1284
          %1290 = dma.hbm_to_vmem [thread:$0]  %s1283, 3072, %s1285, [#allocation25], 64, 64, 4
        $region120: #{complete_model_forward.1} parent=11 // pred_fallthru
          _
        // Predicated region
        $region121: #{complete_model_forward.1} parent=11 // pred_check
          %p1291 = pneg %p721
        $region122: #{complete_model_forward.1} parent=11 // pred_check_branch
          %1293 = sbr.rel (%p1291) target = $region124
        $region123: #{complete_model_forward.1} parent=11 // pred_region
          _
        $region124: #{complete_model_forward.1} parent=11 // pred_fallthru
          _
        // Predicated region
        $region125: #{complete_model_forward.1} parent=11 // pred_check
          %p1294 = pneg %p742
        $region126: #{complete_model_forward.1} parent=11 // pred_check_branch
          %1296 = sbr.rel (%p1294) target = $region128
        $region127: #{complete_model_forward.1} parent=11 // pred_region
          %1298 = vsyncadd [#allocation25], 0
          %s1299 = sshll.u32 %s59, 4
          %s1300 = int_to_ptr.hbm [resolvable:$true] %s1299
          %s1301 = sshll.u32 [#allocation26], 4
          %s1302 = int_to_ptr.vmem [resolvable:$true] %s1301
          %1307 = dma.hbm_to_vmem [thread:$0]  %s1300, 3072, %s1302, [#allocation25], 64, 64, 4
        $region128: #{complete_model_forward.1} parent=11 // pred_fallthru
          _
        // Predicated region
        $region129: #{complete_model_forward.1} parent=11 // pred_check
          %p1308 = pneg %p763
        $region130: #{complete_model_forward.1} parent=11 // pred_check_branch
          %1310 = sbr.rel (%p1308) target = $region132
        $region131: #{complete_model_forward.1} parent=11 // pred_region
          _
        $region132: #{complete_model_forward.1} parent=11 // pred_fallthru
          _
        // Predicated region
        $region133: #{complete_model_forward.1} parent=11 // pred_check
          %p1311 = pneg %p784
        $region134: #{complete_model_forward.1} parent=11 // pred_check_branch
          %1313 = sbr.rel (%p1311) target = $region136
        $region135: #{complete_model_forward.1} parent=11 // pred_region
          %1315 = vsyncadd [#allocation28], 0
          %s1316 = sshll.u32 %s63, 4
          %s1317 = int_to_ptr.hbm [resolvable:$true] %s1316
          %s1318 = sshll.u32 [#allocation27], 4
          %s1319 = int_to_ptr.vmem [resolvable:$true] %s1318
          %1324 = dma.hbm_to_vmem [thread:$0]  %s1317, 3072, %s1319, [#allocation28], 64, 64, 4
        $region136: #{complete_model_forward.1} parent=11 // pred_fallthru
          _
        // Predicated region
        $region137: #{complete_model_forward.1} parent=11 // pred_check
          %p1325 = pneg %p805
        $region138: #{complete_model_forward.1} parent=11 // pred_check_branch
          %1327 = sbr.rel (%p1325) target = $region140
        $region139: #{complete_model_forward.1} parent=11 // pred_region
          _
        $region140: #{complete_model_forward.1} parent=11 // pred_fallthru
          _
        // Predicated region
        $region141: #{complete_model_forward.1} parent=11 // pred_check
          %p1328 = pneg %p826
        $region142: #{complete_model_forward.1} parent=11 // pred_check_branch
          %1330 = sbr.rel (%p1328) target = $region144
        $region143: #{complete_model_forward.1} parent=11 // pred_region
          %1332 = vsyncadd [#allocation28], 0
          %s1333 = sshll.u32 %s67, 4
          %s1334 = int_to_ptr.hbm [resolvable:$true] %s1333
          %s1335 = sshll.u32 [#allocation29], 4
          %s1336 = int_to_ptr.vmem [resolvable:$true] %s1335
          %1341 = dma.hbm_to_vmem [thread:$0]  %s1334, 3072, %s1336, [#allocation28], 64, 64, 4
        $region144: #{complete_model_forward.1} parent=11 // pred_fallthru
          _
        // Predicated region
        $region145: #{complete_model_forward.1} parent=11 // pred_check
          %p1342 = pneg %p847
        $region146: #{complete_model_forward.1} parent=11 // pred_check_branch
          %1344 = sbr.rel (%p1342) target = $region148
        $region147: #{complete_model_forward.1} parent=11 // pred_region
          _
        $region148: #{complete_model_forward.1} parent=11 // pred_fallthru
          _
        // Predicated region
        $region149: #{complete_model_forward.1} parent=11 // pred_check
          %p1345 = pneg %p868
        $region150: #{complete_model_forward.1} parent=11 // pred_check_branch
          %1347 = sbr.rel (%p1345) target = $region152
        $region151: #{complete_model_forward.1} parent=11 // pred_region
          %1349 = vsyncadd [#allocation31], 0
          %s1350 = sshll.u32 %s71, 4
          %s1351 = int_to_ptr.hbm [resolvable:$true] %s1350
          %s1352 = sshll.u32 [#allocation30], 4
          %s1353 = int_to_ptr.vmem [resolvable:$true] %s1352
          %1358 = dma.hbm_to_vmem [thread:$0]  %s1351, 1024, %s1353, [#allocation31], 64, 64, 4
        $region152: #{complete_model_forward.1} parent=11 // pred_fallthru
          _
        // Predicated region
        $region153: #{complete_model_forward.1} parent=11 // pred_check
          %p1359 = pneg %p889
        $region154: #{complete_model_forward.1} parent=11 // pred_check_branch
          %1361 = sbr.rel (%p1359) target = $region156
        $region155: #{complete_model_forward.1} parent=11 // pred_region
          _
        $region156: #{complete_model_forward.1} parent=11 // pred_fallthru
          _
        // Predicated region
        $region157: #{complete_model_forward.1} parent=11 // pred_check
          %p1362 = pneg %p910
        $region158: #{complete_model_forward.1} parent=11 // pred_check_branch
          %1364 = sbr.rel (%p1362) target = $region160
        $region159: #{complete_model_forward.1} parent=11 // pred_region
          %1366 = vsyncadd [#allocation31], 0
          %s1367 = sshll.u32 %s75, 4
          %s1368 = int_to_ptr.hbm [resolvable:$true] %s1367
          %s1369 = sshll.u32 [#allocation32], 4
          %s1370 = int_to_ptr.vmem [resolvable:$true] %s1369
          %1375 = dma.hbm_to_vmem [thread:$0]  %s1368, 3072, %s1370, [#allocation31], 64, 64, 4
        $region160: #{complete_model_forward.1} parent=11 // pred_fallthru
          _
        // Predicated region
        $region161: #{complete_model_forward.1} parent=11 // pred_check
          %p1376 = pneg %p931
        $region162: #{complete_model_forward.1} parent=11 // pred_check_branch
          %1378 = sbr.rel (%p1376) target = $region164
        $region163: #{complete_model_forward.1} parent=11 // pred_region
          _
        $region164: #{complete_model_forward.1} parent=11 // pred_fallthru
          _
        // Predicated region
        $region165: #{complete_model_forward.1} parent=11 // pred_check
          %p1379 = pneg %p952
        $region166: #{complete_model_forward.1} parent=11 // pred_check_branch
          %1381 = sbr.rel (%p1379) target = $region168
        $region167: #{complete_model_forward.1} parent=11 // pred_region
          %1383 = vsyncadd [#allocation34], 0
          %s1384 = sshll.u32 %s79, 4
          %s1385 = int_to_ptr.hbm [resolvable:$true] %s1384
          %s1386 = sshll.u32 [#allocation33], 4
          %s1387 = int_to_ptr.vmem [resolvable:$true] %s1386
          %1392 = dma.hbm_to_vmem [thread:$0]  %s1385, 3072, %s1387, [#allocation34], 64, 64, 4
        $region168: #{complete_model_forward.1} parent=11 // pred_fallthru
          _
        // Predicated region
        $region169: #{complete_model_forward.1} parent=11 // pred_check
          %p1393 = pneg %p973
        $region170: #{complete_model_forward.1} parent=11 // pred_check_branch
          %1395 = sbr.rel (%p1393) target = $region172
        $region171: #{complete_model_forward.1} parent=11 // pred_region
          _
        $region172: #{complete_model_forward.1} parent=11 // pred_fallthru
          _
        // Predicated region
        $region173: #{complete_model_forward.1} parent=11 // pred_check
          %p1396 = pneg %p994
        $region174: #{complete_model_forward.1} parent=11 // pred_check_branch
          %1398 = sbr.rel (%p1396) target = $region176
        $region175: #{complete_model_forward.1} parent=11 // pred_region
          _
        $region176: #{complete_model_forward.1} parent=11 // pred_fallthru
          _
        // Predicated region
        $region177: #{complete_model_forward.1} parent=11 // pred_check
          %p1399 = pneg %p1015
        $region178: #{complete_model_forward.1} parent=11 // pred_check_branch
          %1401 = sbr.rel (%p1399) target = $region180
        $region179: #{complete_model_forward.1} parent=11 // pred_region
          _
        $region180: #{complete_model_forward.1} parent=11 // pred_fallthru
          _
      $region12: #{complete_model_forward.1} parent=5 // pred_fallthru
        _
      %p1402 = scmp.lt.s32.totalorder %s107, 2
      // Predicated region
      $region181: #{complete_model_forward.1} parent=5 // pred_check
        %p1403 = pneg %p1402
      $region182: #{complete_model_forward.1} parent=5 // pred_check_branch
        %1405 = sbr.rel (%p1403) target = $region184
      $region183: #{complete_model_forward.1} parent=5 // pred_region
        // Predicated region
        $region185: #{complete_model_forward.1} parent=183 // pred_check
          %p1406 = pneg %p127
        $region186: #{complete_model_forward.1} parent=183 // pred_check_branch
          %1408 = sbr.rel (%p1406) target = $region188
        $region187: #{complete_model_forward.1} parent=183 // pred_region
          %p1409 = scmp.lt.s32.totalorder %s107, 1
          %s1410 = scalar_select %p1409, %s107, 1
          %s1411 = smul.addr %s1410, 8
          %s1412 = smul.addr %s1411, 8
          %s1413 = scalar_lea.vmem %s1, %s1412
        $region188: #{complete_model_forward.1} parent=183 // pred_fallthru
          _
      $region184: #{complete_model_forward.1} parent=5 // pred_fallthru
        _
      %p1414 = scmp.le.s32.totalorder 1, %s107
      %p1415 = scmp.lt.s32.totalorder %s107, 3
      %p1416 = pnand %p1414, %p1415
      %p1417 = pneg %p1416
      // Predicated region
      $region189: #{complete_model_forward.1} parent=5 // pred_check
        _
      $region190: #{complete_model_forward.1} parent=5 // pred_check_branch
        %1419 = sbr.rel (%p1416) target = $region192
      $region191: #{complete_model_forward.1} parent=5 // pred_region
        %s1420 = ssub.s32 %s107, 1
        // Predicated region
        $region193: #{complete_model_forward.1} parent=191 // pred_check
          %p1421 = pneg %p154
        $region194: #{complete_model_forward.1} parent=191 // pred_check_branch
          %1423 = sbr.rel (%p1421) target = $region196
        $region195: #{complete_model_forward.1} parent=191 // pred_region
          %1425 = dma.done [#allocation4], 7168
        $region196: #{complete_model_forward.1} parent=191 // pred_fallthru
          _
        // Predicated region
        $region197: #{complete_model_forward.1} parent=191 // pred_check
          %p1426 = pneg %p196
        $region198: #{complete_model_forward.1} parent=191 // pred_check_branch
          %1428 = sbr.rel (%p1426) target = $region200
        $region199: #{complete_model_forward.1} parent=191 // pred_region
          %1430 = dma.done [#allocation7], 3072
        $region200: #{complete_model_forward.1} parent=191 // pred_fallthru
          _
        // Predicated region
        $region201: #{complete_model_forward.1} parent=191 // pred_check
          %p1431 = pneg %p238
        $region202: #{complete_model_forward.1} parent=191 // pred_check_branch
          %1433 = sbr.rel (%p1431) target = $region204
        $region203: #{complete_model_forward.1} parent=191 // pred_region
          %1435 = dma.done [#allocation7], 3072
        $region204: #{complete_model_forward.1} parent=191 // pred_fallthru
          _
        // Predicated region
        $region205: #{complete_model_forward.1} parent=191 // pred_check
          %p1436 = pneg %p280
        $region206: #{complete_model_forward.1} parent=191 // pred_check_branch
          %1438 = sbr.rel (%p1436) target = $region208
        $region207: #{complete_model_forward.1} parent=191 // pred_region
          %1440 = dma.done [#allocation10], 3072
        $region208: #{complete_model_forward.1} parent=191 // pred_fallthru
          _
        // Predicated region
        $region209: #{complete_model_forward.1} parent=191 // pred_check
          %p1441 = pneg %p322
        $region210: #{complete_model_forward.1} parent=191 // pred_check_branch
          %1443 = sbr.rel (%p1441) target = $region212
        $region211: #{complete_model_forward.1} parent=191 // pred_region
          %1445 = dma.done [#allocation10], 3072
        $region212: #{complete_model_forward.1} parent=191 // pred_fallthru
          _
        // Predicated region
        $region213: #{complete_model_forward.1} parent=191 // pred_check
          %p1446 = pneg %p364
        $region214: #{complete_model_forward.1} parent=191 // pred_check_branch
          %1448 = sbr.rel (%p1446) target = $region216
        $region215: #{complete_model_forward.1} parent=191 // pred_region
          %1450 = dma.done [#allocation13], 3072
        $region216: #{complete_model_forward.1} parent=191 // pred_fallthru
          _
        // Predicated region
        $region217: #{complete_model_forward.1} parent=191 // pred_check
          %p1451 = pneg %p406
        $region218: #{complete_model_forward.1} parent=191 // pred_check_branch
          %1453 = sbr.rel (%p1451) target = $region220
        $region219: #{complete_model_forward.1} parent=191 // pred_region
          %1455 = dma.done [#allocation13], 3072
        $region220: #{complete_model_forward.1} parent=191 // pred_fallthru
          _
        // Predicated region
        $region221: #{complete_model_forward.1} parent=191 // pred_check
          %p1456 = pneg %p448
        $region222: #{complete_model_forward.1} parent=191 // pred_check_branch
          %1458 = sbr.rel (%p1456) target = $region224
        $region223: #{complete_model_forward.1} parent=191 // pred_region
          %1460 = dma.done [#allocation16], 1024
        $region224: #{complete_model_forward.1} parent=191 // pred_fallthru
          _
        // Predicated region
        $region225: #{complete_model_forward.1} parent=191 // pred_check
          %p1461 = pneg %p490
        $region226: #{complete_model_forward.1} parent=191 // pred_check_branch
          %1463 = sbr.rel (%p1461) target = $region228
        $region227: #{complete_model_forward.1} parent=191 // pred_region
          %1465 = dma.done [#allocation16], 3072
        $region228: #{complete_model_forward.1} parent=191 // pred_fallthru
          _
        // Predicated region
        $region229: #{complete_model_forward.1} parent=191 // pred_check
          %p1466 = pneg %p532
        $region230: #{complete_model_forward.1} parent=191 // pred_check_branch
          %1468 = sbr.rel (%p1466) target = $region232
        $region231: #{complete_model_forward.1} parent=191 // pred_region
          %1470 = dma.done [#allocation19], 3072
        $region232: #{complete_model_forward.1} parent=191 // pred_fallthru
          _
        // Predicated region
        $region233: #{complete_model_forward.1} parent=191 // pred_check
          %p1471 = pneg %p574
        $region234: #{complete_model_forward.1} parent=191 // pred_check_branch
          %1473 = sbr.rel (%p1471) target = $region236
        $region235: #{complete_model_forward.1} parent=191 // pred_region
          %1475 = dma.done [#allocation19], 3072
        $region236: #{complete_model_forward.1} parent=191 // pred_fallthru
          _
        // Predicated region
        $region237: #{complete_model_forward.1} parent=191 // pred_check
          %p1476 = pneg %p616
        $region238: #{complete_model_forward.1} parent=191 // pred_check_branch
          %1478 = sbr.rel (%p1476) target = $region240
        $region239: #{complete_model_forward.1} parent=191 // pred_region
          %1480 = dma.done [#allocation22], 3072
        $region240: #{complete_model_forward.1} parent=191 // pred_fallthru
          _
        // Predicated region
        $region241: #{complete_model_forward.1} parent=191 // pred_check
          %p1481 = pneg %p658
        $region242: #{complete_model_forward.1} parent=191 // pred_check_branch
          %1483 = sbr.rel (%p1481) target = $region244
        $region243: #{complete_model_forward.1} parent=191 // pred_region
          %1485 = dma.done [#allocation22], 1024
        $region244: #{complete_model_forward.1} parent=191 // pred_fallthru
          _
        // Predicated region
        $region245: #{complete_model_forward.1} parent=191 // pred_check
          %p1486 = pneg %p700
        $region246: #{complete_model_forward.1} parent=191 // pred_check_branch
          %1488 = sbr.rel (%p1486) target = $region248
        $region247: #{complete_model_forward.1} parent=191 // pred_region
          %1490 = dma.done [#allocation25], 3072
        $region248: #{complete_model_forward.1} parent=191 // pred_fallthru
          _
        // Predicated region
        $region249: #{complete_model_forward.1} parent=191 // pred_check
          %p1491 = pneg %p742
        $region250: #{complete_model_forward.1} parent=191 // pred_check_branch
          %1493 = sbr.rel (%p1491) target = $region252
        $region251: #{complete_model_forward.1} parent=191 // pred_region
          %1495 = dma.done [#allocation25], 3072
        $region252: #{complete_model_forward.1} parent=191 // pred_fallthru
          _
        // Predicated region
        $region253: #{complete_model_forward.1} parent=191 // pred_check
          %p1496 = pneg %p784
        $region254: #{complete_model_forward.1} parent=191 // pred_check_branch
          %1498 = sbr.rel (%p1496) target = $region256
        $region255: #{complete_model_forward.1} parent=191 // pred_region
          %1500 = dma.done [#allocation28], 3072
        $region256: #{complete_model_forward.1} parent=191 // pred_fallthru
          _
        // Predicated region
        $region257: #{complete_model_forward.1} parent=191 // pred_check
          %p1501 = pneg %p826
        $region258: #{complete_model_forward.1} parent=191 // pred_check_branch
          %1503 = sbr.rel (%p1501) target = $region260
        $region259: #{complete_model_forward.1} parent=191 // pred_region
          %1505 = dma.done [#allocation28], 3072
        $region260: #{complete_model_forward.1} parent=191 // pred_fallthru
          _
        // Predicated region
        $region261: #{complete_model_forward.1} parent=191 // pred_check
          %p1506 = pneg %p868
        $region262: #{complete_model_forward.1} parent=191 // pred_check_branch
          %1508 = sbr.rel (%p1506) target = $region264
        $region263: #{complete_model_forward.1} parent=191 // pred_region
          %1510 = dma.done [#allocation31], 1024
        $region264: #{complete_model_forward.1} parent=191 // pred_fallthru
          _
        // Predicated region
        $region265: #{complete_model_forward.1} parent=191 // pred_check
          %p1511 = pneg %p910
        $region266: #{complete_model_forward.1} parent=191 // pred_check_branch
          %1513 = sbr.rel (%p1511) target = $region268
        $region267: #{complete_model_forward.1} parent=191 // pred_region
          %1515 = dma.done [#allocation31], 3072
        $region268: #{complete_model_forward.1} parent=191 // pred_fallthru
          _
        // Predicated region
        $region269: #{complete_model_forward.1} parent=191 // pred_check
          %p1516 = pneg %p952
        $region270: #{complete_model_forward.1} parent=191 // pred_check_branch
          %1518 = sbr.rel (%p1516) target = $region272
        $region271: #{complete_model_forward.1} parent=191 // pred_region
          %1520 = dma.done [#allocation34], 3072
        $region272: #{complete_model_forward.1} parent=191 // pred_fallthru
          _
        %p1521 = scmp.lt.s32.totalorder %s112, 1
        %s1522 = scalar_select %p1521, %s112, 1
        %s1523 = smul.addr %s1522, 8
        %s1524 = smul.addr %s1523, 8
        %s1525 = scalar_lea.vmem %s1, %s1524
        %p1526 = pneg %p133
        %p1527 = pneg %p130
        %p1528 = pneg %p154
        %p1529 = pneg %p151
        %p1530 = pneg %p175
        %p1531 = pneg %p172
        %p1532 = pneg %p196
        %p1533 = pneg %p193
        %p1534 = pneg %p217
        %p1535 = pneg %p214
        %p1536 = pneg %p238
        %p1537 = pneg %p235
        %p1538 = pneg %p259
        %p1539 = pneg %p256
        %p1540 = pneg %p280
        %p1541 = pneg %p277
        %p1542 = pneg %p301
        %p1543 = pneg %p298
        %p1544 = pneg %p322
        %p1545 = pneg %p319
        %p1546 = pneg %p343
        %p1547 = pneg %p340
        %p1548 = pneg %p364
        %p1549 = pneg %p361
        %p1550 = pneg %p385
        %p1551 = pneg %p382
        %p1552 = pneg %p406
        %p1553 = pneg %p403
        %p1554 = pneg %p427
        %p1555 = pneg %p424
        %p1556 = pneg %p448
        %p1557 = pneg %p445
        %p1558 = pneg %p469
        %p1559 = pneg %p466
        %p1560 = pneg %p490
        %p1561 = pneg %p487
        %p1562 = pneg %p511
        %p1563 = pneg %p508
        %p1564 = pneg %p532
        %p1565 = pneg %p529
        %p1566 = pneg %p553
        %p1567 = pneg %p550
        %p1568 = pneg %p574
        %p1569 = pneg %p571
        %p1570 = pneg %p595
        %p1571 = pneg %p592
        %p1572 = pneg %p616
        %p1573 = pneg %p613
        %p1574 = pneg %p637
        %p1575 = pneg %p634
        %p1576 = pneg %p658
        %p1577 = pneg %p655
        %p1578 = pneg %p679
        %p1579 = pneg %p676
        %p1580 = pneg %p700
        %p1581 = pneg %p697
        %p1582 = pneg %p721
        %p1583 = pneg %p718
        %p1584 = pneg %p742
        %p1585 = pneg %p739
        %p1586 = pneg %p763
        %p1587 = pneg %p760
        %p1588 = pneg %p784
        %p1589 = pneg %p781
        %p1590 = pneg %p805
        %p1591 = pneg %p802
        %p1592 = pneg %p826
        %p1593 = pneg %p823
        %p1594 = pneg %p847
        %p1595 = pneg %p844
        %p1596 = pneg %p868
        %p1597 = pneg %p865
        %p1598 = pneg %p889
        %p1599 = pneg %p886
        %p1600 = pneg %p910
        %p1601 = pneg %p907
        %p1602 = pneg %p931
        %p1603 = pneg %p928
        %p1604 = pneg %p952
        %p1605 = pneg %p949
        %p1606 = pneg %p973
        %p1607 = pneg %p970
        %p1608 = pneg %p994
        %p1609 = pneg %p991
        %p1610 = pneg %p1015
        %p1611 = pneg %p1012
        %p1612 = pneg %p1041
        %p1613 = pneg %p1038
        %s1614 = sand.u32 %s1028, 1
        %s1615 = scalar_lea.sflag [#allocation5], %s1614
        %s1616 = sand.u32 %s1028, 1
        %s1617 = scalar_lea.vmem [#allocation35], %s1616
        %p1618 = scmp.lt.s32.totalorder %s112, 1
        %s1619 = scalar_select %p1618, %s112, 1
        %s1620 = smul.addr %s1619, 8
        %s1621 = smul.addr %s1620, 8
        %s1622 = scalar_lea.vmem %s1, %s1621
        %v1623 = vld [vmem:[%s1622] sm:$0xff]
        %v1624 = vld [vmem:[%s1622 + $0x8] sm:$0xff]
        %v1625 = vld [vmem:[%s1622 + $0x10] sm:$0xff]
        %v1626 = vld [vmem:[%s1622 + $0x18] sm:$0xff]
        %v1627 = vld [vmem:[%s1622 + $0x20] sm:$0xff]
        %v1628 = vld [vmem:[%s1622 + $0x28] sm:$0xff]
        %v1629 = vld [vmem:[%s1622 + $0x30] sm:$0xff]
        %v1630 = vld [vmem:[%s1622 + $0x38] sm:$0xff]
        %1631 = vst [vmem:[#allocation2] sm:$0xff] 0.0
        %1632 = vst [vmem:[#allocation2 + $0x8] sm:$0xff] 0.0
        %1633 = vst [vmem:[#allocation2 + $0x10] sm:$0xff] 0.0
        %1634 = vst [vmem:[#allocation2 + $0x18] sm:$0xff] 0.0
        %1635 = vst [vmem:[#allocation2 + $0x20] sm:$0xff] 0.0
        %1636 = vst [vmem:[#allocation2 + $0x28] sm:$0xff] 0.0
        %1637 = vst [vmem:[#allocation2 + $0x30] sm:$0xff] 0.0
        %1638 = vst [vmem:[#allocation2 + $0x38] sm:$0xff] 0.0
        %1639 = vst [vmem:[#allocation2 + $0x40] sm:$0x3f] 0.0
        %vm1640 = vcmask 31744
        %1641 = vst.msk [vmem:[#allocation2 + $0x3] sm:$0xff] %vm1640, %v1623
        %1642 = vst.msk [vmem:[#allocation2 + $0xb] sm:$0xff] %vm1640, %v1624
        %1643 = vst.msk [vmem:[#allocation2 + $0x13] sm:$0xff] %vm1640, %v1625
        %1644 = vst.msk [vmem:[#allocation2 + $0x1b] sm:$0xff] %vm1640, %v1626
        %1645 = vst.msk [vmem:[#allocation2 + $0x23] sm:$0xff] %vm1640, %v1627
        %1646 = vst.msk [vmem:[#allocation2 + $0x2b] sm:$0xff] %vm1640, %v1628
        %1647 = vst.msk [vmem:[#allocation2 + $0x33] sm:$0xff] %vm1640, %v1629
        %1648 = vst.msk [vmem:[#allocation2 + $0x3b] sm:$0xff] %vm1640, %v1630
        %v1649 = vld [vmem:[#allocation2] ss:$2 sm:$0xff]
        %s1650 = scalar_lea.vmem [#allocation2], 16
        %v1651 = vld [vmem:[%s1650] ss:$2 sm:$0xff]
        %s1652 = scalar_lea.vmem [#allocation2], 32
        %v1653 = vld [vmem:[%s1652] ss:$2 sm:$0xff]
        %s1654 = scalar_lea.vmem [#allocation2], 48
        %v1655 = vld [vmem:[%s1654] ss:$2 sm:$0xff]
        %v1656 = vld [vmem:[#allocation3] sm:$0xf]
        %v1657 = vld [vmem:[#allocation3 + $0x4] sm:$0xf]
        %v1658 = vld [vmem:[#allocation3 + $0x8] sm:$0xf]
        %v1659 = vld [vmem:[#allocation3 + $0xc] sm:$0xf]
        %v1660 = vld [vmem:[#allocation3 + $0x10] sm:$0xf]
        %v1661 = vld [vmem:[#allocation3 + $0x14] sm:$0xf]
        %v1662 = vld [vmem:[#allocation3 + $0x18] sm:$0xf]
        %v1663 = vld [vmem:[#allocation3 + $0x1c] sm:$0xf]
        %v1664 = vld [vmem:[#allocation3 + $0x20] sm:$0xf]
        %v1665 = vld [vmem:[#allocation3 + $0x24] sm:$0xf]
        %v1666 = vld [vmem:[#allocation3 + $0x28] sm:$0xf]
        %v1667 = vld [vmem:[#allocation3 + $0x2c] sm:$0xf]
        %v1668 = vld [vmem:[#allocation3 + $0x30] sm:$0xf]
        %v1669 = vld [vmem:[#allocation3 + $0x34] sm:$0xf]
        %v1670 = vld [vmem:[#allocation3 + $0x38] sm:$0xf]
        %v1671 = vld [vmem:[#allocation3 + $0x3c] sm:$0xf]
        %v1672 = vpack.c.bf16 %v1651, %v1649
        %v1673 = vpack.c.bf16 %v1655, %v1653
        %s1674 = scalar_lea.vmem [#allocation2], 1
        %v1675 = vld [vmem:[%s1674] ss:$2 sm:$0xff]
        %s1676 = scalar_lea.vmem [#allocation2], 17
        %v1677 = vld [vmem:[%s1676] ss:$2 sm:$0xff]
        %s1678 = scalar_lea.vmem [#allocation2], 33
        %v1679 = vld [vmem:[%s1678] ss:$2 sm:$0xff]
        %s1680 = scalar_lea.vmem [#allocation2], 49
        %v1681 = vld [vmem:[%s1680] ss:$2 sm:$0xff]
        %v1682 = vld [vmem:[#allocation3 + $0x40] sm:$0xf]
        %v1683 = vld [vmem:[#allocation3 + $0x44] sm:$0xf]
        %v1684 = vld [vmem:[#allocation3 + $0x48] sm:$0xf]
        %v1685 = vld [vmem:[#allocation3 + $0x4c] sm:$0xf]
        %v1686 = vld [vmem:[#allocation3 + $0x50] sm:$0xf]
        %v1687 = vld [vmem:[#allocation3 + $0x54] sm:$0xf]
        %v1688 = vld [vmem:[#allocation3 + $0x58] sm:$0xf]
        %v1689 = vld [vmem:[#allocation3 + $0x5c] sm:$0xf]
        %v1690 = vld [vmem:[#allocation3 + $0x60] sm:$0xf]
        %v1691 = vld [vmem:[#allocation3 + $0x64] sm:$0xf]
        %v1692 = vld [vmem:[#allocation3 + $0x68] sm:$0xf]
        %v1693 = vld [vmem:[#allocation3 + $0x6c] sm:$0xf]
        %v1694 = vld [vmem:[#allocation3 + $0x70] sm:$0xf]
        %v1695 = vld [vmem:[#allocation3 + $0x74] sm:$0xf]
        %v1696 = vld [vmem:[#allocation3 + $0x78] sm:$0xf]
        %v1697 = vld [vmem:[#allocation3 + $0x7c] sm:$0xf]
        %v1698 = vpack.c.bf16 %v1677, %v1675
        %v1699 = vpack.c.bf16 %v1681, %v1679
        %v1716 = vunpack.c.l.b16 %v1682
        %v1717 = vunpack.c.l.b16 %v1683
        %v1718 = vunpack.c.l.b16 %v1684
        %v1719 = vunpack.c.l.b16 %v1685
        %v1720 = vunpack.c.l.b16 %v1686
        %v1721 = vunpack.c.l.b16 %v1687
        %v1722 = vunpack.c.l.b16 %v1688
        %v1723 = vunpack.c.l.b16 %v1689
        %v1724 = vunpack.c.l.b16 %v1690
        %v1725 = vunpack.c.l.b16 %v1691
        %v1726 = vunpack.c.l.b16 %v1692
        %v1727 = vunpack.c.l.b16 %v1693
        %v1728 = vunpack.c.l.b16 %v1694
        %v1729 = vunpack.c.l.b16 %v1695
        %v1730 = vunpack.c.l.b16 %v1696
        %v1731 = vunpack.c.l.b16 %v1697
        %v1732 = vpack.c.b16 %v1717, %v1716
        %v1733 = vpack.c.b16 %v1719, %v1718
        %v1734 = vpack.c.b16 %v1721, %v1720
        %v1735 = vpack.c.b16 %v1723, %v1722
        %v1736 = vpack.c.b16 %v1725, %v1724
        %v1737 = vpack.c.b16 %v1727, %v1726
        %v1738 = vpack.c.b16 %v1729, %v1728
        %v1739 = vpack.c.b16 %v1731, %v1730
        %1748 = vmatpush.bf16.msra.mxu0 %v1739
        %1749 = vmatpush.bf16.msra.mxu0 %v1738
        %1750 = vmatpush.bf16.msra.mxu0 %v1737
        %1751 = vmatpush.bf16.msra.mxu0 %v1736
        %1752 = vmatpush.bf16.msra.mxu0 %v1735
        %1753 = vmatpush.bf16.msra.mxu0 %v1734
        %1754 = vmatpush.bf16.msra.mxu0 %v1733
        %1755 = vmatpush.bf16.msra.mxu0 %v1732
        %1756 = vmatmul.bf16.gmra.mxu0 %v1698
        %v1757 = vpop.f32.mrf.mxu0
        %v1758 = vadd.f32 0.0, %v1757
        %v1759 = vpop.f32.mrf.mxu0
        %v1760 = vadd.f32 0.0, %v1759
        %1761 = vmatmul.bf16.gmra.mxu0 %v1699
        %v1762 = vpop.f32.mrf.mxu0
        %v1763 = vadd.f32 0.0, %v1762
        %v1764 = vpop.f32.mrf.mxu0
        %v1765 = vadd.f32 0.0, %v1764
        %1766 = vdwg.mxu0
        %v1783 = vunpack.c.l.b16 %v1656
        %v1784 = vunpack.c.l.b16 %v1657
        %v1785 = vunpack.c.l.b16 %v1658
        %v1786 = vunpack.c.l.b16 %v1659
        %v1787 = vunpack.c.l.b16 %v1660
        %v1788 = vunpack.c.l.b16 %v1661
        %v1789 = vunpack.c.l.b16 %v1662
        %v1790 = vunpack.c.l.b16 %v1663
        %v1791 = vunpack.c.l.b16 %v1664
        %v1792 = vunpack.c.l.b16 %v1665
        %v1793 = vunpack.c.l.b16 %v1666
        %v1794 = vunpack.c.l.b16 %v1667
        %v1795 = vunpack.c.l.b16 %v1668
        %v1796 = vunpack.c.l.b16 %v1669
        %v1797 = vunpack.c.l.b16 %v1670
        %v1798 = vunpack.c.l.b16 %v1671
        %v1799 = vpack.c.b16 %v1784, %v1783
        %v1800 = vpack.c.b16 %v1786, %v1785
        %v1801 = vpack.c.b16 %v1788, %v1787
        %v1802 = vpack.c.b16 %v1790, %v1789
        %v1803 = vpack.c.b16 %v1792, %v1791
        %v1804 = vpack.c.b16 %v1794, %v1793
        %v1805 = vpack.c.b16 %v1796, %v1795
        %v1806 = vpack.c.b16 %v1798, %v1797
        %1815 = vmatpush.bf16.msra.mxu0 %v1806
        %1816 = vmatpush.bf16.msra.mxu0 %v1805
        %1817 = vmatpush.bf16.msra.mxu0 %v1804
        %1818 = vmatpush.bf16.msra.mxu0 %v1803
        %1819 = vmatpush.bf16.msra.mxu0 %v1802
        %1820 = vmatpush.bf16.msra.mxu0 %v1801
        %1821 = vmatpush.bf16.msra.mxu0 %v1800
        %1822 = vmatpush.bf16.msra.mxu0 %v1799
        %1823 = vmatmul.bf16.gmra.mxu0 %v1672
        %v1824 = vpop.f32.mrf.mxu0
        %v1825 = vadd.f32 %v1758, %v1824
        %v1826 = vpop.f32.mrf.mxu0
        %v1827 = vadd.f32 %v1760, %v1826
        %1828 = vmatmul.bf16.gmra.mxu0 %v1673
        %v1829 = vpop.f32.mrf.mxu0
        %v1830 = vadd.f32 %v1763, %v1829
        %v1831 = vpop.f32.mrf.mxu0
        %v1832 = vadd.f32 %v1765, %v1831
        %1833 = vdwg.mxu0
        %s1834 = scalar_lea.vmem [#allocation2], 2
        %v1835 = vld [vmem:[%s1834] ss:$2 sm:$0xff]
        %s1836 = scalar_lea.vmem [#allocation2], 18
        %v1837 = vld [vmem:[%s1836] ss:$2 sm:$0xff]
        %s1838 = scalar_lea.vmem [#allocation2], 34
        %v1839 = vld [vmem:[%s1838] ss:$2 sm:$0xff]
        %s1840 = scalar_lea.vmem [#allocation2], 50
        %v1841 = vld [vmem:[%s1840] ss:$2 sm:$0xff]
        %v1842 = vld [vmem:[#allocation3 + $0x80] sm:$0xf]
        %v1843 = vld [vmem:[#allocation3 + $0x84] sm:$0xf]
        %v1844 = vld [vmem:[#allocation3 + $0x88] sm:$0xf]
        %v1845 = vld [vmem:[#allocation3 + $0x8c] sm:$0xf]
        %v1846 = vld [vmem:[#allocation3 + $0x90] sm:$0xf]
        %v1847 = vld [vmem:[#allocation3 + $0x94] sm:$0xf]
        %v1848 = vld [vmem:[#allocation3 + $0x98] sm:$0xf]
        %v1849 = vld [vmem:[#allocation3 + $0x9c] sm:$0xf]
        %v1850 = vld [vmem:[#allocation3 + $0xa0] sm:$0xf]
        %v1851 = vld [vmem:[#allocation3 + $0xa4] sm:$0xf]
        %v1852 = vld [vmem:[#allocation3 + $0xa8] sm:$0xf]
        %v1853 = vld [vmem:[#allocation3 + $0xac] sm:$0xf]
        %v1854 = vld [vmem:[#allocation3 + $0xb0] sm:$0xf]
        %v1855 = vld [vmem:[#allocation3 + $0xb4] sm:$0xf]
        %v1856 = vld [vmem:[#allocation3 + $0xb8] sm:$0xf]
        %v1857 = vld [vmem:[#allocation3 + $0xbc] sm:$0xf]
        %v1858 = vpack.c.bf16 %v1837, %v1835
        %v1859 = vpack.c.bf16 %v1841, %v1839
        %v1876 = vunpack.c.l.b16 %v1842
        %v1877 = vunpack.c.l.b16 %v1843
        %v1878 = vunpack.c.l.b16 %v1844
        %v1879 = vunpack.c.l.b16 %v1845
        %v1880 = vunpack.c.l.b16 %v1846
        %v1881 = vunpack.c.l.b16 %v1847
        %v1882 = vunpack.c.l.b16 %v1848
        %v1883 = vunpack.c.l.b16 %v1849
        %v1884 = vunpack.c.l.b16 %v1850
        %v1885 = vunpack.c.l.b16 %v1851
        %v1886 = vunpack.c.l.b16 %v1852
        %v1887 = vunpack.c.l.b16 %v1853
        %v1888 = vunpack.c.l.b16 %v1854
        %v1889 = vunpack.c.l.b16 %v1855
        %v1890 = vunpack.c.l.b16 %v1856
        %v1891 = vunpack.c.l.b16 %v1857
        %v1892 = vpack.c.b16 %v1877, %v1876
        %v1893 = vpack.c.b16 %v1879, %v1878
        %v1894 = vpack.c.b16 %v1881, %v1880
        %v1895 = vpack.c.b16 %v1883, %v1882
        %v1896 = vpack.c.b16 %v1885, %v1884
        %v1897 = vpack.c.b16 %v1887, %v1886
        %v1898 = vpack.c.b16 %v1889, %v1888
        %v1899 = vpack.c.b16 %v1891, %v1890
        %1908 = vmatpush.bf16.msra.mxu0 %v1899
        %1909 = vmatpush.bf16.msra.mxu0 %v1898
        %1910 = vmatpush.bf16.msra.mxu0 %v1897
        %1911 = vmatpush.bf16.msra.mxu0 %v1896
        %1912 = vmatpush.bf16.msra.mxu0 %v1895
        %1913 = vmatpush.bf16.msra.mxu0 %v1894
        %1914 = vmatpush.bf16.msra.mxu0 %v1893
        %1915 = vmatpush.bf16.msra.mxu0 %v1892
        %1916 = vmatmul.bf16.gmra.mxu0 %v1858
        %v1917 = vpop.f32.mrf.mxu0
        %v1918 = vadd.f32 0.0, %v1917
        %v1919 = vpop.f32.mrf.mxu0
        %v1920 = vadd.f32 0.0, %v1919
        %1921 = vmatmul.bf16.gmra.mxu0 %v1859
        %v1922 = vpop.f32.mrf.mxu0
        %v1923 = vadd.f32 0.0, %v1922
        %v1924 = vpop.f32.mrf.mxu0
        %v1925 = vadd.f32 0.0, %v1924
        %1926 = vdwg.mxu0
        %v1927 = vadd.f32 %v1825, %v1918
        %v1928 = vadd.f32 %v1827, %v1920
        %v1929 = vadd.f32 %v1830, %v1923
        %v1930 = vadd.f32 %v1832, %v1925
        %s1931 = scalar_lea.vmem [#allocation2], 3
        %v1932 = vld [vmem:[%s1931] ss:$2 sm:$0xff]
        %s1933 = scalar_lea.vmem [#allocation2], 19
        %v1934 = vld [vmem:[%s1933] ss:$2 sm:$0xff]
        %s1935 = scalar_lea.vmem [#allocation2], 35
        %v1936 = vld [vmem:[%s1935] ss:$2 sm:$0xff]
        %s1937 = scalar_lea.vmem [#allocation2], 51
        %v1938 = vld [vmem:[%s1937] ss:$2 sm:$0xff]
        %v1939 = vld [vmem:[#allocation3 + $0xc0] sm:$0xf]
        %v1940 = vld [vmem:[#allocation3 + $0xc4] sm:$0xf]
        %v1941 = vld [vmem:[#allocation3 + $0xc8] sm:$0xf]
        %v1942 = vld [vmem:[#allocation3 + $0xcc] sm:$0xf]
        %v1943 = vld [vmem:[#allocation3 + $0xd0] sm:$0xf]
        %v1944 = vld [vmem:[#allocation3 + $0xd4] sm:$0xf]
        %v1945 = vld [vmem:[#allocation3 + $0xd8] sm:$0xf]
        %v1946 = vld [vmem:[#allocation3 + $0xdc] sm:$0xf]
        %v1947 = vld [vmem:[#allocation3 + $0xe0] sm:$0xf]
        %v1948 = vld [vmem:[#allocation3 + $0xe4] sm:$0xf]
        %v1949 = vld [vmem:[#allocation3 + $0xe8] sm:$0xf]
        %v1950 = vld [vmem:[#allocation3 + $0xec] sm:$0xf]
        %v1951 = vld [vmem:[#allocation3 + $0xf0] sm:$0xf]
        %v1952 = vld [vmem:[#allocation3 + $0xf4] sm:$0xf]
        %v1953 = vld [vmem:[#allocation3 + $0xf8] sm:$0xf]
        %v1954 = vld [vmem:[#allocation3 + $0xfc] sm:$0xf]
        %v1955 = vpack.c.bf16 %v1934, %v1932
        %v1956 = vpack.c.bf16 %v1938, %v1936
        %v1973 = vunpack.c.l.b16 %v1939
        %v1974 = vunpack.c.l.b16 %v1940
        %v1975 = vunpack.c.l.b16 %v1941
        %v1976 = vunpack.c.l.b16 %v1942
        %v1977 = vunpack.c.l.b16 %v1943
        %v1978 = vunpack.c.l.b16 %v1944
        %v1979 = vunpack.c.l.b16 %v1945
        %v1980 = vunpack.c.l.b16 %v1946
        %v1981 = vunpack.c.l.b16 %v1947
        %v1982 = vunpack.c.l.b16 %v1948
        %v1983 = vunpack.c.l.b16 %v1949
        %v1984 = vunpack.c.l.b16 %v1950
        %v1985 = vunpack.c.l.b16 %v1951
        %v1986 = vunpack.c.l.b16 %v1952
        %v1987 = vunpack.c.l.b16 %v1953
        %v1988 = vunpack.c.l.b16 %v1954
        %v1989 = vpack.c.b16 %v1974, %v1973
        %v1990 = vpack.c.b16 %v1976, %v1975
        %v1991 = vpack.c.b16 %v1978, %v1977
        %v1992 = vpack.c.b16 %v1980, %v1979
        %v1993 = vpack.c.b16 %v1982, %v1981
        %v1994 = vpack.c.b16 %v1984, %v1983
        %v1995 = vpack.c.b16 %v1986, %v1985
        %v1996 = vpack.c.b16 %v1988, %v1987
        %2005 = vmatpush.bf16.msra.mxu0 %v1996
        %2006 = vmatpush.bf16.msra.mxu0 %v1995
        %2007 = vmatpush.bf16.msra.mxu0 %v1994
        %2008 = vmatpush.bf16.msra.mxu0 %v1993
        %2009 = vmatpush.bf16.msra.mxu0 %v1992
        %2010 = vmatpush.bf16.msra.mxu0 %v1991
        %2011 = vmatpush.bf16.msra.mxu0 %v1990
        %2012 = vmatpush.bf16.msra.mxu0 %v1989
        %2013 = vmatmul.bf16.gmra.mxu0 %v1955
        %v2014 = vpop.f32.mrf.mxu0
        %v2015 = vadd.f32 0.0, %v2014
        %v2016 = vpop.f32.mrf.mxu0
        %v2017 = vadd.f32 0.0, %v2016
        %2018 = vmatmul.bf16.gmra.mxu0 %v1956
        %v2019 = vpop.f32.mrf.mxu0
        %v2020 = vadd.f32 0.0, %v2019
        %v2021 = vpop.f32.mrf.mxu0
        %v2022 = vadd.f32 0.0, %v2021
        %2023 = vdwg.mxu0
        %v2024 = vadd.f32 %v1927, %v2015
        %v2025 = vadd.f32 %v1928, %v2017
        %v2026 = vadd.f32 %v1929, %v2020
        %v2027 = vadd.f32 %v1930, %v2022
        %s2028 = scalar_lea.vmem [#allocation2], 4
        %v2029 = vld [vmem:[%s2028] ss:$2 sm:$0xff]
        %s2030 = scalar_lea.vmem [#allocation2], 20
        %v2031 = vld [vmem:[%s2030] ss:$2 sm:$0xff]
        %s2032 = scalar_lea.vmem [#allocation2], 36
        %v2033 = vld [vmem:[%s2032] ss:$2 sm:$0xff]
        %s2034 = scalar_lea.vmem [#allocation2], 52
        %v2035 = vld [vmem:[%s2034] ss:$2 sm:$0xff]
        %v2036 = vld [vmem:[#allocation3 + $0x100] sm:$0xf]
        %v2037 = vld [vmem:[#allocation3 + $0x104] sm:$0xf]
        %v2038 = vld [vmem:[#allocation3 + $0x108] sm:$0xf]
        %v2039 = vld [vmem:[#allocation3 + $0x10c] sm:$0xf]
        %v2040 = vld [vmem:[#allocation3 + $0x110] sm:$0xf]
        %v2041 = vld [vmem:[#allocation3 + $0x114] sm:$0xf]
        %v2042 = vld [vmem:[#allocation3 + $0x118] sm:$0xf]
        %v2043 = vld [vmem:[#allocation3 + $0x11c] sm:$0xf]
        %v2044 = vld [vmem:[#allocation3 + $0x120] sm:$0xf]
        %v2045 = vld [vmem:[#allocation3 + $0x124] sm:$0xf]
        %v2046 = vld [vmem:[#allocation3 + $0x128] sm:$0xf]
        %v2047 = vld [vmem:[#allocation3 + $0x12c] sm:$0xf]
        %v2048 = vld [vmem:[#allocation3 + $0x130] sm:$0xf]
        %v2049 = vld [vmem:[#allocation3 + $0x134] sm:$0xf]
        %v2050 = vld [vmem:[#allocation3 + $0x138] sm:$0xf]
        %v2051 = vld [vmem:[#allocation3 + $0x13c] sm:$0xf]
        %v2052 = vpack.c.bf16 %v2031, %v2029
        %v2053 = vpack.c.bf16 %v2035, %v2033
        %v2070 = vunpack.c.l.b16 %v2036
        %v2071 = vunpack.c.l.b16 %v2037
        %v2072 = vunpack.c.l.b16 %v2038
        %v2073 = vunpack.c.l.b16 %v2039
        %v2074 = vunpack.c.l.b16 %v2040
        %v2075 = vunpack.c.l.b16 %v2041
        %v2076 = vunpack.c.l.b16 %v2042
        %v2077 = vunpack.c.l.b16 %v2043
        %v2078 = vunpack.c.l.b16 %v2044
        %v2079 = vunpack.c.l.b16 %v2045
        %v2080 = vunpack.c.l.b16 %v2046
        %v2081 = vunpack.c.l.b16 %v2047
        %v2082 = vunpack.c.l.b16 %v2048
        %v2083 = vunpack.c.l.b16 %v2049
        %v2084 = vunpack.c.l.b16 %v2050
        %v2085 = vunpack.c.l.b16 %v2051
        %v2086 = vpack.c.b16 %v2071, %v2070
        %v2087 = vpack.c.b16 %v2073, %v2072
        %v2088 = vpack.c.b16 %v2075, %v2074
        %v2089 = vpack.c.b16 %v2077, %v2076
        %v2090 = vpack.c.b16 %v2079, %v2078
        %v2091 = vpack.c.b16 %v2081, %v2080
        %v2092 = vpack.c.b16 %v2083, %v2082
        %v2093 = vpack.c.b16 %v2085, %v2084
        %2102 = vmatpush.bf16.msra.mxu0 %v2093
        %2103 = vmatpush.bf16.msra.mxu0 %v2092
        %2104 = vmatpush.bf16.msra.mxu0 %v2091
        %2105 = vmatpush.bf16.msra.mxu0 %v2090
        %2106 = vmatpush.bf16.msra.mxu0 %v2089
        %2107 = vmatpush.bf16.msra.mxu0 %v2088
        %2108 = vmatpush.bf16.msra.mxu0 %v2087
        %2109 = vmatpush.bf16.msra.mxu0 %v2086
        %2110 = vmatmul.bf16.gmra.mxu0 %v2052
        %v2111 = vpop.f32.mrf.mxu0
        %v2112 = vadd.f32 0.0, %v2111
        %v2113 = vpop.f32.mrf.mxu0
        %v2114 = vadd.f32 0.0, %v2113
        %2115 = vmatmul.bf16.gmra.mxu0 %v2053
        %v2116 = vpop.f32.mrf.mxu0
        %v2117 = vadd.f32 0.0, %v2116
        %v2118 = vpop.f32.mrf.mxu0
        %v2119 = vadd.f32 0.0, %v2118
        %2120 = vdwg.mxu0
        %v2121 = vadd.f32 %v2024, %v2112
        %v2122 = vadd.f32 %v2025, %v2114
        %v2123 = vadd.f32 %v2026, %v2117
        %v2124 = vadd.f32 %v2027, %v2119
        %s2125 = scalar_lea.vmem [#allocation2], 5
        %v2126 = vld [vmem:[%s2125] ss:$2 sm:$0xff]
        %s2127 = scalar_lea.vmem [#allocation2], 21
        %v2128 = vld [vmem:[%s2127] ss:$2 sm:$0xff]
        %s2129 = scalar_lea.vmem [#allocation2], 37
        %v2130 = vld [vmem:[%s2129] ss:$2 sm:$0xff]
        %s2131 = scalar_lea.vmem [#allocation2], 53
        %v2132 = vld [vmem:[%s2131] ss:$2 sm:$0xff]
        %v2133 = vld [vmem:[#allocation3 + $0x140] sm:$0xf]
        %v2134 = vld [vmem:[#allocation3 + $0x144] sm:$0xf]
        %v2135 = vld [vmem:[#allocation3 + $0x148] sm:$0xf]
        %v2136 = vld [vmem:[#allocation3 + $0x14c] sm:$0xf]
        %v2137 = vld [vmem:[#allocation3 + $0x150] sm:$0xf]
        %v2138 = vld [vmem:[#allocation3 + $0x154] sm:$0xf]
        %v2139 = vld [vmem:[#allocation3 + $0x158] sm:$0xf]
        %v2140 = vld [vmem:[#allocation3 + $0x15c] sm:$0xf]
        %v2141 = vld [vmem:[#allocation3 + $0x160] sm:$0xf]
        %v2142 = vld [vmem:[#allocation3 + $0x164] sm:$0xf]
        %v2143 = vld [vmem:[#allocation3 + $0x168] sm:$0xf]
        %v2144 = vld [vmem:[#allocation3 + $0x16c] sm:$0xf]
        %v2145 = vld [vmem:[#allocation3 + $0x170] sm:$0xf]
        %v2146 = vld [vmem:[#allocation3 + $0x174] sm:$0xf]
        %v2147 = vld [vmem:[#allocation3 + $0x178] sm:$0xf]
        %v2148 = vld [vmem:[#allocation3 + $0x17c] sm:$0xf]
        %v2149 = vpack.c.bf16 %v2128, %v2126
        %v2150 = vpack.c.bf16 %v2132, %v2130
        %v2167 = vunpack.c.l.b16 %v2133
        %v2168 = vunpack.c.l.b16 %v2134
        %v2169 = vunpack.c.l.b16 %v2135
        %v2170 = vunpack.c.l.b16 %v2136
        %v2171 = vunpack.c.l.b16 %v2137
        %v2172 = vunpack.c.l.b16 %v2138
        %v2173 = vunpack.c.l.b16 %v2139
        %v2174 = vunpack.c.l.b16 %v2140
        %v2175 = vunpack.c.l.b16 %v2141
        %v2176 = vunpack.c.l.b16 %v2142
        %v2177 = vunpack.c.l.b16 %v2143
        %v2178 = vunpack.c.l.b16 %v2144
        %v2179 = vunpack.c.l.b16 %v2145
        %v2180 = vunpack.c.l.b16 %v2146
        %v2181 = vunpack.c.l.b16 %v2147
        %v2182 = vunpack.c.l.b16 %v2148
        %v2183 = vpack.c.b16 %v2168, %v2167
        %v2184 = vpack.c.b16 %v2170, %v2169
        %v2185 = vpack.c.b16 %v2172, %v2171
        %v2186 = vpack.c.b16 %v2174, %v2173
        %v2187 = vpack.c.b16 %v2176, %v2175
        %v2188 = vpack.c.b16 %v2178, %v2177
        %v2189 = vpack.c.b16 %v2180, %v2179
        %v2190 = vpack.c.b16 %v2182, %v2181
        %2199 = vmatpush.bf16.msra.mxu0 %v2190
        %2200 = vmatpush.bf16.msra.mxu0 %v2189
        %2201 = vmatpush.bf16.msra.mxu0 %v2188
        %2202 = vmatpush.bf16.msra.mxu0 %v2187
        %2203 = vmatpush.bf16.msra.mxu0 %v2186
        %2204 = vmatpush.bf16.msra.mxu0 %v2185
        %2205 = vmatpush.bf16.msra.mxu0 %v2184
        %2206 = vmatpush.bf16.msra.mxu0 %v2183
        %2207 = vmatmul.bf16.gmra.mxu0 %v2149
        %v2208 = vpop.f32.mrf.mxu0
        %v2209 = vadd.f32 0.0, %v2208
        %v2210 = vpop.f32.mrf.mxu0
        %v2211 = vadd.f32 0.0, %v2210
        %2212 = vmatmul.bf16.gmra.mxu0 %v2150
        %v2213 = vpop.f32.mrf.mxu0
        %v2214 = vadd.f32 0.0, %v2213
        %v2215 = vpop.f32.mrf.mxu0
        %v2216 = vadd.f32 0.0, %v2215
        %2217 = vdwg.mxu0
        %v2218 = vadd.f32 %v2121, %v2209
        %v2219 = vadd.f32 %v2122, %v2211
        %v2220 = vadd.f32 %v2123, %v2214
        %v2221 = vadd.f32 %v2124, %v2216
        %s2222 = scalar_lea.vmem [#allocation2], 6
        %v2223 = vld [vmem:[%s2222] ss:$2 sm:$0xff]
        %s2224 = scalar_lea.vmem [#allocation2], 22
        %v2225 = vld [vmem:[%s2224] ss:$2 sm:$0xff]
        %s2226 = scalar_lea.vmem [#allocation2], 38
        %v2227 = vld [vmem:[%s2226] ss:$2 sm:$0xff]
        %s2228 = scalar_lea.vmem [#allocation2], 54
        %v2229 = vld [vmem:[%s2228] ss:$2 sm:$0xff]
        %v2230 = vld [vmem:[#allocation3 + $0x180] sm:$0xf]
        %v2231 = vld [vmem:[#allocation3 + $0x184] sm:$0xf]
        %v2232 = vld [vmem:[#allocation3 + $0x188] sm:$0xf]
        %v2233 = vld [vmem:[#allocation3 + $0x18c] sm:$0xf]
        %v2234 = vld [vmem:[#allocation3 + $0x190] sm:$0xf]
        %v2235 = vld [vmem:[#allocation3 + $0x194] sm:$0xf]
        %v2236 = vld [vmem:[#allocation3 + $0x198] sm:$0xf]
        %v2237 = vld [vmem:[#allocation3 + $0x19c] sm:$0xf]
        %v2238 = vld [vmem:[#allocation3 + $0x1a0] sm:$0xf]
        %v2239 = vld [vmem:[#allocation3 + $0x1a4] sm:$0xf]
        %v2240 = vld [vmem:[#allocation3 + $0x1a8] sm:$0xf]
        %v2241 = vld [vmem:[#allocation3 + $0x1ac] sm:$0xf]
        %v2242 = vld [vmem:[#allocation3 + $0x1b0] sm:$0xf]
        %v2243 = vld [vmem:[#allocation3 + $0x1b4] sm:$0xf]
        %v2244 = vld [vmem:[#allocation3 + $0x1b8] sm:$0xf]
        %v2245 = vld [vmem:[#allocation3 + $0x1bc] sm:$0xf]
        %v2246 = vpack.c.bf16 %v2225, %v2223
        %v2247 = vpack.c.bf16 %v2229, %v2227
        %v2264 = vunpack.c.l.b16 %v2230
        %v2265 = vunpack.c.l.b16 %v2231
        %v2266 = vunpack.c.l.b16 %v2232
        %v2267 = vunpack.c.l.b16 %v2233
        %v2268 = vunpack.c.l.b16 %v2234
        %v2269 = vunpack.c.l.b16 %v2235
        %v2270 = vunpack.c.l.b16 %v2236
        %v2271 = vunpack.c.l.b16 %v2237
        %v2272 = vunpack.c.l.b16 %v2238
        %v2273 = vunpack.c.l.b16 %v2239
        %v2274 = vunpack.c.l.b16 %v2240
        %v2275 = vunpack.c.l.b16 %v2241
        %v2276 = vunpack.c.l.b16 %v2242
        %v2277 = vunpack.c.l.b16 %v2243
        %v2278 = vunpack.c.l.b16 %v2244
        %v2279 = vunpack.c.l.b16 %v2245
        %v2280 = vpack.c.b16 %v2265, %v2264
        %v2281 = vpack.c.b16 %v2267, %v2266
        %v2282 = vpack.c.b16 %v2269, %v2268
        %v2283 = vpack.c.b16 %v2271, %v2270
        %v2284 = vpack.c.b16 %v2273, %v2272
        %v2285 = vpack.c.b16 %v2275, %v2274
        %v2286 = vpack.c.b16 %v2277, %v2276
        %v2287 = vpack.c.b16 %v2279, %v2278
        %2296 = vmatpush.bf16.msra.mxu0 %v2287
        %2297 = vmatpush.bf16.msra.mxu0 %v2286
        %2298 = vmatpush.bf16.msra.mxu0 %v2285
        %2299 = vmatpush.bf16.msra.mxu0 %v2284
        %2300 = vmatpush.bf16.msra.mxu0 %v2283
        %2301 = vmatpush.bf16.msra.mxu0 %v2282
        %2302 = vmatpush.bf16.msra.mxu0 %v2281
        %2303 = vmatpush.bf16.msra.mxu0 %v2280
        %2304 = vmatmul.bf16.gmra.mxu0 %v2246
        %v2305 = vpop.f32.mrf.mxu0
        %v2306 = vadd.f32 0.0, %v2305
        %v2307 = vpop.f32.mrf.mxu0
        %v2308 = vadd.f32 0.0, %v2307
        %2309 = vmatmul.bf16.gmra.mxu0 %v2247
        %v2310 = vpop.f32.mrf.mxu0
        %v2311 = vadd.f32 0.0, %v2310
        %v2312 = vpop.f32.mrf.mxu0
        %v2313 = vadd.f32 0.0, %v2312
        %2314 = vdwg.mxu0
        %v2315 = vadd.f32 %v2218, %v2306
        %v2316 = vadd.f32 %v2219, %v2308
        %v2317 = vadd.f32 %v2220, %v2311
        %v2318 = vadd.f32 %v2221, %v2313
        %v2319 = vld [vmem:[%s5] sm:$0x1]
        %v2321 = vperm.slane %v2319, 0
        %v2323 = vadd.f32 %v2315, %v2321
        %v2324 = vadd.f32 %v2316, %v2321
        %v2325 = vadd.f32 %v2317, %v2321
        %v2326 = vadd.f32 %v2318, %v2321
        %v2327 = vmax.f32 %v2323, 0.0
        %v2328 = vmax.f32 %v2324, 0.0
        %v2329 = vmax.f32 %v2325, 0.0
        %v2330 = vmax.f32 %v2326, 0.0
        %2331 = vst [vmem:[#allocation2] sm:$0x1] 0.0
        %2332 = vst [vmem:[#allocation2 + $0x21] sm:$0x1] 0.0
        %2333 = vst [vmem:[#allocation2 + $0x1] sm:$0xff] %v2327
        %2334 = vst [vmem:[#allocation2 + $0x9] sm:$0xff] %v2328
        %2335 = vst [vmem:[#allocation2 + $0x11] sm:$0xff] %v2329
        %2336 = vst [vmem:[#allocation2 + $0x19] sm:$0xff] %v2330
        %v2337 = vld [vmem:[#allocation2] ss:$2 sm:$0xff]
        %v2338 = vld [vmem:[%s1650] ss:$2 sm:$0xff]
        %v2339 = vld [vmem:[%s1674] ss:$2 sm:$0xff]
        %v2340 = vld [vmem:[%s1676] ss:$2 sm:$0xff]
        %v2341 = vmax.f32 %v2337, %v2339
        %v2342 = vmax.f32 %v2338, %v2340
        %v2343 = vld [vmem:[%s1834] ss:$2 sm:$0xff]
        %v2344 = vld [vmem:[%s1836] ss:$2 sm:$0xff]
        %v2345 = vmax.f32 %v2341, %v2343
        %v2346 = vmax.f32 %v2342, %v2344
        %2347 = vst [vmem:[#allocation2] sm:$0x1] 0.0
        %2348 = vst [vmem:[#allocation2 + $0x11] sm:$0x1] 0.0
        %2349 = vst [vmem:[#allocation2 + $0x1] sm:$0xff] %v2345
        %2350 = vst [vmem:[#allocation2 + $0x9] sm:$0xff] %v2346
        %v2351 = vld [vmem:[#allocation2] sm:$0xff]
        %v2352 = vld [vmem:[#allocation2 + $0x8] sm:$0xff]
        %v2353 = vld [vmem:[#allocation6] sm:$0xf]
        %v2354 = vld [vmem:[#allocation6 + $0x4] sm:$0xf]
        %v2355 = vld [vmem:[#allocation6 + $0x8] sm:$0xf]
        %v2356 = vld [vmem:[#allocation6 + $0xc] sm:$0xf]
        %v2357 = vld [vmem:[#allocation6 + $0x10] sm:$0xf]
        %v2358 = vld [vmem:[#allocation6 + $0x14] sm:$0xf]
        %v2359 = vld [vmem:[#allocation6 + $0x18] sm:$0xf]
        %v2360 = vld [vmem:[#allocation6 + $0x1c] sm:$0xf]
        %v2361 = vld [vmem:[#allocation6 + $0x20] sm:$0xf]
        %v2362 = vld [vmem:[#allocation6 + $0x24] sm:$0xf]
        %v2363 = vld [vmem:[#allocation6 + $0x28] sm:$0xf]
        %v2364 = vld [vmem:[#allocation6 + $0x2c] sm:$0xf]
        %v2365 = vld [vmem:[#allocation6 + $0x30] sm:$0xf]
        %v2366 = vld [vmem:[#allocation6 + $0x34] sm:$0xf]
        %v2367 = vld [vmem:[#allocation6 + $0x38] sm:$0xf]
        %v2368 = vld [vmem:[#allocation6 + $0x3c] sm:$0xf]
        %v2369 = vpack.c.bf16 %v2352, %v2351
        %v2370 = vld [vmem:[#allocation2 + $0x1] sm:$0xff]
        %v2371 = vld [vmem:[#allocation2 + $0x9] sm:$0xff]
        %v2372 = vld [vmem:[#allocation6 + $0x40] sm:$0xf]
        %v2373 = vld [vmem:[#allocation6 + $0x44] sm:$0xf]
        %v2374 = vld [vmem:[#allocation6 + $0x48] sm:$0xf]
        %v2375 = vld [vmem:[#allocation6 + $0x4c] sm:$0xf]
        %v2376 = vld [vmem:[#allocation6 + $0x50] sm:$0xf]
        %v2377 = vld [vmem:[#allocation6 + $0x54] sm:$0xf]
        %v2378 = vld [vmem:[#allocation6 + $0x58] sm:$0xf]
        %v2379 = vld [vmem:[#allocation6 + $0x5c] sm:$0xf]
        %v2380 = vld [vmem:[#allocation6 + $0x60] sm:$0xf]
        %v2381 = vld [vmem:[#allocation6 + $0x64] sm:$0xf]
        %v2382 = vld [vmem:[#allocation6 + $0x68] sm:$0xf]
        %v2383 = vld [vmem:[#allocation6 + $0x6c] sm:$0xf]
        %v2384 = vld [vmem:[#allocation6 + $0x70] sm:$0xf]
        %v2385 = vld [vmem:[#allocation6 + $0x74] sm:$0xf]
        %v2386 = vld [vmem:[#allocation6 + $0x78] sm:$0xf]
        %v2387 = vld [vmem:[#allocation6 + $0x7c] sm:$0xf]
        %v2388 = vpack.c.bf16 %v2371, %v2370
        %v2405 = vunpack.c.l.b16 %v2372
        %v2406 = vunpack.c.l.b16 %v2373
        %v2407 = vunpack.c.l.b16 %v2374
        %v2408 = vunpack.c.l.b16 %v2375
        %v2409 = vunpack.c.l.b16 %v2376
        %v2410 = vunpack.c.l.b16 %v2377
        %v2411 = vunpack.c.l.b16 %v2378
        %v2412 = vunpack.c.l.b16 %v2379
        %v2413 = vunpack.c.l.b16 %v2380
        %v2414 = vunpack.c.l.b16 %v2381
        %v2415 = vunpack.c.l.b16 %v2382
        %v2416 = vunpack.c.l.b16 %v2383
        %v2417 = vunpack.c.l.b16 %v2384
        %v2418 = vunpack.c.l.b16 %v2385
        %v2419 = vunpack.c.l.b16 %v2386
        %v2420 = vunpack.c.l.b16 %v2387
        %v2421 = vpack.c.b16 %v2406, %v2405
        %v2422 = vpack.c.b16 %v2408, %v2407
        %v2423 = vpack.c.b16 %v2410, %v2409
        %v2424 = vpack.c.b16 %v2412, %v2411
        %v2425 = vpack.c.b16 %v2414, %v2413
        %v2426 = vpack.c.b16 %v2416, %v2415
        %v2427 = vpack.c.b16 %v2418, %v2417
        %v2428 = vpack.c.b16 %v2420, %v2419
        %2437 = vmatpush.bf16.msra.mxu0 %v2428
        %2438 = vmatpush.bf16.msra.mxu0 %v2427
        %2439 = vmatpush.bf16.msra.mxu0 %v2426
        %2440 = vmatpush.bf16.msra.mxu0 %v2425
        %2441 = vmatpush.bf16.msra.mxu0 %v2424
        %2442 = vmatpush.bf16.msra.mxu0 %v2423
        %2443 = vmatpush.bf16.msra.mxu0 %v2422
        %2444 = vmatpush.bf16.msra.mxu0 %v2421
        %2445 = vmatmul.bf16.gmra.mxu0 %v2388
        %v2446 = vpop.f32.mrf.mxu0
        %v2447 = vadd.f32 0.0, %v2446
        %v2448 = vpop.f32.mrf.mxu0
        %v2449 = vadd.f32 0.0, %v2448
        %2450 = vdwg.mxu0
        %v2467 = vunpack.c.l.b16 %v2353
        %v2468 = vunpack.c.l.b16 %v2354
        %v2469 = vunpack.c.l.b16 %v2355
        %v2470 = vunpack.c.l.b16 %v2356
        %v2471 = vunpack.c.l.b16 %v2357
        %v2472 = vunpack.c.l.b16 %v2358
        %v2473 = vunpack.c.l.b16 %v2359
        %v2474 = vunpack.c.l.b16 %v2360
        %v2475 = vunpack.c.l.b16 %v2361
        %v2476 = vunpack.c.l.b16 %v2362
        %v2477 = vunpack.c.l.b16 %v2363
        %v2478 = vunpack.c.l.b16 %v2364
        %v2479 = vunpack.c.l.b16 %v2365
        %v2480 = vunpack.c.l.b16 %v2366
        %v2481 = vunpack.c.l.b16 %v2367
        %v2482 = vunpack.c.l.b16 %v2368
        %v2483 = vpack.c.b16 %v2468, %v2467
        %v2484 = vpack.c.b16 %v2470, %v2469
        %v2485 = vpack.c.b16 %v2472, %v2471
        %v2486 = vpack.c.b16 %v2474, %v2473
        %v2487 = vpack.c.b16 %v2476, %v2475
        %v2488 = vpack.c.b16 %v2478, %v2477
        %v2489 = vpack.c.b16 %v2480, %v2479
        %v2490 = vpack.c.b16 %v2482, %v2481
        %2499 = vmatpush.bf16.msra.mxu0 %v2490
        %2500 = vmatpush.bf16.msra.mxu0 %v2489
        %2501 = vmatpush.bf16.msra.mxu0 %v2488
        %2502 = vmatpush.bf16.msra.mxu0 %v2487
        %2503 = vmatpush.bf16.msra.mxu0 %v2486
        %2504 = vmatpush.bf16.msra.mxu0 %v2485
        %2505 = vmatpush.bf16.msra.mxu0 %v2484
        %2506 = vmatpush.bf16.msra.mxu0 %v2483
        %2507 = vmatmul.bf16.gmra.mxu0 %v2369
        %v2508 = vpop.f32.mrf.mxu0
        %v2509 = vadd.f32 %v2447, %v2508
        %v2510 = vpop.f32.mrf.mxu0
        %v2511 = vadd.f32 %v2449, %v2510
        %2512 = vdwg.mxu0
        %v2513 = vld [vmem:[#allocation2 + $0x2] sm:$0xff]
        %v2514 = vld [vmem:[#allocation2 + $0xa] sm:$0xff]
        %v2515 = vld [vmem:[#allocation6 + $0x80] sm:$0xf]
        %v2516 = vld [vmem:[#allocation6 + $0x84] sm:$0xf]
        %v2517 = vld [vmem:[#allocation6 + $0x88] sm:$0xf]
        %v2518 = vld [vmem:[#allocation6 + $0x8c] sm:$0xf]
        %v2519 = vld [vmem:[#allocation6 + $0x90] sm:$0xf]
        %v2520 = vld [vmem:[#allocation6 + $0x94] sm:$0xf]
        %v2521 = vld [vmem:[#allocation6 + $0x98] sm:$0xf]
        %v2522 = vld [vmem:[#allocation6 + $0x9c] sm:$0xf]
        %v2523 = vld [vmem:[#allocation6 + $0xa0] sm:$0xf]
        %v2524 = vld [vmem:[#allocation6 + $0xa4] sm:$0xf]
        %v2525 = vld [vmem:[#allocation6 + $0xa8] sm:$0xf]
        %v2526 = vld [vmem:[#allocation6 + $0xac] sm:$0xf]
        %v2527 = vld [vmem:[#allocation6 + $0xb0] sm:$0xf]
        %v2528 = vld [vmem:[#allocation6 + $0xb4] sm:$0xf]
        %v2529 = vld [vmem:[#allocation6 + $0xb8] sm:$0xf]
        %v2530 = vld [vmem:[#allocation6 + $0xbc] sm:$0xf]
        %v2531 = vpack.c.bf16 %v2514, %v2513
        %v2548 = vunpack.c.l.b16 %v2515
        %v2549 = vunpack.c.l.b16 %v2516
        %v2550 = vunpack.c.l.b16 %v2517
        %v2551 = vunpack.c.l.b16 %v2518
        %v2552 = vunpack.c.l.b16 %v2519
        %v2553 = vunpack.c.l.b16 %v2520
        %v2554 = vunpack.c.l.b16 %v2521
        %v2555 = vunpack.c.l.b16 %v2522
        %v2556 = vunpack.c.l.b16 %v2523
        %v2557 = vunpack.c.l.b16 %v2524
        %v2558 = vunpack.c.l.b16 %v2525
        %v2559 = vunpack.c.l.b16 %v2526
        %v2560 = vunpack.c.l.b16 %v2527
        %v2561 = vunpack.c.l.b16 %v2528
        %v2562 = vunpack.c.l.b16 %v2529
        %v2563 = vunpack.c.l.b16 %v2530
        %v2564 = vpack.c.b16 %v2549, %v2548
        %v2565 = vpack.c.b16 %v2551, %v2550
        %v2566 = vpack.c.b16 %v2553, %v2552
        %v2567 = vpack.c.b16 %v2555, %v2554
        %v2568 = vpack.c.b16 %v2557, %v2556
        %v2569 = vpack.c.b16 %v2559, %v2558
        %v2570 = vpack.c.b16 %v2561, %v2560
        %v2571 = vpack.c.b16 %v2563, %v2562
        %2580 = vmatpush.bf16.msra.mxu0 %v2571
        %2581 = vmatpush.bf16.msra.mxu0 %v2570
        %2582 = vmatpush.bf16.msra.mxu0 %v2569
        %2583 = vmatpush.bf16.msra.mxu0 %v2568
        %2584 = vmatpush.bf16.msra.mxu0 %v2567
        %2585 = vmatpush.bf16.msra.mxu0 %v2566
        %2586 = vmatpush.bf16.msra.mxu0 %v2565
        %2587 = vmatpush.bf16.msra.mxu0 %v2564
        %2588 = vmatmul.bf16.gmra.mxu0 %v2531
        %v2589 = vpop.f32.mrf.mxu0
        %v2590 = vadd.f32 0.0, %v2589
        %v2591 = vpop.f32.mrf.mxu0
        %v2592 = vadd.f32 0.0, %v2591
        %2593 = vdwg.mxu0
        %v2594 = vadd.f32 %v2509, %v2590
        %v2595 = vadd.f32 %v2511, %v2592
        %v2596 = vld [vmem:[%s9] sm:$0x1]
        %v2598 = vperm.slane %v2596, 0
        %v2600 = vadd.f32 %v2594, %v2598
        %v2601 = vadd.f32 %v2595, %v2598
        %v2602 = vmax.f32 %v2600, 0.0
        %v2603 = vmax.f32 %v2601, 0.0
        %2604 = vst [vmem:[#allocation2] sm:$0x1] 0.0
        %2605 = vst [vmem:[#allocation2 + $0x11] sm:$0x1] 0.0
        %2606 = vst [vmem:[#allocation2 + $0x1] sm:$0xff] %v2602
        %2607 = vst [vmem:[#allocation2 + $0x9] sm:$0xff] %v2603
        %v2608 = vld [vmem:[#allocation2] sm:$0xff]
        %v2609 = vld [vmem:[#allocation2 + $0x8] sm:$0xff]
        %v2610 = vld [vmem:[#allocation8] sm:$0xf]
        %v2611 = vld [vmem:[#allocation8 + $0x4] sm:$0xf]
        %v2612 = vld [vmem:[#allocation8 + $0x8] sm:$0xf]
        %v2613 = vld [vmem:[#allocation8 + $0xc] sm:$0xf]
        %v2614 = vld [vmem:[#allocation8 + $0x10] sm:$0xf]
        %v2615 = vld [vmem:[#allocation8 + $0x14] sm:$0xf]
        %v2616 = vld [vmem:[#allocation8 + $0x18] sm:$0xf]
        %v2617 = vld [vmem:[#allocation8 + $0x1c] sm:$0xf]
        %v2618 = vld [vmem:[#allocation8 + $0x20] sm:$0xf]
        %v2619 = vld [vmem:[#allocation8 + $0x24] sm:$0xf]
        %v2620 = vld [vmem:[#allocation8 + $0x28] sm:$0xf]
        %v2621 = vld [vmem:[#allocation8 + $0x2c] sm:$0xf]
        %v2622 = vld [vmem:[#allocation8 + $0x30] sm:$0xf]
        %v2623 = vld [vmem:[#allocation8 + $0x34] sm:$0xf]
        %v2624 = vld [vmem:[#allocation8 + $0x38] sm:$0xf]
        %v2625 = vld [vmem:[#allocation8 + $0x3c] sm:$0xf]
        %v2626 = vpack.c.bf16 %v2609, %v2608
        %v2627 = vld [vmem:[#allocation2 + $0x1] sm:$0xff]
        %v2628 = vld [vmem:[#allocation2 + $0x9] sm:$0xff]
        %v2629 = vld [vmem:[#allocation8 + $0x40] sm:$0xf]
        %v2630 = vld [vmem:[#allocation8 + $0x44] sm:$0xf]
        %v2631 = vld [vmem:[#allocation8 + $0x48] sm:$0xf]
        %v2632 = vld [vmem:[#allocation8 + $0x4c] sm:$0xf]
        %v2633 = vld [vmem:[#allocation8 + $0x50] sm:$0xf]
        %v2634 = vld [vmem:[#allocation8 + $0x54] sm:$0xf]
        %v2635 = vld [vmem:[#allocation8 + $0x58] sm:$0xf]
        %v2636 = vld [vmem:[#allocation8 + $0x5c] sm:$0xf]
        %v2637 = vld [vmem:[#allocation8 + $0x60] sm:$0xf]
        %v2638 = vld [vmem:[#allocation8 + $0x64] sm:$0xf]
        %v2639 = vld [vmem:[#allocation8 + $0x68] sm:$0xf]
        %v2640 = vld [vmem:[#allocation8 + $0x6c] sm:$0xf]
        %v2641 = vld [vmem:[#allocation8 + $0x70] sm:$0xf]
        %v2642 = vld [vmem:[#allocation8 + $0x74] sm:$0xf]
        %v2643 = vld [vmem:[#allocation8 + $0x78] sm:$0xf]
        %v2644 = vld [vmem:[#allocation8 + $0x7c] sm:$0xf]
        %v2645 = vpack.c.bf16 %v2628, %v2627
        %v2662 = vunpack.c.l.b16 %v2629
        %v2663 = vunpack.c.l.b16 %v2630
        %v2664 = vunpack.c.l.b16 %v2631
        %v2665 = vunpack.c.l.b16 %v2632
        %v2666 = vunpack.c.l.b16 %v2633
        %v2667 = vunpack.c.l.b16 %v2634
        %v2668 = vunpack.c.l.b16 %v2635
        %v2669 = vunpack.c.l.b16 %v2636
        %v2670 = vunpack.c.l.b16 %v2637
        %v2671 = vunpack.c.l.b16 %v2638
        %v2672 = vunpack.c.l.b16 %v2639
        %v2673 = vunpack.c.l.b16 %v2640
        %v2674 = vunpack.c.l.b16 %v2641
        %v2675 = vunpack.c.l.b16 %v2642
        %v2676 = vunpack.c.l.b16 %v2643
        %v2677 = vunpack.c.l.b16 %v2644
        %v2678 = vpack.c.b16 %v2663, %v2662
        %v2679 = vpack.c.b16 %v2665, %v2664
        %v2680 = vpack.c.b16 %v2667, %v2666
        %v2681 = vpack.c.b16 %v2669, %v2668
        %v2682 = vpack.c.b16 %v2671, %v2670
        %v2683 = vpack.c.b16 %v2673, %v2672
        %v2684 = vpack.c.b16 %v2675, %v2674
        %v2685 = vpack.c.b16 %v2677, %v2676
        %2694 = vmatpush.bf16.msra.mxu0 %v2685
        %2695 = vmatpush.bf16.msra.mxu0 %v2684
        %2696 = vmatpush.bf16.msra.mxu0 %v2683
        %2697 = vmatpush.bf16.msra.mxu0 %v2682
        %2698 = vmatpush.bf16.msra.mxu0 %v2681
        %2699 = vmatpush.bf16.msra.mxu0 %v2680
        %2700 = vmatpush.bf16.msra.mxu0 %v2679
        %2701 = vmatpush.bf16.msra.mxu0 %v2678
        %2702 = vmatmul.bf16.gmra.mxu0 %v2645
        %v2703 = vpop.f32.mrf.mxu0
        %v2704 = vadd.f32 0.0, %v2703
        %v2705 = vpop.f32.mrf.mxu0
        %v2706 = vadd.f32 0.0, %v2705
        %2707 = vdwg.mxu0
        %v2724 = vunpack.c.l.b16 %v2610
        %v2725 = vunpack.c.l.b16 %v2611
        %v2726 = vunpack.c.l.b16 %v2612
        %v2727 = vunpack.c.l.b16 %v2613
        %v2728 = vunpack.c.l.b16 %v2614
        %v2729 = vunpack.c.l.b16 %v2615
        %v2730 = vunpack.c.l.b16 %v2616
        %v2731 = vunpack.c.l.b16 %v2617
        %v2732 = vunpack.c.l.b16 %v2618
        %v2733 = vunpack.c.l.b16 %v2619
        %v2734 = vunpack.c.l.b16 %v2620
        %v2735 = vunpack.c.l.b16 %v2621
        %v2736 = vunpack.c.l.b16 %v2622
        %v2737 = vunpack.c.l.b16 %v2623
        %v2738 = vunpack.c.l.b16 %v2624
        %v2739 = vunpack.c.l.b16 %v2625
        %v2740 = vpack.c.b16 %v2725, %v2724
        %v2741 = vpack.c.b16 %v2727, %v2726
        %v2742 = vpack.c.b16 %v2729, %v2728
        %v2743 = vpack.c.b16 %v2731, %v2730
        %v2744 = vpack.c.b16 %v2733, %v2732
        %v2745 = vpack.c.b16 %v2735, %v2734
        %v2746 = vpack.c.b16 %v2737, %v2736
        %v2747 = vpack.c.b16 %v2739, %v2738
        %2756 = vmatpush.bf16.msra.mxu0 %v2747
        %2757 = vmatpush.bf16.msra.mxu0 %v2746
        %2758 = vmatpush.bf16.msra.mxu0 %v2745
        %2759 = vmatpush.bf16.msra.mxu0 %v2744
        %2760 = vmatpush.bf16.msra.mxu0 %v2743
        %2761 = vmatpush.bf16.msra.mxu0 %v2742
        %2762 = vmatpush.bf16.msra.mxu0 %v2741
        %2763 = vmatpush.bf16.msra.mxu0 %v2740
        %2764 = vmatmul.bf16.gmra.mxu0 %v2626
        %v2765 = vpop.f32.mrf.mxu0
        %v2766 = vadd.f32 %v2704, %v2765
        %v2767 = vpop.f32.mrf.mxu0
        %v2768 = vadd.f32 %v2706, %v2767
        %2769 = vdwg.mxu0
        %v2770 = vld [vmem:[#allocation2 + $0x2] sm:$0xff]
        %v2771 = vld [vmem:[#allocation2 + $0xa] sm:$0xff]
        %v2772 = vld [vmem:[#allocation8 + $0x80] sm:$0xf]
        %v2773 = vld [vmem:[#allocation8 + $0x84] sm:$0xf]
        %v2774 = vld [vmem:[#allocation8 + $0x88] sm:$0xf]
        %v2775 = vld [vmem:[#allocation8 + $0x8c] sm:$0xf]
        %v2776 = vld [vmem:[#allocation8 + $0x90] sm:$0xf]
        %v2777 = vld [vmem:[#allocation8 + $0x94] sm:$0xf]
        %v2778 = vld [vmem:[#allocation8 + $0x98] sm:$0xf]
        %v2779 = vld [vmem:[#allocation8 + $0x9c] sm:$0xf]
        %v2780 = vld [vmem:[#allocation8 + $0xa0] sm:$0xf]
        %v2781 = vld [vmem:[#allocation8 + $0xa4] sm:$0xf]
        %v2782 = vld [vmem:[#allocation8 + $0xa8] sm:$0xf]
        %v2783 = vld [vmem:[#allocation8 + $0xac] sm:$0xf]
        %v2784 = vld [vmem:[#allocation8 + $0xb0] sm:$0xf]
        %v2785 = vld [vmem:[#allocation8 + $0xb4] sm:$0xf]
        %v2786 = vld [vmem:[#allocation8 + $0xb8] sm:$0xf]
        %v2787 = vld [vmem:[#allocation8 + $0xbc] sm:$0xf]
        %v2788 = vpack.c.bf16 %v2771, %v2770
        %v2805 = vunpack.c.l.b16 %v2772
        %v2806 = vunpack.c.l.b16 %v2773
        %v2807 = vunpack.c.l.b16 %v2774
        %v2808 = vunpack.c.l.b16 %v2775
        %v2809 = vunpack.c.l.b16 %v2776
        %v2810 = vunpack.c.l.b16 %v2777
        %v2811 = vunpack.c.l.b16 %v2778
        %v2812 = vunpack.c.l.b16 %v2779
        %v2813 = vunpack.c.l.b16 %v2780
        %v2814 = vunpack.c.l.b16 %v2781
        %v2815 = vunpack.c.l.b16 %v2782
        %v2816 = vunpack.c.l.b16 %v2783
        %v2817 = vunpack.c.l.b16 %v2784
        %v2818 = vunpack.c.l.b16 %v2785
        %v2819 = vunpack.c.l.b16 %v2786
        %v2820 = vunpack.c.l.b16 %v2787
        %v2821 = vpack.c.b16 %v2806, %v2805
        %v2822 = vpack.c.b16 %v2808, %v2807
        %v2823 = vpack.c.b16 %v2810, %v2809
        %v2824 = vpack.c.b16 %v2812, %v2811
        %v2825 = vpack.c.b16 %v2814, %v2813
        %v2826 = vpack.c.b16 %v2816, %v2815
        %v2827 = vpack.c.b16 %v2818, %v2817
        %v2828 = vpack.c.b16 %v2820, %v2819
        %2837 = vmatpush.bf16.msra.mxu0 %v2828
        %2838 = vmatpush.bf16.msra.mxu0 %v2827
        %2839 = vmatpush.bf16.msra.mxu0 %v2826
        %2840 = vmatpush.bf16.msra.mxu0 %v2825
        %2841 = vmatpush.bf16.msra.mxu0 %v2824
        %2842 = vmatpush.bf16.msra.mxu0 %v2823
        %2843 = vmatpush.bf16.msra.mxu0 %v2822
        %2844 = vmatpush.bf16.msra.mxu0 %v2821
        %2845 = vmatmul.bf16.gmra.mxu0 %v2788
        %v2846 = vpop.f32.mrf.mxu0
        %v2847 = vadd.f32 0.0, %v2846
        %v2848 = vpop.f32.mrf.mxu0
        %v2849 = vadd.f32 0.0, %v2848
        %2850 = vdwg.mxu0
        %v2851 = vadd.f32 %v2766, %v2847
        %v2852 = vadd.f32 %v2768, %v2849
        %v2853 = vld [vmem:[%s13] sm:$0x1]
        %v2855 = vperm.slane %v2853, 0
        %v2857 = vadd.f32 %v2851, %v2855
        %v2858 = vadd.f32 %v2852, %v2855
        %v2859 = vadd.f32 %v2857, %v2345
        %v2860 = vadd.f32 %v2858, %v2346
        %v2861 = vmax.f32 %v2859, 0.0
        %v2862 = vmax.f32 %v2860, 0.0
        %2863 = vst [vmem:[#allocation2] sm:$0x1] 0.0
        %2864 = vst [vmem:[#allocation2 + $0x11] sm:$0x1] 0.0
        %2865 = vst [vmem:[#allocation2 + $0x1] sm:$0xff] %v2861
        %2866 = vst [vmem:[#allocation2 + $0x9] sm:$0xff] %v2862
        %v2867 = vld [vmem:[#allocation2] sm:$0xff]
        %v2868 = vld [vmem:[#allocation2 + $0x8] sm:$0xff]
        %v2869 = vld [vmem:[#allocation9] sm:$0xf]
        %v2870 = vld [vmem:[#allocation9 + $0x4] sm:$0xf]
        %v2871 = vld [vmem:[#allocation9 + $0x8] sm:$0xf]
        %v2872 = vld [vmem:[#allocation9 + $0xc] sm:$0xf]
        %v2873 = vld [vmem:[#allocation9 + $0x10] sm:$0xf]
        %v2874 = vld [vmem:[#allocation9 + $0x14] sm:$0xf]
        %v2875 = vld [vmem:[#allocation9 + $0x18] sm:$0xf]
        %v2876 = vld [vmem:[#allocation9 + $0x1c] sm:$0xf]
        %v2877 = vld [vmem:[#allocation9 + $0x20] sm:$0xf]
        %v2878 = vld [vmem:[#allocation9 + $0x24] sm:$0xf]
        %v2879 = vld [vmem:[#allocation9 + $0x28] sm:$0xf]
        %v2880 = vld [vmem:[#allocation9 + $0x2c] sm:$0xf]
        %v2881 = vld [vmem:[#allocation9 + $0x30] sm:$0xf]
        %v2882 = vld [vmem:[#allocation9 + $0x34] sm:$0xf]
        %v2883 = vld [vmem:[#allocation9 + $0x38] sm:$0xf]
        %v2884 = vld [vmem:[#allocation9 + $0x3c] sm:$0xf]
        %v2885 = vpack.c.bf16 %v2868, %v2867
        %v2886 = vld [vmem:[#allocation2 + $0x1] sm:$0xff]
        %v2887 = vld [vmem:[#allocation2 + $0x9] sm:$0xff]
        %v2888 = vld [vmem:[#allocation9 + $0x40] sm:$0xf]
        %v2889 = vld [vmem:[#allocation9 + $0x44] sm:$0xf]
        %v2890 = vld [vmem:[#allocation9 + $0x48] sm:$0xf]
        %v2891 = vld [vmem:[#allocation9 + $0x4c] sm:$0xf]
        %v2892 = vld [vmem:[#allocation9 + $0x50] sm:$0xf]
        %v2893 = vld [vmem:[#allocation9 + $0x54] sm:$0xf]
        %v2894 = vld [vmem:[#allocation9 + $0x58] sm:$0xf]
        %v2895 = vld [vmem:[#allocation9 + $0x5c] sm:$0xf]
        %v2896 = vld [vmem:[#allocation9 + $0x60] sm:$0xf]
        %v2897 = vld [vmem:[#allocation9 + $0x64] sm:$0xf]
        %v2898 = vld [vmem:[#allocation9 + $0x68] sm:$0xf]
        %v2899 = vld [vmem:[#allocation9 + $0x6c] sm:$0xf]
        %v2900 = vld [vmem:[#allocation9 + $0x70] sm:$0xf]
        %v2901 = vld [vmem:[#allocation9 + $0x74] sm:$0xf]
        %v2902 = vld [vmem:[#allocation9 + $0x78] sm:$0xf]
        %v2903 = vld [vmem:[#allocation9 + $0x7c] sm:$0xf]
        %v2904 = vpack.c.bf16 %v2887, %v2886
        %v2921 = vunpack.c.l.b16 %v2888
        %v2922 = vunpack.c.l.b16 %v2889
        %v2923 = vunpack.c.l.b16 %v2890
        %v2924 = vunpack.c.l.b16 %v2891
        %v2925 = vunpack.c.l.b16 %v2892
        %v2926 = vunpack.c.l.b16 %v2893
        %v2927 = vunpack.c.l.b16 %v2894
        %v2928 = vunpack.c.l.b16 %v2895
        %v2929 = vunpack.c.l.b16 %v2896
        %v2930 = vunpack.c.l.b16 %v2897
        %v2931 = vunpack.c.l.b16 %v2898
        %v2932 = vunpack.c.l.b16 %v2899
        %v2933 = vunpack.c.l.b16 %v2900
        %v2934 = vunpack.c.l.b16 %v2901
        %v2935 = vunpack.c.l.b16 %v2902
        %v2936 = vunpack.c.l.b16 %v2903
        %v2937 = vpack.c.b16 %v2922, %v2921
        %v2938 = vpack.c.b16 %v2924, %v2923
        %v2939 = vpack.c.b16 %v2926, %v2925
        %v2940 = vpack.c.b16 %v2928, %v2927
        %v2941 = vpack.c.b16 %v2930, %v2929
        %v2942 = vpack.c.b16 %v2932, %v2931
        %v2943 = vpack.c.b16 %v2934, %v2933
        %v2944 = vpack.c.b16 %v2936, %v2935
        %2953 = vmatpush.bf16.msra.mxu0 %v2944
        %2954 = vmatpush.bf16.msra.mxu0 %v2943
        %2955 = vmatpush.bf16.msra.mxu0 %v2942
        %2956 = vmatpush.bf16.msra.mxu0 %v2941
        %2957 = vmatpush.bf16.msra.mxu0 %v2940
        %2958 = vmatpush.bf16.msra.mxu0 %v2939
        %2959 = vmatpush.bf16.msra.mxu0 %v2938
        %2960 = vmatpush.bf16.msra.mxu0 %v2937
        %2961 = vmatmul.bf16.gmra.mxu0 %v2904
        %v2962 = vpop.f32.mrf.mxu0
        %v2963 = vadd.f32 0.0, %v2962
        %v2964 = vpop.f32.mrf.mxu0
        %v2965 = vadd.f32 0.0, %v2964
        %2966 = vdwg.mxu0
        %v2983 = vunpack.c.l.b16 %v2869
        %v2984 = vunpack.c.l.b16 %v2870
        %v2985 = vunpack.c.l.b16 %v2871
        %v2986 = vunpack.c.l.b16 %v2872
        %v2987 = vunpack.c.l.b16 %v2873
        %v2988 = vunpack.c.l.b16 %v2874
        %v2989 = vunpack.c.l.b16 %v2875
        %v2990 = vunpack.c.l.b16 %v2876
        %v2991 = vunpack.c.l.b16 %v2877
        %v2992 = vunpack.c.l.b16 %v2878
        %v2993 = vunpack.c.l.b16 %v2879
        %v2994 = vunpack.c.l.b16 %v2880
        %v2995 = vunpack.c.l.b16 %v2881
        %v2996 = vunpack.c.l.b16 %v2882
        %v2997 = vunpack.c.l.b16 %v2883
        %v2998 = vunpack.c.l.b16 %v2884
        %v2999 = vpack.c.b16 %v2984, %v2983
        %v3000 = vpack.c.b16 %v2986, %v2985
        %v3001 = vpack.c.b16 %v2988, %v2987
        %v3002 = vpack.c.b16 %v2990, %v2989
        %v3003 = vpack.c.b16 %v2992, %v2991
        %v3004 = vpack.c.b16 %v2994, %v2993
        %v3005 = vpack.c.b16 %v2996, %v2995
        %v3006 = vpack.c.b16 %v2998, %v2997
        %3015 = vmatpush.bf16.msra.mxu0 %v3006
        %3016 = vmatpush.bf16.msra.mxu0 %v3005
        %3017 = vmatpush.bf16.msra.mxu0 %v3004
        %3018 = vmatpush.bf16.msra.mxu0 %v3003
        %3019 = vmatpush.bf16.msra.mxu0 %v3002
        %3020 = vmatpush.bf16.msra.mxu0 %v3001
        %3021 = vmatpush.bf16.msra.mxu0 %v3000
        %3022 = vmatpush.bf16.msra.mxu0 %v2999
        %3023 = vmatmul.bf16.gmra.mxu0 %v2885
        %v3024 = vpop.f32.mrf.mxu0
        %v3025 = vadd.f32 %v2963, %v3024
        %v3026 = vpop.f32.mrf.mxu0
        %v3027 = vadd.f32 %v2965, %v3026
        %3028 = vdwg.mxu0
        %v3029 = vld [vmem:[#allocation2 + $0x2] sm:$0xff]
        %v3030 = vld [vmem:[#allocation2 + $0xa] sm:$0xff]
        %v3031 = vld [vmem:[#allocation9 + $0x80] sm:$0xf]
        %v3032 = vld [vmem:[#allocation9 + $0x84] sm:$0xf]
        %v3033 = vld [vmem:[#allocation9 + $0x88] sm:$0xf]
        %v3034 = vld [vmem:[#allocation9 + $0x8c] sm:$0xf]
        %v3035 = vld [vmem:[#allocation9 + $0x90] sm:$0xf]
        %v3036 = vld [vmem:[#allocation9 + $0x94] sm:$0xf]
        %v3037 = vld [vmem:[#allocation9 + $0x98] sm:$0xf]
        %v3038 = vld [vmem:[#allocation9 + $0x9c] sm:$0xf]
        %v3039 = vld [vmem:[#allocation9 + $0xa0] sm:$0xf]
        %v3040 = vld [vmem:[#allocation9 + $0xa4] sm:$0xf]
        %v3041 = vld [vmem:[#allocation9 + $0xa8] sm:$0xf]
        %v3042 = vld [vmem:[#allocation9 + $0xac] sm:$0xf]
        %v3043 = vld [vmem:[#allocation9 + $0xb0] sm:$0xf]
        %v3044 = vld [vmem:[#allocation9 + $0xb4] sm:$0xf]
        %v3045 = vld [vmem:[#allocation9 + $0xb8] sm:$0xf]
        %v3046 = vld [vmem:[#allocation9 + $0xbc] sm:$0xf]
        %v3047 = vpack.c.bf16 %v3030, %v3029
        %v3064 = vunpack.c.l.b16 %v3031
        %v3065 = vunpack.c.l.b16 %v3032
        %v3066 = vunpack.c.l.b16 %v3033
        %v3067 = vunpack.c.l.b16 %v3034
        %v3068 = vunpack.c.l.b16 %v3035
        %v3069 = vunpack.c.l.b16 %v3036
        %v3070 = vunpack.c.l.b16 %v3037
        %v3071 = vunpack.c.l.b16 %v3038
        %v3072 = vunpack.c.l.b16 %v3039
        %v3073 = vunpack.c.l.b16 %v3040
        %v3074 = vunpack.c.l.b16 %v3041
        %v3075 = vunpack.c.l.b16 %v3042
        %v3076 = vunpack.c.l.b16 %v3043
        %v3077 = vunpack.c.l.b16 %v3044
        %v3078 = vunpack.c.l.b16 %v3045
        %v3079 = vunpack.c.l.b16 %v3046
        %v3080 = vpack.c.b16 %v3065, %v3064
        %v3081 = vpack.c.b16 %v3067, %v3066
        %v3082 = vpack.c.b16 %v3069, %v3068
        %v3083 = vpack.c.b16 %v3071, %v3070
        %v3084 = vpack.c.b16 %v3073, %v3072
        %v3085 = vpack.c.b16 %v3075, %v3074
        %v3086 = vpack.c.b16 %v3077, %v3076
        %v3087 = vpack.c.b16 %v3079, %v3078
        %3096 = vmatpush.bf16.msra.mxu0 %v3087
        %3097 = vmatpush.bf16.msra.mxu0 %v3086
        %3098 = vmatpush.bf16.msra.mxu0 %v3085
        %3099 = vmatpush.bf16.msra.mxu0 %v3084
        %3100 = vmatpush.bf16.msra.mxu0 %v3083
        %3101 = vmatpush.bf16.msra.mxu0 %v3082
        %3102 = vmatpush.bf16.msra.mxu0 %v3081
        %3103 = vmatpush.bf16.msra.mxu0 %v3080
        %3104 = vmatmul.bf16.gmra.mxu0 %v3047
        %v3105 = vpop.f32.mrf.mxu0
        %v3106 = vadd.f32 0.0, %v3105
        %v3107 = vpop.f32.mrf.mxu0
        %v3108 = vadd.f32 0.0, %v3107
        %3109 = vdwg.mxu0
        %v3110 = vadd.f32 %v3025, %v3106
        %v3111 = vadd.f32 %v3027, %v3108
        %v3112 = vld [vmem:[%s17] sm:$0x1]
        %v3114 = vperm.slane %v3112, 0
        %v3116 = vadd.f32 %v3110, %v3114
        %v3117 = vadd.f32 %v3111, %v3114
        %v3118 = vmax.f32 %v3116, 0.0
        %v3119 = vmax.f32 %v3117, 0.0
        %3120 = vst [vmem:[#allocation2] sm:$0x1] 0.0
        %3121 = vst [vmem:[#allocation2 + $0x11] sm:$0x1] 0.0
        %3122 = vst [vmem:[#allocation2 + $0x1] sm:$0xff] %v3118
        %3123 = vst [vmem:[#allocation2 + $0x9] sm:$0xff] %v3119
        %v3124 = vld [vmem:[#allocation2] sm:$0xff]
        %v3125 = vld [vmem:[#allocation2 + $0x8] sm:$0xff]
        %v3126 = vld [vmem:[#allocation11] sm:$0xf]
        %v3127 = vld [vmem:[#allocation11 + $0x4] sm:$0xf]
        %v3128 = vld [vmem:[#allocation11 + $0x8] sm:$0xf]
        %v3129 = vld [vmem:[#allocation11 + $0xc] sm:$0xf]
        %v3130 = vld [vmem:[#allocation11 + $0x10] sm:$0xf]
        %v3131 = vld [vmem:[#allocation11 + $0x14] sm:$0xf]
        %v3132 = vld [vmem:[#allocation11 + $0x18] sm:$0xf]
        %v3133 = vld [vmem:[#allocation11 + $0x1c] sm:$0xf]
        %v3134 = vld [vmem:[#allocation11 + $0x20] sm:$0xf]
        %v3135 = vld [vmem:[#allocation11 + $0x24] sm:$0xf]
        %v3136 = vld [vmem:[#allocation11 + $0x28] sm:$0xf]
        %v3137 = vld [vmem:[#allocation11 + $0x2c] sm:$0xf]
        %v3138 = vld [vmem:[#allocation11 + $0x30] sm:$0xf]
        %v3139 = vld [vmem:[#allocation11 + $0x34] sm:$0xf]
        %v3140 = vld [vmem:[#allocation11 + $0x38] sm:$0xf]
        %v3141 = vld [vmem:[#allocation11 + $0x3c] sm:$0xf]
        %v3142 = vpack.c.bf16 %v3125, %v3124
        %v3143 = vld [vmem:[#allocation2 + $0x1] sm:$0xff]
        %v3144 = vld [vmem:[#allocation2 + $0x9] sm:$0xff]
        %v3145 = vld [vmem:[#allocation11 + $0x40] sm:$0xf]
        %v3146 = vld [vmem:[#allocation11 + $0x44] sm:$0xf]
        %v3147 = vld [vmem:[#allocation11 + $0x48] sm:$0xf]
        %v3148 = vld [vmem:[#allocation11 + $0x4c] sm:$0xf]
        %v3149 = vld [vmem:[#allocation11 + $0x50] sm:$0xf]
        %v3150 = vld [vmem:[#allocation11 + $0x54] sm:$0xf]
        %v3151 = vld [vmem:[#allocation11 + $0x58] sm:$0xf]
        %v3152 = vld [vmem:[#allocation11 + $0x5c] sm:$0xf]
        %v3153 = vld [vmem:[#allocation11 + $0x60] sm:$0xf]
        %v3154 = vld [vmem:[#allocation11 + $0x64] sm:$0xf]
        %v3155 = vld [vmem:[#allocation11 + $0x68] sm:$0xf]
        %v3156 = vld [vmem:[#allocation11 + $0x6c] sm:$0xf]
        %v3157 = vld [vmem:[#allocation11 + $0x70] sm:$0xf]
        %v3158 = vld [vmem:[#allocation11 + $0x74] sm:$0xf]
        %v3159 = vld [vmem:[#allocation11 + $0x78] sm:$0xf]
        %v3160 = vld [vmem:[#allocation11 + $0x7c] sm:$0xf]
        %v3161 = vpack.c.bf16 %v3144, %v3143
        %v3178 = vunpack.c.l.b16 %v3145
        %v3179 = vunpack.c.l.b16 %v3146
        %v3180 = vunpack.c.l.b16 %v3147
        %v3181 = vunpack.c.l.b16 %v3148
        %v3182 = vunpack.c.l.b16 %v3149
        %v3183 = vunpack.c.l.b16 %v3150
        %v3184 = vunpack.c.l.b16 %v3151
        %v3185 = vunpack.c.l.b16 %v3152
        %v3186 = vunpack.c.l.b16 %v3153
        %v3187 = vunpack.c.l.b16 %v3154
        %v3188 = vunpack.c.l.b16 %v3155
        %v3189 = vunpack.c.l.b16 %v3156
        %v3190 = vunpack.c.l.b16 %v3157
        %v3191 = vunpack.c.l.b16 %v3158
        %v3192 = vunpack.c.l.b16 %v3159
        %v3193 = vunpack.c.l.b16 %v3160
        %v3194 = vpack.c.b16 %v3179, %v3178
        %v3195 = vpack.c.b16 %v3181, %v3180
        %v3196 = vpack.c.b16 %v3183, %v3182
        %v3197 = vpack.c.b16 %v3185, %v3184
        %v3198 = vpack.c.b16 %v3187, %v3186
        %v3199 = vpack.c.b16 %v3189, %v3188
        %v3200 = vpack.c.b16 %v3191, %v3190
        %v3201 = vpack.c.b16 %v3193, %v3192
        %3210 = vmatpush.bf16.msra.mxu0 %v3201
        %3211 = vmatpush.bf16.msra.mxu0 %v3200
        %3212 = vmatpush.bf16.msra.mxu0 %v3199
        %3213 = vmatpush.bf16.msra.mxu0 %v3198
        %3214 = vmatpush.bf16.msra.mxu0 %v3197
        %3215 = vmatpush.bf16.msra.mxu0 %v3196
        %3216 = vmatpush.bf16.msra.mxu0 %v3195
        %3217 = vmatpush.bf16.msra.mxu0 %v3194
        %3218 = vmatmul.bf16.gmra.mxu0 %v3161
        %v3219 = vpop.f32.mrf.mxu0
        %v3220 = vadd.f32 0.0, %v3219
        %v3221 = vpop.f32.mrf.mxu0
        %v3222 = vadd.f32 0.0, %v3221
        %3223 = vdwg.mxu0
        %v3240 = vunpack.c.l.b16 %v3126
        %v3241 = vunpack.c.l.b16 %v3127
        %v3242 = vunpack.c.l.b16 %v3128
        %v3243 = vunpack.c.l.b16 %v3129
        %v3244 = vunpack.c.l.b16 %v3130
        %v3245 = vunpack.c.l.b16 %v3131
        %v3246 = vunpack.c.l.b16 %v3132
        %v3247 = vunpack.c.l.b16 %v3133
        %v3248 = vunpack.c.l.b16 %v3134
        %v3249 = vunpack.c.l.b16 %v3135
        %v3250 = vunpack.c.l.b16 %v3136
        %v3251 = vunpack.c.l.b16 %v3137
        %v3252 = vunpack.c.l.b16 %v3138
        %v3253 = vunpack.c.l.b16 %v3139
        %v3254 = vunpack.c.l.b16 %v3140
        %v3255 = vunpack.c.l.b16 %v3141
        %v3256 = vpack.c.b16 %v3241, %v3240
        %v3257 = vpack.c.b16 %v3243, %v3242
        %v3258 = vpack.c.b16 %v3245, %v3244
        %v3259 = vpack.c.b16 %v3247, %v3246
        %v3260 = vpack.c.b16 %v3249, %v3248
        %v3261 = vpack.c.b16 %v3251, %v3250
        %v3262 = vpack.c.b16 %v3253, %v3252
        %v3263 = vpack.c.b16 %v3255, %v3254
        %3272 = vmatpush.bf16.msra.mxu0 %v3263
        %3273 = vmatpush.bf16.msra.mxu0 %v3262
        %3274 = vmatpush.bf16.msra.mxu0 %v3261
        %3275 = vmatpush.bf16.msra.mxu0 %v3260
        %3276 = vmatpush.bf16.msra.mxu0 %v3259
        %3277 = vmatpush.bf16.msra.mxu0 %v3258
        %3278 = vmatpush.bf16.msra.mxu0 %v3257
        %3279 = vmatpush.bf16.msra.mxu0 %v3256
        %3280 = vmatmul.bf16.gmra.mxu0 %v3142
        %v3281 = vpop.f32.mrf.mxu0
        %v3282 = vadd.f32 %v3220, %v3281
        %v3283 = vpop.f32.mrf.mxu0
        %v3284 = vadd.f32 %v3222, %v3283
        %3285 = vdwg.mxu0
        %v3286 = vld [vmem:[#allocation2 + $0x2] sm:$0xff]
        %v3287 = vld [vmem:[#allocation2 + $0xa] sm:$0xff]
        %v3288 = vld [vmem:[#allocation11 + $0x80] sm:$0xf]
        %v3289 = vld [vmem:[#allocation11 + $0x84] sm:$0xf]
        %v3290 = vld [vmem:[#allocation11 + $0x88] sm:$0xf]
        %v3291 = vld [vmem:[#allocation11 + $0x8c] sm:$0xf]
        %v3292 = vld [vmem:[#allocation11 + $0x90] sm:$0xf]
        %v3293 = vld [vmem:[#allocation11 + $0x94] sm:$0xf]
        %v3294 = vld [vmem:[#allocation11 + $0x98] sm:$0xf]
        %v3295 = vld [vmem:[#allocation11 + $0x9c] sm:$0xf]
        %v3296 = vld [vmem:[#allocation11 + $0xa0] sm:$0xf]
        %v3297 = vld [vmem:[#allocation11 + $0xa4] sm:$0xf]
        %v3298 = vld [vmem:[#allocation11 + $0xa8] sm:$0xf]
        %v3299 = vld [vmem:[#allocation11 + $0xac] sm:$0xf]
        %v3300 = vld [vmem:[#allocation11 + $0xb0] sm:$0xf]
        %v3301 = vld [vmem:[#allocation11 + $0xb4] sm:$0xf]
        %v3302 = vld [vmem:[#allocation11 + $0xb8] sm:$0xf]
        %v3303 = vld [vmem:[#allocation11 + $0xbc] sm:$0xf]
        %v3304 = vpack.c.bf16 %v3287, %v3286
        %v3321 = vunpack.c.l.b16 %v3288
        %v3322 = vunpack.c.l.b16 %v3289
        %v3323 = vunpack.c.l.b16 %v3290
        %v3324 = vunpack.c.l.b16 %v3291
        %v3325 = vunpack.c.l.b16 %v3292
        %v3326 = vunpack.c.l.b16 %v3293
        %v3327 = vunpack.c.l.b16 %v3294
        %v3328 = vunpack.c.l.b16 %v3295
        %v3329 = vunpack.c.l.b16 %v3296
        %v3330 = vunpack.c.l.b16 %v3297
        %v3331 = vunpack.c.l.b16 %v3298
        %v3332 = vunpack.c.l.b16 %v3299
        %v3333 = vunpack.c.l.b16 %v3300
        %v3334 = vunpack.c.l.b16 %v3301
        %v3335 = vunpack.c.l.b16 %v3302
        %v3336 = vunpack.c.l.b16 %v3303
        %v3337 = vpack.c.b16 %v3322, %v3321
        %v3338 = vpack.c.b16 %v3324, %v3323
        %v3339 = vpack.c.b16 %v3326, %v3325
        %v3340 = vpack.c.b16 %v3328, %v3327
        %v3341 = vpack.c.b16 %v3330, %v3329
        %v3342 = vpack.c.b16 %v3332, %v3331
        %v3343 = vpack.c.b16 %v3334, %v3333
        %v3344 = vpack.c.b16 %v3336, %v3335
        %3353 = vmatpush.bf16.msra.mxu0 %v3344
        %3354 = vmatpush.bf16.msra.mxu0 %v3343
        %3355 = vmatpush.bf16.msra.mxu0 %v3342
        %3356 = vmatpush.bf16.msra.mxu0 %v3341
        %3357 = vmatpush.bf16.msra.mxu0 %v3340
        %3358 = vmatpush.bf16.msra.mxu0 %v3339
        %3359 = vmatpush.bf16.msra.mxu0 %v3338
        %3360 = vmatpush.bf16.msra.mxu0 %v3337
        %3361 = vmatmul.bf16.gmra.mxu0 %v3304
        %v3362 = vpop.f32.mrf.mxu0
        %v3363 = vadd.f32 0.0, %v3362
        %v3364 = vpop.f32.mrf.mxu0
        %v3365 = vadd.f32 0.0, %v3364
        %3366 = vdwg.mxu0
        %v3367 = vadd.f32 %v3282, %v3363
        %v3368 = vadd.f32 %v3284, %v3365
        %v3369 = vld [vmem:[%s21] sm:$0x1]
        %v3371 = vperm.slane %v3369, 0
        %v3373 = vadd.f32 %v3367, %v3371
        %v3374 = vadd.f32 %v3368, %v3371
        %v3375 = vadd.f32 %v3373, %v2861
        %v3376 = vadd.f32 %v3374, %v2862
        %v3377 = vmax.f32 %v3375, 0.0
        %v3378 = vmax.f32 %v3376, 0.0
        %3379 = vst [vmem:[#allocation2] sm:$0xff] %v3377
        %3380 = vst [vmem:[#allocation2 + $0x8] sm:$0xff] %v3378
        %v3381 = vld [vmem:[#allocation2] ss:$2 sm:$0xff]
        %v3382 = vld [vmem:[#allocation15] sm:$0xf]
        %v3383 = vld [vmem:[#allocation15 + $0x4] sm:$0xf]
        %v3384 = vld [vmem:[#allocation15 + $0x8] sm:$0xf]
        %v3385 = vld [vmem:[#allocation15 + $0xc] sm:$0xf]
        %v3386 = vld [vmem:[#allocation15 + $0x10] sm:$0xf]
        %v3387 = vld [vmem:[#allocation15 + $0x14] sm:$0xf]
        %v3388 = vld [vmem:[#allocation15 + $0x18] sm:$0xf]
        %v3389 = vld [vmem:[#allocation15 + $0x1c] sm:$0xf]
        %v3390 = vld [vmem:[#allocation15 + $0x20] sm:$0xf]
        %v3391 = vld [vmem:[#allocation15 + $0x24] sm:$0xf]
        %v3392 = vld [vmem:[#allocation15 + $0x28] sm:$0xf]
        %v3393 = vld [vmem:[#allocation15 + $0x2c] sm:$0xf]
        %v3394 = vld [vmem:[#allocation15 + $0x30] sm:$0xf]
        %v3395 = vld [vmem:[#allocation15 + $0x34] sm:$0xf]
        %v3396 = vld [vmem:[#allocation15 + $0x38] sm:$0xf]
        %v3397 = vld [vmem:[#allocation15 + $0x3c] sm:$0xf]
        %v3398 = vpack.c.bf16 %v3381, %v3381
        %v3399 = vld [vmem:[%s33] sm:$0x1]
        %v3401 = vperm.slane %v3399, 0
        %v3419 = vunpack.c.l.b16 %v3382
        %v3420 = vunpack.c.l.b16 %v3383
        %v3421 = vunpack.c.l.b16 %v3384
        %v3422 = vunpack.c.l.b16 %v3385
        %v3423 = vunpack.c.l.b16 %v3386
        %v3424 = vunpack.c.l.b16 %v3387
        %v3425 = vunpack.c.l.b16 %v3388
        %v3426 = vunpack.c.l.b16 %v3389
        %v3427 = vunpack.c.l.b16 %v3390
        %v3428 = vunpack.c.l.b16 %v3391
        %v3429 = vunpack.c.l.b16 %v3392
        %v3430 = vunpack.c.l.b16 %v3393
        %v3431 = vunpack.c.l.b16 %v3394
        %v3432 = vunpack.c.l.b16 %v3395
        %v3433 = vunpack.c.l.b16 %v3396
        %v3434 = vunpack.c.l.b16 %v3397
        %v3435 = vpack.c.b16 %v3420, %v3419
        %v3436 = vpack.c.b16 %v3422, %v3421
        %v3437 = vpack.c.b16 %v3424, %v3423
        %v3438 = vpack.c.b16 %v3426, %v3425
        %v3439 = vpack.c.b16 %v3428, %v3427
        %v3440 = vpack.c.b16 %v3430, %v3429
        %v3441 = vpack.c.b16 %v3432, %v3431
        %v3442 = vpack.c.b16 %v3434, %v3433
        %3451 = vmatpush.bf16.msra.mxu0 %v3442
        %3452 = vmatpush.bf16.msra.mxu0 %v3441
        %3453 = vmatpush.bf16.msra.mxu0 %v3440
        %3454 = vmatpush.bf16.msra.mxu0 %v3439
        %3455 = vmatpush.bf16.msra.mxu0 %v3438
        %3456 = vmatpush.bf16.msra.mxu0 %v3437
        %3457 = vmatpush.bf16.msra.mxu0 %v3436
        %3458 = vmatpush.bf16.msra.mxu0 %v3435
        %3459 = vmatmul.bf16.gmra.mxu0 %v3398
        %v3460 = vpop.f32.mrf.mxu0
        %v3461 = vadd.f32 %v3401, %v3460
        %v3462 = vpop.f32.mrf.mxu0
        %3463 = vdwg.mxu0
        %3464 = vst [vmem:[#allocation2] sm:$0x1] 0.0
        %3465 = vst [vmem:[#allocation2 + $0x11] sm:$0x1] 0.0
        %3466 = vst [vmem:[#allocation2 + $0x1] sm:$0xff] %v3377
        %3467 = vst [vmem:[#allocation2 + $0x9] sm:$0xff] %v3378
        %v3468 = vld [vmem:[#allocation2] ss:$2 sm:$0xff]
        %v3469 = vld [vmem:[#allocation12] sm:$0xf]
        %v3470 = vld [vmem:[#allocation12 + $0x4] sm:$0xf]
        %v3471 = vld [vmem:[#allocation12 + $0x8] sm:$0xf]
        %v3472 = vld [vmem:[#allocation12 + $0xc] sm:$0xf]
        %v3473 = vld [vmem:[#allocation12 + $0x10] sm:$0xf]
        %v3474 = vld [vmem:[#allocation12 + $0x14] sm:$0xf]
        %v3475 = vld [vmem:[#allocation12 + $0x18] sm:$0xf]
        %v3476 = vld [vmem:[#allocation12 + $0x1c] sm:$0xf]
        %v3477 = vld [vmem:[#allocation12 + $0x20] sm:$0xf]
        %v3478 = vld [vmem:[#allocation12 + $0x24] sm:$0xf]
        %v3479 = vld [vmem:[#allocation12 + $0x28] sm:$0xf]
        %v3480 = vld [vmem:[#allocation12 + $0x2c] sm:$0xf]
        %v3481 = vld [vmem:[#allocation12 + $0x30] sm:$0xf]
        %v3482 = vld [vmem:[#allocation12 + $0x34] sm:$0xf]
        %v3483 = vld [vmem:[#allocation12 + $0x38] sm:$0xf]
        %v3484 = vld [vmem:[#allocation12 + $0x3c] sm:$0xf]
        %v3485 = vpack.c.bf16 %v3468, %v3468
        %v3486 = vld [vmem:[%s1674] ss:$2 sm:$0xff]
        %v3487 = vld [vmem:[#allocation12 + $0x40] sm:$0xf]
        %v3488 = vld [vmem:[#allocation12 + $0x44] sm:$0xf]
        %v3489 = vld [vmem:[#allocation12 + $0x48] sm:$0xf]
        %v3490 = vld [vmem:[#allocation12 + $0x4c] sm:$0xf]
        %v3491 = vld [vmem:[#allocation12 + $0x50] sm:$0xf]
        %v3492 = vld [vmem:[#allocation12 + $0x54] sm:$0xf]
        %v3493 = vld [vmem:[#allocation12 + $0x58] sm:$0xf]
        %v3494 = vld [vmem:[#allocation12 + $0x5c] sm:$0xf]
        %v3495 = vld [vmem:[#allocation12 + $0x60] sm:$0xf]
        %v3496 = vld [vmem:[#allocation12 + $0x64] sm:$0xf]
        %v3497 = vld [vmem:[#allocation12 + $0x68] sm:$0xf]
        %v3498 = vld [vmem:[#allocation12 + $0x6c] sm:$0xf]
        %v3499 = vld [vmem:[#allocation12 + $0x70] sm:$0xf]
        %v3500 = vld [vmem:[#allocation12 + $0x74] sm:$0xf]
        %v3501 = vld [vmem:[#allocation12 + $0x78] sm:$0xf]
        %v3502 = vld [vmem:[#allocation12 + $0x7c] sm:$0xf]
        %v3503 = vpack.c.bf16 %v3486, %v3486
        %v3520 = vunpack.c.l.b16 %v3487
        %v3521 = vunpack.c.l.b16 %v3488
        %v3522 = vunpack.c.l.b16 %v3489
        %v3523 = vunpack.c.l.b16 %v3490
        %v3524 = vunpack.c.l.b16 %v3491
        %v3525 = vunpack.c.l.b16 %v3492
        %v3526 = vunpack.c.l.b16 %v3493
        %v3527 = vunpack.c.l.b16 %v3494
        %v3528 = vunpack.c.l.b16 %v3495
        %v3529 = vunpack.c.l.b16 %v3496
        %v3530 = vunpack.c.l.b16 %v3497
        %v3531 = vunpack.c.l.b16 %v3498
        %v3532 = vunpack.c.l.b16 %v3499
        %v3533 = vunpack.c.l.b16 %v3500
        %v3534 = vunpack.c.l.b16 %v3501
        %v3535 = vunpack.c.l.b16 %v3502
        %v3536 = vpack.c.b16 %v3521, %v3520
        %v3537 = vpack.c.b16 %v3523, %v3522
        %v3538 = vpack.c.b16 %v3525, %v3524
        %v3539 = vpack.c.b16 %v3527, %v3526
        %v3540 = vpack.c.b16 %v3529, %v3528
        %v3541 = vpack.c.b16 %v3531, %v3530
        %v3542 = vpack.c.b16 %v3533, %v3532
        %v3543 = vpack.c.b16 %v3535, %v3534
        %3552 = vmatpush.bf16.msra.mxu0 %v3543
        %3553 = vmatpush.bf16.msra.mxu0 %v3542
        %3554 = vmatpush.bf16.msra.mxu0 %v3541
        %3555 = vmatpush.bf16.msra.mxu0 %v3540
        %3556 = vmatpush.bf16.msra.mxu0 %v3539
        %3557 = vmatpush.bf16.msra.mxu0 %v3538
        %3558 = vmatpush.bf16.msra.mxu0 %v3537
        %3559 = vmatpush.bf16.msra.mxu0 %v3536
        %3560 = vmatmul.bf16.gmra.mxu0 %v3503
        %v3561 = vpop.f32.mrf.mxu0
        %v3562 = vadd.f32 0.0, %v3561
        %v3563 = vpop.f32.mrf.mxu0
        %3564 = vdwg.mxu0
        %v3581 = vunpack.c.l.b16 %v3469
        %v3582 = vunpack.c.l.b16 %v3470
        %v3583 = vunpack.c.l.b16 %v3471
        %v3584 = vunpack.c.l.b16 %v3472
        %v3585 = vunpack.c.l.b16 %v3473
        %v3586 = vunpack.c.l.b16 %v3474
        %v3587 = vunpack.c.l.b16 %v3475
        %v3588 = vunpack.c.l.b16 %v3476
        %v3589 = vunpack.c.l.b16 %v3477
        %v3590 = vunpack.c.l.b16 %v3478
        %v3591 = vunpack.c.l.b16 %v3479
        %v3592 = vunpack.c.l.b16 %v3480
        %v3593 = vunpack.c.l.b16 %v3481
        %v3594 = vunpack.c.l.b16 %v3482
        %v3595 = vunpack.c.l.b16 %v3483
        %v3596 = vunpack.c.l.b16 %v3484
        %v3597 = vpack.c.b16 %v3582, %v3581
        %v3598 = vpack.c.b16 %v3584, %v3583
        %v3599 = vpack.c.b16 %v3586, %v3585
        %v3600 = vpack.c.b16 %v3588, %v3587
        %v3601 = vpack.c.b16 %v3590, %v3589
        %v3602 = vpack.c.b16 %v3592, %v3591
        %v3603 = vpack.c.b16 %v3594, %v3593
        %v3604 = vpack.c.b16 %v3596, %v3595
        %3613 = vmatpush.bf16.msra.mxu0 %v3604
        %3614 = vmatpush.bf16.msra.mxu0 %v3603
        %3615 = vmatpush.bf16.msra.mxu0 %v3602
        %3616 = vmatpush.bf16.msra.mxu0 %v3601
        %3617 = vmatpush.bf16.msra.mxu0 %v3600
        %3618 = vmatpush.bf16.msra.mxu0 %v3599
        %3619 = vmatpush.bf16.msra.mxu0 %v3598
        %3620 = vmatpush.bf16.msra.mxu0 %v3597
        %3621 = vmatmul.bf16.gmra.mxu0 %v3485
        %v3622 = vpop.f32.mrf.mxu0
        %v3623 = vadd.f32 %v3562, %v3622
        %v3624 = vpop.f32.mrf.mxu0
        %3625 = vdwg.mxu0
        %v3626 = vld [vmem:[%s1834] ss:$2 sm:$0xff]
        %v3627 = vld [vmem:[#allocation12 + $0x80] sm:$0xf]
        %v3628 = vld [vmem:[#allocation12 + $0x84] sm:$0xf]
        %v3629 = vld [vmem:[#allocation12 + $0x88] sm:$0xf]
        %v3630 = vld [vmem:[#allocation12 + $0x8c] sm:$0xf]
        %v3631 = vld [vmem:[#allocation12 + $0x90] sm:$0xf]
        %v3632 = vld [vmem:[#allocation12 + $0x94] sm:$0xf]
        %v3633 = vld [vmem:[#allocation12 + $0x98] sm:$0xf]
        %v3634 = vld [vmem:[#allocation12 + $0x9c] sm:$0xf]
        %v3635 = vld [vmem:[#allocation12 + $0xa0] sm:$0xf]
        %v3636 = vld [vmem:[#allocation12 + $0xa4] sm:$0xf]
        %v3637 = vld [vmem:[#allocation12 + $0xa8] sm:$0xf]
        %v3638 = vld [vmem:[#allocation12 + $0xac] sm:$0xf]
        %v3639 = vld [vmem:[#allocation12 + $0xb0] sm:$0xf]
        %v3640 = vld [vmem:[#allocation12 + $0xb4] sm:$0xf]
        %v3641 = vld [vmem:[#allocation12 + $0xb8] sm:$0xf]
        %v3642 = vld [vmem:[#allocation12 + $0xbc] sm:$0xf]
        %v3643 = vpack.c.bf16 %v3626, %v3626
        %v3660 = vunpack.c.l.b16 %v3627
        %v3661 = vunpack.c.l.b16 %v3628
        %v3662 = vunpack.c.l.b16 %v3629
        %v3663 = vunpack.c.l.b16 %v3630
        %v3664 = vunpack.c.l.b16 %v3631
        %v3665 = vunpack.c.l.b16 %v3632
        %v3666 = vunpack.c.l.b16 %v3633
        %v3667 = vunpack.c.l.b16 %v3634
        %v3668 = vunpack.c.l.b16 %v3635
        %v3669 = vunpack.c.l.b16 %v3636
        %v3670 = vunpack.c.l.b16 %v3637
        %v3671 = vunpack.c.l.b16 %v3638
        %v3672 = vunpack.c.l.b16 %v3639
        %v3673 = vunpack.c.l.b16 %v3640
        %v3674 = vunpack.c.l.b16 %v3641
        %v3675 = vunpack.c.l.b16 %v3642
        %v3676 = vpack.c.b16 %v3661, %v3660
        %v3677 = vpack.c.b16 %v3663, %v3662
        %v3678 = vpack.c.b16 %v3665, %v3664
        %v3679 = vpack.c.b16 %v3667, %v3666
        %v3680 = vpack.c.b16 %v3669, %v3668
        %v3681 = vpack.c.b16 %v3671, %v3670
        %v3682 = vpack.c.b16 %v3673, %v3672
        %v3683 = vpack.c.b16 %v3675, %v3674
        %3692 = vmatpush.bf16.msra.mxu0 %v3683
        %3693 = vmatpush.bf16.msra.mxu0 %v3682
        %3694 = vmatpush.bf16.msra.mxu0 %v3681
        %3695 = vmatpush.bf16.msra.mxu0 %v3680
        %3696 = vmatpush.bf16.msra.mxu0 %v3679
        %3697 = vmatpush.bf16.msra.mxu0 %v3678
        %3698 = vmatpush.bf16.msra.mxu0 %v3677
        %3699 = vmatpush.bf16.msra.mxu0 %v3676
        %3700 = vmatmul.bf16.gmra.mxu0 %v3643
        %v3701 = vpop.f32.mrf.mxu0
        %v3702 = vadd.f32 0.0, %v3701
        %v3703 = vpop.f32.mrf.mxu0
        %3704 = vdwg.mxu0
        %v3705 = vadd.f32 %v3623, %v3702
        %v3706 = vld [vmem:[%s25] sm:$0x1]
        %v3708 = vperm.slane %v3706, 0
        %v3710 = vadd.f32 %v3705, %v3708
        %v3711 = vmax.f32 %v3710, 0.0
        %3712 = vst [vmem:[#allocation2] sm:$0x1] 0.0
        %3713 = vst [vmem:[#allocation2 + $0x9] sm:$0x1] 0.0
        %3714 = vst [vmem:[#allocation2 + $0x1] sm:$0xff] %v3711
        %v3715 = vld [vmem:[#allocation2] sm:$0xff]
        %v3716 = vld [vmem:[#allocation14] sm:$0xf]
        %v3717 = vld [vmem:[#allocation14 + $0x4] sm:$0xf]
        %v3718 = vld [vmem:[#allocation14 + $0x8] sm:$0xf]
        %v3719 = vld [vmem:[#allocation14 + $0xc] sm:$0xf]
        %v3720 = vld [vmem:[#allocation14 + $0x10] sm:$0xf]
        %v3721 = vld [vmem:[#allocation14 + $0x14] sm:$0xf]
        %v3722 = vld [vmem:[#allocation14 + $0x18] sm:$0xf]
        %v3723 = vld [vmem:[#allocation14 + $0x1c] sm:$0xf]
        %v3724 = vld [vmem:[#allocation14 + $0x20] sm:$0xf]
        %v3725 = vld [vmem:[#allocation14 + $0x24] sm:$0xf]
        %v3726 = vld [vmem:[#allocation14 + $0x28] sm:$0xf]
        %v3727 = vld [vmem:[#allocation14 + $0x2c] sm:$0xf]
        %v3728 = vld [vmem:[#allocation14 + $0x30] sm:$0xf]
        %v3729 = vld [vmem:[#allocation14 + $0x34] sm:$0xf]
        %v3730 = vld [vmem:[#allocation14 + $0x38] sm:$0xf]
        %v3731 = vld [vmem:[#allocation14 + $0x3c] sm:$0xf]
        %v3732 = vpack.c.bf16 %v3715, %v3715
        %v3733 = vld [vmem:[#allocation2 + $0x1] sm:$0xff]
        %v3734 = vld [vmem:[#allocation14 + $0x40] sm:$0xf]
        %v3735 = vld [vmem:[#allocation14 + $0x44] sm:$0xf]
        %v3736 = vld [vmem:[#allocation14 + $0x48] sm:$0xf]
        %v3737 = vld [vmem:[#allocation14 + $0x4c] sm:$0xf]
        %v3738 = vld [vmem:[#allocation14 + $0x50] sm:$0xf]
        %v3739 = vld [vmem:[#allocation14 + $0x54] sm:$0xf]
        %v3740 = vld [vmem:[#allocation14 + $0x58] sm:$0xf]
        %v3741 = vld [vmem:[#allocation14 + $0x5c] sm:$0xf]
        %v3742 = vld [vmem:[#allocation14 + $0x60] sm:$0xf]
        %v3743 = vld [vmem:[#allocation14 + $0x64] sm:$0xf]
        %v3744 = vld [vmem:[#allocation14 + $0x68] sm:$0xf]
        %v3745 = vld [vmem:[#allocation14 + $0x6c] sm:$0xf]
        %v3746 = vld [vmem:[#allocation14 + $0x70] sm:$0xf]
        %v3747 = vld [vmem:[#allocation14 + $0x74] sm:$0xf]
        %v3748 = vld [vmem:[#allocation14 + $0x78] sm:$0xf]
        %v3749 = vld [vmem:[#allocation14 + $0x7c] sm:$0xf]
        %v3750 = vpack.c.bf16 %v3733, %v3733
        %v3767 = vunpack.c.l.b16 %v3734
        %v3768 = vunpack.c.l.b16 %v3735
        %v3769 = vunpack.c.l.b16 %v3736
        %v3770 = vunpack.c.l.b16 %v3737
        %v3771 = vunpack.c.l.b16 %v3738
        %v3772 = vunpack.c.l.b16 %v3739
        %v3773 = vunpack.c.l.b16 %v3740
        %v3774 = vunpack.c.l.b16 %v3741
        %v3775 = vunpack.c.l.b16 %v3742
        %v3776 = vunpack.c.l.b16 %v3743
        %v3777 = vunpack.c.l.b16 %v3744
        %v3778 = vunpack.c.l.b16 %v3745
        %v3779 = vunpack.c.l.b16 %v3746
        %v3780 = vunpack.c.l.b16 %v3747
        %v3781 = vunpack.c.l.b16 %v3748
        %v3782 = vunpack.c.l.b16 %v3749
        %v3783 = vpack.c.b16 %v3768, %v3767
        %v3784 = vpack.c.b16 %v3770, %v3769
        %v3785 = vpack.c.b16 %v3772, %v3771
        %v3786 = vpack.c.b16 %v3774, %v3773
        %v3787 = vpack.c.b16 %v3776, %v3775
        %v3788 = vpack.c.b16 %v3778, %v3777
        %v3789 = vpack.c.b16 %v3780, %v3779
        %v3790 = vpack.c.b16 %v3782, %v3781
        %3799 = vmatpush.bf16.msra.mxu0 %v3790
        %3800 = vmatpush.bf16.msra.mxu0 %v3789
        %3801 = vmatpush.bf16.msra.mxu0 %v3788
        %3802 = vmatpush.bf16.msra.mxu0 %v3787
        %3803 = vmatpush.bf16.msra.mxu0 %v3786
        %3804 = vmatpush.bf16.msra.mxu0 %v3785
        %3805 = vmatpush.bf16.msra.mxu0 %v3784
        %3806 = vmatpush.bf16.msra.mxu0 %v3783
        %3807 = vmatmul.bf16.gmra.mxu0 %v3750
        %v3808 = vpop.f32.mrf.mxu0
        %v3809 = vadd.f32 0.0, %v3808
        %v3810 = vpop.f32.mrf.mxu0
        %3811 = vdwg.mxu0
        %v3828 = vunpack.c.l.b16 %v3716
        %v3829 = vunpack.c.l.b16 %v3717
        %v3830 = vunpack.c.l.b16 %v3718
        %v3831 = vunpack.c.l.b16 %v3719
        %v3832 = vunpack.c.l.b16 %v3720
        %v3833 = vunpack.c.l.b16 %v3721
        %v3834 = vunpack.c.l.b16 %v3722
        %v3835 = vunpack.c.l.b16 %v3723
        %v3836 = vunpack.c.l.b16 %v3724
        %v3837 = vunpack.c.l.b16 %v3725
        %v3838 = vunpack.c.l.b16 %v3726
        %v3839 = vunpack.c.l.b16 %v3727
        %v3840 = vunpack.c.l.b16 %v3728
        %v3841 = vunpack.c.l.b16 %v3729
        %v3842 = vunpack.c.l.b16 %v3730
        %v3843 = vunpack.c.l.b16 %v3731
        %v3844 = vpack.c.b16 %v3829, %v3828
        %v3845 = vpack.c.b16 %v3831, %v3830
        %v3846 = vpack.c.b16 %v3833, %v3832
        %v3847 = vpack.c.b16 %v3835, %v3834
        %v3848 = vpack.c.b16 %v3837, %v3836
        %v3849 = vpack.c.b16 %v3839, %v3838
        %v3850 = vpack.c.b16 %v3841, %v3840
        %v3851 = vpack.c.b16 %v3843, %v3842
        %3860 = vmatpush.bf16.msra.mxu0 %v3851
        %3861 = vmatpush.bf16.msra.mxu0 %v3850
        %3862 = vmatpush.bf16.msra.mxu0 %v3849
        %3863 = vmatpush.bf16.msra.mxu0 %v3848
        %3864 = vmatpush.bf16.msra.mxu0 %v3847
        %3865 = vmatpush.bf16.msra.mxu0 %v3846
        %3866 = vmatpush.bf16.msra.mxu0 %v3845
        %3867 = vmatpush.bf16.msra.mxu0 %v3844
        %3868 = vmatmul.bf16.gmra.mxu0 %v3732
        %v3869 = vpop.f32.mrf.mxu0
        %v3870 = vadd.f32 %v3809, %v3869
        %v3871 = vpop.f32.mrf.mxu0
        %3872 = vdwg.mxu0
        %v3873 = vld [vmem:[#allocation2 + $0x2] sm:$0xff]
        %v3874 = vld [vmem:[#allocation14 + $0x80] sm:$0xf]
        %v3875 = vld [vmem:[#allocation14 + $0x84] sm:$0xf]
        %v3876 = vld [vmem:[#allocation14 + $0x88] sm:$0xf]
        %v3877 = vld [vmem:[#allocation14 + $0x8c] sm:$0xf]
        %v3878 = vld [vmem:[#allocation14 + $0x90] sm:$0xf]
        %v3879 = vld [vmem:[#allocation14 + $0x94] sm:$0xf]
        %v3880 = vld [vmem:[#allocation14 + $0x98] sm:$0xf]
        %v3881 = vld [vmem:[#allocation14 + $0x9c] sm:$0xf]
        %v3882 = vld [vmem:[#allocation14 + $0xa0] sm:$0xf]
        %v3883 = vld [vmem:[#allocation14 + $0xa4] sm:$0xf]
        %v3884 = vld [vmem:[#allocation14 + $0xa8] sm:$0xf]
        %v3885 = vld [vmem:[#allocation14 + $0xac] sm:$0xf]
        %v3886 = vld [vmem:[#allocation14 + $0xb0] sm:$0xf]
        %v3887 = vld [vmem:[#allocation14 + $0xb4] sm:$0xf]
        %v3888 = vld [vmem:[#allocation14 + $0xb8] sm:$0xf]
        %v3889 = vld [vmem:[#allocation14 + $0xbc] sm:$0xf]
        %v3890 = vpack.c.bf16 %v3873, %v3873
        %v3907 = vunpack.c.l.b16 %v3874
        %v3908 = vunpack.c.l.b16 %v3875
        %v3909 = vunpack.c.l.b16 %v3876
        %v3910 = vunpack.c.l.b16 %v3877
        %v3911 = vunpack.c.l.b16 %v3878
        %v3912 = vunpack.c.l.b16 %v3879
        %v3913 = vunpack.c.l.b16 %v3880
        %v3914 = vunpack.c.l.b16 %v3881
        %v3915 = vunpack.c.l.b16 %v3882
        %v3916 = vunpack.c.l.b16 %v3883
        %v3917 = vunpack.c.l.b16 %v3884
        %v3918 = vunpack.c.l.b16 %v3885
        %v3919 = vunpack.c.l.b16 %v3886
        %v3920 = vunpack.c.l.b16 %v3887
        %v3921 = vunpack.c.l.b16 %v3888
        %v3922 = vunpack.c.l.b16 %v3889
        %v3923 = vpack.c.b16 %v3908, %v3907
        %v3924 = vpack.c.b16 %v3910, %v3909
        %v3925 = vpack.c.b16 %v3912, %v3911
        %v3926 = vpack.c.b16 %v3914, %v3913
        %v3927 = vpack.c.b16 %v3916, %v3915
        %v3928 = vpack.c.b16 %v3918, %v3917
        %v3929 = vpack.c.b16 %v3920, %v3919
        %v3930 = vpack.c.b16 %v3922, %v3921
        %3939 = vmatpush.bf16.msra.mxu0 %v3930
        %3940 = vmatpush.bf16.msra.mxu0 %v3929
        %3941 = vmatpush.bf16.msra.mxu0 %v3928
        %3942 = vmatpush.bf16.msra.mxu0 %v3927
        %3943 = vmatpush.bf16.msra.mxu0 %v3926
        %3944 = vmatpush.bf16.msra.mxu0 %v3925
        %3945 = vmatpush.bf16.msra.mxu0 %v3924
        %3946 = vmatpush.bf16.msra.mxu0 %v3923
        %3947 = vmatmul.bf16.gmra.mxu0 %v3890
        %v3948 = vpop.f32.mrf.mxu0
        %v3949 = vadd.f32 0.0, %v3948
        %v3950 = vpop.f32.mrf.mxu0
        %3951 = vdwg.mxu0
        %v3952 = vadd.f32 %v3870, %v3949
        %v3953 = vld [vmem:[%s29] sm:$0x1]
        %v3955 = vperm.slane %v3953, 0
        %v3957 = vadd.f32 %v3952, %v3955
        %v3958 = vadd.f32 %v3957, %v3461
        %v3959 = vmax.f32 %v3958, 0.0
        %3960 = vst [vmem:[#allocation2] sm:$0x1] 0.0
        %3961 = vst [vmem:[#allocation2 + $0x9] sm:$0x1] 0.0
        %3962 = vst [vmem:[#allocation2 + $0x1] sm:$0xff] %v3959
        %v3963 = vld [vmem:[#allocation2] sm:$0xff]
        %v3964 = vld [vmem:[#allocation17] sm:$0xf]
        %v3965 = vld [vmem:[#allocation17 + $0x4] sm:$0xf]
        %v3966 = vld [vmem:[#allocation17 + $0x8] sm:$0xf]
        %v3967 = vld [vmem:[#allocation17 + $0xc] sm:$0xf]
        %v3968 = vld [vmem:[#allocation17 + $0x10] sm:$0xf]
        %v3969 = vld [vmem:[#allocation17 + $0x14] sm:$0xf]
        %v3970 = vld [vmem:[#allocation17 + $0x18] sm:$0xf]
        %v3971 = vld [vmem:[#allocation17 + $0x1c] sm:$0xf]
        %v3972 = vld [vmem:[#allocation17 + $0x20] sm:$0xf]
        %v3973 = vld [vmem:[#allocation17 + $0x24] sm:$0xf]
        %v3974 = vld [vmem:[#allocation17 + $0x28] sm:$0xf]
        %v3975 = vld [vmem:[#allocation17 + $0x2c] sm:$0xf]
        %v3976 = vld [vmem:[#allocation17 + $0x30] sm:$0xf]
        %v3977 = vld [vmem:[#allocation17 + $0x34] sm:$0xf]
        %v3978 = vld [vmem:[#allocation17 + $0x38] sm:$0xf]
        %v3979 = vld [vmem:[#allocation17 + $0x3c] sm:$0xf]
        %v3980 = vpack.c.bf16 %v3963, %v3963
        %v3981 = vld [vmem:[#allocation2 + $0x1] sm:$0xff]
        %v3982 = vld [vmem:[#allocation17 + $0x40] sm:$0xf]
        %v3983 = vld [vmem:[#allocation17 + $0x44] sm:$0xf]
        %v3984 = vld [vmem:[#allocation17 + $0x48] sm:$0xf]
        %v3985 = vld [vmem:[#allocation17 + $0x4c] sm:$0xf]
        %v3986 = vld [vmem:[#allocation17 + $0x50] sm:$0xf]
        %v3987 = vld [vmem:[#allocation17 + $0x54] sm:$0xf]
        %v3988 = vld [vmem:[#allocation17 + $0x58] sm:$0xf]
        %v3989 = vld [vmem:[#allocation17 + $0x5c] sm:$0xf]
        %v3990 = vld [vmem:[#allocation17 + $0x60] sm:$0xf]
        %v3991 = vld [vmem:[#allocation17 + $0x64] sm:$0xf]
        %v3992 = vld [vmem:[#allocation17 + $0x68] sm:$0xf]
        %v3993 = vld [vmem:[#allocation17 + $0x6c] sm:$0xf]
        %v3994 = vld [vmem:[#allocation17 + $0x70] sm:$0xf]
        %v3995 = vld [vmem:[#allocation17 + $0x74] sm:$0xf]
        %v3996 = vld [vmem:[#allocation17 + $0x78] sm:$0xf]
        %v3997 = vld [vmem:[#allocation17 + $0x7c] sm:$0xf]
        %v3998 = vpack.c.bf16 %v3981, %v3981
        %v4015 = vunpack.c.l.b16 %v3982
        %v4016 = vunpack.c.l.b16 %v3983
        %v4017 = vunpack.c.l.b16 %v3984
        %v4018 = vunpack.c.l.b16 %v3985
        %v4019 = vunpack.c.l.b16 %v3986
        %v4020 = vunpack.c.l.b16 %v3987
        %v4021 = vunpack.c.l.b16 %v3988
        %v4022 = vunpack.c.l.b16 %v3989
        %v4023 = vunpack.c.l.b16 %v3990
        %v4024 = vunpack.c.l.b16 %v3991
        %v4025 = vunpack.c.l.b16 %v3992
        %v4026 = vunpack.c.l.b16 %v3993
        %v4027 = vunpack.c.l.b16 %v3994
        %v4028 = vunpack.c.l.b16 %v3995
        %v4029 = vunpack.c.l.b16 %v3996
        %v4030 = vunpack.c.l.b16 %v3997
        %v4031 = vpack.c.b16 %v4016, %v4015
        %v4032 = vpack.c.b16 %v4018, %v4017
        %v4033 = vpack.c.b16 %v4020, %v4019
        %v4034 = vpack.c.b16 %v4022, %v4021
        %v4035 = vpack.c.b16 %v4024, %v4023
        %v4036 = vpack.c.b16 %v4026, %v4025
        %v4037 = vpack.c.b16 %v4028, %v4027
        %v4038 = vpack.c.b16 %v4030, %v4029
        %4047 = vmatpush.bf16.msra.mxu0 %v4038
        %4048 = vmatpush.bf16.msra.mxu0 %v4037
        %4049 = vmatpush.bf16.msra.mxu0 %v4036
        %4050 = vmatpush.bf16.msra.mxu0 %v4035
        %4051 = vmatpush.bf16.msra.mxu0 %v4034
        %4052 = vmatpush.bf16.msra.mxu0 %v4033
        %4053 = vmatpush.bf16.msra.mxu0 %v4032
        %4054 = vmatpush.bf16.msra.mxu0 %v4031
        %4055 = vmatmul.bf16.gmra.mxu0 %v3998
        %v4056 = vpop.f32.mrf.mxu0
        %v4057 = vadd.f32 0.0, %v4056
        %v4058 = vpop.f32.mrf.mxu0
        %4059 = vdwg.mxu0
        %v4076 = vunpack.c.l.b16 %v3964
        %v4077 = vunpack.c.l.b16 %v3965
        %v4078 = vunpack.c.l.b16 %v3966
        %v4079 = vunpack.c.l.b16 %v3967
        %v4080 = vunpack.c.l.b16 %v3968
        %v4081 = vunpack.c.l.b16 %v3969
        %v4082 = vunpack.c.l.b16 %v3970
        %v4083 = vunpack.c.l.b16 %v3971
        %v4084 = vunpack.c.l.b16 %v3972
        %v4085 = vunpack.c.l.b16 %v3973
        %v4086 = vunpack.c.l.b16 %v3974
        %v4087 = vunpack.c.l.b16 %v3975
        %v4088 = vunpack.c.l.b16 %v3976
        %v4089 = vunpack.c.l.b16 %v3977
        %v4090 = vunpack.c.l.b16 %v3978
        %v4091 = vunpack.c.l.b16 %v3979
        %v4092 = vpack.c.b16 %v4077, %v4076
        %v4093 = vpack.c.b16 %v4079, %v4078
        %v4094 = vpack.c.b16 %v4081, %v4080
        %v4095 = vpack.c.b16 %v4083, %v4082
        %v4096 = vpack.c.b16 %v4085, %v4084
        %v4097 = vpack.c.b16 %v4087, %v4086
        %v4098 = vpack.c.b16 %v4089, %v4088
        %v4099 = vpack.c.b16 %v4091, %v4090
        %4108 = vmatpush.bf16.msra.mxu0 %v4099
        %4109 = vmatpush.bf16.msra.mxu0 %v4098
        %4110 = vmatpush.bf16.msra.mxu0 %v4097
        %4111 = vmatpush.bf16.msra.mxu0 %v4096
        %4112 = vmatpush.bf16.msra.mxu0 %v4095
        %4113 = vmatpush.bf16.msra.mxu0 %v4094
        %4114 = vmatpush.bf16.msra.mxu0 %v4093
        %4115 = vmatpush.bf16.msra.mxu0 %v4092
        %4116 = vmatmul.bf16.gmra.mxu0 %v3980
        %v4117 = vpop.f32.mrf.mxu0
        %v4118 = vadd.f32 %v4057, %v4117
        %v4119 = vpop.f32.mrf.mxu0
        %4120 = vdwg.mxu0
        %v4121 = vld [vmem:[#allocation2 + $0x2] sm:$0xff]
        %v4122 = vld [vmem:[#allocation17 + $0x80] sm:$0xf]
        %v4123 = vld [vmem:[#allocation17 + $0x84] sm:$0xf]
        %v4124 = vld [vmem:[#allocation17 + $0x88] sm:$0xf]
        %v4125 = vld [vmem:[#allocation17 + $0x8c] sm:$0xf]
        %v4126 = vld [vmem:[#allocation17 + $0x90] sm:$0xf]
        %v4127 = vld [vmem:[#allocation17 + $0x94] sm:$0xf]
        %v4128 = vld [vmem:[#allocation17 + $0x98] sm:$0xf]
        %v4129 = vld [vmem:[#allocation17 + $0x9c] sm:$0xf]
        %v4130 = vld [vmem:[#allocation17 + $0xa0] sm:$0xf]
        %v4131 = vld [vmem:[#allocation17 + $0xa4] sm:$0xf]
        %v4132 = vld [vmem:[#allocation17 + $0xa8] sm:$0xf]
        %v4133 = vld [vmem:[#allocation17 + $0xac] sm:$0xf]
        %v4134 = vld [vmem:[#allocation17 + $0xb0] sm:$0xf]
        %v4135 = vld [vmem:[#allocation17 + $0xb4] sm:$0xf]
        %v4136 = vld [vmem:[#allocation17 + $0xb8] sm:$0xf]
        %v4137 = vld [vmem:[#allocation17 + $0xbc] sm:$0xf]
        %v4138 = vpack.c.bf16 %v4121, %v4121
        %v4155 = vunpack.c.l.b16 %v4122
        %v4156 = vunpack.c.l.b16 %v4123
        %v4157 = vunpack.c.l.b16 %v4124
        %v4158 = vunpack.c.l.b16 %v4125
        %v4159 = vunpack.c.l.b16 %v4126
        %v4160 = vunpack.c.l.b16 %v4127
        %v4161 = vunpack.c.l.b16 %v4128
        %v4162 = vunpack.c.l.b16 %v4129
        %v4163 = vunpack.c.l.b16 %v4130
        %v4164 = vunpack.c.l.b16 %v4131
        %v4165 = vunpack.c.l.b16 %v4132
        %v4166 = vunpack.c.l.b16 %v4133
        %v4167 = vunpack.c.l.b16 %v4134
        %v4168 = vunpack.c.l.b16 %v4135
        %v4169 = vunpack.c.l.b16 %v4136
        %v4170 = vunpack.c.l.b16 %v4137
        %v4171 = vpack.c.b16 %v4156, %v4155
        %v4172 = vpack.c.b16 %v4158, %v4157
        %v4173 = vpack.c.b16 %v4160, %v4159
        %v4174 = vpack.c.b16 %v4162, %v4161
        %v4175 = vpack.c.b16 %v4164, %v4163
        %v4176 = vpack.c.b16 %v4166, %v4165
        %v4177 = vpack.c.b16 %v4168, %v4167
        %v4178 = vpack.c.b16 %v4170, %v4169
        %4187 = vmatpush.bf16.msra.mxu0 %v4178
        %4188 = vmatpush.bf16.msra.mxu0 %v4177
        %4189 = vmatpush.bf16.msra.mxu0 %v4176
        %4190 = vmatpush.bf16.msra.mxu0 %v4175
        %4191 = vmatpush.bf16.msra.mxu0 %v4174
        %4192 = vmatpush.bf16.msra.mxu0 %v4173
        %4193 = vmatpush.bf16.msra.mxu0 %v4172
        %4194 = vmatpush.bf16.msra.mxu0 %v4171
        %4195 = vmatmul.bf16.gmra.mxu0 %v4138
        %v4196 = vpop.f32.mrf.mxu0
        %v4197 = vadd.f32 0.0, %v4196
        %v4198 = vpop.f32.mrf.mxu0
        %4199 = vdwg.mxu0
        %v4200 = vadd.f32 %v4118, %v4197
        %v4201 = vld [vmem:[%s37] sm:$0x1]
        %v4203 = vperm.slane %v4201, 0
        %v4205 = vadd.f32 %v4200, %v4203
        %v4206 = vmax.f32 %v4205, 0.0
        %4207 = vst [vmem:[#allocation2] sm:$0x1] 0.0
        %4208 = vst [vmem:[#allocation2 + $0x9] sm:$0x1] 0.0
        %4209 = vst [vmem:[#allocation2 + $0x1] sm:$0xff] %v4206
        %v4210 = vld [vmem:[#allocation2] sm:$0xff]
        %v4211 = vld [vmem:[#allocation18] sm:$0xf]
        %v4212 = vld [vmem:[#allocation18 + $0x4] sm:$0xf]
        %v4213 = vld [vmem:[#allocation18 + $0x8] sm:$0xf]
        %v4214 = vld [vmem:[#allocation18 + $0xc] sm:$0xf]
        %v4215 = vld [vmem:[#allocation18 + $0x10] sm:$0xf]
        %v4216 = vld [vmem:[#allocation18 + $0x14] sm:$0xf]
        %v4217 = vld [vmem:[#allocation18 + $0x18] sm:$0xf]
        %v4218 = vld [vmem:[#allocation18 + $0x1c] sm:$0xf]
        %v4219 = vld [vmem:[#allocation18 + $0x20] sm:$0xf]
        %v4220 = vld [vmem:[#allocation18 + $0x24] sm:$0xf]
        %v4221 = vld [vmem:[#allocation18 + $0x28] sm:$0xf]
        %v4222 = vld [vmem:[#allocation18 + $0x2c] sm:$0xf]
        %v4223 = vld [vmem:[#allocation18 + $0x30] sm:$0xf]
        %v4224 = vld [vmem:[#allocation18 + $0x34] sm:$0xf]
        %v4225 = vld [vmem:[#allocation18 + $0x38] sm:$0xf]
        %v4226 = vld [vmem:[#allocation18 + $0x3c] sm:$0xf]
        %v4227 = vpack.c.bf16 %v4210, %v4210
        %v4228 = vld [vmem:[#allocation2 + $0x1] sm:$0xff]
        %v4229 = vld [vmem:[#allocation18 + $0x40] sm:$0xf]
        %v4230 = vld [vmem:[#allocation18 + $0x44] sm:$0xf]
        %v4231 = vld [vmem:[#allocation18 + $0x48] sm:$0xf]
        %v4232 = vld [vmem:[#allocation18 + $0x4c] sm:$0xf]
        %v4233 = vld [vmem:[#allocation18 + $0x50] sm:$0xf]
        %v4234 = vld [vmem:[#allocation18 + $0x54] sm:$0xf]
        %v4235 = vld [vmem:[#allocation18 + $0x58] sm:$0xf]
        %v4236 = vld [vmem:[#allocation18 + $0x5c] sm:$0xf]
        %v4237 = vld [vmem:[#allocation18 + $0x60] sm:$0xf]
        %v4238 = vld [vmem:[#allocation18 + $0x64] sm:$0xf]
        %v4239 = vld [vmem:[#allocation18 + $0x68] sm:$0xf]
        %v4240 = vld [vmem:[#allocation18 + $0x6c] sm:$0xf]
        %v4241 = vld [vmem:[#allocation18 + $0x70] sm:$0xf]
        %v4242 = vld [vmem:[#allocation18 + $0x74] sm:$0xf]
        %v4243 = vld [vmem:[#allocation18 + $0x78] sm:$0xf]
        %v4244 = vld [vmem:[#allocation18 + $0x7c] sm:$0xf]
        %v4245 = vpack.c.bf16 %v4228, %v4228
        %v4262 = vunpack.c.l.b16 %v4229
        %v4263 = vunpack.c.l.b16 %v4230
        %v4264 = vunpack.c.l.b16 %v4231
        %v4265 = vunpack.c.l.b16 %v4232
        %v4266 = vunpack.c.l.b16 %v4233
        %v4267 = vunpack.c.l.b16 %v4234
        %v4268 = vunpack.c.l.b16 %v4235
        %v4269 = vunpack.c.l.b16 %v4236
        %v4270 = vunpack.c.l.b16 %v4237
        %v4271 = vunpack.c.l.b16 %v4238
        %v4272 = vunpack.c.l.b16 %v4239
        %v4273 = vunpack.c.l.b16 %v4240
        %v4274 = vunpack.c.l.b16 %v4241
        %v4275 = vunpack.c.l.b16 %v4242
        %v4276 = vunpack.c.l.b16 %v4243
        %v4277 = vunpack.c.l.b16 %v4244
        %v4278 = vpack.c.b16 %v4263, %v4262
        %v4279 = vpack.c.b16 %v4265, %v4264
        %v4280 = vpack.c.b16 %v4267, %v4266
        %v4281 = vpack.c.b16 %v4269, %v4268
        %v4282 = vpack.c.b16 %v4271, %v4270
        %v4283 = vpack.c.b16 %v4273, %v4272
        %v4284 = vpack.c.b16 %v4275, %v4274
        %v4285 = vpack.c.b16 %v4277, %v4276
        %4294 = vmatpush.bf16.msra.mxu0 %v4285
        %4295 = vmatpush.bf16.msra.mxu0 %v4284
        %4296 = vmatpush.bf16.msra.mxu0 %v4283
        %4297 = vmatpush.bf16.msra.mxu0 %v4282
        %4298 = vmatpush.bf16.msra.mxu0 %v4281
        %4299 = vmatpush.bf16.msra.mxu0 %v4280
        %4300 = vmatpush.bf16.msra.mxu0 %v4279
        %4301 = vmatpush.bf16.msra.mxu0 %v4278
        %4302 = vmatmul.bf16.gmra.mxu0 %v4245
        %v4303 = vpop.f32.mrf.mxu0
        %v4304 = vadd.f32 0.0, %v4303
        %v4305 = vpop.f32.mrf.mxu0
        %4306 = vdwg.mxu0
        %v4323 = vunpack.c.l.b16 %v4211
        %v4324 = vunpack.c.l.b16 %v4212
        %v4325 = vunpack.c.l.b16 %v4213
        %v4326 = vunpack.c.l.b16 %v4214
        %v4327 = vunpack.c.l.b16 %v4215
        %v4328 = vunpack.c.l.b16 %v4216
        %v4329 = vunpack.c.l.b16 %v4217
        %v4330 = vunpack.c.l.b16 %v4218
        %v4331 = vunpack.c.l.b16 %v4219
        %v4332 = vunpack.c.l.b16 %v4220
        %v4333 = vunpack.c.l.b16 %v4221
        %v4334 = vunpack.c.l.b16 %v4222
        %v4335 = vunpack.c.l.b16 %v4223
        %v4336 = vunpack.c.l.b16 %v4224
        %v4337 = vunpack.c.l.b16 %v4225
        %v4338 = vunpack.c.l.b16 %v4226
        %v4339 = vpack.c.b16 %v4324, %v4323
        %v4340 = vpack.c.b16 %v4326, %v4325
        %v4341 = vpack.c.b16 %v4328, %v4327
        %v4342 = vpack.c.b16 %v4330, %v4329
        %v4343 = vpack.c.b16 %v4332, %v4331
        %v4344 = vpack.c.b16 %v4334, %v4333
        %v4345 = vpack.c.b16 %v4336, %v4335
        %v4346 = vpack.c.b16 %v4338, %v4337
        %4355 = vmatpush.bf16.msra.mxu0 %v4346
        %4356 = vmatpush.bf16.msra.mxu0 %v4345
        %4357 = vmatpush.bf16.msra.mxu0 %v4344
        %4358 = vmatpush.bf16.msra.mxu0 %v4343
        %4359 = vmatpush.bf16.msra.mxu0 %v4342
        %4360 = vmatpush.bf16.msra.mxu0 %v4341
        %4361 = vmatpush.bf16.msra.mxu0 %v4340
        %4362 = vmatpush.bf16.msra.mxu0 %v4339
        %4363 = vmatmul.bf16.gmra.mxu0 %v4227
        %v4364 = vpop.f32.mrf.mxu0
        %v4365 = vadd.f32 %v4304, %v4364
        %v4366 = vpop.f32.mrf.mxu0
        %4367 = vdwg.mxu0
        %v4368 = vld [vmem:[#allocation2 + $0x2] sm:$0xff]
        %v4369 = vld [vmem:[#allocation18 + $0x80] sm:$0xf]
        %v4370 = vld [vmem:[#allocation18 + $0x84] sm:$0xf]
        %v4371 = vld [vmem:[#allocation18 + $0x88] sm:$0xf]
        %v4372 = vld [vmem:[#allocation18 + $0x8c] sm:$0xf]
        %v4373 = vld [vmem:[#allocation18 + $0x90] sm:$0xf]
        %v4374 = vld [vmem:[#allocation18 + $0x94] sm:$0xf]
        %v4375 = vld [vmem:[#allocation18 + $0x98] sm:$0xf]
        %v4376 = vld [vmem:[#allocation18 + $0x9c] sm:$0xf]
        %v4377 = vld [vmem:[#allocation18 + $0xa0] sm:$0xf]
        %v4378 = vld [vmem:[#allocation18 + $0xa4] sm:$0xf]
        %v4379 = vld [vmem:[#allocation18 + $0xa8] sm:$0xf]
        %v4380 = vld [vmem:[#allocation18 + $0xac] sm:$0xf]
        %v4381 = vld [vmem:[#allocation18 + $0xb0] sm:$0xf]
        %v4382 = vld [vmem:[#allocation18 + $0xb4] sm:$0xf]
        %v4383 = vld [vmem:[#allocation18 + $0xb8] sm:$0xf]
        %v4384 = vld [vmem:[#allocation18 + $0xbc] sm:$0xf]
        %v4385 = vpack.c.bf16 %v4368, %v4368
        %v4402 = vunpack.c.l.b16 %v4369
        %v4403 = vunpack.c.l.b16 %v4370
        %v4404 = vunpack.c.l.b16 %v4371
        %v4405 = vunpack.c.l.b16 %v4372
        %v4406 = vunpack.c.l.b16 %v4373
        %v4407 = vunpack.c.l.b16 %v4374
        %v4408 = vunpack.c.l.b16 %v4375
        %v4409 = vunpack.c.l.b16 %v4376
        %v4410 = vunpack.c.l.b16 %v4377
        %v4411 = vunpack.c.l.b16 %v4378
        %v4412 = vunpack.c.l.b16 %v4379
        %v4413 = vunpack.c.l.b16 %v4380
        %v4414 = vunpack.c.l.b16 %v4381
        %v4415 = vunpack.c.l.b16 %v4382
        %v4416 = vunpack.c.l.b16 %v4383
        %v4417 = vunpack.c.l.b16 %v4384
        %v4418 = vpack.c.b16 %v4403, %v4402
        %v4419 = vpack.c.b16 %v4405, %v4404
        %v4420 = vpack.c.b16 %v4407, %v4406
        %v4421 = vpack.c.b16 %v4409, %v4408
        %v4422 = vpack.c.b16 %v4411, %v4410
        %v4423 = vpack.c.b16 %v4413, %v4412
        %v4424 = vpack.c.b16 %v4415, %v4414
        %v4425 = vpack.c.b16 %v4417, %v4416
        %4434 = vmatpush.bf16.msra.mxu0 %v4425
        %4435 = vmatpush.bf16.msra.mxu0 %v4424
        %4436 = vmatpush.bf16.msra.mxu0 %v4423
        %4437 = vmatpush.bf16.msra.mxu0 %v4422
        %4438 = vmatpush.bf16.msra.mxu0 %v4421
        %4439 = vmatpush.bf16.msra.mxu0 %v4420
        %4440 = vmatpush.bf16.msra.mxu0 %v4419
        %4441 = vmatpush.bf16.msra.mxu0 %v4418
        %4442 = vmatmul.bf16.gmra.mxu0 %v4385
        %v4443 = vpop.f32.mrf.mxu0
        %v4444 = vadd.f32 0.0, %v4443
        %v4445 = vpop.f32.mrf.mxu0
        %4446 = vdwg.mxu0
        %v4447 = vadd.f32 %v4365, %v4444
        %v4448 = vld [vmem:[%s41] sm:$0x1]
        %v4450 = vperm.slane %v4448, 0
        %v4452 = vadd.f32 %v4447, %v4450
        %v4453 = vadd.f32 %v4452, %v3959
        %v4454 = vmax.f32 %v4453, 0.0
        %4455 = vst [vmem:[#allocation2] sm:$0xff] %v4454
        %v4456 = vld [vmem:[#allocation2] ss:$2 sm:$0xf]
        %v4457 = vld [vmem:[#allocation23] sm:$0xf]
        %v4458 = vld [vmem:[#allocation23 + $0x4] sm:$0xf]
        %v4459 = vld [vmem:[#allocation23 + $0x8] sm:$0xf]
        %v4460 = vld [vmem:[#allocation23 + $0xc] sm:$0xf]
        %v4461 = vld [vmem:[#allocation23 + $0x10] sm:$0xf]
        %v4462 = vld [vmem:[#allocation23 + $0x14] sm:$0xf]
        %v4463 = vld [vmem:[#allocation23 + $0x18] sm:$0xf]
        %v4464 = vld [vmem:[#allocation23 + $0x1c] sm:$0xf]
        %v4465 = vld [vmem:[#allocation23 + $0x20] sm:$0xf]
        %v4466 = vld [vmem:[#allocation23 + $0x24] sm:$0xf]
        %v4467 = vld [vmem:[#allocation23 + $0x28] sm:$0xf]
        %v4468 = vld [vmem:[#allocation23 + $0x2c] sm:$0xf]
        %v4469 = vld [vmem:[#allocation23 + $0x30] sm:$0xf]
        %v4470 = vld [vmem:[#allocation23 + $0x34] sm:$0xf]
        %v4471 = vld [vmem:[#allocation23 + $0x38] sm:$0xf]
        %v4472 = vld [vmem:[#allocation23 + $0x3c] sm:$0xf]
        %v4473 = vpack.c.bf16 %v4456, %v4456
        %v4474 = vld [vmem:[%s53] sm:$0x1]
        %v4476 = vperm.slane %v4474, 0
        %v4494 = vunpack.c.l.b16 %v4457
        %v4495 = vunpack.c.l.b16 %v4458
        %v4496 = vunpack.c.l.b16 %v4459
        %v4497 = vunpack.c.l.b16 %v4460
        %v4498 = vunpack.c.l.b16 %v4461
        %v4499 = vunpack.c.l.b16 %v4462
        %v4500 = vunpack.c.l.b16 %v4463
        %v4501 = vunpack.c.l.b16 %v4464
        %v4502 = vunpack.c.l.b16 %v4465
        %v4503 = vunpack.c.l.b16 %v4466
        %v4504 = vunpack.c.l.b16 %v4467
        %v4505 = vunpack.c.l.b16 %v4468
        %v4506 = vunpack.c.l.b16 %v4469
        %v4507 = vunpack.c.l.b16 %v4470
        %v4508 = vunpack.c.l.b16 %v4471
        %v4509 = vunpack.c.l.b16 %v4472
        %v4510 = vpack.c.b16 %v4495, %v4494
        %v4511 = vpack.c.b16 %v4497, %v4496
        %v4512 = vpack.c.b16 %v4499, %v4498
        %v4513 = vpack.c.b16 %v4501, %v4500
        %v4514 = vpack.c.b16 %v4503, %v4502
        %v4515 = vpack.c.b16 %v4505, %v4504
        %v4516 = vpack.c.b16 %v4507, %v4506
        %v4517 = vpack.c.b16 %v4509, %v4508
        %4526 = vmatpush.bf16.msra.mxu0 %v4517
        %4527 = vmatpush.bf16.msra.mxu0 %v4516
        %4528 = vmatpush.bf16.msra.mxu0 %v4515
        %4529 = vmatpush.bf16.msra.mxu0 %v4514
        %4530 = vmatpush.bf16.msra.mxu0 %v4513
        %4531 = vmatpush.bf16.msra.mxu0 %v4512
        %4532 = vmatpush.bf16.msra.mxu0 %v4511
        %4533 = vmatpush.bf16.msra.mxu0 %v4510
        %4534 = vmatmul.bf16.gmra.mxu0 %v4473
        %v4535 = vpop.f32.mrf.mxu0
        %v4536 = vadd.f32 %v4476, %v4535
        %v4537 = vpop.f32.mrf.mxu0
        %4538 = vdwg.mxu0
        %4539 = vst [vmem:[#allocation2] sm:$0x1] 0.0
        %4540 = vst [vmem:[#allocation2 + $0x9] sm:$0x1] 0.0
        %4541 = vst [vmem:[#allocation2 + $0x1] sm:$0xff] %v4454
        %v4542 = vld [vmem:[#allocation2] ss:$2 sm:$0xf]
        %v4543 = vld [vmem:[#allocation20] sm:$0xf]
        %v4544 = vld [vmem:[#allocation20 + $0x4] sm:$0xf]
        %v4545 = vld [vmem:[#allocation20 + $0x8] sm:$0xf]
        %v4546 = vld [vmem:[#allocation20 + $0xc] sm:$0xf]
        %v4547 = vld [vmem:[#allocation20 + $0x10] sm:$0xf]
        %v4548 = vld [vmem:[#allocation20 + $0x14] sm:$0xf]
        %v4549 = vld [vmem:[#allocation20 + $0x18] sm:$0xf]
        %v4550 = vld [vmem:[#allocation20 + $0x1c] sm:$0xf]
        %v4551 = vld [vmem:[#allocation20 + $0x20] sm:$0xf]
        %v4552 = vld [vmem:[#allocation20 + $0x24] sm:$0xf]
        %v4553 = vld [vmem:[#allocation20 + $0x28] sm:$0xf]
        %v4554 = vld [vmem:[#allocation20 + $0x2c] sm:$0xf]
        %v4555 = vld [vmem:[#allocation20 + $0x30] sm:$0xf]
        %v4556 = vld [vmem:[#allocation20 + $0x34] sm:$0xf]
        %v4557 = vld [vmem:[#allocation20 + $0x38] sm:$0xf]
        %v4558 = vld [vmem:[#allocation20 + $0x3c] sm:$0xf]
        %v4559 = vpack.c.bf16 %v4542, %v4542
        %v4560 = vld [vmem:[%s1674] ss:$2 sm:$0xf]
        %v4561 = vld [vmem:[#allocation20 + $0x40] sm:$0xf]
        %v4562 = vld [vmem:[#allocation20 + $0x44] sm:$0xf]
        %v4563 = vld [vmem:[#allocation20 + $0x48] sm:$0xf]
        %v4564 = vld [vmem:[#allocation20 + $0x4c] sm:$0xf]
        %v4565 = vld [vmem:[#allocation20 + $0x50] sm:$0xf]
        %v4566 = vld [vmem:[#allocation20 + $0x54] sm:$0xf]
        %v4567 = vld [vmem:[#allocation20 + $0x58] sm:$0xf]
        %v4568 = vld [vmem:[#allocation20 + $0x5c] sm:$0xf]
        %v4569 = vld [vmem:[#allocation20 + $0x60] sm:$0xf]
        %v4570 = vld [vmem:[#allocation20 + $0x64] sm:$0xf]
        %v4571 = vld [vmem:[#allocation20 + $0x68] sm:$0xf]
        %v4572 = vld [vmem:[#allocation20 + $0x6c] sm:$0xf]
        %v4573 = vld [vmem:[#allocation20 + $0x70] sm:$0xf]
        %v4574 = vld [vmem:[#allocation20 + $0x74] sm:$0xf]
        %v4575 = vld [vmem:[#allocation20 + $0x78] sm:$0xf]
        %v4576 = vld [vmem:[#allocation20 + $0x7c] sm:$0xf]
        %v4577 = vpack.c.bf16 %v4560, %v4560
        %v4594 = vunpack.c.l.b16 %v4561
        %v4595 = vunpack.c.l.b16 %v4562
        %v4596 = vunpack.c.l.b16 %v4563
        %v4597 = vunpack.c.l.b16 %v4564
        %v4598 = vunpack.c.l.b16 %v4565
        %v4599 = vunpack.c.l.b16 %v4566
        %v4600 = vunpack.c.l.b16 %v4567
        %v4601 = vunpack.c.l.b16 %v4568
        %v4602 = vunpack.c.l.b16 %v4569
        %v4603 = vunpack.c.l.b16 %v4570
        %v4604 = vunpack.c.l.b16 %v4571
        %v4605 = vunpack.c.l.b16 %v4572
        %v4606 = vunpack.c.l.b16 %v4573
        %v4607 = vunpack.c.l.b16 %v4574
        %v4608 = vunpack.c.l.b16 %v4575
        %v4609 = vunpack.c.l.b16 %v4576
        %v4610 = vpack.c.b16 %v4595, %v4594
        %v4611 = vpack.c.b16 %v4597, %v4596
        %v4612 = vpack.c.b16 %v4599, %v4598
        %v4613 = vpack.c.b16 %v4601, %v4600
        %v4614 = vpack.c.b16 %v4603, %v4602
        %v4615 = vpack.c.b16 %v4605, %v4604
        %v4616 = vpack.c.b16 %v4607, %v4606
        %v4617 = vpack.c.b16 %v4609, %v4608
        %4626 = vmatpush.bf16.msra.mxu0 %v4617
        %4627 = vmatpush.bf16.msra.mxu0 %v4616
        %4628 = vmatpush.bf16.msra.mxu0 %v4615
        %4629 = vmatpush.bf16.msra.mxu0 %v4614
        %4630 = vmatpush.bf16.msra.mxu0 %v4613
        %4631 = vmatpush.bf16.msra.mxu0 %v4612
        %4632 = vmatpush.bf16.msra.mxu0 %v4611
        %4633 = vmatpush.bf16.msra.mxu0 %v4610
        %4634 = vmatmul.bf16.gmra.mxu0 %v4577
        %v4635 = vpop.f32.mrf.mxu0
        %v4636 = vadd.f32 0.0, %v4635
        %v4637 = vpop.f32.mrf.mxu0
        %4638 = vdwg.mxu0
        %v4655 = vunpack.c.l.b16 %v4543
        %v4656 = vunpack.c.l.b16 %v4544
        %v4657 = vunpack.c.l.b16 %v4545
        %v4658 = vunpack.c.l.b16 %v4546
        %v4659 = vunpack.c.l.b16 %v4547
        %v4660 = vunpack.c.l.b16 %v4548
        %v4661 = vunpack.c.l.b16 %v4549
        %v4662 = vunpack.c.l.b16 %v4550
        %v4663 = vunpack.c.l.b16 %v4551
        %v4664 = vunpack.c.l.b16 %v4552
        %v4665 = vunpack.c.l.b16 %v4553
        %v4666 = vunpack.c.l.b16 %v4554
        %v4667 = vunpack.c.l.b16 %v4555
        %v4668 = vunpack.c.l.b16 %v4556
        %v4669 = vunpack.c.l.b16 %v4557
        %v4670 = vunpack.c.l.b16 %v4558
        %v4671 = vpack.c.b16 %v4656, %v4655
        %v4672 = vpack.c.b16 %v4658, %v4657
        %v4673 = vpack.c.b16 %v4660, %v4659
        %v4674 = vpack.c.b16 %v4662, %v4661
        %v4675 = vpack.c.b16 %v4664, %v4663
        %v4676 = vpack.c.b16 %v4666, %v4665
        %v4677 = vpack.c.b16 %v4668, %v4667
        %v4678 = vpack.c.b16 %v4670, %v4669
        %4687 = vmatpush.bf16.msra.mxu0 %v4678
        %4688 = vmatpush.bf16.msra.mxu0 %v4677
        %4689 = vmatpush.bf16.msra.mxu0 %v4676
        %4690 = vmatpush.bf16.msra.mxu0 %v4675
        %4691 = vmatpush.bf16.msra.mxu0 %v4674
        %4692 = vmatpush.bf16.msra.mxu0 %v4673
        %4693 = vmatpush.bf16.msra.mxu0 %v4672
        %4694 = vmatpush.bf16.msra.mxu0 %v4671
        %4695 = vmatmul.bf16.gmra.mxu0 %v4559
        %v4696 = vpop.f32.mrf.mxu0
        %v4697 = vadd.f32 %v4636, %v4696
        %v4698 = vpop.f32.mrf.mxu0
        %4699 = vdwg.mxu0
        %v4700 = vld [vmem:[%s1834] ss:$2 sm:$0xf]
        %v4701 = vld [vmem:[#allocation20 + $0x80] sm:$0xf]
        %v4702 = vld [vmem:[#allocation20 + $0x84] sm:$0xf]
        %v4703 = vld [vmem:[#allocation20 + $0x88] sm:$0xf]
        %v4704 = vld [vmem:[#allocation20 + $0x8c] sm:$0xf]
        %v4705 = vld [vmem:[#allocation20 + $0x90] sm:$0xf]
        %v4706 = vld [vmem:[#allocation20 + $0x94] sm:$0xf]
        %v4707 = vld [vmem:[#allocation20 + $0x98] sm:$0xf]
        %v4708 = vld [vmem:[#allocation20 + $0x9c] sm:$0xf]
        %v4709 = vld [vmem:[#allocation20 + $0xa0] sm:$0xf]
        %v4710 = vld [vmem:[#allocation20 + $0xa4] sm:$0xf]
        %v4711 = vld [vmem:[#allocation20 + $0xa8] sm:$0xf]
        %v4712 = vld [vmem:[#allocation20 + $0xac] sm:$0xf]
        %v4713 = vld [vmem:[#allocation20 + $0xb0] sm:$0xf]
        %v4714 = vld [vmem:[#allocation20 + $0xb4] sm:$0xf]
        %v4715 = vld [vmem:[#allocation20 + $0xb8] sm:$0xf]
        %v4716 = vld [vmem:[#allocation20 + $0xbc] sm:$0xf]
        %v4717 = vpack.c.bf16 %v4700, %v4700
        %v4734 = vunpack.c.l.b16 %v4701
        %v4735 = vunpack.c.l.b16 %v4702
        %v4736 = vunpack.c.l.b16 %v4703
        %v4737 = vunpack.c.l.b16 %v4704
        %v4738 = vunpack.c.l.b16 %v4705
        %v4739 = vunpack.c.l.b16 %v4706
        %v4740 = vunpack.c.l.b16 %v4707
        %v4741 = vunpack.c.l.b16 %v4708
        %v4742 = vunpack.c.l.b16 %v4709
        %v4743 = vunpack.c.l.b16 %v4710
        %v4744 = vunpack.c.l.b16 %v4711
        %v4745 = vunpack.c.l.b16 %v4712
        %v4746 = vunpack.c.l.b16 %v4713
        %v4747 = vunpack.c.l.b16 %v4714
        %v4748 = vunpack.c.l.b16 %v4715
        %v4749 = vunpack.c.l.b16 %v4716
        %v4750 = vpack.c.b16 %v4735, %v4734
        %v4751 = vpack.c.b16 %v4737, %v4736
        %v4752 = vpack.c.b16 %v4739, %v4738
        %v4753 = vpack.c.b16 %v4741, %v4740
        %v4754 = vpack.c.b16 %v4743, %v4742
        %v4755 = vpack.c.b16 %v4745, %v4744
        %v4756 = vpack.c.b16 %v4747, %v4746
        %v4757 = vpack.c.b16 %v4749, %v4748
        %4766 = vmatpush.bf16.msra.mxu0 %v4757
        %4767 = vmatpush.bf16.msra.mxu0 %v4756
        %4768 = vmatpush.bf16.msra.mxu0 %v4755
        %4769 = vmatpush.bf16.msra.mxu0 %v4754
        %4770 = vmatpush.bf16.msra.mxu0 %v4753
        %4771 = vmatpush.bf16.msra.mxu0 %v4752
        %4772 = vmatpush.bf16.msra.mxu0 %v4751
        %4773 = vmatpush.bf16.msra.mxu0 %v4750
        %4774 = vmatmul.bf16.gmra.mxu0 %v4717
        %v4775 = vpop.f32.mrf.mxu0
        %v4776 = vadd.f32 0.0, %v4775
        %v4777 = vpop.f32.mrf.mxu0
        %4778 = vdwg.mxu0
        %v4779 = vadd.f32 %v4697, %v4776
        %v4780 = vld [vmem:[%s45] sm:$0x1]
        %v4782 = vperm.slane %v4780, 0
        %v4784 = vadd.f32 %v4779, %v4782
        %v4785 = vmax.f32 %v4784, 0.0
        %4786 = vst [vmem:[#allocation2] sm:$0x1] 0.0
        %4787 = vst [vmem:[#allocation2 + $0x5] sm:$0x1] 0.0
        %4788 = vst [vmem:[#allocation2 + $0x1] sm:$0xf] %v4785
        %v4789 = vld [vmem:[#allocation2] sm:$0xf]
        %v4790 = vld [vmem:[#allocation21] sm:$0xf]
        %v4791 = vld [vmem:[#allocation21 + $0x4] sm:$0xf]
        %v4792 = vld [vmem:[#allocation21 + $0x8] sm:$0xf]
        %v4793 = vld [vmem:[#allocation21 + $0xc] sm:$0xf]
        %v4794 = vld [vmem:[#allocation21 + $0x10] sm:$0xf]
        %v4795 = vld [vmem:[#allocation21 + $0x14] sm:$0xf]
        %v4796 = vld [vmem:[#allocation21 + $0x18] sm:$0xf]
        %v4797 = vld [vmem:[#allocation21 + $0x1c] sm:$0xf]
        %v4798 = vld [vmem:[#allocation21 + $0x20] sm:$0xf]
        %v4799 = vld [vmem:[#allocation21 + $0x24] sm:$0xf]
        %v4800 = vld [vmem:[#allocation21 + $0x28] sm:$0xf]
        %v4801 = vld [vmem:[#allocation21 + $0x2c] sm:$0xf]
        %v4802 = vld [vmem:[#allocation21 + $0x30] sm:$0xf]
        %v4803 = vld [vmem:[#allocation21 + $0x34] sm:$0xf]
        %v4804 = vld [vmem:[#allocation21 + $0x38] sm:$0xf]
        %v4805 = vld [vmem:[#allocation21 + $0x3c] sm:$0xf]
        %v4806 = vpack.c.bf16 %v4789, %v4789
        %v4807 = vld [vmem:[#allocation2 + $0x1] sm:$0xf]
        %v4808 = vld [vmem:[#allocation21 + $0x40] sm:$0xf]
        %v4809 = vld [vmem:[#allocation21 + $0x44] sm:$0xf]
        %v4810 = vld [vmem:[#allocation21 + $0x48] sm:$0xf]
        %v4811 = vld [vmem:[#allocation21 + $0x4c] sm:$0xf]
        %v4812 = vld [vmem:[#allocation21 + $0x50] sm:$0xf]
        %v4813 = vld [vmem:[#allocation21 + $0x54] sm:$0xf]
        %v4814 = vld [vmem:[#allocation21 + $0x58] sm:$0xf]
        %v4815 = vld [vmem:[#allocation21 + $0x5c] sm:$0xf]
        %v4816 = vld [vmem:[#allocation21 + $0x60] sm:$0xf]
        %v4817 = vld [vmem:[#allocation21 + $0x64] sm:$0xf]
        %v4818 = vld [vmem:[#allocation21 + $0x68] sm:$0xf]
        %v4819 = vld [vmem:[#allocation21 + $0x6c] sm:$0xf]
        %v4820 = vld [vmem:[#allocation21 + $0x70] sm:$0xf]
        %v4821 = vld [vmem:[#allocation21 + $0x74] sm:$0xf]
        %v4822 = vld [vmem:[#allocation21 + $0x78] sm:$0xf]
        %v4823 = vld [vmem:[#allocation21 + $0x7c] sm:$0xf]
        %v4824 = vpack.c.bf16 %v4807, %v4807
        %v4841 = vunpack.c.l.b16 %v4808
        %v4842 = vunpack.c.l.b16 %v4809
        %v4843 = vunpack.c.l.b16 %v4810
        %v4844 = vunpack.c.l.b16 %v4811
        %v4845 = vunpack.c.l.b16 %v4812
        %v4846 = vunpack.c.l.b16 %v4813
        %v4847 = vunpack.c.l.b16 %v4814
        %v4848 = vunpack.c.l.b16 %v4815
        %v4849 = vunpack.c.l.b16 %v4816
        %v4850 = vunpack.c.l.b16 %v4817
        %v4851 = vunpack.c.l.b16 %v4818
        %v4852 = vunpack.c.l.b16 %v4819
        %v4853 = vunpack.c.l.b16 %v4820
        %v4854 = vunpack.c.l.b16 %v4821
        %v4855 = vunpack.c.l.b16 %v4822
        %v4856 = vunpack.c.l.b16 %v4823
        %v4857 = vpack.c.b16 %v4842, %v4841
        %v4858 = vpack.c.b16 %v4844, %v4843
        %v4859 = vpack.c.b16 %v4846, %v4845
        %v4860 = vpack.c.b16 %v4848, %v4847
        %v4861 = vpack.c.b16 %v4850, %v4849
        %v4862 = vpack.c.b16 %v4852, %v4851
        %v4863 = vpack.c.b16 %v4854, %v4853
        %v4864 = vpack.c.b16 %v4856, %v4855
        %4873 = vmatpush.bf16.msra.mxu0 %v4864
        %4874 = vmatpush.bf16.msra.mxu0 %v4863
        %4875 = vmatpush.bf16.msra.mxu0 %v4862
        %4876 = vmatpush.bf16.msra.mxu0 %v4861
        %4877 = vmatpush.bf16.msra.mxu0 %v4860
        %4878 = vmatpush.bf16.msra.mxu0 %v4859
        %4879 = vmatpush.bf16.msra.mxu0 %v4858
        %4880 = vmatpush.bf16.msra.mxu0 %v4857
        %4881 = vmatmul.bf16.gmra.mxu0 %v4824
        %v4882 = vpop.f32.mrf.mxu0
        %v4883 = vadd.f32 0.0, %v4882
        %v4884 = vpop.f32.mrf.mxu0
        %4885 = vdwg.mxu0
        %v4902 = vunpack.c.l.b16 %v4790
        %v4903 = vunpack.c.l.b16 %v4791
        %v4904 = vunpack.c.l.b16 %v4792
        %v4905 = vunpack.c.l.b16 %v4793
        %v4906 = vunpack.c.l.b16 %v4794
        %v4907 = vunpack.c.l.b16 %v4795
        %v4908 = vunpack.c.l.b16 %v4796
        %v4909 = vunpack.c.l.b16 %v4797
        %v4910 = vunpack.c.l.b16 %v4798
        %v4911 = vunpack.c.l.b16 %v4799
        %v4912 = vunpack.c.l.b16 %v4800
        %v4913 = vunpack.c.l.b16 %v4801
        %v4914 = vunpack.c.l.b16 %v4802
        %v4915 = vunpack.c.l.b16 %v4803
        %v4916 = vunpack.c.l.b16 %v4804
        %v4917 = vunpack.c.l.b16 %v4805
        %v4918 = vpack.c.b16 %v4903, %v4902
        %v4919 = vpack.c.b16 %v4905, %v4904
        %v4920 = vpack.c.b16 %v4907, %v4906
        %v4921 = vpack.c.b16 %v4909, %v4908
        %v4922 = vpack.c.b16 %v4911, %v4910
        %v4923 = vpack.c.b16 %v4913, %v4912
        %v4924 = vpack.c.b16 %v4915, %v4914
        %v4925 = vpack.c.b16 %v4917, %v4916
        %4934 = vmatpush.bf16.msra.mxu0 %v4925
        %4935 = vmatpush.bf16.msra.mxu0 %v4924
        %4936 = vmatpush.bf16.msra.mxu0 %v4923
        %4937 = vmatpush.bf16.msra.mxu0 %v4922
        %4938 = vmatpush.bf16.msra.mxu0 %v4921
        %4939 = vmatpush.bf16.msra.mxu0 %v4920
        %4940 = vmatpush.bf16.msra.mxu0 %v4919
        %4941 = vmatpush.bf16.msra.mxu0 %v4918
        %4942 = vmatmul.bf16.gmra.mxu0 %v4806
        %v4943 = vpop.f32.mrf.mxu0
        %v4944 = vadd.f32 %v4883, %v4943
        %v4945 = vpop.f32.mrf.mxu0
        %4946 = vdwg.mxu0
        %v4947 = vld [vmem:[#allocation2 + $0x2] sm:$0xf]
        %v4948 = vld [vmem:[#allocation21 + $0x80] sm:$0xf]
        %v4949 = vld [vmem:[#allocation21 + $0x84] sm:$0xf]
        %v4950 = vld [vmem:[#allocation21 + $0x88] sm:$0xf]
        %v4951 = vld [vmem:[#allocation21 + $0x8c] sm:$0xf]
        %v4952 = vld [vmem:[#allocation21 + $0x90] sm:$0xf]
        %v4953 = vld [vmem:[#allocation21 + $0x94] sm:$0xf]
        %v4954 = vld [vmem:[#allocation21 + $0x98] sm:$0xf]
        %v4955 = vld [vmem:[#allocation21 + $0x9c] sm:$0xf]
        %v4956 = vld [vmem:[#allocation21 + $0xa0] sm:$0xf]
        %v4957 = vld [vmem:[#allocation21 + $0xa4] sm:$0xf]
        %v4958 = vld [vmem:[#allocation21 + $0xa8] sm:$0xf]
        %v4959 = vld [vmem:[#allocation21 + $0xac] sm:$0xf]
        %v4960 = vld [vmem:[#allocation21 + $0xb0] sm:$0xf]
        %v4961 = vld [vmem:[#allocation21 + $0xb4] sm:$0xf]
        %v4962 = vld [vmem:[#allocation21 + $0xb8] sm:$0xf]
        %v4963 = vld [vmem:[#allocation21 + $0xbc] sm:$0xf]
        %v4964 = vpack.c.bf16 %v4947, %v4947
        %v4981 = vunpack.c.l.b16 %v4948
        %v4982 = vunpack.c.l.b16 %v4949
        %v4983 = vunpack.c.l.b16 %v4950
        %v4984 = vunpack.c.l.b16 %v4951
        %v4985 = vunpack.c.l.b16 %v4952
        %v4986 = vunpack.c.l.b16 %v4953
        %v4987 = vunpack.c.l.b16 %v4954
        %v4988 = vunpack.c.l.b16 %v4955
        %v4989 = vunpack.c.l.b16 %v4956
        %v4990 = vunpack.c.l.b16 %v4957
        %v4991 = vunpack.c.l.b16 %v4958
        %v4992 = vunpack.c.l.b16 %v4959
        %v4993 = vunpack.c.l.b16 %v4960
        %v4994 = vunpack.c.l.b16 %v4961
        %v4995 = vunpack.c.l.b16 %v4962
        %v4996 = vunpack.c.l.b16 %v4963
        %v4997 = vpack.c.b16 %v4982, %v4981
        %v4998 = vpack.c.b16 %v4984, %v4983
        %v4999 = vpack.c.b16 %v4986, %v4985
        %v5000 = vpack.c.b16 %v4988, %v4987
        %v5001 = vpack.c.b16 %v4990, %v4989
        %v5002 = vpack.c.b16 %v4992, %v4991
        %v5003 = vpack.c.b16 %v4994, %v4993
        %v5004 = vpack.c.b16 %v4996, %v4995
        %5013 = vmatpush.bf16.msra.mxu0 %v5004
        %5014 = vmatpush.bf16.msra.mxu0 %v5003
        %5015 = vmatpush.bf16.msra.mxu0 %v5002
        %5016 = vmatpush.bf16.msra.mxu0 %v5001
        %5017 = vmatpush.bf16.msra.mxu0 %v5000
        %5018 = vmatpush.bf16.msra.mxu0 %v4999
        %5019 = vmatpush.bf16.msra.mxu0 %v4998
        %5020 = vmatpush.bf16.msra.mxu0 %v4997
        %5021 = vmatmul.bf16.gmra.mxu0 %v4964
        %v5022 = vpop.f32.mrf.mxu0
        %v5023 = vadd.f32 0.0, %v5022
        %v5024 = vpop.f32.mrf.mxu0
        %5025 = vdwg.mxu0
        %v5026 = vadd.f32 %v4944, %v5023
        %v5027 = vld [vmem:[%s49] sm:$0x1]
        %v5029 = vperm.slane %v5027, 0
        %v5031 = vadd.f32 %v5026, %v5029
        %v5032 = vadd.f32 %v5031, %v4536
        %v5033 = vmax.f32 %v5032, 0.0
        %5034 = vst [vmem:[#allocation2] sm:$0x1] 0.0
        %5035 = vst [vmem:[#allocation2 + $0x5] sm:$0x1] 0.0
        %5036 = vst [vmem:[#allocation2 + $0x1] sm:$0xf] %v5033
        %v5037 = vld [vmem:[#allocation2] sm:$0xf]
        %v5038 = vld [vmem:[#allocation24] sm:$0xf]
        %v5039 = vld [vmem:[#allocation24 + $0x4] sm:$0xf]
        %v5040 = vld [vmem:[#allocation24 + $0x8] sm:$0xf]
        %v5041 = vld [vmem:[#allocation24 + $0xc] sm:$0xf]
        %v5042 = vld [vmem:[#allocation24 + $0x10] sm:$0xf]
        %v5043 = vld [vmem:[#allocation24 + $0x14] sm:$0xf]
        %v5044 = vld [vmem:[#allocation24 + $0x18] sm:$0xf]
        %v5045 = vld [vmem:[#allocation24 + $0x1c] sm:$0xf]
        %v5046 = vld [vmem:[#allocation24 + $0x20] sm:$0xf]
        %v5047 = vld [vmem:[#allocation24 + $0x24] sm:$0xf]
        %v5048 = vld [vmem:[#allocation24 + $0x28] sm:$0xf]
        %v5049 = vld [vmem:[#allocation24 + $0x2c] sm:$0xf]
        %v5050 = vld [vmem:[#allocation24 + $0x30] sm:$0xf]
        %v5051 = vld [vmem:[#allocation24 + $0x34] sm:$0xf]
        %v5052 = vld [vmem:[#allocation24 + $0x38] sm:$0xf]
        %v5053 = vld [vmem:[#allocation24 + $0x3c] sm:$0xf]
        %v5054 = vpack.c.bf16 %v5037, %v5037
        %v5055 = vld [vmem:[#allocation2 + $0x1] sm:$0xf]
        %v5056 = vld [vmem:[#allocation24 + $0x40] sm:$0xf]
        %v5057 = vld [vmem:[#allocation24 + $0x44] sm:$0xf]
        %v5058 = vld [vmem:[#allocation24 + $0x48] sm:$0xf]
        %v5059 = vld [vmem:[#allocation24 + $0x4c] sm:$0xf]
        %v5060 = vld [vmem:[#allocation24 + $0x50] sm:$0xf]
        %v5061 = vld [vmem:[#allocation24 + $0x54] sm:$0xf]
        %v5062 = vld [vmem:[#allocation24 + $0x58] sm:$0xf]
        %v5063 = vld [vmem:[#allocation24 + $0x5c] sm:$0xf]
        %v5064 = vld [vmem:[#allocation24 + $0x60] sm:$0xf]
        %v5065 = vld [vmem:[#allocation24 + $0x64] sm:$0xf]
        %v5066 = vld [vmem:[#allocation24 + $0x68] sm:$0xf]
        %v5067 = vld [vmem:[#allocation24 + $0x6c] sm:$0xf]
        %v5068 = vld [vmem:[#allocation24 + $0x70] sm:$0xf]
        %v5069 = vld [vmem:[#allocation24 + $0x74] sm:$0xf]
        %v5070 = vld [vmem:[#allocation24 + $0x78] sm:$0xf]
        %v5071 = vld [vmem:[#allocation24 + $0x7c] sm:$0xf]
        %v5072 = vpack.c.bf16 %v5055, %v5055
        %v5089 = vunpack.c.l.b16 %v5056
        %v5090 = vunpack.c.l.b16 %v5057
        %v5091 = vunpack.c.l.b16 %v5058
        %v5092 = vunpack.c.l.b16 %v5059
        %v5093 = vunpack.c.l.b16 %v5060
        %v5094 = vunpack.c.l.b16 %v5061
        %v5095 = vunpack.c.l.b16 %v5062
        %v5096 = vunpack.c.l.b16 %v5063
        %v5097 = vunpack.c.l.b16 %v5064
        %v5098 = vunpack.c.l.b16 %v5065
        %v5099 = vunpack.c.l.b16 %v5066
        %v5100 = vunpack.c.l.b16 %v5067
        %v5101 = vunpack.c.l.b16 %v5068
        %v5102 = vunpack.c.l.b16 %v5069
        %v5103 = vunpack.c.l.b16 %v5070
        %v5104 = vunpack.c.l.b16 %v5071
        %v5105 = vpack.c.b16 %v5090, %v5089
        %v5106 = vpack.c.b16 %v5092, %v5091
        %v5107 = vpack.c.b16 %v5094, %v5093
        %v5108 = vpack.c.b16 %v5096, %v5095
        %v5109 = vpack.c.b16 %v5098, %v5097
        %v5110 = vpack.c.b16 %v5100, %v5099
        %v5111 = vpack.c.b16 %v5102, %v5101
        %v5112 = vpack.c.b16 %v5104, %v5103
        %5121 = vmatpush.bf16.msra.mxu0 %v5112
        %5122 = vmatpush.bf16.msra.mxu0 %v5111
        %5123 = vmatpush.bf16.msra.mxu0 %v5110
        %5124 = vmatpush.bf16.msra.mxu0 %v5109
        %5125 = vmatpush.bf16.msra.mxu0 %v5108
        %5126 = vmatpush.bf16.msra.mxu0 %v5107
        %5127 = vmatpush.bf16.msra.mxu0 %v5106
        %5128 = vmatpush.bf16.msra.mxu0 %v5105
        %5129 = vmatmul.bf16.gmra.mxu0 %v5072
        %v5130 = vpop.f32.mrf.mxu0
        %v5131 = vadd.f32 0.0, %v5130
        %v5132 = vpop.f32.mrf.mxu0
        %5133 = vdwg.mxu0
        %v5150 = vunpack.c.l.b16 %v5038
        %v5151 = vunpack.c.l.b16 %v5039
        %v5152 = vunpack.c.l.b16 %v5040
        %v5153 = vunpack.c.l.b16 %v5041
        %v5154 = vunpack.c.l.b16 %v5042
        %v5155 = vunpack.c.l.b16 %v5043
        %v5156 = vunpack.c.l.b16 %v5044
        %v5157 = vunpack.c.l.b16 %v5045
        %v5158 = vunpack.c.l.b16 %v5046
        %v5159 = vunpack.c.l.b16 %v5047
        %v5160 = vunpack.c.l.b16 %v5048
        %v5161 = vunpack.c.l.b16 %v5049
        %v5162 = vunpack.c.l.b16 %v5050
        %v5163 = vunpack.c.l.b16 %v5051
        %v5164 = vunpack.c.l.b16 %v5052
        %v5165 = vunpack.c.l.b16 %v5053
        %v5166 = vpack.c.b16 %v5151, %v5150
        %v5167 = vpack.c.b16 %v5153, %v5152
        %v5168 = vpack.c.b16 %v5155, %v5154
        %v5169 = vpack.c.b16 %v5157, %v5156
        %v5170 = vpack.c.b16 %v5159, %v5158
        %v5171 = vpack.c.b16 %v5161, %v5160
        %v5172 = vpack.c.b16 %v5163, %v5162
        %v5173 = vpack.c.b16 %v5165, %v5164
        %5182 = vmatpush.bf16.msra.mxu0 %v5173
        %5183 = vmatpush.bf16.msra.mxu0 %v5172
        %5184 = vmatpush.bf16.msra.mxu0 %v5171
        %5185 = vmatpush.bf16.msra.mxu0 %v5170
        %5186 = vmatpush.bf16.msra.mxu0 %v5169
        %5187 = vmatpush.bf16.msra.mxu0 %v5168
        %5188 = vmatpush.bf16.msra.mxu0 %v5167
        %5189 = vmatpush.bf16.msra.mxu0 %v5166
        %5190 = vmatmul.bf16.gmra.mxu0 %v5054
        %v5191 = vpop.f32.mrf.mxu0
        %v5192 = vadd.f32 %v5131, %v5191
        %v5193 = vpop.f32.mrf.mxu0
        %5194 = vdwg.mxu0
        %v5195 = vld [vmem:[#allocation2 + $0x2] sm:$0xf]
        %v5196 = vld [vmem:[#allocation24 + $0x80] sm:$0xf]
        %v5197 = vld [vmem:[#allocation24 + $0x84] sm:$0xf]
        %v5198 = vld [vmem:[#allocation24 + $0x88] sm:$0xf]
        %v5199 = vld [vmem:[#allocation24 + $0x8c] sm:$0xf]
        %v5200 = vld [vmem:[#allocation24 + $0x90] sm:$0xf]
        %v5201 = vld [vmem:[#allocation24 + $0x94] sm:$0xf]
        %v5202 = vld [vmem:[#allocation24 + $0x98] sm:$0xf]
        %v5203 = vld [vmem:[#allocation24 + $0x9c] sm:$0xf]
        %v5204 = vld [vmem:[#allocation24 + $0xa0] sm:$0xf]
        %v5205 = vld [vmem:[#allocation24 + $0xa4] sm:$0xf]
        %v5206 = vld [vmem:[#allocation24 + $0xa8] sm:$0xf]
        %v5207 = vld [vmem:[#allocation24 + $0xac] sm:$0xf]
        %v5208 = vld [vmem:[#allocation24 + $0xb0] sm:$0xf]
        %v5209 = vld [vmem:[#allocation24 + $0xb4] sm:$0xf]
        %v5210 = vld [vmem:[#allocation24 + $0xb8] sm:$0xf]
        %v5211 = vld [vmem:[#allocation24 + $0xbc] sm:$0xf]
        %v5212 = vpack.c.bf16 %v5195, %v5195
        %v5229 = vunpack.c.l.b16 %v5196
        %v5230 = vunpack.c.l.b16 %v5197
        %v5231 = vunpack.c.l.b16 %v5198
        %v5232 = vunpack.c.l.b16 %v5199
        %v5233 = vunpack.c.l.b16 %v5200
        %v5234 = vunpack.c.l.b16 %v5201
        %v5235 = vunpack.c.l.b16 %v5202
        %v5236 = vunpack.c.l.b16 %v5203
        %v5237 = vunpack.c.l.b16 %v5204
        %v5238 = vunpack.c.l.b16 %v5205
        %v5239 = vunpack.c.l.b16 %v5206
        %v5240 = vunpack.c.l.b16 %v5207
        %v5241 = vunpack.c.l.b16 %v5208
        %v5242 = vunpack.c.l.b16 %v5209
        %v5243 = vunpack.c.l.b16 %v5210
        %v5244 = vunpack.c.l.b16 %v5211
        %v5245 = vpack.c.b16 %v5230, %v5229
        %v5246 = vpack.c.b16 %v5232, %v5231
        %v5247 = vpack.c.b16 %v5234, %v5233
        %v5248 = vpack.c.b16 %v5236, %v5235
        %v5249 = vpack.c.b16 %v5238, %v5237
        %v5250 = vpack.c.b16 %v5240, %v5239
        %v5251 = vpack.c.b16 %v5242, %v5241
        %v5252 = vpack.c.b16 %v5244, %v5243
        %5261 = vmatpush.bf16.msra.mxu0 %v5252
        %5262 = vmatpush.bf16.msra.mxu0 %v5251
        %5263 = vmatpush.bf16.msra.mxu0 %v5250
        %5264 = vmatpush.bf16.msra.mxu0 %v5249
        %5265 = vmatpush.bf16.msra.mxu0 %v5248
        %5266 = vmatpush.bf16.msra.mxu0 %v5247
        %5267 = vmatpush.bf16.msra.mxu0 %v5246
        %5268 = vmatpush.bf16.msra.mxu0 %v5245
        %5269 = vmatmul.bf16.gmra.mxu0 %v5212
        %v5270 = vpop.f32.mrf.mxu0
        %v5271 = vadd.f32 0.0, %v5270
        %v5272 = vpop.f32.mrf.mxu0
        %5273 = vdwg.mxu0
        %v5274 = vadd.f32 %v5192, %v5271
        %v5275 = vld [vmem:[%s57] sm:$0x1]
        %v5277 = vperm.slane %v5275, 0
        %v5279 = vadd.f32 %v5274, %v5277
        %v5280 = vmax.f32 %v5279, 0.0
        %5281 = vst [vmem:[#allocation2] sm:$0x1] 0.0
        %5282 = vst [vmem:[#allocation2 + $0x5] sm:$0x1] 0.0
        %5283 = vst [vmem:[#allocation2 + $0x1] sm:$0xf] %v5280
        %v5284 = vld [vmem:[#allocation2] sm:$0xf]
        %v5285 = vld [vmem:[#allocation26] sm:$0xf]
        %v5286 = vld [vmem:[#allocation26 + $0x4] sm:$0xf]
        %v5287 = vld [vmem:[#allocation26 + $0x8] sm:$0xf]
        %v5288 = vld [vmem:[#allocation26 + $0xc] sm:$0xf]
        %v5289 = vld [vmem:[#allocation26 + $0x10] sm:$0xf]
        %v5290 = vld [vmem:[#allocation26 + $0x14] sm:$0xf]
        %v5291 = vld [vmem:[#allocation26 + $0x18] sm:$0xf]
        %v5292 = vld [vmem:[#allocation26 + $0x1c] sm:$0xf]
        %v5293 = vld [vmem:[#allocation26 + $0x20] sm:$0xf]
        %v5294 = vld [vmem:[#allocation26 + $0x24] sm:$0xf]
        %v5295 = vld [vmem:[#allocation26 + $0x28] sm:$0xf]
        %v5296 = vld [vmem:[#allocation26 + $0x2c] sm:$0xf]
        %v5297 = vld [vmem:[#allocation26 + $0x30] sm:$0xf]
        %v5298 = vld [vmem:[#allocation26 + $0x34] sm:$0xf]
        %v5299 = vld [vmem:[#allocation26 + $0x38] sm:$0xf]
        %v5300 = vld [vmem:[#allocation26 + $0x3c] sm:$0xf]
        %v5301 = vpack.c.bf16 %v5284, %v5284
        %v5302 = vld [vmem:[#allocation2 + $0x1] sm:$0xf]
        %v5303 = vld [vmem:[#allocation26 + $0x40] sm:$0xf]
        %v5304 = vld [vmem:[#allocation26 + $0x44] sm:$0xf]
        %v5305 = vld [vmem:[#allocation26 + $0x48] sm:$0xf]
        %v5306 = vld [vmem:[#allocation26 + $0x4c] sm:$0xf]
        %v5307 = vld [vmem:[#allocation26 + $0x50] sm:$0xf]
        %v5308 = vld [vmem:[#allocation26 + $0x54] sm:$0xf]
        %v5309 = vld [vmem:[#allocation26 + $0x58] sm:$0xf]
        %v5310 = vld [vmem:[#allocation26 + $0x5c] sm:$0xf]
        %v5311 = vld [vmem:[#allocation26 + $0x60] sm:$0xf]
        %v5312 = vld [vmem:[#allocation26 + $0x64] sm:$0xf]
        %v5313 = vld [vmem:[#allocation26 + $0x68] sm:$0xf]
        %v5314 = vld [vmem:[#allocation26 + $0x6c] sm:$0xf]
        %v5315 = vld [vmem:[#allocation26 + $0x70] sm:$0xf]
        %v5316 = vld [vmem:[#allocation26 + $0x74] sm:$0xf]
        %v5317 = vld [vmem:[#allocation26 + $0x78] sm:$0xf]
        %v5318 = vld [vmem:[#allocation26 + $0x7c] sm:$0xf]
        %v5319 = vpack.c.bf16 %v5302, %v5302
        %v5336 = vunpack.c.l.b16 %v5303
        %v5337 = vunpack.c.l.b16 %v5304
        %v5338 = vunpack.c.l.b16 %v5305
        %v5339 = vunpack.c.l.b16 %v5306
        %v5340 = vunpack.c.l.b16 %v5307
        %v5341 = vunpack.c.l.b16 %v5308
        %v5342 = vunpack.c.l.b16 %v5309
        %v5343 = vunpack.c.l.b16 %v5310
        %v5344 = vunpack.c.l.b16 %v5311
        %v5345 = vunpack.c.l.b16 %v5312
        %v5346 = vunpack.c.l.b16 %v5313
        %v5347 = vunpack.c.l.b16 %v5314
        %v5348 = vunpack.c.l.b16 %v5315
        %v5349 = vunpack.c.l.b16 %v5316
        %v5350 = vunpack.c.l.b16 %v5317
        %v5351 = vunpack.c.l.b16 %v5318
        %v5352 = vpack.c.b16 %v5337, %v5336
        %v5353 = vpack.c.b16 %v5339, %v5338
        %v5354 = vpack.c.b16 %v5341, %v5340
        %v5355 = vpack.c.b16 %v5343, %v5342
        %v5356 = vpack.c.b16 %v5345, %v5344
        %v5357 = vpack.c.b16 %v5347, %v5346
        %v5358 = vpack.c.b16 %v5349, %v5348
        %v5359 = vpack.c.b16 %v5351, %v5350
        %5368 = vmatpush.bf16.msra.mxu0 %v5359
        %5369 = vmatpush.bf16.msra.mxu0 %v5358
        %5370 = vmatpush.bf16.msra.mxu0 %v5357
        %5371 = vmatpush.bf16.msra.mxu0 %v5356
        %5372 = vmatpush.bf16.msra.mxu0 %v5355
        %5373 = vmatpush.bf16.msra.mxu0 %v5354
        %5374 = vmatpush.bf16.msra.mxu0 %v5353
        %5375 = vmatpush.bf16.msra.mxu0 %v5352
        %5376 = vmatmul.bf16.gmra.mxu0 %v5319
        %v5377 = vpop.f32.mrf.mxu0
        %v5378 = vadd.f32 0.0, %v5377
        %v5379 = vpop.f32.mrf.mxu0
        %5380 = vdwg.mxu0
        %v5397 = vunpack.c.l.b16 %v5285
        %v5398 = vunpack.c.l.b16 %v5286
        %v5399 = vunpack.c.l.b16 %v5287
        %v5400 = vunpack.c.l.b16 %v5288
        %v5401 = vunpack.c.l.b16 %v5289
        %v5402 = vunpack.c.l.b16 %v5290
        %v5403 = vunpack.c.l.b16 %v5291
        %v5404 = vunpack.c.l.b16 %v5292
        %v5405 = vunpack.c.l.b16 %v5293
        %v5406 = vunpack.c.l.b16 %v5294
        %v5407 = vunpack.c.l.b16 %v5295
        %v5408 = vunpack.c.l.b16 %v5296
        %v5409 = vunpack.c.l.b16 %v5297
        %v5410 = vunpack.c.l.b16 %v5298
        %v5411 = vunpack.c.l.b16 %v5299
        %v5412 = vunpack.c.l.b16 %v5300
        %v5413 = vpack.c.b16 %v5398, %v5397
        %v5414 = vpack.c.b16 %v5400, %v5399
        %v5415 = vpack.c.b16 %v5402, %v5401
        %v5416 = vpack.c.b16 %v5404, %v5403
        %v5417 = vpack.c.b16 %v5406, %v5405
        %v5418 = vpack.c.b16 %v5408, %v5407
        %v5419 = vpack.c.b16 %v5410, %v5409
        %v5420 = vpack.c.b16 %v5412, %v5411
        %5429 = vmatpush.bf16.msra.mxu0 %v5420
        %5430 = vmatpush.bf16.msra.mxu0 %v5419
        %5431 = vmatpush.bf16.msra.mxu0 %v5418
        %5432 = vmatpush.bf16.msra.mxu0 %v5417
        %5433 = vmatpush.bf16.msra.mxu0 %v5416
        %5434 = vmatpush.bf16.msra.mxu0 %v5415
        %5435 = vmatpush.bf16.msra.mxu0 %v5414
        %5436 = vmatpush.bf16.msra.mxu0 %v5413
        %5437 = vmatmul.bf16.gmra.mxu0 %v5301
        %v5438 = vpop.f32.mrf.mxu0
        %v5439 = vadd.f32 %v5378, %v5438
        %v5440 = vpop.f32.mrf.mxu0
        %5441 = vdwg.mxu0
        %v5442 = vld [vmem:[#allocation2 + $0x2] sm:$0xf]
        %v5443 = vld [vmem:[#allocation26 + $0x80] sm:$0xf]
        %v5444 = vld [vmem:[#allocation26 + $0x84] sm:$0xf]
        %v5445 = vld [vmem:[#allocation26 + $0x88] sm:$0xf]
        %v5446 = vld [vmem:[#allocation26 + $0x8c] sm:$0xf]
        %v5447 = vld [vmem:[#allocation26 + $0x90] sm:$0xf]
        %v5448 = vld [vmem:[#allocation26 + $0x94] sm:$0xf]
        %v5449 = vld [vmem:[#allocation26 + $0x98] sm:$0xf]
        %v5450 = vld [vmem:[#allocation26 + $0x9c] sm:$0xf]
        %v5451 = vld [vmem:[#allocation26 + $0xa0] sm:$0xf]
        %v5452 = vld [vmem:[#allocation26 + $0xa4] sm:$0xf]
        %v5453 = vld [vmem:[#allocation26 + $0xa8] sm:$0xf]
        %v5454 = vld [vmem:[#allocation26 + $0xac] sm:$0xf]
        %v5455 = vld [vmem:[#allocation26 + $0xb0] sm:$0xf]
        %v5456 = vld [vmem:[#allocation26 + $0xb4] sm:$0xf]
        %v5457 = vld [vmem:[#allocation26 + $0xb8] sm:$0xf]
        %v5458 = vld [vmem:[#allocation26 + $0xbc] sm:$0xf]
        %v5459 = vpack.c.bf16 %v5442, %v5442
        %v5476 = vunpack.c.l.b16 %v5443
        %v5477 = vunpack.c.l.b16 %v5444
        %v5478 = vunpack.c.l.b16 %v5445
        %v5479 = vunpack.c.l.b16 %v5446
        %v5480 = vunpack.c.l.b16 %v5447
        %v5481 = vunpack.c.l.b16 %v5448
        %v5482 = vunpack.c.l.b16 %v5449
        %v5483 = vunpack.c.l.b16 %v5450
        %v5484 = vunpack.c.l.b16 %v5451
        %v5485 = vunpack.c.l.b16 %v5452
        %v5486 = vunpack.c.l.b16 %v5453
        %v5487 = vunpack.c.l.b16 %v5454
        %v5488 = vunpack.c.l.b16 %v5455
        %v5489 = vunpack.c.l.b16 %v5456
        %v5490 = vunpack.c.l.b16 %v5457
        %v5491 = vunpack.c.l.b16 %v5458
        %v5492 = vpack.c.b16 %v5477, %v5476
        %v5493 = vpack.c.b16 %v5479, %v5478
        %v5494 = vpack.c.b16 %v5481, %v5480
        %v5495 = vpack.c.b16 %v5483, %v5482
        %v5496 = vpack.c.b16 %v5485, %v5484
        %v5497 = vpack.c.b16 %v5487, %v5486
        %v5498 = vpack.c.b16 %v5489, %v5488
        %v5499 = vpack.c.b16 %v5491, %v5490
        %5508 = vmatpush.bf16.msra.mxu0 %v5499
        %5509 = vmatpush.bf16.msra.mxu0 %v5498
        %5510 = vmatpush.bf16.msra.mxu0 %v5497
        %5511 = vmatpush.bf16.msra.mxu0 %v5496
        %5512 = vmatpush.bf16.msra.mxu0 %v5495
        %5513 = vmatpush.bf16.msra.mxu0 %v5494
        %5514 = vmatpush.bf16.msra.mxu0 %v5493
        %5515 = vmatpush.bf16.msra.mxu0 %v5492
        %5516 = vmatmul.bf16.gmra.mxu0 %v5459
        %v5517 = vpop.f32.mrf.mxu0
        %v5518 = vadd.f32 0.0, %v5517
        %v5519 = vpop.f32.mrf.mxu0
        %5520 = vdwg.mxu0
        %v5521 = vadd.f32 %v5439, %v5518
        %v5522 = vld [vmem:[%s61] sm:$0x1]
        %v5524 = vperm.slane %v5522, 0
        %v5526 = vadd.f32 %v5521, %v5524
        %v5527 = vadd.f32 %v5526, %v5033
        %v5528 = vmax.f32 %v5527, 0.0
        %5529 = vst [vmem:[#allocation2] sm:$0xf] %v5528
        %v5530 = vld [vmem:[#allocation2] ss:$2 sm:$0x3]
        %v5531 = vld [vmem:[#allocation30] sm:$0xf]
        %v5532 = vld [vmem:[#allocation30 + $0x4] sm:$0xf]
        %v5533 = vld [vmem:[#allocation30 + $0x8] sm:$0xf]
        %v5534 = vld [vmem:[#allocation30 + $0xc] sm:$0xf]
        %v5535 = vld [vmem:[#allocation30 + $0x10] sm:$0xf]
        %v5536 = vld [vmem:[#allocation30 + $0x14] sm:$0xf]
        %v5537 = vld [vmem:[#allocation30 + $0x18] sm:$0xf]
        %v5538 = vld [vmem:[#allocation30 + $0x1c] sm:$0xf]
        %v5539 = vld [vmem:[#allocation30 + $0x20] sm:$0xf]
        %v5540 = vld [vmem:[#allocation30 + $0x24] sm:$0xf]
        %v5541 = vld [vmem:[#allocation30 + $0x28] sm:$0xf]
        %v5542 = vld [vmem:[#allocation30 + $0x2c] sm:$0xf]
        %v5543 = vld [vmem:[#allocation30 + $0x30] sm:$0xf]
        %v5544 = vld [vmem:[#allocation30 + $0x34] sm:$0xf]
        %v5545 = vld [vmem:[#allocation30 + $0x38] sm:$0xf]
        %v5546 = vld [vmem:[#allocation30 + $0x3c] sm:$0xf]
        %v5547 = vpack.c.bf16 %v5530, %v5530
        %v5548 = vld [vmem:[%s73] sm:$0x1]
        %v5550 = vperm.slane %v5548, 0
        %v5568 = vunpack.c.l.b16 %v5531
        %v5569 = vunpack.c.l.b16 %v5532
        %v5570 = vunpack.c.l.b16 %v5533
        %v5571 = vunpack.c.l.b16 %v5534
        %v5572 = vunpack.c.l.b16 %v5535
        %v5573 = vunpack.c.l.b16 %v5536
        %v5574 = vunpack.c.l.b16 %v5537
        %v5575 = vunpack.c.l.b16 %v5538
        %v5576 = vunpack.c.l.b16 %v5539
        %v5577 = vunpack.c.l.b16 %v5540
        %v5578 = vunpack.c.l.b16 %v5541
        %v5579 = vunpack.c.l.b16 %v5542
        %v5580 = vunpack.c.l.b16 %v5543
        %v5581 = vunpack.c.l.b16 %v5544
        %v5582 = vunpack.c.l.b16 %v5545
        %v5583 = vunpack.c.l.b16 %v5546
        %v5584 = vpack.c.b16 %v5569, %v5568
        %v5585 = vpack.c.b16 %v5571, %v5570
        %v5586 = vpack.c.b16 %v5573, %v5572
        %v5587 = vpack.c.b16 %v5575, %v5574
        %v5588 = vpack.c.b16 %v5577, %v5576
        %v5589 = vpack.c.b16 %v5579, %v5578
        %v5590 = vpack.c.b16 %v5581, %v5580
        %v5591 = vpack.c.b16 %v5583, %v5582
        %5600 = vmatpush.bf16.msra.mxu0 %v5591
        %5601 = vmatpush.bf16.msra.mxu0 %v5590
        %5602 = vmatpush.bf16.msra.mxu0 %v5589
        %5603 = vmatpush.bf16.msra.mxu0 %v5588
        %5604 = vmatpush.bf16.msra.mxu0 %v5587
        %5605 = vmatpush.bf16.msra.mxu0 %v5586
        %5606 = vmatpush.bf16.msra.mxu0 %v5585
        %5607 = vmatpush.bf16.msra.mxu0 %v5584
        %5608 = vmatmul.bf16.gmra.mxu0 %v5547
        %v5609 = vpop.f32.mrf.mxu0
        %v5610 = vadd.f32 %v5550, %v5609
        %v5611 = vpop.f32.mrf.mxu0
        %5612 = vdwg.mxu0
        %5613 = vst [vmem:[#allocation2] sm:$0x1] 0.0
        %5614 = vst [vmem:[#allocation2 + $0x5] sm:$0x1] 0.0
        %5615 = vst [vmem:[#allocation2 + $0x1] sm:$0xf] %v5528
        %v5616 = vld [vmem:[#allocation2] ss:$2 sm:$0x3]
        %v5617 = vld [vmem:[#allocation27] sm:$0xf]
        %v5618 = vld [vmem:[#allocation27 + $0x4] sm:$0xf]
        %v5619 = vld [vmem:[#allocation27 + $0x8] sm:$0xf]
        %v5620 = vld [vmem:[#allocation27 + $0xc] sm:$0xf]
        %v5621 = vld [vmem:[#allocation27 + $0x10] sm:$0xf]
        %v5622 = vld [vmem:[#allocation27 + $0x14] sm:$0xf]
        %v5623 = vld [vmem:[#allocation27 + $0x18] sm:$0xf]
        %v5624 = vld [vmem:[#allocation27 + $0x1c] sm:$0xf]
        %v5625 = vld [vmem:[#allocation27 + $0x20] sm:$0xf]
        %v5626 = vld [vmem:[#allocation27 + $0x24] sm:$0xf]
        %v5627 = vld [vmem:[#allocation27 + $0x28] sm:$0xf]
        %v5628 = vld [vmem:[#allocation27 + $0x2c] sm:$0xf]
        %v5629 = vld [vmem:[#allocation27 + $0x30] sm:$0xf]
        %v5630 = vld [vmem:[#allocation27 + $0x34] sm:$0xf]
        %v5631 = vld [vmem:[#allocation27 + $0x38] sm:$0xf]
        %v5632 = vld [vmem:[#allocation27 + $0x3c] sm:$0xf]
        %v5633 = vpack.c.bf16 %v5616, %v5616
        %v5634 = vld [vmem:[%s1674] ss:$2 sm:$0x3]
        %v5635 = vld [vmem:[#allocation27 + $0x40] sm:$0xf]
        %v5636 = vld [vmem:[#allocation27 + $0x44] sm:$0xf]
        %v5637 = vld [vmem:[#allocation27 + $0x48] sm:$0xf]
        %v5638 = vld [vmem:[#allocation27 + $0x4c] sm:$0xf]
        %v5639 = vld [vmem:[#allocation27 + $0x50] sm:$0xf]
        %v5640 = vld [vmem:[#allocation27 + $0x54] sm:$0xf]
        %v5641 = vld [vmem:[#allocation27 + $0x58] sm:$0xf]
        %v5642 = vld [vmem:[#allocation27 + $0x5c] sm:$0xf]
        %v5643 = vld [vmem:[#allocation27 + $0x60] sm:$0xf]
        %v5644 = vld [vmem:[#allocation27 + $0x64] sm:$0xf]
        %v5645 = vld [vmem:[#allocation27 + $0x68] sm:$0xf]
        %v5646 = vld [vmem:[#allocation27 + $0x6c] sm:$0xf]
        %v5647 = vld [vmem:[#allocation27 + $0x70] sm:$0xf]
        %v5648 = vld [vmem:[#allocation27 + $0x74] sm:$0xf]
        %v5649 = vld [vmem:[#allocation27 + $0x78] sm:$0xf]
        %v5650 = vld [vmem:[#allocation27 + $0x7c] sm:$0xf]
        %v5651 = vpack.c.bf16 %v5634, %v5634
        %v5668 = vunpack.c.l.b16 %v5635
        %v5669 = vunpack.c.l.b16 %v5636
        %v5670 = vunpack.c.l.b16 %v5637
        %v5671 = vunpack.c.l.b16 %v5638
        %v5672 = vunpack.c.l.b16 %v5639
        %v5673 = vunpack.c.l.b16 %v5640
        %v5674 = vunpack.c.l.b16 %v5641
        %v5675 = vunpack.c.l.b16 %v5642
        %v5676 = vunpack.c.l.b16 %v5643
        %v5677 = vunpack.c.l.b16 %v5644
        %v5678 = vunpack.c.l.b16 %v5645
        %v5679 = vunpack.c.l.b16 %v5646
        %v5680 = vunpack.c.l.b16 %v5647
        %v5681 = vunpack.c.l.b16 %v5648
        %v5682 = vunpack.c.l.b16 %v5649
        %v5683 = vunpack.c.l.b16 %v5650
        %v5684 = vpack.c.b16 %v5669, %v5668
        %v5685 = vpack.c.b16 %v5671, %v5670
        %v5686 = vpack.c.b16 %v5673, %v5672
        %v5687 = vpack.c.b16 %v5675, %v5674
        %v5688 = vpack.c.b16 %v5677, %v5676
        %v5689 = vpack.c.b16 %v5679, %v5678
        %v5690 = vpack.c.b16 %v5681, %v5680
        %v5691 = vpack.c.b16 %v5683, %v5682
        %5700 = vmatpush.bf16.msra.mxu0 %v5691
        %5701 = vmatpush.bf16.msra.mxu0 %v5690
        %5702 = vmatpush.bf16.msra.mxu0 %v5689
        %5703 = vmatpush.bf16.msra.mxu0 %v5688
        %5704 = vmatpush.bf16.msra.mxu0 %v5687
        %5705 = vmatpush.bf16.msra.mxu0 %v5686
        %5706 = vmatpush.bf16.msra.mxu0 %v5685
        %5707 = vmatpush.bf16.msra.mxu0 %v5684
        %5708 = vmatmul.bf16.gmra.mxu0 %v5651
        %v5709 = vpop.f32.mrf.mxu0
        %v5710 = vadd.f32 0.0, %v5709
        %v5711 = vpop.f32.mrf.mxu0
        %5712 = vdwg.mxu0
        %v5729 = vunpack.c.l.b16 %v5617
        %v5730 = vunpack.c.l.b16 %v5618
        %v5731 = vunpack.c.l.b16 %v5619
        %v5732 = vunpack.c.l.b16 %v5620
        %v5733 = vunpack.c.l.b16 %v5621
        %v5734 = vunpack.c.l.b16 %v5622
        %v5735 = vunpack.c.l.b16 %v5623
        %v5736 = vunpack.c.l.b16 %v5624
        %v5737 = vunpack.c.l.b16 %v5625
        %v5738 = vunpack.c.l.b16 %v5626
        %v5739 = vunpack.c.l.b16 %v5627
        %v5740 = vunpack.c.l.b16 %v5628
        %v5741 = vunpack.c.l.b16 %v5629
        %v5742 = vunpack.c.l.b16 %v5630
        %v5743 = vunpack.c.l.b16 %v5631
        %v5744 = vunpack.c.l.b16 %v5632
        %v5745 = vpack.c.b16 %v5730, %v5729
        %v5746 = vpack.c.b16 %v5732, %v5731
        %v5747 = vpack.c.b16 %v5734, %v5733
        %v5748 = vpack.c.b16 %v5736, %v5735
        %v5749 = vpack.c.b16 %v5738, %v5737
        %v5750 = vpack.c.b16 %v5740, %v5739
        %v5751 = vpack.c.b16 %v5742, %v5741
        %v5752 = vpack.c.b16 %v5744, %v5743
        %5761 = vmatpush.bf16.msra.mxu0 %v5752
        %5762 = vmatpush.bf16.msra.mxu0 %v5751
        %5763 = vmatpush.bf16.msra.mxu0 %v5750
        %5764 = vmatpush.bf16.msra.mxu0 %v5749
        %5765 = vmatpush.bf16.msra.mxu0 %v5748
        %5766 = vmatpush.bf16.msra.mxu0 %v5747
        %5767 = vmatpush.bf16.msra.mxu0 %v5746
        %5768 = vmatpush.bf16.msra.mxu0 %v5745
        %5769 = vmatmul.bf16.gmra.mxu0 %v5633
        %v5770 = vpop.f32.mrf.mxu0
        %v5771 = vadd.f32 %v5710, %v5770
        %v5772 = vpop.f32.mrf.mxu0
        %5773 = vdwg.mxu0
        %v5774 = vld [vmem:[%s1834] ss:$2 sm:$0x3]
        %v5775 = vld [vmem:[#allocation27 + $0x80] sm:$0xf]
        %v5776 = vld [vmem:[#allocation27 + $0x84] sm:$0xf]
        %v5777 = vld [vmem:[#allocation27 + $0x88] sm:$0xf]
        %v5778 = vld [vmem:[#allocation27 + $0x8c] sm:$0xf]
        %v5779 = vld [vmem:[#allocation27 + $0x90] sm:$0xf]
        %v5780 = vld [vmem:[#allocation27 + $0x94] sm:$0xf]
        %v5781 = vld [vmem:[#allocation27 + $0x98] sm:$0xf]
        %v5782 = vld [vmem:[#allocation27 + $0x9c] sm:$0xf]
        %v5783 = vld [vmem:[#allocation27 + $0xa0] sm:$0xf]
        %v5784 = vld [vmem:[#allocation27 + $0xa4] sm:$0xf]
        %v5785 = vld [vmem:[#allocation27 + $0xa8] sm:$0xf]
        %v5786 = vld [vmem:[#allocation27 + $0xac] sm:$0xf]
        %v5787 = vld [vmem:[#allocation27 + $0xb0] sm:$0xf]
        %v5788 = vld [vmem:[#allocation27 + $0xb4] sm:$0xf]
        %v5789 = vld [vmem:[#allocation27 + $0xb8] sm:$0xf]
        %v5790 = vld [vmem:[#allocation27 + $0xbc] sm:$0xf]
        %v5791 = vpack.c.bf16 %v5774, %v5774
        %v5808 = vunpack.c.l.b16 %v5775
        %v5809 = vunpack.c.l.b16 %v5776
        %v5810 = vunpack.c.l.b16 %v5777
        %v5811 = vunpack.c.l.b16 %v5778
        %v5812 = vunpack.c.l.b16 %v5779
        %v5813 = vunpack.c.l.b16 %v5780
        %v5814 = vunpack.c.l.b16 %v5781
        %v5815 = vunpack.c.l.b16 %v5782
        %v5816 = vunpack.c.l.b16 %v5783
        %v5817 = vunpack.c.l.b16 %v5784
        %v5818 = vunpack.c.l.b16 %v5785
        %v5819 = vunpack.c.l.b16 %v5786
        %v5820 = vunpack.c.l.b16 %v5787
        %v5821 = vunpack.c.l.b16 %v5788
        %v5822 = vunpack.c.l.b16 %v5789
        %v5823 = vunpack.c.l.b16 %v5790
        %v5824 = vpack.c.b16 %v5809, %v5808
        %v5825 = vpack.c.b16 %v5811, %v5810
        %v5826 = vpack.c.b16 %v5813, %v5812
        %v5827 = vpack.c.b16 %v5815, %v5814
        %v5828 = vpack.c.b16 %v5817, %v5816
        %v5829 = vpack.c.b16 %v5819, %v5818
        %v5830 = vpack.c.b16 %v5821, %v5820
        %v5831 = vpack.c.b16 %v5823, %v5822
        %5840 = vmatpush.bf16.msra.mxu0 %v5831
        %5841 = vmatpush.bf16.msra.mxu0 %v5830
        %5842 = vmatpush.bf16.msra.mxu0 %v5829
        %5843 = vmatpush.bf16.msra.mxu0 %v5828
        %5844 = vmatpush.bf16.msra.mxu0 %v5827
        %5845 = vmatpush.bf16.msra.mxu0 %v5826
        %5846 = vmatpush.bf16.msra.mxu0 %v5825
        %5847 = vmatpush.bf16.msra.mxu0 %v5824
        %5848 = vmatmul.bf16.gmra.mxu0 %v5791
        %v5849 = vpop.f32.mrf.mxu0
        %v5850 = vadd.f32 0.0, %v5849
        %v5851 = vpop.f32.mrf.mxu0
        %5852 = vdwg.mxu0
        %v5853 = vadd.f32 %v5771, %v5850
        %v5854 = vld [vmem:[%s65] sm:$0x1]
        %v5856 = vperm.slane %v5854, 0
        %v5858 = vadd.f32 %v5853, %v5856
        %v5859 = vmax.f32 %v5858, 0.0
        %5860 = vst [vmem:[#allocation2] sm:$0x1] 0.0
        %5861 = vst [vmem:[#allocation2 + $0x3] sm:$0x1] 0.0
        %5862 = vst [vmem:[#allocation2 + $0x1] sm:$0x3] %v5859
        %v5863 = vld [vmem:[#allocation2] sm:$0x3]
        %v5864 = vld [vmem:[#allocation29] sm:$0xf]
        %v5865 = vld [vmem:[#allocation29 + $0x4] sm:$0xf]
        %v5866 = vld [vmem:[#allocation29 + $0x8] sm:$0xf]
        %v5867 = vld [vmem:[#allocation29 + $0xc] sm:$0xf]
        %v5868 = vld [vmem:[#allocation29 + $0x10] sm:$0xf]
        %v5869 = vld [vmem:[#allocation29 + $0x14] sm:$0xf]
        %v5870 = vld [vmem:[#allocation29 + $0x18] sm:$0xf]
        %v5871 = vld [vmem:[#allocation29 + $0x1c] sm:$0xf]
        %v5872 = vld [vmem:[#allocation29 + $0x20] sm:$0xf]
        %v5873 = vld [vmem:[#allocation29 + $0x24] sm:$0xf]
        %v5874 = vld [vmem:[#allocation29 + $0x28] sm:$0xf]
        %v5875 = vld [vmem:[#allocation29 + $0x2c] sm:$0xf]
        %v5876 = vld [vmem:[#allocation29 + $0x30] sm:$0xf]
        %v5877 = vld [vmem:[#allocation29 + $0x34] sm:$0xf]
        %v5878 = vld [vmem:[#allocation29 + $0x38] sm:$0xf]
        %v5879 = vld [vmem:[#allocation29 + $0x3c] sm:$0xf]
        %v5880 = vpack.c.bf16 %v5863, %v5863
        %v5881 = vld [vmem:[#allocation2 + $0x1] sm:$0x3]
        %v5882 = vld [vmem:[#allocation29 + $0x40] sm:$0xf]
        %v5883 = vld [vmem:[#allocation29 + $0x44] sm:$0xf]
        %v5884 = vld [vmem:[#allocation29 + $0x48] sm:$0xf]
        %v5885 = vld [vmem:[#allocation29 + $0x4c] sm:$0xf]
        %v5886 = vld [vmem:[#allocation29 + $0x50] sm:$0xf]
        %v5887 = vld [vmem:[#allocation29 + $0x54] sm:$0xf]
        %v5888 = vld [vmem:[#allocation29 + $0x58] sm:$0xf]
        %v5889 = vld [vmem:[#allocation29 + $0x5c] sm:$0xf]
        %v5890 = vld [vmem:[#allocation29 + $0x60] sm:$0xf]
        %v5891 = vld [vmem:[#allocation29 + $0x64] sm:$0xf]
        %v5892 = vld [vmem:[#allocation29 + $0x68] sm:$0xf]
        %v5893 = vld [vmem:[#allocation29 + $0x6c] sm:$0xf]
        %v5894 = vld [vmem:[#allocation29 + $0x70] sm:$0xf]
        %v5895 = vld [vmem:[#allocation29 + $0x74] sm:$0xf]
        %v5896 = vld [vmem:[#allocation29 + $0x78] sm:$0xf]
        %v5897 = vld [vmem:[#allocation29 + $0x7c] sm:$0xf]
        %v5898 = vpack.c.bf16 %v5881, %v5881
        %v5915 = vunpack.c.l.b16 %v5882
        %v5916 = vunpack.c.l.b16 %v5883
        %v5917 = vunpack.c.l.b16 %v5884
        %v5918 = vunpack.c.l.b16 %v5885
        %v5919 = vunpack.c.l.b16 %v5886
        %v5920 = vunpack.c.l.b16 %v5887
        %v5921 = vunpack.c.l.b16 %v5888
        %v5922 = vunpack.c.l.b16 %v5889
        %v5923 = vunpack.c.l.b16 %v5890
        %v5924 = vunpack.c.l.b16 %v5891
        %v5925 = vunpack.c.l.b16 %v5892
        %v5926 = vunpack.c.l.b16 %v5893
        %v5927 = vunpack.c.l.b16 %v5894
        %v5928 = vunpack.c.l.b16 %v5895
        %v5929 = vunpack.c.l.b16 %v5896
        %v5930 = vunpack.c.l.b16 %v5897
        %v5931 = vpack.c.b16 %v5916, %v5915
        %v5932 = vpack.c.b16 %v5918, %v5917
        %v5933 = vpack.c.b16 %v5920, %v5919
        %v5934 = vpack.c.b16 %v5922, %v5921
        %v5935 = vpack.c.b16 %v5924, %v5923
        %v5936 = vpack.c.b16 %v5926, %v5925
        %v5937 = vpack.c.b16 %v5928, %v5927
        %v5938 = vpack.c.b16 %v5930, %v5929
        %5947 = vmatpush.bf16.msra.mxu0 %v5938
        %5948 = vmatpush.bf16.msra.mxu0 %v5937
        %5949 = vmatpush.bf16.msra.mxu0 %v5936
        %5950 = vmatpush.bf16.msra.mxu0 %v5935
        %5951 = vmatpush.bf16.msra.mxu0 %v5934
        %5952 = vmatpush.bf16.msra.mxu0 %v5933
        %5953 = vmatpush.bf16.msra.mxu0 %v5932
        %5954 = vmatpush.bf16.msra.mxu0 %v5931
        %5955 = vmatmul.bf16.gmra.mxu0 %v5898
        %v5956 = vpop.f32.mrf.mxu0
        %v5957 = vadd.f32 0.0, %v5956
        %v5958 = vpop.f32.mrf.mxu0
        %5959 = vdwg.mxu0
        %v5976 = vunpack.c.l.b16 %v5864
        %v5977 = vunpack.c.l.b16 %v5865
        %v5978 = vunpack.c.l.b16 %v5866
        %v5979 = vunpack.c.l.b16 %v5867
        %v5980 = vunpack.c.l.b16 %v5868
        %v5981 = vunpack.c.l.b16 %v5869
        %v5982 = vunpack.c.l.b16 %v5870
        %v5983 = vunpack.c.l.b16 %v5871
        %v5984 = vunpack.c.l.b16 %v5872
        %v5985 = vunpack.c.l.b16 %v5873
        %v5986 = vunpack.c.l.b16 %v5874
        %v5987 = vunpack.c.l.b16 %v5875
        %v5988 = vunpack.c.l.b16 %v5876
        %v5989 = vunpack.c.l.b16 %v5877
        %v5990 = vunpack.c.l.b16 %v5878
        %v5991 = vunpack.c.l.b16 %v5879
        %v5992 = vpack.c.b16 %v5977, %v5976
        %v5993 = vpack.c.b16 %v5979, %v5978
        %v5994 = vpack.c.b16 %v5981, %v5980
        %v5995 = vpack.c.b16 %v5983, %v5982
        %v5996 = vpack.c.b16 %v5985, %v5984
        %v5997 = vpack.c.b16 %v5987, %v5986
        %v5998 = vpack.c.b16 %v5989, %v5988
        %v5999 = vpack.c.b16 %v5991, %v5990
        %6008 = vmatpush.bf16.msra.mxu0 %v5999
        %6009 = vmatpush.bf16.msra.mxu0 %v5998
        %6010 = vmatpush.bf16.msra.mxu0 %v5997
        %6011 = vmatpush.bf16.msra.mxu0 %v5996
        %6012 = vmatpush.bf16.msra.mxu0 %v5995
        %6013 = vmatpush.bf16.msra.mxu0 %v5994
        %6014 = vmatpush.bf16.msra.mxu0 %v5993
        %6015 = vmatpush.bf16.msra.mxu0 %v5992
        %6016 = vmatmul.bf16.gmra.mxu0 %v5880
        %v6017 = vpop.f32.mrf.mxu0
        %v6018 = vadd.f32 %v5957, %v6017
        %v6019 = vpop.f32.mrf.mxu0
        %6020 = vdwg.mxu0
        %v6021 = vld [vmem:[#allocation2 + $0x2] sm:$0x3]
        %v6022 = vld [vmem:[#allocation29 + $0x80] sm:$0xf]
        %v6023 = vld [vmem:[#allocation29 + $0x84] sm:$0xf]
        %v6024 = vld [vmem:[#allocation29 + $0x88] sm:$0xf]
        %v6025 = vld [vmem:[#allocation29 + $0x8c] sm:$0xf]
        %v6026 = vld [vmem:[#allocation29 + $0x90] sm:$0xf]
        %v6027 = vld [vmem:[#allocation29 + $0x94] sm:$0xf]
        %v6028 = vld [vmem:[#allocation29 + $0x98] sm:$0xf]
        %v6029 = vld [vmem:[#allocation29 + $0x9c] sm:$0xf]
        %v6030 = vld [vmem:[#allocation29 + $0xa0] sm:$0xf]
        %v6031 = vld [vmem:[#allocation29 + $0xa4] sm:$0xf]
        %v6032 = vld [vmem:[#allocation29 + $0xa8] sm:$0xf]
        %v6033 = vld [vmem:[#allocation29 + $0xac] sm:$0xf]
        %v6034 = vld [vmem:[#allocation29 + $0xb0] sm:$0xf]
        %v6035 = vld [vmem:[#allocation29 + $0xb4] sm:$0xf]
        %v6036 = vld [vmem:[#allocation29 + $0xb8] sm:$0xf]
        %v6037 = vld [vmem:[#allocation29 + $0xbc] sm:$0xf]
        %v6038 = vpack.c.bf16 %v6021, %v6021
        %v6055 = vunpack.c.l.b16 %v6022
        %v6056 = vunpack.c.l.b16 %v6023
        %v6057 = vunpack.c.l.b16 %v6024
        %v6058 = vunpack.c.l.b16 %v6025
        %v6059 = vunpack.c.l.b16 %v6026
        %v6060 = vunpack.c.l.b16 %v6027
        %v6061 = vunpack.c.l.b16 %v6028
        %v6062 = vunpack.c.l.b16 %v6029
        %v6063 = vunpack.c.l.b16 %v6030
        %v6064 = vunpack.c.l.b16 %v6031
        %v6065 = vunpack.c.l.b16 %v6032
        %v6066 = vunpack.c.l.b16 %v6033
        %v6067 = vunpack.c.l.b16 %v6034
        %v6068 = vunpack.c.l.b16 %v6035
        %v6069 = vunpack.c.l.b16 %v6036
        %v6070 = vunpack.c.l.b16 %v6037
        %v6071 = vpack.c.b16 %v6056, %v6055
        %v6072 = vpack.c.b16 %v6058, %v6057
        %v6073 = vpack.c.b16 %v6060, %v6059
        %v6074 = vpack.c.b16 %v6062, %v6061
        %v6075 = vpack.c.b16 %v6064, %v6063
        %v6076 = vpack.c.b16 %v6066, %v6065
        %v6077 = vpack.c.b16 %v6068, %v6067
        %v6078 = vpack.c.b16 %v6070, %v6069
        %6087 = vmatpush.bf16.msra.mxu0 %v6078
        %6088 = vmatpush.bf16.msra.mxu0 %v6077
        %6089 = vmatpush.bf16.msra.mxu0 %v6076
        %6090 = vmatpush.bf16.msra.mxu0 %v6075
        %6091 = vmatpush.bf16.msra.mxu0 %v6074
        %6092 = vmatpush.bf16.msra.mxu0 %v6073
        %6093 = vmatpush.bf16.msra.mxu0 %v6072
        %6094 = vmatpush.bf16.msra.mxu0 %v6071
        %6095 = vmatmul.bf16.gmra.mxu0 %v6038
        %v6096 = vpop.f32.mrf.mxu0
        %v6097 = vadd.f32 0.0, %v6096
        %v6098 = vpop.f32.mrf.mxu0
        %6099 = vdwg.mxu0
        %v6100 = vadd.f32 %v6018, %v6097
        %v6101 = vld [vmem:[%s69] sm:$0x1]
        %v6103 = vperm.slane %v6101, 0
        %v6105 = vadd.f32 %v6100, %v6103
        %v6106 = vadd.f32 %v6105, %v5610
        %v6107 = vmax.f32 %v6106, 0.0
        %6108 = vst [vmem:[#allocation2] sm:$0x1] 0.0
        %6109 = vst [vmem:[#allocation2 + $0x3] sm:$0x1] 0.0
        %6110 = vst [vmem:[#allocation2 + $0x1] sm:$0x3] %v6107
        %v6111 = vld [vmem:[#allocation2] sm:$0x3]
        %v6112 = vld [vmem:[#allocation32] sm:$0xf]
        %v6113 = vld [vmem:[#allocation32 + $0x4] sm:$0xf]
        %v6114 = vld [vmem:[#allocation32 + $0x8] sm:$0xf]
        %v6115 = vld [vmem:[#allocation32 + $0xc] sm:$0xf]
        %v6116 = vld [vmem:[#allocation32 + $0x10] sm:$0xf]
        %v6117 = vld [vmem:[#allocation32 + $0x14] sm:$0xf]
        %v6118 = vld [vmem:[#allocation32 + $0x18] sm:$0xf]
        %v6119 = vld [vmem:[#allocation32 + $0x1c] sm:$0xf]
        %v6120 = vld [vmem:[#allocation32 + $0x20] sm:$0xf]
        %v6121 = vld [vmem:[#allocation32 + $0x24] sm:$0xf]
        %v6122 = vld [vmem:[#allocation32 + $0x28] sm:$0xf]
        %v6123 = vld [vmem:[#allocation32 + $0x2c] sm:$0xf]
        %v6124 = vld [vmem:[#allocation32 + $0x30] sm:$0xf]
        %v6125 = vld [vmem:[#allocation32 + $0x34] sm:$0xf]
        %v6126 = vld [vmem:[#allocation32 + $0x38] sm:$0xf]
        %v6127 = vld [vmem:[#allocation32 + $0x3c] sm:$0xf]
        %v6128 = vpack.c.bf16 %v6111, %v6111
        %v6129 = vld [vmem:[#allocation2 + $0x1] sm:$0x3]
        %v6130 = vld [vmem:[#allocation32 + $0x40] sm:$0xf]
        %v6131 = vld [vmem:[#allocation32 + $0x44] sm:$0xf]
        %v6132 = vld [vmem:[#allocation32 + $0x48] sm:$0xf]
        %v6133 = vld [vmem:[#allocation32 + $0x4c] sm:$0xf]
        %v6134 = vld [vmem:[#allocation32 + $0x50] sm:$0xf]
        %v6135 = vld [vmem:[#allocation32 + $0x54] sm:$0xf]
        %v6136 = vld [vmem:[#allocation32 + $0x58] sm:$0xf]
        %v6137 = vld [vmem:[#allocation32 + $0x5c] sm:$0xf]
        %v6138 = vld [vmem:[#allocation32 + $0x60] sm:$0xf]
        %v6139 = vld [vmem:[#allocation32 + $0x64] sm:$0xf]
        %v6140 = vld [vmem:[#allocation32 + $0x68] sm:$0xf]
        %v6141 = vld [vmem:[#allocation32 + $0x6c] sm:$0xf]
        %v6142 = vld [vmem:[#allocation32 + $0x70] sm:$0xf]
        %v6143 = vld [vmem:[#allocation32 + $0x74] sm:$0xf]
        %v6144 = vld [vmem:[#allocation32 + $0x78] sm:$0xf]
        %v6145 = vld [vmem:[#allocation32 + $0x7c] sm:$0xf]
        %v6146 = vpack.c.bf16 %v6129, %v6129
        %v6163 = vunpack.c.l.b16 %v6130
        %v6164 = vunpack.c.l.b16 %v6131
        %v6165 = vunpack.c.l.b16 %v6132
        %v6166 = vunpack.c.l.b16 %v6133
        %v6167 = vunpack.c.l.b16 %v6134
        %v6168 = vunpack.c.l.b16 %v6135
        %v6169 = vunpack.c.l.b16 %v6136
        %v6170 = vunpack.c.l.b16 %v6137
        %v6171 = vunpack.c.l.b16 %v6138
        %v6172 = vunpack.c.l.b16 %v6139
        %v6173 = vunpack.c.l.b16 %v6140
        %v6174 = vunpack.c.l.b16 %v6141
        %v6175 = vunpack.c.l.b16 %v6142
        %v6176 = vunpack.c.l.b16 %v6143
        %v6177 = vunpack.c.l.b16 %v6144
        %v6178 = vunpack.c.l.b16 %v6145
        %v6179 = vpack.c.b16 %v6164, %v6163
        %v6180 = vpack.c.b16 %v6166, %v6165
        %v6181 = vpack.c.b16 %v6168, %v6167
        %v6182 = vpack.c.b16 %v6170, %v6169
        %v6183 = vpack.c.b16 %v6172, %v6171
        %v6184 = vpack.c.b16 %v6174, %v6173
        %v6185 = vpack.c.b16 %v6176, %v6175
        %v6186 = vpack.c.b16 %v6178, %v6177
        %6195 = vmatpush.bf16.msra.mxu0 %v6186
        %6196 = vmatpush.bf16.msra.mxu0 %v6185
        %6197 = vmatpush.bf16.msra.mxu0 %v6184
        %6198 = vmatpush.bf16.msra.mxu0 %v6183
        %6199 = vmatpush.bf16.msra.mxu0 %v6182
        %6200 = vmatpush.bf16.msra.mxu0 %v6181
        %6201 = vmatpush.bf16.msra.mxu0 %v6180
        %6202 = vmatpush.bf16.msra.mxu0 %v6179
        %6203 = vmatmul.bf16.gmra.mxu0 %v6146
        %v6204 = vpop.f32.mrf.mxu0
        %v6205 = vadd.f32 0.0, %v6204
        %v6206 = vpop.f32.mrf.mxu0
        %6207 = vdwg.mxu0
        %v6224 = vunpack.c.l.b16 %v6112
        %v6225 = vunpack.c.l.b16 %v6113
        %v6226 = vunpack.c.l.b16 %v6114
        %v6227 = vunpack.c.l.b16 %v6115
        %v6228 = vunpack.c.l.b16 %v6116
        %v6229 = vunpack.c.l.b16 %v6117
        %v6230 = vunpack.c.l.b16 %v6118
        %v6231 = vunpack.c.l.b16 %v6119
        %v6232 = vunpack.c.l.b16 %v6120
        %v6233 = vunpack.c.l.b16 %v6121
        %v6234 = vunpack.c.l.b16 %v6122
        %v6235 = vunpack.c.l.b16 %v6123
        %v6236 = vunpack.c.l.b16 %v6124
        %v6237 = vunpack.c.l.b16 %v6125
        %v6238 = vunpack.c.l.b16 %v6126
        %v6239 = vunpack.c.l.b16 %v6127
        %v6240 = vpack.c.b16 %v6225, %v6224
        %v6241 = vpack.c.b16 %v6227, %v6226
        %v6242 = vpack.c.b16 %v6229, %v6228
        %v6243 = vpack.c.b16 %v6231, %v6230
        %v6244 = vpack.c.b16 %v6233, %v6232
        %v6245 = vpack.c.b16 %v6235, %v6234
        %v6246 = vpack.c.b16 %v6237, %v6236
        %v6247 = vpack.c.b16 %v6239, %v6238
        %6256 = vmatpush.bf16.msra.mxu0 %v6247
        %6257 = vmatpush.bf16.msra.mxu0 %v6246
        %6258 = vmatpush.bf16.msra.mxu0 %v6245
        %6259 = vmatpush.bf16.msra.mxu0 %v6244
        %6260 = vmatpush.bf16.msra.mxu0 %v6243
        %6261 = vmatpush.bf16.msra.mxu0 %v6242
        %6262 = vmatpush.bf16.msra.mxu0 %v6241
        %6263 = vmatpush.bf16.msra.mxu0 %v6240
        %6264 = vmatmul.bf16.gmra.mxu0 %v6128
        %v6265 = vpop.f32.mrf.mxu0
        %v6266 = vadd.f32 %v6205, %v6265
        %v6267 = vpop.f32.mrf.mxu0
        %6268 = vdwg.mxu0
        %v6269 = vld [vmem:[#allocation2 + $0x2] sm:$0x3]
        %v6270 = vld [vmem:[#allocation32 + $0x80] sm:$0xf]
        %v6271 = vld [vmem:[#allocation32 + $0x84] sm:$0xf]
        %v6272 = vld [vmem:[#allocation32 + $0x88] sm:$0xf]
        %v6273 = vld [vmem:[#allocation32 + $0x8c] sm:$0xf]
        %v6274 = vld [vmem:[#allocation32 + $0x90] sm:$0xf]
        %v6275 = vld [vmem:[#allocation32 + $0x94] sm:$0xf]
        %v6276 = vld [vmem:[#allocation32 + $0x98] sm:$0xf]
        %v6277 = vld [vmem:[#allocation32 + $0x9c] sm:$0xf]
        %v6278 = vld [vmem:[#allocation32 + $0xa0] sm:$0xf]
        %v6279 = vld [vmem:[#allocation32 + $0xa4] sm:$0xf]
        %v6280 = vld [vmem:[#allocation32 + $0xa8] sm:$0xf]
        %v6281 = vld [vmem:[#allocation32 + $0xac] sm:$0xf]
        %v6282 = vld [vmem:[#allocation32 + $0xb0] sm:$0xf]
        %v6283 = vld [vmem:[#allocation32 + $0xb4] sm:$0xf]
        %v6284 = vld [vmem:[#allocation32 + $0xb8] sm:$0xf]
        %v6285 = vld [vmem:[#allocation32 + $0xbc] sm:$0xf]
        %v6286 = vpack.c.bf16 %v6269, %v6269
        %v6303 = vunpack.c.l.b16 %v6270
        %v6304 = vunpack.c.l.b16 %v6271
        %v6305 = vunpack.c.l.b16 %v6272
        %v6306 = vunpack.c.l.b16 %v6273
        %v6307 = vunpack.c.l.b16 %v6274
        %v6308 = vunpack.c.l.b16 %v6275
        %v6309 = vunpack.c.l.b16 %v6276
        %v6310 = vunpack.c.l.b16 %v6277
        %v6311 = vunpack.c.l.b16 %v6278
        %v6312 = vunpack.c.l.b16 %v6279
        %v6313 = vunpack.c.l.b16 %v6280
        %v6314 = vunpack.c.l.b16 %v6281
        %v6315 = vunpack.c.l.b16 %v6282
        %v6316 = vunpack.c.l.b16 %v6283
        %v6317 = vunpack.c.l.b16 %v6284
        %v6318 = vunpack.c.l.b16 %v6285
        %v6319 = vpack.c.b16 %v6304, %v6303
        %v6320 = vpack.c.b16 %v6306, %v6305
        %v6321 = vpack.c.b16 %v6308, %v6307
        %v6322 = vpack.c.b16 %v6310, %v6309
        %v6323 = vpack.c.b16 %v6312, %v6311
        %v6324 = vpack.c.b16 %v6314, %v6313
        %v6325 = vpack.c.b16 %v6316, %v6315
        %v6326 = vpack.c.b16 %v6318, %v6317
        %6335 = vmatpush.bf16.msra.mxu0 %v6326
        %6336 = vmatpush.bf16.msra.mxu0 %v6325
        %6337 = vmatpush.bf16.msra.mxu0 %v6324
        %6338 = vmatpush.bf16.msra.mxu0 %v6323
        %6339 = vmatpush.bf16.msra.mxu0 %v6322
        %6340 = vmatpush.bf16.msra.mxu0 %v6321
        %6341 = vmatpush.bf16.msra.mxu0 %v6320
        %6342 = vmatpush.bf16.msra.mxu0 %v6319
        %6343 = vmatmul.bf16.gmra.mxu0 %v6286
        %v6344 = vpop.f32.mrf.mxu0
        %v6345 = vadd.f32 0.0, %v6344
        %v6346 = vpop.f32.mrf.mxu0
        %6347 = vdwg.mxu0
        %v6348 = vadd.f32 %v6266, %v6345
        %v6349 = vld [vmem:[%s77] sm:$0x1]
        %v6351 = vperm.slane %v6349, 0
        %v6353 = vadd.f32 %v6348, %v6351
        %v6354 = vmax.f32 %v6353, 0.0
        %6355 = vst [vmem:[#allocation2] sm:$0x1] 0.0
        %6356 = vst [vmem:[#allocation2 + $0x3] sm:$0x1] 0.0
        %6357 = vst [vmem:[#allocation2 + $0x1] sm:$0x3] %v6354
        %v6358 = vld [vmem:[#allocation2] sm:$0x3]
        %v6359 = vld [vmem:[#allocation33] sm:$0xf]
        %v6360 = vld [vmem:[#allocation33 + $0x4] sm:$0xf]
        %v6361 = vld [vmem:[#allocation33 + $0x8] sm:$0xf]
        %v6362 = vld [vmem:[#allocation33 + $0xc] sm:$0xf]
        %v6363 = vld [vmem:[#allocation33 + $0x10] sm:$0xf]
        %v6364 = vld [vmem:[#allocation33 + $0x14] sm:$0xf]
        %v6365 = vld [vmem:[#allocation33 + $0x18] sm:$0xf]
        %v6366 = vld [vmem:[#allocation33 + $0x1c] sm:$0xf]
        %v6367 = vld [vmem:[#allocation33 + $0x20] sm:$0xf]
        %v6368 = vld [vmem:[#allocation33 + $0x24] sm:$0xf]
        %v6369 = vld [vmem:[#allocation33 + $0x28] sm:$0xf]
        %v6370 = vld [vmem:[#allocation33 + $0x2c] sm:$0xf]
        %v6371 = vld [vmem:[#allocation33 + $0x30] sm:$0xf]
        %v6372 = vld [vmem:[#allocation33 + $0x34] sm:$0xf]
        %v6373 = vld [vmem:[#allocation33 + $0x38] sm:$0xf]
        %v6374 = vld [vmem:[#allocation33 + $0x3c] sm:$0xf]
        %v6375 = vpack.c.bf16 %v6358, %v6358
        %v6376 = vld [vmem:[#allocation2 + $0x1] sm:$0x3]
        %v6377 = vld [vmem:[#allocation33 + $0x40] sm:$0xf]
        %v6378 = vld [vmem:[#allocation33 + $0x44] sm:$0xf]
        %v6379 = vld [vmem:[#allocation33 + $0x48] sm:$0xf]
        %v6380 = vld [vmem:[#allocation33 + $0x4c] sm:$0xf]
        %v6381 = vld [vmem:[#allocation33 + $0x50] sm:$0xf]
        %v6382 = vld [vmem:[#allocation33 + $0x54] sm:$0xf]
        %v6383 = vld [vmem:[#allocation33 + $0x58] sm:$0xf]
        %v6384 = vld [vmem:[#allocation33 + $0x5c] sm:$0xf]
        %v6385 = vld [vmem:[#allocation33 + $0x60] sm:$0xf]
        %v6386 = vld [vmem:[#allocation33 + $0x64] sm:$0xf]
        %v6387 = vld [vmem:[#allocation33 + $0x68] sm:$0xf]
        %v6388 = vld [vmem:[#allocation33 + $0x6c] sm:$0xf]
        %v6389 = vld [vmem:[#allocation33 + $0x70] sm:$0xf]
        %v6390 = vld [vmem:[#allocation33 + $0x74] sm:$0xf]
        %v6391 = vld [vmem:[#allocation33 + $0x78] sm:$0xf]
        %v6392 = vld [vmem:[#allocation33 + $0x7c] sm:$0xf]
        %v6393 = vpack.c.bf16 %v6376, %v6376
        %v6410 = vunpack.c.l.b16 %v6377
        %v6411 = vunpack.c.l.b16 %v6378
        %v6412 = vunpack.c.l.b16 %v6379
        %v6413 = vunpack.c.l.b16 %v6380
        %v6414 = vunpack.c.l.b16 %v6381
        %v6415 = vunpack.c.l.b16 %v6382
        %v6416 = vunpack.c.l.b16 %v6383
        %v6417 = vunpack.c.l.b16 %v6384
        %v6418 = vunpack.c.l.b16 %v6385
        %v6419 = vunpack.c.l.b16 %v6386
        %v6420 = vunpack.c.l.b16 %v6387
        %v6421 = vunpack.c.l.b16 %v6388
        %v6422 = vunpack.c.l.b16 %v6389
        %v6423 = vunpack.c.l.b16 %v6390
        %v6424 = vunpack.c.l.b16 %v6391
        %v6425 = vunpack.c.l.b16 %v6392
        %v6426 = vpack.c.b16 %v6411, %v6410
        %v6427 = vpack.c.b16 %v6413, %v6412
        %v6428 = vpack.c.b16 %v6415, %v6414
        %v6429 = vpack.c.b16 %v6417, %v6416
        %v6430 = vpack.c.b16 %v6419, %v6418
        %v6431 = vpack.c.b16 %v6421, %v6420
        %v6432 = vpack.c.b16 %v6423, %v6422
        %v6433 = vpack.c.b16 %v6425, %v6424
        %6442 = vmatpush.bf16.msra.mxu0 %v6433
        %6443 = vmatpush.bf16.msra.mxu0 %v6432
        %6444 = vmatpush.bf16.msra.mxu0 %v6431
        %6445 = vmatpush.bf16.msra.mxu0 %v6430
        %6446 = vmatpush.bf16.msra.mxu0 %v6429
        %6447 = vmatpush.bf16.msra.mxu0 %v6428
        %6448 = vmatpush.bf16.msra.mxu0 %v6427
        %6449 = vmatpush.bf16.msra.mxu0 %v6426
        %6450 = vmatmul.bf16.gmra.mxu0 %v6393
        %v6451 = vpop.f32.mrf.mxu0
        %v6452 = vadd.f32 0.0, %v6451
        %v6453 = vpop.f32.mrf.mxu0
        %6454 = vdwg.mxu0
        %v6471 = vunpack.c.l.b16 %v6359
        %v6472 = vunpack.c.l.b16 %v6360
        %v6473 = vunpack.c.l.b16 %v6361
        %v6474 = vunpack.c.l.b16 %v6362
        %v6475 = vunpack.c.l.b16 %v6363
        %v6476 = vunpack.c.l.b16 %v6364
        %v6477 = vunpack.c.l.b16 %v6365
        %v6478 = vunpack.c.l.b16 %v6366
        %v6479 = vunpack.c.l.b16 %v6367
        %v6480 = vunpack.c.l.b16 %v6368
        %v6481 = vunpack.c.l.b16 %v6369
        %v6482 = vunpack.c.l.b16 %v6370
        %v6483 = vunpack.c.l.b16 %v6371
        %v6484 = vunpack.c.l.b16 %v6372
        %v6485 = vunpack.c.l.b16 %v6373
        %v6486 = vunpack.c.l.b16 %v6374
        %v6487 = vpack.c.b16 %v6472, %v6471
        %v6488 = vpack.c.b16 %v6474, %v6473
        %v6489 = vpack.c.b16 %v6476, %v6475
        %v6490 = vpack.c.b16 %v6478, %v6477
        %v6491 = vpack.c.b16 %v6480, %v6479
        %v6492 = vpack.c.b16 %v6482, %v6481
        %v6493 = vpack.c.b16 %v6484, %v6483
        %v6494 = vpack.c.b16 %v6486, %v6485
        %6503 = vmatpush.bf16.msra.mxu0 %v6494
        %6504 = vmatpush.bf16.msra.mxu0 %v6493
        %6505 = vmatpush.bf16.msra.mxu0 %v6492
        %6506 = vmatpush.bf16.msra.mxu0 %v6491
        %6507 = vmatpush.bf16.msra.mxu0 %v6490
        %6508 = vmatpush.bf16.msra.mxu0 %v6489
        %6509 = vmatpush.bf16.msra.mxu0 %v6488
        %6510 = vmatpush.bf16.msra.mxu0 %v6487
        %6511 = vmatmul.bf16.gmra.mxu0 %v6375
        %v6512 = vpop.f32.mrf.mxu0
        %v6513 = vadd.f32 %v6452, %v6512
        %v6514 = vpop.f32.mrf.mxu0
        %6515 = vdwg.mxu0
        %v6516 = vld [vmem:[#allocation2 + $0x2] sm:$0x3]
        %v6517 = vld [vmem:[#allocation33 + $0x80] sm:$0xf]
        %v6518 = vld [vmem:[#allocation33 + $0x84] sm:$0xf]
        %v6519 = vld [vmem:[#allocation33 + $0x88] sm:$0xf]
        %v6520 = vld [vmem:[#allocation33 + $0x8c] sm:$0xf]
        %v6521 = vld [vmem:[#allocation33 + $0x90] sm:$0xf]
        %v6522 = vld [vmem:[#allocation33 + $0x94] sm:$0xf]
        %v6523 = vld [vmem:[#allocation33 + $0x98] sm:$0xf]
        %v6524 = vld [vmem:[#allocation33 + $0x9c] sm:$0xf]
        %v6525 = vld [vmem:[#allocation33 + $0xa0] sm:$0xf]
        %v6526 = vld [vmem:[#allocation33 + $0xa4] sm:$0xf]
        %v6527 = vld [vmem:[#allocation33 + $0xa8] sm:$0xf]
        %v6528 = vld [vmem:[#allocation33 + $0xac] sm:$0xf]
        %v6529 = vld [vmem:[#allocation33 + $0xb0] sm:$0xf]
        %v6530 = vld [vmem:[#allocation33 + $0xb4] sm:$0xf]
        %v6531 = vld [vmem:[#allocation33 + $0xb8] sm:$0xf]
        %v6532 = vld [vmem:[#allocation33 + $0xbc] sm:$0xf]
        %v6533 = vpack.c.bf16 %v6516, %v6516
        %v6550 = vunpack.c.l.b16 %v6517
        %v6551 = vunpack.c.l.b16 %v6518
        %v6552 = vunpack.c.l.b16 %v6519
        %v6553 = vunpack.c.l.b16 %v6520
        %v6554 = vunpack.c.l.b16 %v6521
        %v6555 = vunpack.c.l.b16 %v6522
        %v6556 = vunpack.c.l.b16 %v6523
        %v6557 = vunpack.c.l.b16 %v6524
        %v6558 = vunpack.c.l.b16 %v6525
        %v6559 = vunpack.c.l.b16 %v6526
        %v6560 = vunpack.c.l.b16 %v6527
        %v6561 = vunpack.c.l.b16 %v6528
        %v6562 = vunpack.c.l.b16 %v6529
        %v6563 = vunpack.c.l.b16 %v6530
        %v6564 = vunpack.c.l.b16 %v6531
        %v6565 = vunpack.c.l.b16 %v6532
        %v6566 = vpack.c.b16 %v6551, %v6550
        %v6567 = vpack.c.b16 %v6553, %v6552
        %v6568 = vpack.c.b16 %v6555, %v6554
        %v6569 = vpack.c.b16 %v6557, %v6556
        %v6570 = vpack.c.b16 %v6559, %v6558
        %v6571 = vpack.c.b16 %v6561, %v6560
        %v6572 = vpack.c.b16 %v6563, %v6562
        %v6573 = vpack.c.b16 %v6565, %v6564
        %6582 = vmatpush.bf16.msra.mxu0 %v6573
        %6583 = vmatpush.bf16.msra.mxu0 %v6572
        %6584 = vmatpush.bf16.msra.mxu0 %v6571
        %6585 = vmatpush.bf16.msra.mxu0 %v6570
        %6586 = vmatpush.bf16.msra.mxu0 %v6569
        %6587 = vmatpush.bf16.msra.mxu0 %v6568
        %6588 = vmatpush.bf16.msra.mxu0 %v6567
        %6589 = vmatpush.bf16.msra.mxu0 %v6566
        %6590 = vmatmul.bf16.gmra.mxu0 %v6533
        %v6591 = vpop.f32.mrf.mxu0
        %v6592 = vadd.f32 0.0, %v6591
        %v6593 = vpop.f32.mrf.mxu0
        %6594 = vdwg.mxu0
        %v6595 = vadd.f32 %v6513, %v6592
        %v6596 = vld [vmem:[%s81] sm:$0x1]
        %v6598 = vperm.slane %v6596, 0
        %v6600 = vadd.f32 %v6595, %v6598
        %v6601 = vadd.f32 %v6600, %v6107
        %v6602 = vmax.f32 %v6601, 0.0
        %vm6603 = vcmask 1041408
        %v6604 = vsel %vm6603, %v6602, 0.0
        %v6605 = vrot.slane %v6604, 4
        %v6606 = vadd.f32 %v6604, %v6605
        %v6607 = vrot.slane %v6606, 2
        %v6608 = vadd.f32 %v6606, %v6607
        %v6609 = vrot.slane %v6608, 1
        %v6610 = vadd.f32 %v6608, %v6609
        %v6611 = vrcp.pop 2.0
        %v6612 = vmul.f32 2.0, %v6611
        %v6613 = vsub.f32 1.0, %v6612
        %v6614 = vmul.f32 %v6611, %v6613
        %v6615 = vadd.f32 %v6611, %v6614
        %vm6616 = vweird.f32 %v6611
        %v6617 = vsel %vm6616, %v6611, %v6615
        %v6618 = vmul.f32 %v6610, %v6617
        %v6619 = vld [vmem:[%s83] sm:$0xff]
        %v6620 = vld [vmem:[%s83 + $0x8] sm:$0xff]
        %v6621 = vld [vmem:[%s83 + $0x10] sm:$0xff]
        %v6622 = vld [vmem:[%s83 + $0x18] sm:$0xff]
        %v6623 = vld [vmem:[%s83 + $0x20] sm:$0xff]
        %v6624 = vld [vmem:[%s83 + $0x28] sm:$0xff]
        %v6625 = vld [vmem:[%s83 + $0x30] sm:$0xff]
        %v6626 = vld [vmem:[%s83 + $0x38] sm:$0xff]
        %v6627 = vld [vmem:[%s83 + $0x40] sm:$0xff]
        %v6628 = vld [vmem:[%s83 + $0x48] sm:$0xff]
        %v6629 = vld [vmem:[%s83 + $0x50] sm:$0xff]
        %v6630 = vld [vmem:[%s83 + $0x58] sm:$0xff]
        %v6631 = vld [vmem:[%s83 + $0x60] sm:$0xff]
        %v6632 = vld [vmem:[%s83 + $0x68] sm:$0xff]
        %v6633 = vld [vmem:[%s83 + $0x70] sm:$0xff]
        %v6634 = vld [vmem:[%s83 + $0x78] sm:$0xff]
        %v6635 = vld [vmem:[%s85] sm:$0x1]
        %6636 = vmatpush.msra.mxu0 %v6634
        %6637 = vmatpush.msra.mxu0 %v6633
        %6638 = vmatpush.msra.mxu0 %v6632
        %6639 = vmatpush.msra.mxu0 %v6631
        %6640 = vmatpush.msra.mxu0 %v6630
        %6641 = vmatpush.msra.mxu0 %v6629
        %6642 = vmatpush.msra.mxu0 %v6628
        %6643 = vmatpush.msra.mxu0 %v6627
        %6644 = vmatpush.msra.mxu0 %v6626
        %6645 = vmatpush.msra.mxu0 %v6625
        %6646 = vmatpush.msra.mxu0 %v6624
        %6647 = vmatpush.msra.mxu0 %v6623
        %6648 = vmatpush.msra.mxu0 %v6622
        %6649 = vmatpush.msra.mxu0 %v6621
        %6650 = vmatpush.msra.mxu0 %v6620
        %6651 = vmatpush.msra.mxu0 %v6619
        %6652 = vmatmul.f32.gmra.mxu0 %v6618
        %v6653 = vpop.f32.mrf.mxu0
        %v6654 = vadd.f32 %v6635, %v6653
        %6655 = vdwg.mxu0
        %6656 = vst [vmem:[%s1617] sm:$0x1] %v6654
        %s6657 = sand.u32 %s1028, 1
        %s6658 = scalar_lea.sflag [#allocation5], %s6657
        %s6659 = sand.u32 %s1028, 1
        %s6660 = scalar_lea.vmem [#allocation35], %s6659
        // Predicated region
        $region273: #{complete_model_forward.1} parent=191 // pred_check
          %p6661 = pneg %p1038
        $region274: #{complete_model_forward.1} parent=191 // pred_check_branch
          %6663 = sbr.rel (%p6661) target = $region276
        $region275: #{complete_model_forward.1} parent=191 // pred_region
          %6665 = vsyncadd %s6658, 0
          %s6666 = scalar_lea.hbm %s87, %s112
          %s6668 = sshll.u32 %s6660, 4
          %s6669 = int_to_ptr.vmem [resolvable:$true] %s6668
          %s6670 = sshll.u32 %s6666, 4
          %s6671 = int_to_ptr.hbm [resolvable:$true] %s6670
          %6673 = dma.vmem_to_hbm [thread:$0]  %s6669, 16, %s6671, %s6658
        $region276: #{complete_model_forward.1} parent=191 // pred_fallthru
          _
      $region192: #{complete_model_forward.1} parent=5 // pred_fallthru
        _
      %p6674 = scmp.le.s32.totalorder 2, %s107
      // Predicated region
      $region277: #{complete_model_forward.1} parent=5 // pred_check
        %p6675 = pneg %p6674
      $region278: #{complete_model_forward.1} parent=5 // pred_check_branch
        %6677 = sbr.rel (%p6675) target = $region280
      $region279: #{complete_model_forward.1} parent=5 // pred_region
        %s6678 = ssub.s32 %s107, 2
        // Predicated region
        $region281: #{complete_model_forward.1} parent=279 // pred_check
          %p6679 = pneg %p1044
        $region282: #{complete_model_forward.1} parent=279 // pred_check_branch
          %6681 = sbr.rel (%p6679) target = $region284
        $region283: #{complete_model_forward.1} parent=279 // pred_region
          %s6682 = sand.u32 %s1029, 1
          %s6683 = scalar_lea.sflag [#allocation5], %s6682
          %s6684 = sand.u32 %s1029, 1
          %s6685 = scalar_lea.vmem [#allocation35], %s6684
          %6687 = dma.done %s6683, 16
        $region284: #{complete_model_forward.1} parent=279 // pred_fallthru
          _
      $region280: #{complete_model_forward.1} parent=5 // pred_fallthru
        _
    $region6: #{complete_model_forward.1} parent=1 // loop_footer
      %s111 = sadd.s32 1, %s107
    $region7: #{complete_model_forward.1} parent=1 // loop_footer_branch
      %106 = sbr.rel target = $region3
    $region8: #{complete_model_forward.1} parent=1 // loop_exit
      _
    %6688 = vsyncpa [#allocation4], 1
    %s6689 = scalar_lea.sflag [#allocation4], 1
    %6690 = vsyncpa %s6689, 1
    %6691 = vsyncpa [#allocation7], 1
    %6692 = vsyncpa [#allocation10], 1
    %6693 = vsyncpa [#allocation13], 1
    %6694 = vsyncpa [#allocation16], 1
    %6695 = vsyncpa [#allocation19], 1
    %6696 = vsyncpa [#allocation22], 1
    %6697 = vsyncpa [#allocation25], 1
    %6698 = vsyncpa [#allocation28], 1
    %6699 = vsyncpa [#allocation31], 1
    %6700 = vsyncpa [#allocation34], 1
    %6701 = vsyncpa [#allocation5], 1
    %s6702 = scalar_lea.sflag [#allocation5], 1
    %6703 = vsyncpa %s6702, 1

</llo_original>
